<compile_context>
chip_gen: v5e
topology: v5e:2x2
jax: 0.10.0
libtpu: 0.0.40
codegen_flags: <defaults>
</compile_context>

<pallas_src>
import numpy as np
import jax
import jax.numpy as jnp
from jax import lax
from jax.experimental import pallas as pl
from jax.experimental.pallas import tpu as pltpu

G = 4              # images packed along the lane axis per grid step (4 * 32 = 128 lanes)
H = W = 32         # input spatial size implied by the module (batch x 1 x 32 x 32)
CO = 6             # conv output channels
CONV = 30          # conv output spatial size (valid 3x3 on 32)
PH = PW = 15       # pooled spatial size
SEG = 128          # lane-segment width per (channel, pooled-row) in the routed feature row
FDIM = CO * PH * SEG   # 11520
NOUT = 10


def net_kernel(x_ref, cw_ref, cb_ref, wbig_ref, fb_ref, o_ref, pk_ref, f_ref):
    # x_ref:    (1, 4, 32, 32) VMEM  -- the 4 images of this grid step
    # cw_ref:   (6, 9)   SMEM        -- conv weight, k = di*3 + dj
    # cb_ref:   (6,)     SMEM        -- conv bias
    # wbig_ref: (11520, 40) VMEM     -- fc weight with pool-position + image routing folded in
    # fb_ref:   (1, 40)  VMEM        -- fc bias tiled per packed image
    # o_ref:    (1, 4, 10) VMEM      -- logits for the 4 images
    # pk_ref:   (3, 32, 128) VMEM scratch -- lane-packed input, pre-shifted by dj = 0,1,2
    # f_ref:    (1, 11520) VMEM scratch   -- routed feature row shared by the 4 images

    # ---- pack the 4 images along lanes; build the 3 column(dj)-shifted planes --------
    # (zero first so the never-consumed tail lanes stay finite; everything they touch
    #  is multiplied by exact zeros in wbig)
    pk_ref[...] = jnp.zeros((3, H, G * W), jnp.float32)
    xb = x_ref[0]                                            # (4, 32, 32)
    for dj in range(3):
        for g in range(G):
            pk_ref[dj, :, g * W: g * W + (W - dj)] = xb[g, :, dj:]

    # 9 shifted windows, hoisted once per grid step and reused by all 6 channels.
    wins = [pk_ref[dj, di:di + CONV, :] for di in range(3) for dj in range(3)]  # (30,128)

    f_ref[...] = jnp.zeros((1, FDIM), jnp.float32)           # unwritten lanes must be 0/finite

    for c in range(CO):
        # 3x3 valid cross-correlation + bias + ReLU for all 4 packed images (pure VPU).
        acc = wins[0] * cw_ref[c, 0]
        for k in range(1, 9):
            acc = acc + wins[k] * cw_ref[c, k]
        acc = jnp.maximum(acc + cb_ref[c], 0.0)              # (30, 128)

        # 2x2 / stride-2 max-pool on the VPU via unit-stride shifted slices.
        rowm = jnp.maximum(acc[0:29, :], acc[1:30, :])       # (29, 128) max of row pairs
        colm = jnp.maximum(rowm[:, 0:127], rowm[:, 1:128])   # (29, 127) max of col pairs
        # pooled value of image g at (ph, pw) now sits at colm[2*ph, g*32 + 2*pw]

        base = c * PH * SEG
        for ph in range(PH):
            # lane-dense (127-wide), 128-aligned stores; channel-major flatten order is
            # realized by the static segment offset, matching torch's .view(B, -1)
            off = base + ph * SEG
            f_ref[:, off: off + 127] = colm[2 * ph: 2 * ph + 1, :]

    # flatten + de-interleave of the 4 packed images + fc1, as ONE MXU matmul.
    res = jnp.dot(f_ref[...], wbig_ref[...],
                  preferred_element_type=jnp.float32) + fb_ref[...]   # (1, 40)
    for g in range(G):
        o_ref[0, g: g + 1, :] = res[:, g * NOUT: (g + 1) * NOUT]


@jax.jit
def net_forward(x, conv_w, conv_b, fc_w, fc_b):
    B = x.shape[0]
    Bp = ((B + G - 1) // G) * G
    ng = Bp // G

    xs = x.reshape(B, H, W)
    if Bp != B:
        xs = jnp.pad(xs, ((0, Bp - B), (0, 0), (0, 0)))
    xg = xs.reshape(ng, G, H, W)

    cw = conv_w.reshape(CO, 9)                       # k = di*3 + dj
    fc4 = fc_w.reshape(NOUT, CO, PH, PW)             # bitcast-level reshape of (10, 1350)

    # Static 0/1 routing matrix: the pooled value of packed image g, pooled column pw,
    # lives at lane g*32 + 2*pw of its (channel, pooled-row) segment in f_ref.
    sel = np.zeros((G, PW, SEG), np.float32)
    for g in range(G):
        for pw in range(PW):
            sel[g, pw, g * W + 2 * pw] = 1.0
    # wbig[(c*15+h)*128 + m, g*10 + o] = fc_w[o, c*225 + h*15 + pw] iff m == g*32 + 2*pw
    wbig = jnp.einsum('gwm,ochw->chmgo', jnp.asarray(sel), fc4).reshape(FDIM, G * NOUT)
    fb = jnp.tile(fc_b, G).reshape(1, G * NOUT)

    out = pl.pallas_call(
        net_kernel,
        out_shape=jax.ShapeDtypeStruct((ng, G, NOUT), jnp.float32),
        grid=(ng,),
        in_specs=[
            pl.BlockSpec((1, G, H, W), lambda b: (b, 0, 0, 0)),
            pl.BlockSpec(memory_space=pltpu.MemorySpace.SMEM),   # conv weight (6, 9)
            pl.BlockSpec(memory_space=pltpu.MemorySpace.SMEM),   # conv bias (6,)
            pl.BlockSpec((FDIM, G * NOUT), lambda b: (0, 0)),    # routed fc weight (resident)
            pl.BlockSpec((1, G * NOUT), lambda b: (0, 0)),       # tiled fc bias
        ],
        out_specs=pl.BlockSpec((1, G, NOUT), lambda b: (b, 0, 0)),
        scratch_shapes=[
            pltpu.VMEM((3, H, G * W), jnp.float32),   # packed, column-pre-shifted input
            pltpu.VMEM((1, FDIM), jnp.float32),       # routed feature row
        ],
        compiler_params=pltpu.CompilerParams(dimension_semantics=("parallel",)),
    )(xg, cw, conv_b, wbig, fb)

    return out.reshape(Bp, NOUT)[:B]


def ref_forward(x, conv_w, conv_b, fc_w, fc_b):
    y = lax.conv_general_dilated(x, conv_w, (1, 1), "VALID",
                                 dimension_numbers=("NCHW", "OIHW", "NCHW"))
    y = jnp.maximum(y + conv_b.reshape(1, CO, 1, 1), 0.0)
    y = lax.reduce_window(y, -jnp.inf, lax.max, (1, 1, 2, 2), (1, 1, 2, 2), "VALID")
    y = y.reshape(x.shape[0], -1)
    return y @ fc_w.T + fc_b


if __name__ == "__main__":
    key = jax.random.PRNGKey(0)
    k1, k2, k3, k4, k5 = jax.random.split(key, 5)
    B = 2
    # MNIST-like input implied by the module: batch x 1 x 32 x 32
    x = jax.random.normal(k1, (B, 1, 32, 32), jnp.float32)
    # Deterministic synthetic parameters (shapes from Net.__init__)
    conv_w = jax.random.normal(k2, (6, 1, 3, 3), jnp.float32) * 0.3
    conv_b = jax.random.normal(k3, (6,), jnp.float32) * 0.1
    fc_w = jax.random.normal(k4, (10, 1350), jnp.float32) * 0.02
    fc_b = jax.random.normal(k5, (10,), jnp.float32) * 0.1

    out = jax.block_until_ready(net_forward(x, conv_w, conv_b, fc_w, fc_b))
    assert out.shape == (B, 10) and out.dtype == jnp.float32

    ref = ref_forward(x, conv_w, conv_b, fc_w, fc_b)
    np.testing.assert_allclose(np.asarray(out), np.asarray(ref), rtol=1e-4, atol=1e-4)
    print("KERNEL_OK")
</pallas_src>

<mosaic_0001>
module attributes {stable_mosaic.version = 11 : i64} {
  func.func @net_kernel(%arg0: i32, %arg1: memref<1x4x32x32xf32, #tpu.memory_space<vmem>>, %arg2: memref<6x9xf32, #tpu.memory_space<smem>>, %arg3: memref<6xf32, #tpu.memory_space<smem>>, %arg4: memref<11520x40xf32, #tpu.memory_space<vmem>>, %arg5: memref<1x40xf32, #tpu.memory_space<vmem>>, %arg6: memref<1x4x10xf32, #tpu.memory_space<vmem>>, %arg7: memref<3x32x128xf32, #tpu.memory_space<vmem>>, %arg8: memref<1x11520xf32, #tpu.memory_space<vmem>>) attributes {dimension_semantics = [#tpu.dimension_semantics<parallel>], iteration_bounds = array<i64: 1>, scalar_prefetch = 0 : i64, scratch_operands = 2 : i64, tpu.core_type = #tpu.core_type<tc>, window_params = [{transform_indices = @transform_0, window_bounds = array<i64: 1, 4, 32, 32>}, {transform_indices = @transform_1, window_bounds = array<i64: 6, 9>}, {transform_indices = @transform_2, window_bounds = array<i64: 6>}, {pipeline_mode = #tpu.pipeline_mode<synchronous>, transform_indices = @transform_3, window_bounds = array<i64: 11520, 40>}, {pipeline_mode = #tpu.pipeline_mode<synchronous>, transform_indices = @transform_4, window_bounds = array<i64: 1, 40>}, {transform_indices = @transform_5, window_bounds = array<i64: 1, 4, 10>}]} {
    %cst = arith.constant 0.000000e+00 : f32
    %0 = vector.broadcast %cst : f32 to vector<3x32x128xf32>
    %c0 = arith.constant 0 : index
    %c0_0 = arith.constant 0 : index
    %c0_1 = arith.constant 0 : index
    %1 = vector.load %arg7[%c0, %c0_0, %c0_1] : memref<3x32x128xf32, #tpu.memory_space<vmem>>, vector<3x32x128xf32>
    tpu.vector_store %arg7[%c0, %c0_0, %c0_1], %0 {strides = array<i32>} : memref<3x32x128xf32, #tpu.memory_space<vmem>>, vector<3x32x128xf32>,
    %c0_2 = arith.constant 0 : index
    %c0_3 = arith.constant 0 : index
    %c0_4 = arith.constant 0 : index
    %c0_5 = arith.constant 0 : index
    %2 = vector.load %arg1[%c0_2, %c0_3, %c0_4, %c0_5] : memref<1x4x32x32xf32, #tpu.memory_space<vmem>>, vector<1x4x32x32xf32>
    %3 = vector.shape_cast %2 : vector<1x4x32x32xf32> to vector<4x32x32xf32>
    %4 = vector.extract_strided_slice %3 {offsets = [0, 0, 0], sizes = [1, 32, 32], strides = [1, 1, 1]} : vector<4x32x32xf32> to vector<1x32x32xf32>
    %5 = vector.shape_cast %4 : vector<1x32x32xf32> to vector<32x32xf32>
    %c0_6 = arith.constant 0 : index
    %c0_7 = arith.constant 0 : index
    %c0_8 = arith.constant 0 : index
    %6 = vector.load %arg7[%c0_6, %c0_7, %c0_8] : memref<3x32x128xf32, #tpu.memory_space<vmem>>, vector<1x32x32xf32>
    %7 = vector.shape_cast %6 : vector<1x32x32xf32> to vector<32x32xf32>
    %8 = vector.shape_cast %5 : vector<32x32xf32> to vector<1x32x32xf32>
    tpu.vector_store %arg7[%c0_6, %c0_7, %c0_8], %8 {strides = array<i32>} : memref<3x32x128xf32, #tpu.memory_space<vmem>>, vector<1x32x32xf32>,
    %9 = vector.extract_strided_slice %3 {offsets = [1, 0, 0], sizes = [1, 32, 32], strides = [1, 1, 1]} : vector<4x32x32xf32> to vector<1x32x32xf32>
    %10 = vector.shape_cast %9 : vector<1x32x32xf32> to vector<32x32xf32>
    %c0_9 = arith.constant 0 : index
    %c0_10 = arith.constant 0 : index
    %c32 = arith.constant 32 : index
    %11 = vector.load %arg7[%c0_9, %c0_10, %c32] : memref<3x32x128xf32, #tpu.memory_space<vmem>>, vector<1x32x32xf32>
    %12 = vector.shape_cast %11 : vector<1x32x32xf32> to vector<32x32xf32>
    %13 = vector.shape_cast %10 : vector<32x32xf32> to vector<1x32x32xf32>
    tpu.vector_store %arg7[%c0_9, %c0_10, %c32], %13 {strides = array<i32>} : memref<3x32x128xf32, #tpu.memory_space<vmem>>, vector<1x32x32xf32>,
    %14 = vector.extract_strided_slice %3 {offsets = [2, 0, 0], sizes = [1, 32, 32], strides = [1, 1, 1]} : vector<4x32x32xf32> to vector<1x32x32xf32>
    %15 = vector.shape_cast %14 : vector<1x32x32xf32> to vector<32x32xf32>
    %c0_11 = arith.constant 0 : index
    %c0_12 = arith.constant 0 : index
    %c64 = arith.constant 64 : index
    %16 = vector.load %arg7[%c0_11, %c0_12, %c64] : memref<3x32x128xf32, #tpu.memory_space<vmem>>, vector<1x32x32xf32>
    %17 = vector.shape_cast %16 : vector<1x32x32xf32> to vector<32x32xf32>
    %18 = vector.shape_cast %15 : vector<32x32xf32> to vector<1x32x32xf32>
    tpu.vector_store %arg7[%c0_11, %c0_12, %c64], %18 {strides = array<i32>} : memref<3x32x128xf32, #tpu.memory_space<vmem>>, vector<1x32x32xf32>,
    %19 = vector.extract_strided_slice %3 {offsets = [3, 0, 0], sizes = [1, 32, 32], strides = [1, 1, 1]} : vector<4x32x32xf32> to vector<1x32x32xf32>
    %20 = vector.shape_cast %19 : vector<1x32x32xf32> to vector<32x32xf32>
    %c0_13 = arith.constant 0 : index
    %c0_14 = arith.constant 0 : index
    %c96 = arith.constant 96 : index
    %21 = vector.load %arg7[%c0_13, %c0_14, %c96] : memref<3x32x128xf32, #tpu.memory_space<vmem>>, vector<1x32x32xf32>
    %22 = vector.shape_cast %21 : vector<1x32x32xf32> to vector<32x32xf32>
    %23 = vector.shape_cast %20 : vector<32x32xf32> to vector<1x32x32xf32>
    tpu.vector_store %arg7[%c0_13, %c0_14, %c96], %23 {strides = array<i32>} : memref<3x32x128xf32, #tpu.memory_space<vmem>>, vector<1x32x32xf32>,
    %24 = vector.extract_strided_slice %3 {offsets = [0, 0, 1], sizes = [1, 32, 31], strides = [1, 1, 1]} : vector<4x32x32xf32> to vector<1x32x31xf32>
    %25 = vector.shape_cast %24 : vector<1x32x31xf32> to vector<32x31xf32>
    %c1 = arith.constant 1 : index
    %c0_15 = arith.constant 0 : index
    %c0_16 = arith.constant 0 : index
    %26 = vector.load %arg7[%c1, %c0_15, %c0_16] : memref<3x32x128xf32, #tpu.memory_space<vmem>>, vector<1x32x31xf32>
    %27 = vector.shape_cast %26 : vector<1x32x31xf32> to vector<32x31xf32>
    %28 = vector.shape_cast %25 : vector<32x31xf32> to vector<1x32x31xf32>
    tpu.vector_store %arg7[%c1, %c0_15, %c0_16], %28 {strides = array<i32>} : memref<3x32x128xf32, #tpu.memory_space<vmem>>, vector<1x32x31xf32>,
    %29 = vector.extract_strided_slice %3 {offsets = [1, 0, 1], sizes = [1, 32, 31], strides = [1, 1, 1]} : vector<4x32x32xf32> to vector<1x32x31xf32>
    %30 = vector.shape_cast %29 : vector<1x32x31xf32> to vector<32x31xf32>
    %c1_17 = arith.constant 1 : index
    %c0_18 = arith.constant 0 : index
    %c32_19 = arith.constant 32 : index
    %31 = vector.load %arg7[%c1_17, %c0_18, %c32_19] : memref<3x32x128xf32, #tpu.memory_space<vmem>>, vector<1x32x31xf32>
    %32 = vector.shape_cast %31 : vector<1x32x31xf32> to vector<32x31xf32>
    %33 = vector.shape_cast %30 : vector<32x31xf32> to vector<1x32x31xf32>
    tpu.vector_store %arg7[%c1_17, %c0_18, %c32_19], %33 {strides = array<i32>} : memref<3x32x128xf32, #tpu.memory_space<vmem>>, vector<1x32x31xf32>,
    %34 = vector.extract_strided_slice %3 {offsets = [2, 0, 1], sizes = [1, 32, 31], strides = [1, 1, 1]} : vector<4x32x32xf32> to vector<1x32x31xf32>
    %35 = vector.shape_cast %34 : vector<1x32x31xf32> to vector<32x31xf32>
    %c1_20 = arith.constant 1 : index
    %c0_21 = arith.constant 0 : index
    %c64_22 = arith.constant 64 : index
    %36 = vector.load %arg7[%c1_20, %c0_21, %c64_22] : memref<3x32x128xf32, #tpu.memory_space<vmem>>, vector<1x32x31xf32>
    %37 = vector.shape_cast %36 : vector<1x32x31xf32> to vector<32x31xf32>
    %38 = vector.shape_cast %35 : vector<32x31xf32> to vector<1x32x31xf32>
    tpu.vector_store %arg7[%c1_20, %c0_21, %c64_22], %38 {strides = array<i32>} : memref<3x32x128xf32, #tpu.memory_space<vmem>>, vector<1x32x31xf32>,
    %39 = vector.extract_strided_slice %3 {offsets = [3, 0, 1], sizes = [1, 32, 31], strides = [1, 1, 1]} : vector<4x32x32xf32> to vector<1x32x31xf32>
    %40 = vector.shape_cast %39 : vector<1x32x31xf32> to vector<32x31xf32>
    %c1_23 = arith.constant 1 : index
    %c0_24 = arith.constant 0 : index
    %c96_25 = arith.constant 96 : index
    %41 = vector.load %arg7[%c1_23, %c0_24, %c96_25] : memref<3x32x128xf32, #tpu.memory_space<vmem>>, vector<1x32x31xf32>
    %42 = vector.shape_cast %41 : vector<1x32x31xf32> to vector<32x31xf32>
    %43 = vector.shape_cast %40 : vector<32x31xf32> to vector<1x32x31xf32>
    tpu.vector_store %arg7[%c1_23, %c0_24, %c96_25], %43 {strides = array<i32>} : memref<3x32x128xf32, #tpu.memory_space<vmem>>, vector<1x32x31xf32>,
    %44 = vector.extract_strided_slice %3 {offsets = [0, 0, 2], sizes = [1, 32, 30], strides = [1, 1, 1]} : vector<4x32x32xf32> to vector<1x32x30xf32>
    %45 = vector.shape_cast %44 : vector<1x32x30xf32> to vector<32x30xf32>
    %c2 = arith.constant 2 : index
    %c0_26 = arith.constant 0 : index
    %c0_27 = arith.constant 0 : index
    %46 = vector.load %arg7[%c2, %c0_26, %c0_27] : memref<3x32x128xf32, #tpu.memory_space<vmem>>, vector<1x32x30xf32>
    %47 = vector.shape_cast %46 : vector<1x32x30xf32> to vector<32x30xf32>
    %48 = vector.shape_cast %45 : vector<32x30xf32> to vector<1x32x30xf32>
    tpu.vector_store %arg7[%c2, %c0_26, %c0_27], %48 {strides = array<i32>} : memref<3x32x128xf32, #tpu.memory_space<vmem>>, vector<1x32x30xf32>,
    %49 = vector.extract_strided_slice %3 {offsets = [1, 0, 2], sizes = [1, 32, 30], strides = [1, 1, 1]} : vector<4x32x32xf32> to vector<1x32x30xf32>
    %50 = vector.shape_cast %49 : vector<1x32x30xf32> to vector<32x30xf32>
    %c2_28 = arith.constant 2 : index
    %c0_29 = arith.constant 0 : index
    %c32_30 = arith.constant 32 : index
    %51 = vector.load %arg7[%c2_28, %c0_29, %c32_30] : memref<3x32x128xf32, #tpu.memory_space<vmem>>, vector<1x32x30xf32>
    %52 = vector.shape_cast %51 : vector<1x32x30xf32> to vector<32x30xf32>
    %53 = vector.shape_cast %50 : vector<32x30xf32> to vector<1x32x30xf32>
    tpu.vector_store %arg7[%c2_28, %c0_29, %c32_30], %53 {strides = array<i32>} : memref<3x32x128xf32, #tpu.memory_space<vmem>>, vector<1x32x30xf32>,
    %54 = vector.extract_strided_slice %3 {offsets = [2, 0, 2], sizes = [1, 32, 30], strides = [1, 1, 1]} : vector<4x32x32xf32> to vector<1x32x30xf32>
    %55 = vector.shape_cast %54 : vector<1x32x30xf32> to vector<32x30xf32>
    %c2_31 = arith.constant 2 : index
    %c0_32 = arith.constant 0 : index
    %c64_33 = arith.constant 64 : index
    %56 = vector.load %arg7[%c2_31, %c0_32, %c64_33] : memref<3x32x128xf32, #tpu.memory_space<vmem>>, vector<1x32x30xf32>
    %57 = vector.shape_cast %56 : vector<1x32x30xf32> to vector<32x30xf32>
    %58 = vector.shape_cast %55 : vector<32x30xf32> to vector<1x32x30xf32>
    tpu.vector_store %arg7[%c2_31, %c0_32, %c64_33], %58 {strides = array<i32>} : memref<3x32x128xf32, #tpu.memory_space<vmem>>, vector<1x32x30xf32>,
    %59 = vector.extract_strided_slice %3 {offsets = [3, 0, 2], sizes = [1, 32, 30], strides = [1, 1, 1]} : vector<4x32x32xf32> to vector<1x32x30xf32>
    %60 = vector.shape_cast %59 : vector<1x32x30xf32> to vector<32x30xf32>
    %c2_34 = arith.constant 2 : index
    %c0_35 = arith.constant 0 : index
    %c96_36 = arith.constant 96 : index
    %61 = vector.load %arg7[%c2_34, %c0_35, %c96_36] : memref<3x32x128xf32, #tpu.memory_space<vmem>>, vector<1x32x30xf32>
    %62 = vector.shape_cast %61 : vector<1x32x30xf32> to vector<32x30xf32>
    %63 = vector.shape_cast %60 : vector<32x30xf32> to vector<1x32x30xf32>
    tpu.vector_store %arg7[%c2_34, %c0_35, %c96_36], %63 {strides = array<i32>} : memref<3x32x128xf32, #tpu.memory_space<vmem>>, vector<1x32x30xf32>,
    %c0_37 = arith.constant 0 : index
    %c0_38 = arith.constant 0 : index
    %c0_39 = arith.constant 0 : index
    %64 = vector.load %arg7[%c0_37, %c0_38, %c0_39] : memref<3x32x128xf32, #tpu.memory_space<vmem>>, vector<1x30x128xf32>
    %65 = vector.shape_cast %64 : vector<1x30x128xf32> to vector<30x128xf32>
    %c1_40 = arith.constant 1 : index
    %c0_41 = arith.constant 0 : index
    %c0_42 = arith.constant 0 : index
    %66 = vector.load %arg7[%c1_40, %c0_41, %c0_42] : memref<3x32x128xf32, #tpu.memory_space<vmem>>, vector<1x30x128xf32>
    %67 = vector.shape_cast %66 : vector<1x30x128xf32> to vector<30x128xf32>
    %c2_43 = arith.constant 2 : index
    %c0_44 = arith.constant 0 : index
    %c0_45 = arith.constant 0 : index
    %68 = vector.load %arg7[%c2_43, %c0_44, %c0_45] : memref<3x32x128xf32, #tpu.memory_space<vmem>>, vector<1x30x128xf32>
    %69 = vector.shape_cast %68 : vector<1x30x128xf32> to vector<30x128xf32>
    %c0_46 = arith.constant 0 : index
    %c1_47 = arith.constant 1 : index
    %c0_48 = arith.constant 0 : index
    %70 = vector.load %arg7[%c0_46, %c1_47, %c0_48] : memref<3x32x128xf32, #tpu.memory_space<vmem>>, vector<1x30x128xf32>
    %71 = vector.shape_cast %70 : vector<1x30x128xf32> to vector<30x128xf32>
    %c1_49 = arith.constant 1 : index
    %c1_50 = arith.constant 1 : index
    %c0_51 = arith.constant 0 : index
    %72 = vector.load %arg7[%c1_49, %c1_50, %c0_51] : memref<3x32x128xf32, #tpu.memory_space<vmem>>, vector<1x30x128xf32>
    %73 = vector.shape_cast %72 : vector<1x30x128xf32> to vector<30x128xf32>
    %c2_52 = arith.constant 2 : index
    %c1_53 = arith.constant 1 : index
    %c0_54 = arith.constant 0 : index
    %74 = vector.load %arg7[%c2_52, %c1_53, %c0_54] : memref<3x32x128xf32, #tpu.memory_space<vmem>>, vector<1x30x128xf32>
    %75 = vector.shape_cast %74 : vector<1x30x128xf32> to vector<30x128xf32>
    %c0_55 = arith.constant 0 : index
    %c2_56 = arith.constant 2 : index
    %c0_57 = arith.constant 0 : index
    %76 = vector.load %arg7[%c0_55, %c2_56, %c0_57] : memref<3x32x128xf32, #tpu.memory_space<vmem>>, vector<1x30x128xf32>
    %77 = vector.shape_cast %76 : vector<1x30x128xf32> to vector<30x128xf32>
    %c1_58 = arith.constant 1 : index
    %c2_59 = arith.constant 2 : index
    %c0_60 = arith.constant 0 : index
    %78 = vector.load %arg7[%c1_58, %c2_59, %c0_60] : memref<3x32x128xf32, #tpu.memory_space<vmem>>, vector<1x30x128xf32>
    %79 = vector.shape_cast %78 : vector<1x30x128xf32> to vector<30x128xf32>
    %c2_61 = arith.constant 2 : index
    %c2_62 = arith.constant 2 : index
    %c0_63 = arith.constant 0 : index
    %80 = vector.load %arg7[%c2_61, %c2_62, %c0_63] : memref<3x32x128xf32, #tpu.memory_space<vmem>>, vector<1x30x128xf32>
    %81 = vector.shape_cast %80 : vector<1x30x128xf32> to vector<30x128xf32>
    %cst_64 = arith.constant 0.000000e+00 : f32
    %82 = vector.broadcast %cst_64 : f32 to vector<1x11520xf32>
    %c0_65 = arith.constant 0 : index
    %c0_66 = arith.constant 0 : index
    %83 = vector.load %arg8[%c0_65, %c0_66] : memref<1x11520xf32, #tpu.memory_space<vmem>>, vector<1x11520xf32>
    tpu.vector_store %arg8[%c0_65, %c0_66], %82 {strides = array<i32>} : memref<1x11520xf32, #tpu.memory_space<vmem>>, vector<1x11520xf32>,
    %c0_67 = arith.constant 0 : index
    %c0_68 = arith.constant 0 : index
    %84 = memref.load %arg2[%c0_67, %c0_68] : memref<6x9xf32, #tpu.memory_space<smem>>
    %85 = vector.broadcast %84 : f32 to vector<30x128xf32>
    %86 = arith.mulf %65, %85 : vector<30x128xf32>
    %c0_69 = arith.constant 0 : index
    %c1_70 = arith.constant 1 : index
    %87 = memref.load %arg2[%c0_69, %c1_70] : memref<6x9xf32, #tpu.memory_space<smem>>
    %88 = vector.broadcast %87 : f32 to vector<30x128xf32>
    %89 = arith.mulf %67, %88 : vector<30x128xf32>
    %90 = arith.addf %86, %89 : vector<30x128xf32>
    %c0_71 = arith.constant 0 : index
    %c2_72 = arith.constant 2 : index
    %91 = memref.load %arg2[%c0_71, %c2_72] : memref<6x9xf32, #tpu.memory_space<smem>>
    %92 = vector.broadcast %91 : f32 to vector<30x128xf32>
    %93 = arith.mulf %69, %92 : vector<30x128xf32>
    %94 = arith.addf %90, %93 : vector<30x128xf32>
    %c0_73 = arith.constant 0 : index
    %c3 = arith.constant 3 : index
    %95 = memref.load %arg2[%c0_73, %c3] : memref<6x9xf32, #tpu.memory_space<smem>>
    %96 = vector.broadcast %95 : f32 to vector<30x128xf32>
    %97 = arith.mulf %71, %96 : vector<30x128xf32>
    %98 = arith.addf %94, %97 : vector<30x128xf32>
    %c0_74 = arith.constant 0 : index
    %c4 = arith.constant 4 : index
    %99 = memref.load %arg2[%c0_74, %c4] : memref<6x9xf32, #tpu.memory_space<smem>>
    %100 = vector.broadcast %99 : f32 to vector<30x128xf32>
    %101 = arith.mulf %73, %100 : vector<30x128xf32>
    %102 = arith.addf %98, %101 : vector<30x128xf32>
    %c0_75 = arith.constant 0 : index
    %c5 = arith.constant 5 : index
    %103 = memref.load %arg2[%c0_75, %c5] : memref<6x9xf32, #tpu.memory_space<smem>>
    %104 = vector.broadcast %103 : f32 to vector<30x128xf32>
    %105 = arith.mulf %75, %104 : vector<30x128xf32>
    %106 = arith.addf %102, %105 : vector<30x128xf32>
    %c0_76 = arith.constant 0 : index
    %c6 = arith.constant 6 : index
    %107 = memref.load %arg2[%c0_76, %c6] : memref<6x9xf32, #tpu.memory_space<smem>>
    %108 = vector.broadcast %107 : f32 to vector<30x128xf32>
    %109 = arith.mulf %77, %108 : vector<30x128xf32>
    %110 = arith.addf %106, %109 : vector<30x128xf32>
    %c0_77 = arith.constant 0 : index
    %c7 = arith.constant 7 : index
    %111 = memref.load %arg2[%c0_77, %c7] : memref<6x9xf32, #tpu.memory_space<smem>>
    %112 = vector.broadcast %111 : f32 to vector<30x128xf32>
    %113 = arith.mulf %79, %112 : vector<30x128xf32>
    %114 = arith.addf %110, %113 : vector<30x128xf32>
    %c0_78 = arith.constant 0 : index
    %c8 = arith.constant 8 : index
    %115 = memref.load %arg2[%c0_78, %c8] : memref<6x9xf32, #tpu.memory_space<smem>>
    %116 = vector.broadcast %115 : f32 to vector<30x128xf32>
    %117 = arith.mulf %81, %116 : vector<30x128xf32>
    %118 = arith.addf %114, %117 : vector<30x128xf32>
    %c0_79 = arith.constant 0 : index
    %119 = memref.load %arg3[%c0_79] : memref<6xf32, #tpu.memory_space<smem>>
    %120 = vector.broadcast %119 : f32 to vector<30x128xf32>
    %121 = arith.addf %118, %120 : vector<30x128xf32>
    %cst_80 = arith.constant 0.000000e+00 : f32
    %122 = vector.broadcast %cst_80 : f32 to vector<30x128xf32>
    %123 = arith.maximumf %121, %122 : vector<30x128xf32>
    %124 = vector.extract_strided_slice %123 {offsets = [0, 0], sizes = [29, 128], strides = [1, 1]} : vector<30x128xf32> to vector<29x128xf32>
    %125 = vector.extract_strided_slice %123 {offsets = [1, 0], sizes = [29, 128], strides = [1, 1]} : vector<30x128xf32> to vector<29x128xf32>
    %126 = arith.maximumf %124, %125 : vector<29x128xf32>
    %127 = vector.extract_strided_slice %126 {offsets = [0, 0], sizes = [29, 127], strides = [1, 1]} : vector<29x128xf32> to vector<29x127xf32>
    %128 = vector.extract_strided_slice %126 {offsets = [0, 1], sizes = [29, 127], strides = [1, 1]} : vector<29x128xf32> to vector<29x127xf32>
    %129 = arith.maximumf %127, %128 : vector<29x127xf32>
    %130 = vector.extract_strided_slice %129 {offsets = [0, 0], sizes = [1, 127], strides = [1, 1]} : vector<29x127xf32> to vector<1x127xf32>
    %c0_81 = arith.constant 0 : index
    %c0_82 = arith.constant 0 : index
    %131 = vector.load %arg8[%c0_81, %c0_82] : memref<1x11520xf32, #tpu.memory_space<vmem>>, vector<1x127xf32>
    tpu.vector_store %arg8[%c0_81, %c0_82], %130 {strides = array<i32>} : memref<1x11520xf32, #tpu.memory_space<vmem>>, vector<1x127xf32>,
    %132 = vector.extract_strided_slice %129 {offsets = [2, 0], sizes = [1, 127], strides = [1, 1]} : vector<29x127xf32> to vector<1x127xf32>
    %c0_83 = arith.constant 0 : index
    %c128 = arith.constant 128 : index
    %133 = vector.load %arg8[%c0_83, %c128] : memref<1x11520xf32, #tpu.memory_space<vmem>>, vector<1x127xf32>
    tpu.vector_store %arg8[%c0_83, %c128], %132 {strides = array<i32>} : memref<1x11520xf32, #tpu.memory_space<vmem>>, vector<1x127xf32>,
    %134 = vector.extract_strided_slice %129 {offsets = [4, 0], sizes = [1, 127], strides = [1, 1]} : vector<29x127xf32> to vector<1x127xf32>
    %c0_84 = arith.constant 0 : index
    %c256 = arith.constant 256 : index
    %135 = vector.load %arg8[%c0_84, %c256] : memref<1x11520xf32, #tpu.memory_space<vmem>>, vector<1x127xf32>
    tpu.vector_store %arg8[%c0_84, %c256], %134 {strides = array<i32>} : memref<1x11520xf32, #tpu.memory_space<vmem>>, vector<1x127xf32>,
    %136 = vector.extract_strided_slice %129 {offsets = [6, 0], sizes = [1, 127], strides = [1, 1]} : vector<29x127xf32> to vector<1x127xf32>
    %c0_85 = arith.constant 0 : index
    %c384 = arith.constant 384 : index
    %137 = vector.load %arg8[%c0_85, %c384] : memref<1x11520xf32, #tpu.memory_space<vmem>>, vector<1x127xf32>
    tpu.vector_store %arg8[%c0_85, %c384], %136 {strides = array<i32>} : memref<1x11520xf32, #tpu.memory_space<vmem>>, vector<1x127xf32>,
    %138 = vector.extract_strided_slice %129 {offsets = [8, 0], sizes = [1, 127], strides = [1, 1]} : vector<29x127xf32> to vector<1x127xf32>
    %c0_86 = arith.constant 0 : index
    %c512 = arith.constant 512 : index
    %139 = vector.load %arg8[%c0_86, %c512] : memref<1x11520xf32, #tpu.memory_space<vmem>>, vector<1x127xf32>
    tpu.vector_store %arg8[%c0_86, %c512], %138 {strides = array<i32>} : memref<1x11520xf32, #tpu.memory_space<vmem>>, vector<1x127xf32>,
    %140 = vector.extract_strided_slice %129 {offsets = [10, 0], sizes = [1, 127], strides = [1, 1]} : vector<29x127xf32> to vector<1x127xf32>
    %c0_87 = arith.constant 0 : index
    %c640 = arith.constant 640 : index
    %141 = vector.load %arg8[%c0_87, %c640] : memref<1x11520xf32, #tpu.memory_space<vmem>>, vector<1x127xf32>
    tpu.vector_store %arg8[%c0_87, %c640], %140 {strides = array<i32>} : memref<1x11520xf32, #tpu.memory_space<vmem>>, vector<1x127xf32>,
    %142 = vector.extract_strided_slice %129 {offsets = [12, 0], sizes = [1, 127], strides = [1, 1]} : vector<29x127xf32> to vector<1x127xf32>
    %c0_88 = arith.constant 0 : index
    %c768 = arith.constant 768 : index
    %143 = vector.load %arg8[%c0_88, %c768] : memref<1x11520xf32, #tpu.memory_space<vmem>>, vector<1x127xf32>
    tpu.vector_store %arg8[%c0_88, %c768], %142 {strides = array<i32>} : memref<1x11520xf32, #tpu.memory_space<vmem>>, vector<1x127xf32>,
    %144 = vector.extract_strided_slice %129 {offsets = [14, 0], sizes = [1, 127], strides = [1, 1]} : vector<29x127xf32> to vector<1x127xf32>
    %c0_89 = arith.constant 0 : index
    %c896 = arith.constant 896 : index
    %145 = vector.load %arg8[%c0_89, %c896] : memref<1x11520xf32, #tpu.memory_space<vmem>>, vector<1x127xf32>
    tpu.vector_store %arg8[%c0_89, %c896], %144 {strides = array<i32>} : memref<1x11520xf32, #tpu.memory_space<vmem>>, vector<1x127xf32>,
    %146 = vector.extract_strided_slice %129 {offsets = [16, 0], sizes = [1, 127], strides = [1, 1]} : vector<29x127xf32> to vector<1x127xf32>
    %c0_90 = arith.constant 0 : index
    %c1024 = arith.constant 1024 : index
    %147 = vector.load %arg8[%c0_90, %c1024] : memref<1x11520xf32, #tpu.memory_space<vmem>>, vector<1x127xf32>
    tpu.vector_store %arg8[%c0_90, %c1024], %146 {strides = array<i32>} : memref<1x11520xf32, #tpu.memory_space<vmem>>, vector<1x127xf32>,
    %148 = vector.extract_strided_slice %129 {offsets = [18, 0], sizes = [1, 127], strides = [1, 1]} : vector<29x127xf32> to vector<1x127xf32>
    %c0_91 = arith.constant 0 : index
    %c1152 = arith.constant 1152 : index
    %149 = vector.load %arg8[%c0_91, %c1152] : memref<1x11520xf32, #tpu.memory_space<vmem>>, vector<1x127xf32>
    tpu.vector_store %arg8[%c0_91, %c1152], %148 {strides = array<i32>} : memref<1x11520xf32, #tpu.memory_space<vmem>>, vector<1x127xf32>,
    %150 = vector.extract_strided_slice %129 {offsets = [20, 0], sizes = [1, 127], strides = [1, 1]} : vector<29x127xf32> to vector<1x127xf32>
    %c0_92 = arith.constant 0 : index
    %c1280 = arith.constant 1280 : index
    %151 = vector.load %arg8[%c0_92, %c1280] : memref<1x11520xf32, #tpu.memory_space<vmem>>, vector<1x127xf32>
    tpu.vector_store %arg8[%c0_92, %c1280], %150 {strides = array<i32>} : memref<1x11520xf32, #tpu.memory_space<vmem>>, vector<1x127xf32>,
    %152 = vector.extract_strided_slice %129 {offsets = [22, 0], sizes = [1, 127], strides = [1, 1]} : vector<29x127xf32> to vector<1x127xf32>
    %c0_93 = arith.constant 0 : index
    %c1408 = arith.constant 1408 : index
    %153 = vector.load %arg8[%c0_93, %c1408] : memref<1x11520xf32, #tpu.memory_space<vmem>>, vector<1x127xf32>
    tpu.vector_store %arg8[%c0_93, %c1408], %152 {strides = array<i32>} : memref<1x11520xf32, #tpu.memory_space<vmem>>, vector<1x127xf32>,
    %154 = vector.extract_strided_slice %129 {offsets = [24, 0], sizes = [1, 127], strides = [1, 1]} : vector<29x127xf32> to vector<1x127xf32>
    %c0_94 = arith.constant 0 : index
    %c1536 = arith.constant 1536 : index
    %155 = vector.load %arg8[%c0_94, %c1536] : memref<1x11520xf32, #tpu.memory_space<vmem>>, vector<1x127xf32>
    tpu.vector_store %arg8[%c0_94, %c1536], %154 {strides = array<i32>} : memref<1x11520xf32, #tpu.memory_space<vmem>>, vector<1x127xf32>,
    %156 = vector.extract_strided_slice %129 {offsets = [26, 0], sizes = [1, 127], strides = [1, 1]} : vector<29x127xf32> to vector<1x127xf32>
    %c0_95 = arith.constant 0 : index
    %c1664 = arith.constant 1664 : index
    %157 = vector.load %arg8[%c0_95, %c1664] : memref<1x11520xf32, #tpu.memory_space<vmem>>, vector<1x127xf32>
    tpu.vector_store %arg8[%c0_95, %c1664], %156 {strides = array<i32>} : memref<1x11520xf32, #tpu.memory_space<vmem>>, vector<1x127xf32>,
    %158 = vector.extract_strided_slice %129 {offsets = [28, 0], sizes = [1, 127], strides = [1, 1]} : vector<29x127xf32> to vector<1x127xf32>
    %c0_96 = arith.constant 0 : index
    %c1792 = arith.constant 1792 : index
    %159 = vector.load %arg8[%c0_96, %c1792] : memref<1x11520xf32, #tpu.memory_space<vmem>>, vector<1x127xf32>
    tpu.vector_store %arg8[%c0_96, %c1792], %158 {strides = array<i32>} : memref<1x11520xf32, #tpu.memory_space<vmem>>, vector<1x127xf32>,
    %c1_97 = arith.constant 1 : index
    %c0_98 = arith.constant 0 : index
    %160 = memref.load %arg2[%c1_97, %c0_98] : memref<6x9xf32, #tpu.memory_space<smem>>
    %161 = vector.broadcast %160 : f32 to vector<30x128xf32>
    %162 = arith.mulf %65, %161 : vector<30x128xf32>
    %c1_99 = arith.constant 1 : index
    %c1_100 = arith.constant 1 : index
    %163 = memref.load %arg2[%c1_99, %c1_100] : memref<6x9xf32, #tpu.memory_space<smem>>
    %164 = vector.broadcast %163 : f32 to vector<30x128xf32>
    %165 = arith.mulf %67, %164 : vector<30x128xf32>
    %166 = arith.addf %162, %165 : vector<30x128xf32>
    %c1_101 = arith.constant 1 : index
    %c2_102 = arith.constant 2 : index
    %167 = memref.load %arg2[%c1_101, %c2_102] : memref<6x9xf32, #tpu.memory_space<smem>>
    %168 = vector.broadcast %167 : f32 to vector<30x128xf32>
    %169 = arith.mulf %69, %168 : vector<30x128xf32>
    %170 = arith.addf %166, %169 : vector<30x128xf32>
    %c1_103 = arith.constant 1 : index
    %c3_104 = arith.constant 3 : index
    %171 = memref.load %arg2[%c1_103, %c3_104] : memref<6x9xf32, #tpu.memory_space<smem>>
    %172 = vector.broadcast %171 : f32 to vector<30x128xf32>
    %173 = arith.mulf %71, %172 : vector<30x128xf32>
    %174 = arith.addf %170, %173 : vector<30x128xf32>
    %c1_105 = arith.constant 1 : index
    %c4_106 = arith.constant 4 : index
    %175 = memref.load %arg2[%c1_105, %c4_106] : memref<6x9xf32, #tpu.memory_space<smem>>
    %176 = vector.broadcast %175 : f32 to vector<30x128xf32>
    %177 = arith.mulf %73, %176 : vector<30x128xf32>
    %178 = arith.addf %174, %177 : vector<30x128xf32>
    %c1_107 = arith.constant 1 : index
    %c5_108 = arith.constant 5 : index
    %179 = memref.load %arg2[%c1_107, %c5_108] : memref<6x9xf32, #tpu.memory_space<smem>>
    %180 = vector.broadcast %179 : f32 to vector<30x128xf32>
    %181 = arith.mulf %75, %180 : vector<30x128xf32>
    %182 = arith.addf %178, %181 : vector<30x128xf32>
    %c1_109 = arith.constant 1 : index
    %c6_110 = arith.constant 6 : index
    %183 = memref.load %arg2[%c1_109, %c6_110] : memref<6x9xf32, #tpu.memory_space<smem>>
    %184 = vector.broadcast %183 : f32 to vector<30x128xf32>
    %185 = arith.mulf %77, %184 : vector<30x128xf32>
    %186 = arith.addf %182, %185 : vector<30x128xf32>
    %c1_111 = arith.constant 1 : index
    %c7_112 = arith.constant 7 : index
    %187 = memref.load %arg2[%c1_111, %c7_112] : memref<6x9xf32, #tpu.memory_space<smem>>
    %188 = vector.broadcast %187 : f32 to vector<30x128xf32>
    %189 = arith.mulf %79, %188 : vector<30x128xf32>
    %190 = arith.addf %186, %189 : vector<30x128xf32>
    %c1_113 = arith.constant 1 : index
    %c8_114 = arith.constant 8 : index
    %191 = memref.load %arg2[%c1_113, %c8_114] : memref<6x9xf32, #tpu.memory_space<smem>>
    %192 = vector.broadcast %191 : f32 to vector<30x128xf32>
    %193 = arith.mulf %81, %192 : vector<30x128xf32>
    %194 = arith.addf %190, %193 : vector<30x128xf32>
    %c1_115 = arith.constant 1 : index
    %195 = memref.load %arg3[%c1_115] : memref<6xf32, #tpu.memory_space<smem>>
    %196 = vector.broadcast %195 : f32 to vector<30x128xf32>
    %197 = arith.addf %194, %196 : vector<30x128xf32>
    %cst_116 = arith.constant 0.000000e+00 : f32
    %198 = vector.broadcast %cst_116 : f32 to vector<30x128xf32>
    %199 = arith.maximumf %197, %198 : vector<30x128xf32>
    %200 = vector.extract_strided_slice %199 {offsets = [0, 0], sizes = [29, 128], strides = [1, 1]} : vector<30x128xf32> to vector<29x128xf32>
    %201 = vector.extract_strided_slice %199 {offsets = [1, 0], sizes = [29, 128], strides = [1, 1]} : vector<30x128xf32> to vector<29x128xf32>
    %202 = arith.maximumf %200, %201 : vector<29x128xf32>
    %203 = vector.extract_strided_slice %202 {offsets = [0, 0], sizes = [29, 127], strides = [1, 1]} : vector<29x128xf32> to vector<29x127xf32>
    %204 = vector.extract_strided_slice %202 {offsets = [0, 1], sizes = [29, 127], strides = [1, 1]} : vector<29x128xf32> to vector<29x127xf32>
    %205 = arith.maximumf %203, %204 : vector<29x127xf32>
    %206 = vector.extract_strided_slice %205 {offsets = [0, 0], sizes = [1, 127], strides = [1, 1]} : vector<29x127xf32> to vector<1x127xf32>
    %c0_117 = arith.constant 0 : index
    %c1920 = arith.constant 1920 : index
    %207 = vector.load %arg8[%c0_117, %c1920] : memref<1x11520xf32, #tpu.memory_space<vmem>>, vector<1x127xf32>
    tpu.vector_store %arg8[%c0_117, %c1920], %206 {strides = array<i32>} : memref<1x11520xf32, #tpu.memory_space<vmem>>, vector<1x127xf32>,
    %208 = vector.extract_strided_slice %205 {offsets = [2, 0], sizes = [1, 127], strides = [1, 1]} : vector<29x127xf32> to vector<1x127xf32>
    %c0_118 = arith.constant 0 : index
    %c2048 = arith.constant 2048 : index
    %209 = vector.load %arg8[%c0_118, %c2048] : memref<1x11520xf32, #tpu.memory_space<vmem>>, vector<1x127xf32>
    tpu.vector_store %arg8[%c0_118, %c2048], %208 {strides = array<i32>} : memref<1x11520xf32, #tpu.memory_space<vmem>>, vector<1x127xf32>,
    %210 = vector.extract_strided_slice %205 {offsets = [4, 0], sizes = [1, 127], strides = [1, 1]} : vector<29x127xf32> to vector<1x127xf32>
    %c0_119 = arith.constant 0 : index
    %c2176 = arith.constant 2176 : index
    %211 = vector.load %arg8[%c0_119, %c2176] : memref<1x11520xf32, #tpu.memory_space<vmem>>, vector<1x127xf32>
    tpu.vector_store %arg8[%c0_119, %c2176], %210 {strides = array<i32>} : memref<1x11520xf32, #tpu.memory_space<vmem>>, vector<1x127xf32>,
    %212 = vector.extract_strided_slice %205 {offsets = [6, 0], sizes = [1, 127], strides = [1, 1]} : vector<29x127xf32> to vector<1x127xf32>
    %c0_120 = arith.constant 0 : index
    %c2304 = arith.constant 2304 : index
    %213 = vector.load %arg8[%c0_120, %c2304] : memref<1x11520xf32, #tpu.memory_space<vmem>>, vector<1x127xf32>
    tpu.vector_store %arg8[%c0_120, %c2304], %212 {strides = array<i32>} : memref<1x11520xf32, #tpu.memory_space<vmem>>, vector<1x127xf32>,
    %214 = vector.extract_strided_slice %205 {offsets = [8, 0], sizes = [1, 127], strides = [1, 1]} : vector<29x127xf32> to vector<1x127xf32>
    %c0_121 = arith.constant 0 : index
    %c2432 = arith.constant 2432 : index
    %215 = vector.load %arg8[%c0_121, %c2432] : memref<1x11520xf32, #tpu.memory_space<vmem>>, vector<1x127xf32>
    tpu.vector_store %arg8[%c0_121, %c2432], %214 {strides = array<i32>} : memref<1x11520xf32, #tpu.memory_space<vmem>>, vector<1x127xf32>,
    %216 = vector.extract_strided_slice %205 {offsets = [10, 0], sizes = [1, 127], strides = [1, 1]} : vector<29x127xf32> to vector<1x127xf32>
    %c0_122 = arith.constant 0 : index
    %c2560 = arith.constant 2560 : index
    %217 = vector.load %arg8[%c0_122, %c2560] : memref<1x11520xf32, #tpu.memory_space<vmem>>, vector<1x127xf32>
    tpu.vector_store %arg8[%c0_122, %c2560], %216 {strides = array<i32>} : memref<1x11520xf32, #tpu.memory_space<vmem>>, vector<1x127xf32>,
    %218 = vector.extract_strided_slice %205 {offsets = [12, 0], sizes = [1, 127], strides = [1, 1]} : vector<29x127xf32> to vector<1x127xf32>
    %c0_123 = arith.constant 0 : index
    %c2688 = arith.constant 2688 : index
    %219 = vector.load %arg8[%c0_123, %c2688] : memref<1x11520xf32, #tpu.memory_space<vmem>>, vector<1x127xf32>
    tpu.vector_store %arg8[%c0_123, %c2688], %218 {strides = array<i32>} : memref<1x11520xf32, #tpu.memory_space<vmem>>, vector<1x127xf32>,
    %220 = vector.extract_strided_slice %205 {offsets = [14, 0], sizes = [1, 127], strides = [1, 1]} : vector<29x127xf32> to vector<1x127xf32>
    %c0_124 = arith.constant 0 : index
    %c2816 = arith.constant 2816 : index
    %221 = vector.load %arg8[%c0_124, %c2816] : memref<1x11520xf32, #tpu.memory_space<vmem>>, vector<1x127xf32>
    tpu.vector_store %arg8[%c0_124, %c2816], %220 {strides = array<i32>} : memref<1x11520xf32, #tpu.memory_space<vmem>>, vector<1x127xf32>,
    %222 = vector.extract_strided_slice %205 {offsets = [16, 0], sizes = [1, 127], strides = [1, 1]} : vector<29x127xf32> to vector<1x127xf32>
    %c0_125 = arith.constant 0 : index
    %c2944 = arith.constant 2944 : index
    %223 = vector.load %arg8[%c0_125, %c2944] : memref<1x11520xf32, #tpu.memory_space<vmem>>, vector<1x127xf32>
    tpu.vector_store %arg8[%c0_125, %c2944], %222 {strides = array<i32>} : memref<1x11520xf32, #tpu.memory_space<vmem>>, vector<1x127xf32>,
    %224 = vector.extract_strided_slice %205 {offsets = [18, 0], sizes = [1, 127], strides = [1, 1]} : vector<29x127xf32> to vector<1x127xf32>
    %c0_126 = arith.constant 0 : index
    %c3072 = arith.constant 3072 : index
    %225 = vector.load %arg8[%c0_126, %c3072] : memref<1x11520xf32, #tpu.memory_space<vmem>>, vector<1x127xf32>
    tpu.vector_store %arg8[%c0_126, %c3072], %224 {strides = array<i32>} : memref<1x11520xf32, #tpu.memory_space<vmem>>, vector<1x127xf32>,
    %226 = vector.extract_strided_slice %205 {offsets = [20, 0], sizes = [1, 127], strides = [1, 1]} : vector<29x127xf32> to vector<1x127xf32>
    %c0_127 = arith.constant 0 : index
    %c3200 = arith.constant 3200 : index
    %227 = vector.load %arg8[%c0_127, %c3200] : memref<1x11520xf32, #tpu.memory_space<vmem>>, vector<1x127xf32>
    tpu.vector_store %arg8[%c0_127, %c3200], %226 {strides = array<i32>} : memref<1x11520xf32, #tpu.memory_space<vmem>>, vector<1x127xf32>,
    %228 = vector.extract_strided_slice %205 {offsets = [22, 0], sizes = [1, 127], strides = [1, 1]} : vector<29x127xf32> to vector<1x127xf32>
    %c0_128 = arith.constant 0 : index
    %c3328 = arith.constant 3328 : index
    %229 = vector.load %arg8[%c0_128, %c3328] : memref<1x11520xf32, #tpu.memory_space<vmem>>, vector<1x127xf32>
    tpu.vector_store %arg8[%c0_128, %c3328], %228 {strides = array<i32>} : memref<1x11520xf32, #tpu.memory_space<vmem>>, vector<1x127xf32>,
    %230 = vector.extract_strided_slice %205 {offsets = [24, 0], sizes = [1, 127], strides = [1, 1]} : vector<29x127xf32> to vector<1x127xf32>
    %c0_129 = arith.constant 0 : index
    %c3456 = arith.constant 3456 : index
    %231 = vector.load %arg8[%c0_129, %c3456] : memref<1x11520xf32, #tpu.memory_space<vmem>>, vector<1x127xf32>
    tpu.vector_store %arg8[%c0_129, %c3456], %230 {strides = array<i32>} : memref<1x11520xf32, #tpu.memory_space<vmem>>, vector<1x127xf32>,
    %232 = vector.extract_strided_slice %205 {offsets = [26, 0], sizes = [1, 127], strides = [1, 1]} : vector<29x127xf32> to vector<1x127xf32>
    %c0_130 = arith.constant 0 : index
    %c3584 = arith.constant 3584 : index
    %233 = vector.load %arg8[%c0_130, %c3584] : memref<1x11520xf32, #tpu.memory_space<vmem>>, vector<1x127xf32>
    tpu.vector_store %arg8[%c0_130, %c3584], %232 {strides = array<i32>} : memref<1x11520xf32, #tpu.memory_space<vmem>>, vector<1x127xf32>,
    %234 = vector.extract_strided_slice %205 {offsets = [28, 0], sizes = [1, 127], strides = [1, 1]} : vector<29x127xf32> to vector<1x127xf32>
    %c0_131 = arith.constant 0 : index
    %c3712 = arith.constant 3712 : index
    %235 = vector.load %arg8[%c0_131, %c3712] : memref<1x11520xf32, #tpu.memory_space<vmem>>, vector<1x127xf32>
    tpu.vector_store %arg8[%c0_131, %c3712], %234 {strides = array<i32>} : memref<1x11520xf32, #tpu.memory_space<vmem>>, vector<1x127xf32>,
    %c2_132 = arith.constant 2 : index
    %c0_133 = arith.constant 0 : index
    %236 = memref.load %arg2[%c2_132, %c0_133] : memref<6x9xf32, #tpu.memory_space<smem>>
    %237 = vector.broadcast %236 : f32 to vector<30x128xf32>
    %238 = arith.mulf %65, %237 : vector<30x128xf32>
    %c2_134 = arith.constant 2 : index
    %c1_135 = arith.constant 1 : index
    %239 = memref.load %arg2[%c2_134, %c1_135] : memref<6x9xf32, #tpu.memory_space<smem>>
    %240 = vector.broadcast %239 : f32 to vector<30x128xf32>
    %241 = arith.mulf %67, %240 : vector<30x128xf32>
    %242 = arith.addf %238, %241 : vector<30x128xf32>
    %c2_136 = arith.constant 2 : index
    %c2_137 = arith.constant 2 : index
    %243 = memref.load %arg2[%c2_136, %c2_137] : memref<6x9xf32, #tpu.memory_space<smem>>
    %244 = vector.broadcast %243 : f32 to vector<30x128xf32>
    %245 = arith.mulf %69, %244 : vector<30x128xf32>
    %246 = arith.addf %242, %245 : vector<30x128xf32>
    %c2_138 = arith.constant 2 : index
    %c3_139 = arith.constant 3 : index
    %247 = memref.load %arg2[%c2_138, %c3_139] : memref<6x9xf32, #tpu.memory_space<smem>>
    %248 = vector.broadcast %247 : f32 to vector<30x128xf32>
    %249 = arith.mulf %71, %248 : vector<30x128xf32>
    %250 = arith.addf %246, %249 : vector<30x128xf32>
    %c2_140 = arith.constant 2 : index
    %c4_141 = arith.constant 4 : index
    %251 = memref.load %arg2[%c2_140, %c4_141] : memref<6x9xf32, #tpu.memory_space<smem>>
    %252 = vector.broadcast %251 : f32 to vector<30x128xf32>
    %253 = arith.mulf %73, %252 : vector<30x128xf32>
    %254 = arith.addf %250, %253 : vector<30x128xf32>
    %c2_142 = arith.constant 2 : index
    %c5_143 = arith.constant 5 : index
    %255 = memref.load %arg2[%c2_142, %c5_143] : memref<6x9xf32, #tpu.memory_space<smem>>
    %256 = vector.broadcast %255 : f32 to vector<30x128xf32>
    %257 = arith.mulf %75, %256 : vector<30x128xf32>
    %258 = arith.addf %254, %257 : vector<30x128xf32>
    %c2_144 = arith.constant 2 : index
    %c6_145 = arith.constant 6 : index
    %259 = memref.load %arg2[%c2_144, %c6_145] : memref<6x9xf32, #tpu.memory_space<smem>>
    %260 = vector.broadcast %259 : f32 to vector<30x128xf32>
    %261 = arith.mulf %77, %260 : vector<30x128xf32>
    %262 = arith.addf %258, %261 : vector<30x128xf32>
    %c2_146 = arith.constant 2 : index
    %c7_147 = arith.constant 7 : index
    %263 = memref.load %arg2[%c2_146, %c7_147] : memref<6x9xf32, #tpu.memory_space<smem>>
    %264 = vector.broadcast %263 : f32 to vector<30x128xf32>
    %265 = arith.mulf %79, %264 : vector<30x128xf32>
    %266 = arith.addf %262, %265 : vector<30x128xf32>
    %c2_148 = arith.constant 2 : index
    %c8_149 = arith.constant 8 : index
    %267 = memref.load %arg2[%c2_148, %c8_149] : memref<6x9xf32, #tpu.memory_space<smem>>
    %268 = vector.broadcast %267 : f32 to vector<30x128xf32>
    %269 = arith.mulf %81, %268 : vector<30x128xf32>
    %270 = arith.addf %266, %269 : vector<30x128xf32>
    %c2_150 = arith.constant 2 : index
    %271 = memref.load %arg3[%c2_150] : memref<6xf32, #tpu.memory_space<smem>>
    %272 = vector.broadcast %271 : f32 to vector<30x128xf32>
    %273 = arith.addf %270, %272 : vector<30x128xf32>
    %cst_151 = arith.constant 0.000000e+00 : f32
    %274 = vector.broadcast %cst_151 : f32 to vector<30x128xf32>
    %275 = arith.maximumf %273, %274 : vector<30x128xf32>
    %276 = vector.extract_strided_slice %275 {offsets = [0, 0], sizes = [29, 128], strides = [1, 1]} : vector<30x128xf32> to vector<29x128xf32>
    %277 = vector.extract_strided_slice %275 {offsets = [1, 0], sizes = [29, 128], strides = [1, 1]} : vector<30x128xf32> to vector<29x128xf32>
    %278 = arith.maximumf %276, %277 : vector<29x128xf32>
    %279 = vector.extract_strided_slice %278 {offsets = [0, 0], sizes = [29, 127], strides = [1, 1]} : vector<29x128xf32> to vector<29x127xf32>
    %280 = vector.extract_strided_slice %278 {offsets = [0, 1], sizes = [29, 127], strides = [1, 1]} : vector<29x128xf32> to vector<29x127xf32>
    %281 = arith.maximumf %279, %280 : vector<29x127xf32>
    %282 = vector.extract_strided_slice %281 {offsets = [0, 0], sizes = [1, 127], strides = [1, 1]} : vector<29x127xf32> to vector<1x127xf32>
    %c0_152 = arith.constant 0 : index
    %c3840 = arith.constant 3840 : index
    %283 = vector.load %arg8[%c0_152, %c3840] : memref<1x11520xf32, #tpu.memory_space<vmem>>, vector<1x127xf32>
    tpu.vector_store %arg8[%c0_152, %c3840], %282 {strides = array<i32>} : memref<1x11520xf32, #tpu.memory_space<vmem>>, vector<1x127xf32>,
    %284 = vector.extract_strided_slice %281 {offsets = [2, 0], sizes = [1, 127], strides = [1, 1]} : vector<29x127xf32> to vector<1x127xf32>
    %c0_153 = arith.constant 0 : index
    %c3968 = arith.constant 3968 : index
    %285 = vector.load %arg8[%c0_153, %c3968] : memref<1x11520xf32, #tpu.memory_space<vmem>>, vector<1x127xf32>
    tpu.vector_store %arg8[%c0_153, %c3968], %284 {strides = array<i32>} : memref<1x11520xf32, #tpu.memory_space<vmem>>, vector<1x127xf32>,
    %286 = vector.extract_strided_slice %281 {offsets = [4, 0], sizes = [1, 127], strides = [1, 1]} : vector<29x127xf32> to vector<1x127xf32>
    %c0_154 = arith.constant 0 : index
    %c4096 = arith.constant 4096 : index
    %287 = vector.load %arg8[%c0_154, %c4096] : memref<1x11520xf32, #tpu.memory_space<vmem>>, vector<1x127xf32>
    tpu.vector_store %arg8[%c0_154, %c4096], %286 {strides = array<i32>} : memref<1x11520xf32, #tpu.memory_space<vmem>>, vector<1x127xf32>,
    %288 = vector.extract_strided_slice %281 {offsets = [6, 0], sizes = [1, 127], strides = [1, 1]} : vector<29x127xf32> to vector<1x127xf32>
    %c0_155 = arith.constant 0 : index
    %c4224 = arith.constant 4224 : index
    %289 = vector.load %arg8[%c0_155, %c4224] : memref<1x11520xf32, #tpu.memory_space<vmem>>, vector<1x127xf32>
    tpu.vector_store %arg8[%c0_155, %c4224], %288 {strides = array<i32>} : memref<1x11520xf32, #tpu.memory_space<vmem>>, vector<1x127xf32>,
    %290 = vector.extract_strided_slice %281 {offsets = [8, 0], sizes = [1, 127], strides = [1, 1]} : vector<29x127xf32> to vector<1x127xf32>
    %c0_156 = arith.constant 0 : index
    %c4352 = arith.constant 4352 : index
    %291 = vector.load %arg8[%c0_156, %c4352] : memref<1x11520xf32, #tpu.memory_space<vmem>>, vector<1x127xf32>
    tpu.vector_store %arg8[%c0_156, %c4352], %290 {strides = array<i32>} : memref<1x11520xf32, #tpu.memory_space<vmem>>, vector<1x127xf32>,
    %292 = vector.extract_strided_slice %281 {offsets = [10, 0], sizes = [1, 127], strides = [1, 1]} : vector<29x127xf32> to vector<1x127xf32>
    %c0_157 = arith.constant 0 : index
    %c4480 = arith.constant 4480 : index
    %293 = vector.load %arg8[%c0_157, %c4480] : memref<1x11520xf32, #tpu.memory_space<vmem>>, vector<1x127xf32>
    tpu.vector_store %arg8[%c0_157, %c4480], %292 {strides = array<i32>} : memref<1x11520xf32, #tpu.memory_space<vmem>>, vector<1x127xf32>,
    %294 = vector.extract_strided_slice %281 {offsets = [12, 0], sizes = [1, 127], strides = [1, 1]} : vector<29x127xf32> to vector<1x127xf32>
    %c0_158 = arith.constant 0 : index
    %c4608 = arith.constant 4608 : index
    %295 = vector.load %arg8[%c0_158, %c4608] : memref<1x11520xf32, #tpu.memory_space<vmem>>, vector<1x127xf32>
    tpu.vector_store %arg8[%c0_158, %c4608], %294 {strides = array<i32>} : memref<1x11520xf32, #tpu.memory_space<vmem>>, vector<1x127xf32>,
    %296 = vector.extract_strided_slice %281 {offsets = [14, 0], sizes = [1, 127], strides = [1, 1]} : vector<29x127xf32> to vector<1x127xf32>
    %c0_159 = arith.constant 0 : index
    %c4736 = arith.constant 4736 : index
    %297 = vector.load %arg8[%c0_159, %c4736] : memref<1x11520xf32, #tpu.memory_space<vmem>>, vector<1x127xf32>
    tpu.vector_store %arg8[%c0_159, %c4736], %296 {strides = array<i32>} : memref<1x11520xf32, #tpu.memory_space<vmem>>, vector<1x127xf32>,
    %298 = vector.extract_strided_slice %281 {offsets = [16, 0], sizes = [1, 127], strides = [1, 1]} : vector<29x127xf32> to vector<1x127xf32>
    %c0_160 = arith.constant 0 : index
    %c4864 = arith.constant 4864 : index
    %299 = vector.load %arg8[%c0_160, %c4864] : memref<1x11520xf32, #tpu.memory_space<vmem>>, vector<1x127xf32>
    tpu.vector_store %arg8[%c0_160, %c4864], %298 {strides = array<i32>} : memref<1x11520xf32, #tpu.memory_space<vmem>>, vector<1x127xf32>,
    %300 = vector.extract_strided_slice %281 {offsets = [18, 0], sizes = [1, 127], strides = [1, 1]} : vector<29x127xf32> to vector<1x127xf32>
    %c0_161 = arith.constant 0 : index
    %c4992 = arith.constant 4992 : index
    %301 = vector.load %arg8[%c0_161, %c4992] : memref<1x11520xf32, #tpu.memory_space<vmem>>, vector<1x127xf32>
    tpu.vector_store %arg8[%c0_161, %c4992], %300 {strides = array<i32>} : memref<1x11520xf32, #tpu.memory_space<vmem>>, vector<1x127xf32>,
    %302 = vector.extract_strided_slice %281 {offsets = [20, 0], sizes = [1, 127], strides = [1, 1]} : vector<29x127xf32> to vector<1x127xf32>
    %c0_162 = arith.constant 0 : index
    %c5120 = arith.constant 5120 : index
    %303 = vector.load %arg8[%c0_162, %c5120] : memref<1x11520xf32, #tpu.memory_space<vmem>>, vector<1x127xf32>
    tpu.vector_store %arg8[%c0_162, %c5120], %302 {strides = array<i32>} : memref<1x11520xf32, #tpu.memory_space<vmem>>, vector<1x127xf32>,
    %304 = vector.extract_strided_slice %281 {offsets = [22, 0], sizes = [1, 127], strides = [1, 1]} : vector<29x127xf32> to vector<1x127xf32>
    %c0_163 = arith.constant 0 : index
    %c5248 = arith.constant 5248 : index
    %305 = vector.load %arg8[%c0_163, %c5248] : memref<1x11520xf32, #tpu.memory_space<vmem>>, vector<1x127xf32>
    tpu.vector_store %arg8[%c0_163, %c5248], %304 {strides = array<i32>} : memref<1x11520xf32, #tpu.memory_space<vmem>>, vector<1x127xf32>,
    %306 = vector.extract_strided_slice %281 {offsets = [24, 0], sizes = [1, 127], strides = [1, 1]} : vector<29x127xf32> to vector<1x127xf32>
    %c0_164 = arith.constant 0 : index
    %c5376 = arith.constant 5376 : index
    %307 = vector.load %arg8[%c0_164, %c5376] : memref<1x11520xf32, #tpu.memory_space<vmem>>, vector<1x127xf32>
    tpu.vector_store %arg8[%c0_164, %c5376], %306 {strides = array<i32>} : memref<1x11520xf32, #tpu.memory_space<vmem>>, vector<1x127xf32>,
    %308 = vector.extract_strided_slice %281 {offsets = [26, 0], sizes = [1, 127], strides = [1, 1]} : vector<29x127xf32> to vector<1x127xf32>
    %c0_165 = arith.constant 0 : index
    %c5504 = arith.constant 5504 : index
    %309 = vector.load %arg8[%c0_165, %c5504] : memref<1x11520xf32, #tpu.memory_space<vmem>>, vector<1x127xf32>
    tpu.vector_store %arg8[%c0_165, %c5504], %308 {strides = array<i32>} : memref<1x11520xf32, #tpu.memory_space<vmem>>, vector<1x127xf32>,
    %310 = vector.extract_strided_slice %281 {offsets = [28, 0], sizes = [1, 127], strides = [1, 1]} : vector<29x127xf32> to vector<1x127xf32>
    %c0_166 = arith.constant 0 : index
    %c5632 = arith.constant 5632 : index
    %311 = vector.load %arg8[%c0_166, %c5632] : memref<1x11520xf32, #tpu.memory_space<vmem>>, vector<1x127xf32>
    tpu.vector_store %arg8[%c0_166, %c5632], %310 {strides = array<i32>} : memref<1x11520xf32, #tpu.memory_space<vmem>>, vector<1x127xf32>,
    %c3_167 = arith.constant 3 : index
    %c0_168 = arith.constant 0 : index
    %312 = memref.load %arg2[%c3_167, %c0_168] : memref<6x9xf32, #tpu.memory_space<smem>>
    %313 = vector.broadcast %312 : f32 to vector<30x128xf32>
    %314 = arith.mulf %65, %313 : vector<30x128xf32>
    %c3_169 = arith.constant 3 : index
    %c1_170 = arith.constant 1 : index
    %315 = memref.load %arg2[%c3_169, %c1_170] : memref<6x9xf32, #tpu.memory_space<smem>>
    %316 = vector.broadcast %315 : f32 to vector<30x128xf32>
    %317 = arith.mulf %67, %316 : vector<30x128xf32>
    %318 = arith.addf %314, %317 : vector<30x128xf32>
    %c3_171 = arith.constant 3 : index
    %c2_172 = arith.constant 2 : index
    %319 = memref.load %arg2[%c3_171, %c2_172] : memref<6x9xf32, #tpu.memory_space<smem>>
    %320 = vector.broadcast %319 : f32 to vector<30x128xf32>
    %321 = arith.mulf %69, %320 : vector<30x128xf32>
    %322 = arith.addf %318, %321 : vector<30x128xf32>
    %c3_173 = arith.constant 3 : index
    %c3_174 = arith.constant 3 : index
    %323 = memref.load %arg2[%c3_173, %c3_174] : memref<6x9xf32, #tpu.memory_space<smem>>
    %324 = vector.broadcast %323 : f32 to vector<30x128xf32>
    %325 = arith.mulf %71, %324 : vector<30x128xf32>
    %326 = arith.addf %322, %325 : vector<30x128xf32>
    %c3_175 = arith.constant 3 : index
    %c4_176 = arith.constant 4 : index
    %327 = memref.load %arg2[%c3_175, %c4_176] : memref<6x9xf32, #tpu.memory_space<smem>>
    %328 = vector.broadcast %327 : f32 to vector<30x128xf32>
    %329 = arith.mulf %73, %328 : vector<30x128xf32>
    %330 = arith.addf %326, %329 : vector<30x128xf32>
    %c3_177 = arith.constant 3 : index
    %c5_178 = arith.constant 5 : index
    %331 = memref.load %arg2[%c3_177, %c5_178] : memref<6x9xf32, #tpu.memory_space<smem>>
    %332 = vector.broadcast %331 : f32 to vector<30x128xf32>
    %333 = arith.mulf %75, %332 : vector<30x128xf32>
    %334 = arith.addf %330, %333 : vector<30x128xf32>
    %c3_179 = arith.constant 3 : index
    %c6_180 = arith.constant 6 : index
    %335 = memref.load %arg2[%c3_179, %c6_180] : memref<6x9xf32, #tpu.memory_space<smem>>
    %336 = vector.broadcast %335 : f32 to vector<30x128xf32>
    %337 = arith.mulf %77, %336 : vector<30x128xf32>
    %338 = arith.addf %334, %337 : vector<30x128xf32>
    %c3_181 = arith.constant 3 : index
    %c7_182 = arith.constant 7 : index
    %339 = memref.load %arg2[%c3_181, %c7_182] : memref<6x9xf32, #tpu.memory_space<smem>>
    %340 = vector.broadcast %339 : f32 to vector<30x128xf32>
    %341 = arith.mulf %79, %340 : vector<30x128xf32>
    %342 = arith.addf %338, %341 : vector<30x128xf32>
    %c3_183 = arith.constant 3 : index
    %c8_184 = arith.constant 8 : index
    %343 = memref.load %arg2[%c3_183, %c8_184] : memref<6x9xf32, #tpu.memory_space<smem>>
    %344 = vector.broadcast %343 : f32 to vector<30x128xf32>
    %345 = arith.mulf %81, %344 : vector<30x128xf32>
    %346 = arith.addf %342, %345 : vector<30x128xf32>
    %c3_185 = arith.constant 3 : index
    %347 = memref.load %arg3[%c3_185] : memref<6xf32, #tpu.memory_space<smem>>
    %348 = vector.broadcast %347 : f32 to vector<30x128xf32>
    %349 = arith.addf %346, %348 : vector<30x128xf32>
    %cst_186 = arith.constant 0.000000e+00 : f32
    %350 = vector.broadcast %cst_186 : f32 to vector<30x128xf32>
    %351 = arith.maximumf %349, %350 : vector<30x128xf32>
    %352 = vector.extract_strided_slice %351 {offsets = [0, 0], sizes = [29, 128], strides = [1, 1]} : vector<30x128xf32> to vector<29x128xf32>
    %353 = vector.extract_strided_slice %351 {offsets = [1, 0], sizes = [29, 128], strides = [1, 1]} : vector<30x128xf32> to vector<29x128xf32>
    %354 = arith.maximumf %352, %353 : vector<29x128xf32>
    %355 = vector.extract_strided_slice %354 {offsets = [0, 0], sizes = [29, 127], strides = [1, 1]} : vector<29x128xf32> to vector<29x127xf32>
    %356 = vector.extract_strided_slice %354 {offsets = [0, 1], sizes = [29, 127], strides = [1, 1]} : vector<29x128xf32> to vector<29x127xf32>
    %357 = arith.maximumf %355, %356 : vector<29x127xf32>
    %358 = vector.extract_strided_slice %357 {offsets = [0, 0], sizes = [1, 127], strides = [1, 1]} : vector<29x127xf32> to vector<1x127xf32>
    %c0_187 = arith.constant 0 : index
    %c5760 = arith.constant 5760 : index
    %359 = vector.load %arg8[%c0_187, %c5760] : memref<1x11520xf32, #tpu.memory_space<vmem>>, vector<1x127xf32>
    tpu.vector_store %arg8[%c0_187, %c5760], %358 {strides = array<i32>} : memref<1x11520xf32, #tpu.memory_space<vmem>>, vector<1x127xf32>,
    %360 = vector.extract_strided_slice %357 {offsets = [2, 0], sizes = [1, 127], strides = [1, 1]} : vector<29x127xf32> to vector<1x127xf32>
    %c0_188 = arith.constant 0 : index
    %c5888 = arith.constant 5888 : index
    %361 = vector.load %arg8[%c0_188, %c5888] : memref<1x11520xf32, #tpu.memory_space<vmem>>, vector<1x127xf32>
    tpu.vector_store %arg8[%c0_188, %c5888], %360 {strides = array<i32>} : memref<1x11520xf32, #tpu.memory_space<vmem>>, vector<1x127xf32>,
    %362 = vector.extract_strided_slice %357 {offsets = [4, 0], sizes = [1, 127], strides = [1, 1]} : vector<29x127xf32> to vector<1x127xf32>
    %c0_189 = arith.constant 0 : index
    %c6016 = arith.constant 6016 : index
    %363 = vector.load %arg8[%c0_189, %c6016] : memref<1x11520xf32, #tpu.memory_space<vmem>>, vector<1x127xf32>
    tpu.vector_store %arg8[%c0_189, %c6016], %362 {strides = array<i32>} : memref<1x11520xf32, #tpu.memory_space<vmem>>, vector<1x127xf32>,
    %364 = vector.extract_strided_slice %357 {offsets = [6, 0], sizes = [1, 127], strides = [1, 1]} : vector<29x127xf32> to vector<1x127xf32>
    %c0_190 = arith.constant 0 : index
    %c6144 = arith.constant 6144 : index
    %365 = vector.load %arg8[%c0_190, %c6144] : memref<1x11520xf32, #tpu.memory_space<vmem>>, vector<1x127xf32>
    tpu.vector_store %arg8[%c0_190, %c6144], %364 {strides = array<i32>} : memref<1x11520xf32, #tpu.memory_space<vmem>>, vector<1x127xf32>,
    %366 = vector.extract_strided_slice %357 {offsets = [8, 0], sizes = [1, 127], strides = [1, 1]} : vector<29x127xf32> to vector<1x127xf32>
    %c0_191 = arith.constant 0 : index
    %c6272 = arith.constant 6272 : index
    %367 = vector.load %arg8[%c0_191, %c6272] : memref<1x11520xf32, #tpu.memory_space<vmem>>, vector<1x127xf32>
    tpu.vector_store %arg8[%c0_191, %c6272], %366 {strides = array<i32>} : memref<1x11520xf32, #tpu.memory_space<vmem>>, vector<1x127xf32>,
    %368 = vector.extract_strided_slice %357 {offsets = [10, 0], sizes = [1, 127], strides = [1, 1]} : vector<29x127xf32> to vector<1x127xf32>
    %c0_192 = arith.constant 0 : index
    %c6400 = arith.constant 6400 : index
    %369 = vector.load %arg8[%c0_192, %c6400] : memref<1x11520xf32, #tpu.memory_space<vmem>>, vector<1x127xf32>
    tpu.vector_store %arg8[%c0_192, %c6400], %368 {strides = array<i32>} : memref<1x11520xf32, #tpu.memory_space<vmem>>, vector<1x127xf32>,
    %370 = vector.extract_strided_slice %357 {offsets = [12, 0], sizes = [1, 127], strides = [1, 1]} : vector<29x127xf32> to vector<1x127xf32>
    %c0_193 = arith.constant 0 : index
    %c6528 = arith.constant 6528 : index
    %371 = vector.load %arg8[%c0_193, %c6528] : memref<1x11520xf32, #tpu.memory_space<vmem>>, vector<1x127xf32>
    tpu.vector_store %arg8[%c0_193, %c6528], %370 {strides = array<i32>} : memref<1x11520xf32, #tpu.memory_space<vmem>>, vector<1x127xf32>,
    %372 = vector.extract_strided_slice %357 {offsets = [14, 0], sizes = [1, 127], strides = [1, 1]} : vector<29x127xf32> to vector<1x127xf32>
    %c0_194 = arith.constant 0 : index
    %c6656 = arith.constant 6656 : index
    %373 = vector.load %arg8[%c0_194, %c6656] : memref<1x11520xf32, #tpu.memory_space<vmem>>, vector<1x127xf32>
    tpu.vector_store %arg8[%c0_194, %c6656], %372 {strides = array<i32>} : memref<1x11520xf32, #tpu.memory_space<vmem>>, vector<1x127xf32>,
    %374 = vector.extract_strided_slice %357 {offsets = [16, 0], sizes = [1, 127], strides = [1, 1]} : vector<29x127xf32> to vector<1x127xf32>
    %c0_195 = arith.constant 0 : index
    %c6784 = arith.constant 6784 : index
    %375 = vector.load %arg8[%c0_195, %c6784] : memref<1x11520xf32, #tpu.memory_space<vmem>>, vector<1x127xf32>
    tpu.vector_store %arg8[%c0_195, %c6784], %374 {strides = array<i32>} : memref<1x11520xf32, #tpu.memory_space<vmem>>, vector<1x127xf32>,
    %376 = vector.extract_strided_slice %357 {offsets = [18, 0], sizes = [1, 127], strides = [1, 1]} : vector<29x127xf32> to vector<1x127xf32>
    %c0_196 = arith.constant 0 : index
    %c6912 = arith.constant 6912 : index
    %377 = vector.load %arg8[%c0_196, %c6912] : memref<1x11520xf32, #tpu.memory_space<vmem>>, vector<1x127xf32>
    tpu.vector_store %arg8[%c0_196, %c6912], %376 {strides = array<i32>} : memref<1x11520xf32, #tpu.memory_space<vmem>>, vector<1x127xf32>,
    %378 = vector.extract_strided_slice %357 {offsets = [20, 0], sizes = [1, 127], strides = [1, 1]} : vector<29x127xf32> to vector<1x127xf32>
    %c0_197 = arith.constant 0 : index
    %c7040 = arith.constant 7040 : index
    %379 = vector.load %arg8[%c0_197, %c7040] : memref<1x11520xf32, #tpu.memory_space<vmem>>, vector<1x127xf32>
    tpu.vector_store %arg8[%c0_197, %c7040], %378 {strides = array<i32>} : memref<1x11520xf32, #tpu.memory_space<vmem>>, vector<1x127xf32>,
    %380 = vector.extract_strided_slice %357 {offsets = [22, 0], sizes = [1, 127], strides = [1, 1]} : vector<29x127xf32> to vector<1x127xf32>
    %c0_198 = arith.constant 0 : index
    %c7168 = arith.constant 7168 : index
    %381 = vector.load %arg8[%c0_198, %c7168] : memref<1x11520xf32, #tpu.memory_space<vmem>>, vector<1x127xf32>
    tpu.vector_store %arg8[%c0_198, %c7168], %380 {strides = array<i32>} : memref<1x11520xf32, #tpu.memory_space<vmem>>, vector<1x127xf32>,
    %382 = vector.extract_strided_slice %357 {offsets = [24, 0], sizes = [1, 127], strides = [1, 1]} : vector<29x127xf32> to vector<1x127xf32>
    %c0_199 = arith.constant 0 : index
    %c7296 = arith.constant 7296 : index
    %383 = vector.load %arg8[%c0_199, %c7296] : memref<1x11520xf32, #tpu.memory_space<vmem>>, vector<1x127xf32>
    tpu.vector_store %arg8[%c0_199, %c7296], %382 {strides = array<i32>} : memref<1x11520xf32, #tpu.memory_space<vmem>>, vector<1x127xf32>,
    %384 = vector.extract_strided_slice %357 {offsets = [26, 0], sizes = [1, 127], strides = [1, 1]} : vector<29x127xf32> to vector<1x127xf32>
    %c0_200 = arith.constant 0 : index
    %c7424 = arith.constant 7424 : index
    %385 = vector.load %arg8[%c0_200, %c7424] : memref<1x11520xf32, #tpu.memory_space<vmem>>, vector<1x127xf32>
    tpu.vector_store %arg8[%c0_200, %c7424], %384 {strides = array<i32>} : memref<1x11520xf32, #tpu.memory_space<vmem>>, vector<1x127xf32>,
    %386 = vector.extract_strided_slice %357 {offsets = [28, 0], sizes = [1, 127], strides = [1, 1]} : vector<29x127xf32> to vector<1x127xf32>
    %c0_201 = arith.constant 0 : index
    %c7552 = arith.constant 7552 : index
    %387 = vector.load %arg8[%c0_201, %c7552] : memref<1x11520xf32, #tpu.memory_space<vmem>>, vector<1x127xf32>
    tpu.vector_store %arg8[%c0_201, %c7552], %386 {strides = array<i32>} : memref<1x11520xf32, #tpu.memory_space<vmem>>, vector<1x127xf32>,
    %c4_202 = arith.constant 4 : index
    %c0_203 = arith.constant 0 : index
    %388 = memref.load %arg2[%c4_202, %c0_203] : memref<6x9xf32, #tpu.memory_space<smem>>
    %389 = vector.broadcast %388 : f32 to vector<30x128xf32>
    %390 = arith.mulf %65, %389 : vector<30x128xf32>
    %c4_204 = arith.constant 4 : index
    %c1_205 = arith.constant 1 : index
    %391 = memref.load %arg2[%c4_204, %c1_205] : memref<6x9xf32, #tpu.memory_space<smem>>
    %392 = vector.broadcast %391 : f32 to vector<30x128xf32>
    %393 = arith.mulf %67, %392 : vector<30x128xf32>
    %394 = arith.addf %390, %393 : vector<30x128xf32>
    %c4_206 = arith.constant 4 : index
    %c2_207 = arith.constant 2 : index
    %395 = memref.load %arg2[%c4_206, %c2_207] : memref<6x9xf32, #tpu.memory_space<smem>>
    %396 = vector.broadcast %395 : f32 to vector<30x128xf32>
    %397 = arith.mulf %69, %396 : vector<30x128xf32>
    %398 = arith.addf %394, %397 : vector<30x128xf32>
    %c4_208 = arith.constant 4 : index
    %c3_209 = arith.constant 3 : index
    %399 = memref.load %arg2[%c4_208, %c3_209] : memref<6x9xf32, #tpu.memory_space<smem>>
    %400 = vector.broadcast %399 : f32 to vector<30x128xf32>
    %401 = arith.mulf %71, %400 : vector<30x128xf32>
    %402 = arith.addf %398, %401 : vector<30x128xf32>
    %c4_210 = arith.constant 4 : index
    %c4_211 = arith.constant 4 : index
    %403 = memref.load %arg2[%c4_210, %c4_211] : memref<6x9xf32, #tpu.memory_space<smem>>
    %404 = vector.broadcast %403 : f32 to vector<30x128xf32>
    %405 = arith.mulf %73, %404 : vector<30x128xf32>
    %406 = arith.addf %402, %405 : vector<30x128xf32>
    %c4_212 = arith.constant 4 : index
    %c5_213 = arith.constant 5 : index
    %407 = memref.load %arg2[%c4_212, %c5_213] : memref<6x9xf32, #tpu.memory_space<smem>>
    %408 = vector.broadcast %407 : f32 to vector<30x128xf32>
    %409 = arith.mulf %75, %408 : vector<30x128xf32>
    %410 = arith.addf %406, %409 : vector<30x128xf32>
    %c4_214 = arith.constant 4 : index
    %c6_215 = arith.constant 6 : index
    %411 = memref.load %arg2[%c4_214, %c6_215] : memref<6x9xf32, #tpu.memory_space<smem>>
    %412 = vector.broadcast %411 : f32 to vector<30x128xf32>
    %413 = arith.mulf %77, %412 : vector<30x128xf32>
    %414 = arith.addf %410, %413 : vector<30x128xf32>
    %c4_216 = arith.constant 4 : index
    %c7_217 = arith.constant 7 : index
    %415 = memref.load %arg2[%c4_216, %c7_217] : memref<6x9xf32, #tpu.memory_space<smem>>
    %416 = vector.broadcast %415 : f32 to vector<30x128xf32>
    %417 = arith.mulf %79, %416 : vector<30x128xf32>
    %418 = arith.addf %414, %417 : vector<30x128xf32>
    %c4_218 = arith.constant 4 : index
    %c8_219 = arith.constant 8 : index
    %419 = memref.load %arg2[%c4_218, %c8_219] : memref<6x9xf32, #tpu.memory_space<smem>>
    %420 = vector.broadcast %419 : f32 to vector<30x128xf32>
    %421 = arith.mulf %81, %420 : vector<30x128xf32>
    %422 = arith.addf %418, %421 : vector<30x128xf32>
    %c4_220 = arith.constant 4 : index
    %423 = memref.load %arg3[%c4_220] : memref<6xf32, #tpu.memory_space<smem>>
    %424 = vector.broadcast %423 : f32 to vector<30x128xf32>
    %425 = arith.addf %422, %424 : vector<30x128xf32>
    %cst_221 = arith.constant 0.000000e+00 : f32
    %426 = vector.broadcast %cst_221 : f32 to vector<30x128xf32>
    %427 = arith.maximumf %425, %426 : vector<30x128xf32>
    %428 = vector.extract_strided_slice %427 {offsets = [0, 0], sizes = [29, 128], strides = [1, 1]} : vector<30x128xf32> to vector<29x128xf32>
    %429 = vector.extract_strided_slice %427 {offsets = [1, 0], sizes = [29, 128], strides = [1, 1]} : vector<30x128xf32> to vector<29x128xf32>
    %430 = arith.maximumf %428, %429 : vector<29x128xf32>
    %431 = vector.extract_strided_slice %430 {offsets = [0, 0], sizes = [29, 127], strides = [1, 1]} : vector<29x128xf32> to vector<29x127xf32>
    %432 = vector.extract_strided_slice %430 {offsets = [0, 1], sizes = [29, 127], strides = [1, 1]} : vector<29x128xf32> to vector<29x127xf32>
    %433 = arith.maximumf %431, %432 : vector<29x127xf32>
    %434 = vector.extract_strided_slice %433 {offsets = [0, 0], sizes = [1, 127], strides = [1, 1]} : vector<29x127xf32> to vector<1x127xf32>
    %c0_222 = arith.constant 0 : index
    %c7680 = arith.constant 7680 : index
    %435 = vector.load %arg8[%c0_222, %c7680] : memref<1x11520xf32, #tpu.memory_space<vmem>>, vector<1x127xf32>
    tpu.vector_store %arg8[%c0_222, %c7680], %434 {strides = array<i32>} : memref<1x11520xf32, #tpu.memory_space<vmem>>, vector<1x127xf32>,
    %436 = vector.extract_strided_slice %433 {offsets = [2, 0], sizes = [1, 127], strides = [1, 1]} : vector<29x127xf32> to vector<1x127xf32>
    %c0_223 = arith.constant 0 : index
    %c7808 = arith.constant 7808 : index
    %437 = vector.load %arg8[%c0_223, %c7808] : memref<1x11520xf32, #tpu.memory_space<vmem>>, vector<1x127xf32>
    tpu.vector_store %arg8[%c0_223, %c7808], %436 {strides = array<i32>} : memref<1x11520xf32, #tpu.memory_space<vmem>>, vector<1x127xf32>,
    %438 = vector.extract_strided_slice %433 {offsets = [4, 0], sizes = [1, 127], strides = [1, 1]} : vector<29x127xf32> to vector<1x127xf32>
    %c0_224 = arith.constant 0 : index
    %c7936 = arith.constant 7936 : index
    %439 = vector.load %arg8[%c0_224, %c7936] : memref<1x11520xf32, #tpu.memory_space<vmem>>, vector<1x127xf32>
    tpu.vector_store %arg8[%c0_224, %c7936], %438 {strides = array<i32>} : memref<1x11520xf32, #tpu.memory_space<vmem>>, vector<1x127xf32>,
    %440 = vector.extract_strided_slice %433 {offsets = [6, 0], sizes = [1, 127], strides = [1, 1]} : vector<29x127xf32> to vector<1x127xf32>
    %c0_225 = arith.constant 0 : index
    %c8064 = arith.constant 8064 : index
    %441 = vector.load %arg8[%c0_225, %c8064] : memref<1x11520xf32, #tpu.memory_space<vmem>>, vector<1x127xf32>
    tpu.vector_store %arg8[%c0_225, %c8064], %440 {strides = array<i32>} : memref<1x11520xf32, #tpu.memory_space<vmem>>, vector<1x127xf32>,
    %442 = vector.extract_strided_slice %433 {offsets = [8, 0], sizes = [1, 127], strides = [1, 1]} : vector<29x127xf32> to vector<1x127xf32>
    %c0_226 = arith.constant 0 : index
    %c8192 = arith.constant 8192 : index
    %443 = vector.load %arg8[%c0_226, %c8192] : memref<1x11520xf32, #tpu.memory_space<vmem>>, vector<1x127xf32>
    tpu.vector_store %arg8[%c0_226, %c8192], %442 {strides = array<i32>} : memref<1x11520xf32, #tpu.memory_space<vmem>>, vector<1x127xf32>,
    %444 = vector.extract_strided_slice %433 {offsets = [10, 0], sizes = [1, 127], strides = [1, 1]} : vector<29x127xf32> to vector<1x127xf32>
    %c0_227 = arith.constant 0 : index
    %c8320 = arith.constant 8320 : index
    %445 = vector.load %arg8[%c0_227, %c8320] : memref<1x11520xf32, #tpu.memory_space<vmem>>, vector<1x127xf32>
    tpu.vector_store %arg8[%c0_227, %c8320], %444 {strides = array<i32>} : memref<1x11520xf32, #tpu.memory_space<vmem>>, vector<1x127xf32>,
    %446 = vector.extract_strided_slice %433 {offsets = [12, 0], sizes = [1, 127], strides = [1, 1]} : vector<29x127xf32> to vector<1x127xf32>
    %c0_228 = arith.constant 0 : index
    %c8448 = arith.constant 8448 : index
    %447 = vector.load %arg8[%c0_228, %c8448] : memref<1x11520xf32, #tpu.memory_space<vmem>>, vector<1x127xf32>
    tpu.vector_store %arg8[%c0_228, %c8448], %446 {strides = array<i32>} : memref<1x11520xf32, #tpu.memory_space<vmem>>, vector<1x127xf32>,
    %448 = vector.extract_strided_slice %433 {offsets = [14, 0], sizes = [1, 127], strides = [1, 1]} : vector<29x127xf32> to vector<1x127xf32>
    %c0_229 = arith.constant 0 : index
    %c8576 = arith.constant 8576 : index
    %449 = vector.load %arg8[%c0_229, %c8576] : memref<1x11520xf32, #tpu.memory_space<vmem>>, vector<1x127xf32>
    tpu.vector_store %arg8[%c0_229, %c8576], %448 {strides = array<i32>} : memref<1x11520xf32, #tpu.memory_space<vmem>>, vector<1x127xf32>,
    %450 = vector.extract_strided_slice %433 {offsets = [16, 0], sizes = [1, 127], strides = [1, 1]} : vector<29x127xf32> to vector<1x127xf32>
    %c0_230 = arith.constant 0 : index
    %c8704 = arith.constant 8704 : index
    %451 = vector.load %arg8[%c0_230, %c8704] : memref<1x11520xf32, #tpu.memory_space<vmem>>, vector<1x127xf32>
    tpu.vector_store %arg8[%c0_230, %c8704], %450 {strides = array<i32>} : memref<1x11520xf32, #tpu.memory_space<vmem>>, vector<1x127xf32>,
    %452 = vector.extract_strided_slice %433 {offsets = [18, 0], sizes = [1, 127], strides = [1, 1]} : vector<29x127xf32> to vector<1x127xf32>
    %c0_231 = arith.constant 0 : index
    %c8832 = arith.constant 8832 : index
    %453 = vector.load %arg8[%c0_231, %c8832] : memref<1x11520xf32, #tpu.memory_space<vmem>>, vector<1x127xf32>
    tpu.vector_store %arg8[%c0_231, %c8832], %452 {strides = array<i32>} : memref<1x11520xf32, #tpu.memory_space<vmem>>, vector<1x127xf32>,
    %454 = vector.extract_strided_slice %433 {offsets = [20, 0], sizes = [1, 127], strides = [1, 1]} : vector<29x127xf32> to vector<1x127xf32>
    %c0_232 = arith.constant 0 : index
    %c8960 = arith.constant 8960 : index
    %455 = vector.load %arg8[%c0_232, %c8960] : memref<1x11520xf32, #tpu.memory_space<vmem>>, vector<1x127xf32>
    tpu.vector_store %arg8[%c0_232, %c8960], %454 {strides = array<i32>} : memref<1x11520xf32, #tpu.memory_space<vmem>>, vector<1x127xf32>,
    %456 = vector.extract_strided_slice %433 {offsets = [22, 0], sizes = [1, 127], strides = [1, 1]} : vector<29x127xf32> to vector<1x127xf32>
    %c0_233 = arith.constant 0 : index
    %c9088 = arith.constant 9088 : index
    %457 = vector.load %arg8[%c0_233, %c9088] : memref<1x11520xf32, #tpu.memory_space<vmem>>, vector<1x127xf32>
    tpu.vector_store %arg8[%c0_233, %c9088], %456 {strides = array<i32>} : memref<1x11520xf32, #tpu.memory_space<vmem>>, vector<1x127xf32>,
    %458 = vector.extract_strided_slice %433 {offsets = [24, 0], sizes = [1, 127], strides = [1, 1]} : vector<29x127xf32> to vector<1x127xf32>
    %c0_234 = arith.constant 0 : index
    %c9216 = arith.constant 9216 : index
    %459 = vector.load %arg8[%c0_234, %c9216] : memref<1x11520xf32, #tpu.memory_space<vmem>>, vector<1x127xf32>
    tpu.vector_store %arg8[%c0_234, %c9216], %458 {strides = array<i32>} : memref<1x11520xf32, #tpu.memory_space<vmem>>, vector<1x127xf32>,
    %460 = vector.extract_strided_slice %433 {offsets = [26, 0], sizes = [1, 127], strides = [1, 1]} : vector<29x127xf32> to vector<1x127xf32>
    %c0_235 = arith.constant 0 : index
    %c9344 = arith.constant 9344 : index
    %461 = vector.load %arg8[%c0_235, %c9344] : memref<1x11520xf32, #tpu.memory_space<vmem>>, vector<1x127xf32>
    tpu.vector_store %arg8[%c0_235, %c9344], %460 {strides = array<i32>} : memref<1x11520xf32, #tpu.memory_space<vmem>>, vector<1x127xf32>,
    %462 = vector.extract_strided_slice %433 {offsets = [28, 0], sizes = [1, 127], strides = [1, 1]} : vector<29x127xf32> to vector<1x127xf32>
    %c0_236 = arith.constant 0 : index
    %c9472 = arith.constant 9472 : index
    %463 = vector.load %arg8[%c0_236, %c9472] : memref<1x11520xf32, #tpu.memory_space<vmem>>, vector<1x127xf32>
    tpu.vector_store %arg8[%c0_236, %c9472], %462 {strides = array<i32>} : memref<1x11520xf32, #tpu.memory_space<vmem>>, vector<1x127xf32>,
    %c5_237 = arith.constant 5 : index
    %c0_238 = arith.constant 0 : index
    %464 = memref.load %arg2[%c5_237, %c0_238] : memref<6x9xf32, #tpu.memory_space<smem>>
    %465 = vector.broadcast %464 : f32 to vector<30x128xf32>
    %466 = arith.mulf %65, %465 : vector<30x128xf32>
    %c5_239 = arith.constant 5 : index
    %c1_240 = arith.constant 1 : index
    %467 = memref.load %arg2[%c5_239, %c1_240] : memref<6x9xf32, #tpu.memory_space<smem>>
    %468 = vector.broadcast %467 : f32 to vector<30x128xf32>
    %469 = arith.mulf %67, %468 : vector<30x128xf32>
    %470 = arith.addf %466, %469 : vector<30x128xf32>
    %c5_241 = arith.constant 5 : index
    %c2_242 = arith.constant 2 : index
    %471 = memref.load %arg2[%c5_241, %c2_242] : memref<6x9xf32, #tpu.memory_space<smem>>
    %472 = vector.broadcast %471 : f32 to vector<30x128xf32>
    %473 = arith.mulf %69, %472 : vector<30x128xf32>
    %474 = arith.addf %470, %473 : vector<30x128xf32>
    %c5_243 = arith.constant 5 : index
    %c3_244 = arith.constant 3 : index
    %475 = memref.load %arg2[%c5_243, %c3_244] : memref<6x9xf32, #tpu.memory_space<smem>>
    %476 = vector.broadcast %475 : f32 to vector<30x128xf32>
    %477 = arith.mulf %71, %476 : vector<30x128xf32>
    %478 = arith.addf %474, %477 : vector<30x128xf32>
    %c5_245 = arith.constant 5 : index
    %c4_246 = arith.constant 4 : index
    %479 = memref.load %arg2[%c5_245, %c4_246] : memref<6x9xf32, #tpu.memory_space<smem>>
    %480 = vector.broadcast %479 : f32 to vector<30x128xf32>
    %481 = arith.mulf %73, %480 : vector<30x128xf32>
    %482 = arith.addf %478, %481 : vector<30x128xf32>
    %c5_247 = arith.constant 5 : index
    %c5_248 = arith.constant 5 : index
    %483 = memref.load %arg2[%c5_247, %c5_248] : memref<6x9xf32, #tpu.memory_space<smem>>
    %484 = vector.broadcast %483 : f32 to vector<30x128xf32>
    %485 = arith.mulf %75, %484 : vector<30x128xf32>
    %486 = arith.addf %482, %485 : vector<30x128xf32>
    %c5_249 = arith.constant 5 : index
    %c6_250 = arith.constant 6 : index
    %487 = memref.load %arg2[%c5_249, %c6_250] : memref<6x9xf32, #tpu.memory_space<smem>>
    %488 = vector.broadcast %487 : f32 to vector<30x128xf32>
    %489 = arith.mulf %77, %488 : vector<30x128xf32>
    %490 = arith.addf %486, %489 : vector<30x128xf32>
    %c5_251 = arith.constant 5 : index
    %c7_252 = arith.constant 7 : index
    %491 = memref.load %arg2[%c5_251, %c7_252] : memref<6x9xf32, #tpu.memory_space<smem>>
    %492 = vector.broadcast %491 : f32 to vector<30x128xf32>
    %493 = arith.mulf %79, %492 : vector<30x128xf32>
    %494 = arith.addf %490, %493 : vector<30x128xf32>
    %c5_253 = arith.constant 5 : index
    %c8_254 = arith.constant 8 : index
    %495 = memref.load %arg2[%c5_253, %c8_254] : memref<6x9xf32, #tpu.memory_space<smem>>
    %496 = vector.broadcast %495 : f32 to vector<30x128xf32>
    %497 = arith.mulf %81, %496 : vector<30x128xf32>
    %498 = arith.addf %494, %497 : vector<30x128xf32>
    %c5_255 = arith.constant 5 : index
    %499 = memref.load %arg3[%c5_255] : memref<6xf32, #tpu.memory_space<smem>>
    %500 = vector.broadcast %499 : f32 to vector<30x128xf32>
    %501 = arith.addf %498, %500 : vector<30x128xf32>
    %cst_256 = arith.constant 0.000000e+00 : f32
    %502 = vector.broadcast %cst_256 : f32 to vector<30x128xf32>
    %503 = arith.maximumf %501, %502 : vector<30x128xf32>
    %504 = vector.extract_strided_slice %503 {offsets = [0, 0], sizes = [29, 128], strides = [1, 1]} : vector<30x128xf32> to vector<29x128xf32>
    %505 = vector.extract_strided_slice %503 {offsets = [1, 0], sizes = [29, 128], strides = [1, 1]} : vector<30x128xf32> to vector<29x128xf32>
    %506 = arith.maximumf %504, %505 : vector<29x128xf32>
    %507 = vector.extract_strided_slice %506 {offsets = [0, 0], sizes = [29, 127], strides = [1, 1]} : vector<29x128xf32> to vector<29x127xf32>
    %508 = vector.extract_strided_slice %506 {offsets = [0, 1], sizes = [29, 127], strides = [1, 1]} : vector<29x128xf32> to vector<29x127xf32>
    %509 = arith.maximumf %507, %508 : vector<29x127xf32>
    %510 = vector.extract_strided_slice %509 {offsets = [0, 0], sizes = [1, 127], strides = [1, 1]} : vector<29x127xf32> to vector<1x127xf32>
    %c0_257 = arith.constant 0 : index
    %c9600 = arith.constant 9600 : index
    %511 = vector.load %arg8[%c0_257, %c9600] : memref<1x11520xf32, #tpu.memory_space<vmem>>, vector<1x127xf32>
    tpu.vector_store %arg8[%c0_257, %c9600], %510 {strides = array<i32>} : memref<1x11520xf32, #tpu.memory_space<vmem>>, vector<1x127xf32>,
    %512 = vector.extract_strided_slice %509 {offsets = [2, 0], sizes = [1, 127], strides = [1, 1]} : vector<29x127xf32> to vector<1x127xf32>
    %c0_258 = arith.constant 0 : index
    %c9728 = arith.constant 9728 : index
    %513 = vector.load %arg8[%c0_258, %c9728] : memref<1x11520xf32, #tpu.memory_space<vmem>>, vector<1x127xf32>
    tpu.vector_store %arg8[%c0_258, %c9728], %512 {strides = array<i32>} : memref<1x11520xf32, #tpu.memory_space<vmem>>, vector<1x127xf32>,
    %514 = vector.extract_strided_slice %509 {offsets = [4, 0], sizes = [1, 127], strides = [1, 1]} : vector<29x127xf32> to vector<1x127xf32>
    %c0_259 = arith.constant 0 : index
    %c9856 = arith.constant 9856 : index
    %515 = vector.load %arg8[%c0_259, %c9856] : memref<1x11520xf32, #tpu.memory_space<vmem>>, vector<1x127xf32>
    tpu.vector_store %arg8[%c0_259, %c9856], %514 {strides = array<i32>} : memref<1x11520xf32, #tpu.memory_space<vmem>>, vector<1x127xf32>,
    %516 = vector.extract_strided_slice %509 {offsets = [6, 0], sizes = [1, 127], strides = [1, 1]} : vector<29x127xf32> to vector<1x127xf32>
    %c0_260 = arith.constant 0 : index
    %c9984 = arith.constant 9984 : index
    %517 = vector.load %arg8[%c0_260, %c9984] : memref<1x11520xf32, #tpu.memory_space<vmem>>, vector<1x127xf32>
    tpu.vector_store %arg8[%c0_260, %c9984], %516 {strides = array<i32>} : memref<1x11520xf32, #tpu.memory_space<vmem>>, vector<1x127xf32>,
    %518 = vector.extract_strided_slice %509 {offsets = [8, 0], sizes = [1, 127], strides = [1, 1]} : vector<29x127xf32> to vector<1x127xf32>
    %c0_261 = arith.constant 0 : index
    %c10112 = arith.constant 10112 : index
    %519 = vector.load %arg8[%c0_261, %c10112] : memref<1x11520xf32, #tpu.memory_space<vmem>>, vector<1x127xf32>
    tpu.vector_store %arg8[%c0_261, %c10112], %518 {strides = array<i32>} : memref<1x11520xf32, #tpu.memory_space<vmem>>, vector<1x127xf32>,
    %520 = vector.extract_strided_slice %509 {offsets = [10, 0], sizes = [1, 127], strides = [1, 1]} : vector<29x127xf32> to vector<1x127xf32>
    %c0_262 = arith.constant 0 : index
    %c10240 = arith.constant 10240 : index
    %521 = vector.load %arg8[%c0_262, %c10240] : memref<1x11520xf32, #tpu.memory_space<vmem>>, vector<1x127xf32>
    tpu.vector_store %arg8[%c0_262, %c10240], %520 {strides = array<i32>} : memref<1x11520xf32, #tpu.memory_space<vmem>>, vector<1x127xf32>,
    %522 = vector.extract_strided_slice %509 {offsets = [12, 0], sizes = [1, 127], strides = [1, 1]} : vector<29x127xf32> to vector<1x127xf32>
    %c0_263 = arith.constant 0 : index
    %c10368 = arith.constant 10368 : index
    %523 = vector.load %arg8[%c0_263, %c10368] : memref<1x11520xf32, #tpu.memory_space<vmem>>, vector<1x127xf32>
    tpu.vector_store %arg8[%c0_263, %c10368], %522 {strides = array<i32>} : memref<1x11520xf32, #tpu.memory_space<vmem>>, vector<1x127xf32>,
    %524 = vector.extract_strided_slice %509 {offsets = [14, 0], sizes = [1, 127], strides = [1, 1]} : vector<29x127xf32> to vector<1x127xf32>
    %c0_264 = arith.constant 0 : index
    %c10496 = arith.constant 10496 : index
    %525 = vector.load %arg8[%c0_264, %c10496] : memref<1x11520xf32, #tpu.memory_space<vmem>>, vector<1x127xf32>
    tpu.vector_store %arg8[%c0_264, %c10496], %524 {strides = array<i32>} : memref<1x11520xf32, #tpu.memory_space<vmem>>, vector<1x127xf32>,
    %526 = vector.extract_strided_slice %509 {offsets = [16, 0], sizes = [1, 127], strides = [1, 1]} : vector<29x127xf32> to vector<1x127xf32>
    %c0_265 = arith.constant 0 : index
    %c10624 = arith.constant 10624 : index
    %527 = vector.load %arg8[%c0_265, %c10624] : memref<1x11520xf32, #tpu.memory_space<vmem>>, vector<1x127xf32>
    tpu.vector_store %arg8[%c0_265, %c10624], %526 {strides = array<i32>} : memref<1x11520xf32, #tpu.memory_space<vmem>>, vector<1x127xf32>,
    %528 = vector.extract_strided_slice %509 {offsets = [18, 0], sizes = [1, 127], strides = [1, 1]} : vector<29x127xf32> to vector<1x127xf32>
    %c0_266 = arith.constant 0 : index
    %c10752 = arith.constant 10752 : index
    %529 = vector.load %arg8[%c0_266, %c10752] : memref<1x11520xf32, #tpu.memory_space<vmem>>, vector<1x127xf32>
    tpu.vector_store %arg8[%c0_266, %c10752], %528 {strides = array<i32>} : memref<1x11520xf32, #tpu.memory_space<vmem>>, vector<1x127xf32>,
    %530 = vector.extract_strided_slice %509 {offsets = [20, 0], sizes = [1, 127], strides = [1, 1]} : vector<29x127xf32> to vector<1x127xf32>
    %c0_267 = arith.constant 0 : index
    %c10880 = arith.constant 10880 : index
    %531 = vector.load %arg8[%c0_267, %c10880] : memref<1x11520xf32, #tpu.memory_space<vmem>>, vector<1x127xf32>
    tpu.vector_store %arg8[%c0_267, %c10880], %530 {strides = array<i32>} : memref<1x11520xf32, #tpu.memory_space<vmem>>, vector<1x127xf32>,
    %532 = vector.extract_strided_slice %509 {offsets = [22, 0], sizes = [1, 127], strides = [1, 1]} : vector<29x127xf32> to vector<1x127xf32>
    %c0_268 = arith.constant 0 : index
    %c11008 = arith.constant 11008 : index
    %533 = vector.load %arg8[%c0_268, %c11008] : memref<1x11520xf32, #tpu.memory_space<vmem>>, vector<1x127xf32>
    tpu.vector_store %arg8[%c0_268, %c11008], %532 {strides = array<i32>} : memref<1x11520xf32, #tpu.memory_space<vmem>>, vector<1x127xf32>,
    %534 = vector.extract_strided_slice %509 {offsets = [24, 0], sizes = [1, 127], strides = [1, 1]} : vector<29x127xf32> to vector<1x127xf32>
    %c0_269 = arith.constant 0 : index
    %c11136 = arith.constant 11136 : index
    %535 = vector.load %arg8[%c0_269, %c11136] : memref<1x11520xf32, #tpu.memory_space<vmem>>, vector<1x127xf32>
    tpu.vector_store %arg8[%c0_269, %c11136], %534 {strides = array<i32>} : memref<1x11520xf32, #tpu.memory_space<vmem>>, vector<1x127xf32>,
    %536 = vector.extract_strided_slice %509 {offsets = [26, 0], sizes = [1, 127], strides = [1, 1]} : vector<29x127xf32> to vector<1x127xf32>
    %c0_270 = arith.constant 0 : index
    %c11264 = arith.constant 11264 : index
    %537 = vector.load %arg8[%c0_270, %c11264] : memref<1x11520xf32, #tpu.memory_space<vmem>>, vector<1x127xf32>
    tpu.vector_store %arg8[%c0_270, %c11264], %536 {strides = array<i32>} : memref<1x11520xf32, #tpu.memory_space<vmem>>, vector<1x127xf32>,
    %538 = vector.extract_strided_slice %509 {offsets = [28, 0], sizes = [1, 127], strides = [1, 1]} : vector<29x127xf32> to vector<1x127xf32>
    %c0_271 = arith.constant 0 : index
    %c11392 = arith.constant 11392 : index
    %539 = vector.load %arg8[%c0_271, %c11392] : memref<1x11520xf32, #tpu.memory_space<vmem>>, vector<1x127xf32>
    tpu.vector_store %arg8[%c0_271, %c11392], %538 {strides = array<i32>} : memref<1x11520xf32, #tpu.memory_space<vmem>>, vector<1x127xf32>,
    %c0_272 = arith.constant 0 : index
    %c0_273 = arith.constant 0 : index
    %540 = vector.load %arg8[%c0_272, %c0_273] : memref<1x11520xf32, #tpu.memory_space<vmem>>, vector<1x11520xf32>
    %c0_274 = arith.constant 0 : index
    %c0_275 = arith.constant 0 : index
    %541 = vector.load %arg4[%c0_274, %c0_275] : memref<11520x40xf32, #tpu.memory_space<vmem>>, vector<11520x40xf32>
    %cst_276 = arith.constant dense<0.000000e+00> : vector<1x40xf32>
    %542 = tpu.matmul %540, %541, %cst_276 {dimension_numbers = #tpu.dot_dimension_numbers<[1], [0], [0], [1], [0, 0, 1, 1], [], []>} : vector<1x11520xf32>, vector<11520x40xf32>, vector<1x40xf32> -> vector<1x40xf32>
    %c0_277 = arith.constant 0 : index
    %c0_278 = arith.constant 0 : index
    %543 = vector.load %arg5[%c0_277, %c0_278] : memref<1x40xf32, #tpu.memory_space<vmem>>, vector<1x40xf32>
    %544 = arith.addf %542, %543 : vector<1x40xf32>
    %545 = vector.extract_strided_slice %544 {offsets = [0, 0], sizes = [1, 10], strides = [1, 1]} : vector<1x40xf32> to vector<1x10xf32>
    %c0_279 = arith.constant 0 : index
    %c0_280 = arith.constant 0 : index
    %c0_281 = arith.constant 0 : index
    %546 = vector.load %arg6[%c0_279, %c0_280, %c0_281] : memref<1x4x10xf32, #tpu.memory_space<vmem>>, vector<1x1x10xf32>
    %547 = vector.shape_cast %546 : vector<1x1x10xf32> to vector<1x10xf32>
    %548 = vector.shape_cast %545 : vector<1x10xf32> to vector<1x1x10xf32>
    tpu.vector_store %arg6[%c0_279, %c0_280, %c0_281], %548 {strides = array<i32>} : memref<1x4x10xf32, #tpu.memory_space<vmem>>, vector<1x1x10xf32>,
    %549 = vector.extract_strided_slice %544 {offsets = [0, 10], sizes = [1, 10], strides = [1, 1]} : vector<1x40xf32> to vector<1x10xf32>
    %c0_282 = arith.constant 0 : index
    %c1_283 = arith.constant 1 : index
    %c0_284 = arith.constant 0 : index
    %550 = vector.load %arg6[%c0_282, %c1_283, %c0_284] : memref<1x4x10xf32, #tpu.memory_space<vmem>>, vector<1x1x10xf32>
    %551 = vector.shape_cast %550 : vector<1x1x10xf32> to vector<1x10xf32>
    %552 = vector.shape_cast %549 : vector<1x10xf32> to vector<1x1x10xf32>
    tpu.vector_store %arg6[%c0_282, %c1_283, %c0_284], %552 {strides = array<i32>} : memref<1x4x10xf32, #tpu.memory_space<vmem>>, vector<1x1x10xf32>,
    %553 = vector.extract_strided_slice %544 {offsets = [0, 20], sizes = [1, 10], strides = [1, 1]} : vector<1x40xf32> to vector<1x10xf32>
    %c0_285 = arith.constant 0 : index
    %c2_286 = arith.constant 2 : index
    %c0_287 = arith.constant 0 : index
    %554 = vector.load %arg6[%c0_285, %c2_286, %c0_287] : memref<1x4x10xf32, #tpu.memory_space<vmem>>, vector<1x1x10xf32>
    %555 = vector.shape_cast %554 : vector<1x1x10xf32> to vector<1x10xf32>
    %556 = vector.shape_cast %553 : vector<1x10xf32> to vector<1x1x10xf32>
    tpu.vector_store %arg6[%c0_285, %c2_286, %c0_287], %556 {strides = array<i32>} : memref<1x4x10xf32, #tpu.memory_space<vmem>>, vector<1x1x10xf32>,
    %557 = vector.extract_strided_slice %544 {offsets = [0, 30], sizes = [1, 10], strides = [1, 1]} : vector<1x40xf32> to vector<1x10xf32>
    %c0_288 = arith.constant 0 : index
    %c3_289 = arith.constant 3 : index
    %c0_290 = arith.constant 0 : index
    %558 = vector.load %arg6[%c0_288, %c3_289, %c0_290] : memref<1x4x10xf32, #tpu.memory_space<vmem>>, vector<1x1x10xf32>
    %559 = vector.shape_cast %558 : vector<1x1x10xf32> to vector<1x10xf32>
    %560 = vector.shape_cast %557 : vector<1x10xf32> to vector<1x1x10xf32>
    tpu.vector_store %arg6[%c0_288, %c3_289, %c0_290], %560 {strides = array<i32>} : memref<1x4x10xf32, #tpu.memory_space<vmem>>, vector<1x1x10xf32>,
    return
  }
  func.func @transform_0(%arg0: i32) -> (i32, i32, i32, i32) {
    %c0_i32 = arith.constant 0 : i32
    %c0_i32_0 = arith.constant 0 : i32
    %c0_i32_1 = arith.constant 0 : i32
    %c0_i32_2 = arith.constant 0 : i32
    return %arg0, %c0_i32, %c0_i32_0, %c0_i32_1 : i32, i32, i32, i32
  }
  func.func @transform_1(%arg0: i32) -> (i32, i32) {
    %c0_i32 = arith.constant 0 : i32
    %c0_i32_0 = arith.constant 0 : i32
    %c0_i32_1 = arith.constant 0 : i32
    return %c0_i32, %c0_i32_0 : i32, i32
  }
  func.func @transform_2(%arg0: i32) -> i32 {
    %c0_i32 = arith.constant 0 : i32
    %c0_i32_0 = arith.constant 0 : i32
    return %c0_i32 : i32
  }
  func.func @transform_3(%arg0: i32) -> (i32, i32) {
    %c0_i32 = arith.constant 0 : i32
    %c0_i32_0 = arith.constant 0 : i32
    %c0_i32_1 = arith.constant 0 : i32
    return %c0_i32, %c0_i32_0 : i32, i32
  }
  func.func @transform_4(%arg0: i32) -> (i32, i32) {
    %c0_i32 = arith.constant 0 : i32
    %c0_i32_0 = arith.constant 0 : i32
    %c0_i32_1 = arith.constant 0 : i32
    return %c0_i32, %c0_i32_0 : i32, i32
  }
  func.func @transform_5(%arg0: i32) -> (i32, i32, i32) {
    %c0_i32 = arith.constant 0 : i32
    %c0_i32_0 = arith.constant 0 : i32
    %c0_i32_1 = arith.constant 0 : i32
    return %arg0, %c0_i32, %c0_i32_0 : i32, i32, i32
  }
}

</mosaic_0001>

<llo_original>
// kernel: tile.8
$region0: #{tile.8}
  #allocation0 [shape = 's32[1]{0}', space=sflag, size = 0x4, scoped, tag = 'scoped memory for tile.8']
  %s0 = inlined_call_operand.vmem [shape: f32[10], index: 0, kind: input, shape index: {}]
  %s1 = inlined_call_operand.vmem [shape: f32[4,10], index: 1, kind: output, shape index: {}]
  // Predicated region
  $region2: #{tile.8} parent=0 // pred_check
    _
  $region3: #{tile.8} parent=0 // pred_check_branch
    %3 = sbr.rel (0) target = $region5
  $region4: #{tile.8} parent=0 // pred_region
    _
  $region5: #{tile.8} parent=0 // pred_fallthru
    _
  %v4 = vld [vmem:[%s0] ss:$0 sm:$0xff]
  %5 = vst [vmem:[%s1] sm:$0xf] %v4

// kernel: tile.9
$region0: #{tile.9}
  %s0 = inlined_call_operand.vmem [shape: f32[4,10], index: 0, kind: input, shape index: {}]
  %s1 = inlined_call_operand.vmem [shape: f32[1,40], index: 1, kind: output, shape index: {}]
  $region1: #{tile.9} parent=0
    #allocation0 [shape = 'u8[4096]{0}', space=vmem, size = 0x1000, scoped, tag = 'scoped mem for output reshape']
    #allocation1 [shape = 'u8[4096]{0}', space=vmem, size = 0x1000, scoped, tag = 'scoped mem for input reshape']
    %s3 = ssub.s32 16, 1
    %v4 = vld [vmem:[%s0] sm:%s3]
    %5 = vst [vmem:[#allocation1] sm:%s3] %v4
    %v6 = vld [vmem:[#allocation1] sm:$0x1]
    %vm7 = vcmask 80896
    %8 = vst.msk [vmem:[#allocation0] sm:$0x1] %vm7, %v6
    %s9 = scalar_lea.vmem [#allocation1], 3
    %v10 = vld [vmem:[%s9] sm:$0x1]
    %11 = vrot.lane.b32.xlu0 %v10, 30
    %v12 = vpop.permute.xlu0 %11
    %vm13 = vcmask 326896
    %14 = vst.msk [vmem:[#allocation0] sm:$0x1] %vm13, %v12
    %s15 = scalar_lea.vmem [#allocation1], 2
    %v16 = vld [vmem:[%s15] sm:$0x1]
    %17 = vrot.lane.b32.xlu0 %v16, 20
    %v18 = vpop.permute.xlu0 %17
    %vm19 = vcmask 244896
    %20 = vst.msk [vmem:[#allocation0] sm:$0x1] %vm19, %v18
    %s21 = scalar_lea.vmem [#allocation1], 1
    %v22 = vld [vmem:[%s21] sm:$0x1]
    %23 = vrot.lane.b32.xlu0 %v22, 10
    %v24 = vpop.permute.xlu0 %23
    %vm25 = vcmask 162896
    %26 = vst.msk [vmem:[#allocation0] sm:$0x1] %vm25, %v24
    %s28 = ssub.s32 2, 1
    %v29 = vld [vmem:[#allocation0] sm:%s28]
    %s31 = ssub.s32 2, 1
    %32 = vst [vmem:[%s1] sm:%s31] %v29

// kernel: net_forward.1
$region0: #{net_forward.1}
  #allocation0 [shape = 'u32[]', space=smem, size = 0x4, offset = 0x4, fixed_abs, tag = 'smem constant byte address 0x4 - core index']
  #allocation1 [shape = 'u32[72,128]{1,0:T(1,128)}', space=vmem, size = 0x9000, scoped, tag = 'internal scratch']
  #allocation2 [shape = 'f32[3,32,128]{2,1,0:T(8,128)}', space=vmem, size = 0xc000, scoped, tag = 'scratch operand']
  #allocation3 [shape = 'f32[1,11520]{1,0:T(1,128)}', space=vmem, size = 0xb400, scoped, tag = 'scratch operand']
  %s0 = inlined_call_operand.vmem [shape: f32[1,4,32,32], index: 0, kind: input, shape index: {}]
  %s1 = inlined_call_operand.vmem [shape: f32[6,9], index: 1, kind: input, shape index: {}]
  %s2 = inlined_call_operand.vmem [shape: f32[6], index: 2, kind: input, shape index: {}]
  %s3 = inlined_call_operand.vmem [shape: f32[11520,40], index: 3, kind: input, shape index: {}]
  %s4 = inlined_call_operand.vmem [shape: f32[1,40], index: 4, kind: input, shape index: {}]
  %s5 = inlined_call_operand.vmem [shape: f32[1,4,10], index: 5, kind: output, shape index: {}]
  %s6 = sld [smem:[#allocation0]]
  $region38: #{net_forward.1} parent=0
    _
  %s8 = ssub.s32 1, %s6
  %s9 = scalar_select 0, %s8, %s6
  $region1: #{net_forward.1} parent=0
    #allocation4 [shape = 'u8[4096]{0}', space=smem, size = 0x1000, scoped, tag = 'input window, operand 1, single buffered']
    #allocation5 [shape = 's32[1]{0}', space=sflag, size = 0x4, scoped, tag = 'scoped memory for net_forward.1']
    #allocation6 [shape = 'u8[512]{0}', space=smem, size = 0x200, scoped, tag = 'input window, operand 2, single buffered']
    #allocation7 [shape = 's32[1]{0}', space=sflag, size = 0x4, scoped, tag = 'scoped memory for net_forward.1']
    %10 = vsyncpa [#allocation5], 0
    %11 = vsyncpa [#allocation7], 0
    // Predicated region
    $region2: #{net_forward.1} parent=1 // pred_check
      _
    $region3: #{net_forward.1} parent=1 // pred_check_branch
      %13 = sbr.rel (0) target = $region5
    $region4: #{net_forward.1} parent=1 // pred_region
      _
    $region5: #{net_forward.1} parent=1 // pred_fallthru
      _
    // Predicated region
    $region6: #{net_forward.1} parent=1 // pred_check
      _
    $region7: #{net_forward.1} parent=1 // pred_check_branch
      %15 = sbr.rel (0) target = $region9
    $region8: #{net_forward.1} parent=1 // pred_region
      %17 = vsyncadd [#allocation5], 0
      %s19 = sshll.u32 %s1, 4
      %s20 = int_to_ptr.vmem [resolvable:$true] %s19
      %22 = dma.vmem_to_smem %s20, 128, [#allocation4], [#allocation5]
    $region9: #{net_forward.1} parent=1 // pred_fallthru
      _
    // Predicated region
    $region10: #{net_forward.1} parent=1 // pred_check
      _
    $region11: #{net_forward.1} parent=1 // pred_check_branch
      %24 = sbr.rel (0) target = $region13
    $region12: #{net_forward.1} parent=1 // pred_region
      %26 = vsyncadd [#allocation7], 0
      %s28 = sshll.u32 %s2, 4
      %s29 = int_to_ptr.vmem [resolvable:$true] %s28
      %31 = dma.vmem_to_smem %s29, 16, [#allocation6], [#allocation7]
    $region13: #{net_forward.1} parent=1 // pred_fallthru
      _
    // Predicated region
    $region14: #{net_forward.1} parent=1 // pred_check
      _
    $region15: #{net_forward.1} parent=1 // pred_check_branch
      %33 = sbr.rel (0) target = $region17
    $region16: #{net_forward.1} parent=1 // pred_region
      _
    $region17: #{net_forward.1} parent=1 // pred_fallthru
      _
    // Predicated region
    $region18: #{net_forward.1} parent=1 // pred_check
      _
    $region19: #{net_forward.1} parent=1 // pred_check_branch
      %35 = sbr.rel (0) target = $region21
    $region20: #{net_forward.1} parent=1 // pred_region
      _
    $region21: #{net_forward.1} parent=1 // pred_fallthru
      _
    // Predicated region
    $region22: #{net_forward.1} parent=1 // pred_check
      _
    $region23: #{net_forward.1} parent=1 // pred_check_branch
      %37 = sbr.rel (0) target = $region25
    $region24: #{net_forward.1} parent=1 // pred_region
      %39 = dma.done [#allocation5], 128
    $region25: #{net_forward.1} parent=1 // pred_fallthru
      _
    // Predicated region
    $region26: #{net_forward.1} parent=1 // pred_check
      _
    $region27: #{net_forward.1} parent=1 // pred_check_branch
      %41 = sbr.rel (0) target = $region29
    $region28: #{net_forward.1} parent=1 // pred_region
      %43 = dma.done [#allocation7], 16
    $region29: #{net_forward.1} parent=1 // pred_fallthru
      _
    %44 = sfence
    %45 = vst [vmem:[#allocation2] sm:$0xff] 0.0
    %46 = vst [vmem:[#allocation2 + $0x8] sm:$0xff] 0.0
    %47 = vst [vmem:[#allocation2 + $0x10] sm:$0xff] 0.0
    %48 = vst [vmem:[#allocation2 + $0x18] sm:$0xff] 0.0
    %49 = vst [vmem:[#allocation2 + $0x20] sm:$0xff] 0.0
    %50 = vst [vmem:[#allocation2 + $0x28] sm:$0xff] 0.0
    %51 = vst [vmem:[#allocation2 + $0x30] sm:$0xff] 0.0
    %52 = vst [vmem:[#allocation2 + $0x38] sm:$0xff] 0.0
    %53 = vst [vmem:[#allocation2 + $0x40] sm:$0xff] 0.0
    %54 = vst [vmem:[#allocation2 + $0x48] sm:$0xff] 0.0
    %55 = vst [vmem:[#allocation2 + $0x50] sm:$0xff] 0.0
    %56 = vst [vmem:[#allocation2 + $0x58] sm:$0xff] 0.0
    %v57 = vld [vmem:[%s0] sm:$0xff]
    %v58 = vld [vmem:[%s0 + $0x8] sm:$0xff]
    %v59 = vld [vmem:[%s0 + $0x10] sm:$0xff]
    %v60 = vld [vmem:[%s0 + $0x18] sm:$0xff]
    %v61 = vld [vmem:[%s0 + $0x20] sm:$0xff]
    %v62 = vld [vmem:[%s0 + $0x28] sm:$0xff]
    %v63 = vld [vmem:[%s0 + $0x30] sm:$0xff]
    %v64 = vld [vmem:[%s0 + $0x38] sm:$0xff]
    %v65 = vld [vmem:[%s0 + $0x40] sm:$0xff]
    %v66 = vld [vmem:[%s0 + $0x48] sm:$0xff]
    %v67 = vld [vmem:[%s0 + $0x50] sm:$0xff]
    %v68 = vld [vmem:[%s0 + $0x58] sm:$0xff]
    %v69 = vld [vmem:[%s0 + $0x60] sm:$0xff]
    %v70 = vld [vmem:[%s0 + $0x68] sm:$0xff]
    %v71 = vld [vmem:[%s0 + $0x70] sm:$0xff]
    %v72 = vld [vmem:[%s0 + $0x78] sm:$0xff]
    %vm73 = vcmask 261120
    %74 = vst.msk [vmem:[#allocation2] sm:$0xff] %vm73, %v57
    %75 = vst.msk [vmem:[#allocation2 + $0x8] sm:$0xff] %vm73, %v58
    %76 = vst.msk [vmem:[#allocation2 + $0x10] sm:$0xff] %vm73, %v59
    %77 = vst.msk [vmem:[#allocation2 + $0x18] sm:$0xff] %vm73, %v60
    %82 = vrot.lane.b32.xlu0 %v61, 32
    %v83 = vpop.permute.xlu0 %82
    %84 = vrot.lane.b32.xlu0 %v62, 32
    %v85 = vpop.permute.xlu0 %84
    %86 = vrot.lane.b32.xlu0 %v63, 32
    %v87 = vpop.permute.xlu0 %86
    %88 = vrot.lane.b32.xlu0 %v64, 32
    %v89 = vpop.permute.xlu0 %88
    %vm94 = vcmask 523520
    %95 = vst.msk [vmem:[#allocation2] sm:$0xff] %vm94, %v83
    %96 = vst.msk [vmem:[#allocation2 + $0x8] sm:$0xff] %vm94, %v85
    %97 = vst.msk [vmem:[#allocation2 + $0x10] sm:$0xff] %vm94, %v87
    %98 = vst.msk [vmem:[#allocation2 + $0x18] sm:$0xff] %vm94, %v89
    %103 = vrot.lane.b32.xlu0 %v65, 64
    %v104 = vpop.permute.xlu0 %103
    %105 = vrot.lane.b32.xlu0 %v66, 64
    %v106 = vpop.permute.xlu0 %105
    %107 = vrot.lane.b32.xlu0 %v67, 64
    %v108 = vpop.permute.xlu0 %107
    %109 = vrot.lane.b32.xlu0 %v68, 64
    %v110 = vpop.permute.xlu0 %109
    %vm115 = vcmask 785920
    %116 = vst.msk [vmem:[#allocation2] sm:$0xff] %vm115, %v104
    %117 = vst.msk [vmem:[#allocation2 + $0x8] sm:$0xff] %vm115, %v106
    %118 = vst.msk [vmem:[#allocation2 + $0x10] sm:$0xff] %vm115, %v108
    %119 = vst.msk [vmem:[#allocation2 + $0x18] sm:$0xff] %vm115, %v110
    %124 = vrot.lane.b32.xlu0 %v69, 96
    %v125 = vpop.permute.xlu0 %124
    %126 = vrot.lane.b32.xlu0 %v70, 96
    %v127 = vpop.permute.xlu0 %126
    %128 = vrot.lane.b32.xlu0 %v71, 96
    %v129 = vpop.permute.xlu0 %128
    %130 = vrot.lane.b32.xlu0 %v72, 96
    %v131 = vpop.permute.xlu0 %130
    %vm136 = vcmask 1048320
    %137 = vst.msk [vmem:[#allocation2] sm:$0xff] %vm136, %v125
    %138 = vst.msk [vmem:[#allocation2 + $0x8] sm:$0xff] %vm136, %v127
    %139 = vst.msk [vmem:[#allocation2 + $0x10] sm:$0xff] %vm136, %v129
    %140 = vst.msk [vmem:[#allocation2 + $0x18] sm:$0xff] %vm136, %v131
    %145 = vrot.lane.b32.xlu0 %v57, 127
    %v146 = vpop.permute.xlu0 %145
    %147 = vrot.lane.b32.xlu0 %v58, 127
    %v148 = vpop.permute.xlu0 %147
    %149 = vrot.lane.b32.xlu0 %v59, 127
    %v150 = vpop.permute.xlu0 %149
    %151 = vrot.lane.b32.xlu0 %v60, 127
    %v152 = vpop.permute.xlu0 %151
    %s157 = scalar_lea.vmem [#allocation2], 32
    %vm158 = vcmask 252928
    %159 = vst.msk [vmem:[%s157] sm:$0xff] %vm158, %v146
    %160 = vst.msk [vmem:[%s157 + $0x8] sm:$0xff] %vm158, %v148
    %161 = vst.msk [vmem:[%s157 + $0x10] sm:$0xff] %vm158, %v150
    %162 = vst.msk [vmem:[%s157 + $0x18] sm:$0xff] %vm158, %v152
    %163 = vrot.lane.b32.xlu0 %v61, 31
    %v164 = vpop.permute.xlu0 %163
    %165 = vrot.lane.b32.xlu0 %v62, 31
    %v166 = vpop.permute.xlu0 %165
    %167 = vrot.lane.b32.xlu0 %v63, 31
    %v168 = vpop.permute.xlu0 %167
    %169 = vrot.lane.b32.xlu0 %v64, 31
    %v170 = vpop.permute.xlu0 %169
    %vm175 = vcmask 515328
    %176 = vst.msk [vmem:[%s157] sm:$0xff] %vm175, %v164
    %177 = vst.msk [vmem:[%s157 + $0x8] sm:$0xff] %vm175, %v166
    %178 = vst.msk [vmem:[%s157 + $0x10] sm:$0xff] %vm175, %v168
    %179 = vst.msk [vmem:[%s157 + $0x18] sm:$0xff] %vm175, %v170
    %180 = vrot.lane.b32.xlu0 %v65, 63
    %v181 = vpop.permute.xlu0 %180
    %182 = vrot.lane.b32.xlu0 %v66, 63
    %v183 = vpop.permute.xlu0 %182
    %184 = vrot.lane.b32.xlu0 %v67, 63
    %v185 = vpop.permute.xlu0 %184
    %186 = vrot.lane.b32.xlu0 %v68, 63
    %v187 = vpop.permute.xlu0 %186
    %vm192 = vcmask 777728
    %193 = vst.msk [vmem:[%s157] sm:$0xff] %vm192, %v181
    %194 = vst.msk [vmem:[%s157 + $0x8] sm:$0xff] %vm192, %v183
    %195 = vst.msk [vmem:[%s157 + $0x10] sm:$0xff] %vm192, %v185
    %196 = vst.msk [vmem:[%s157 + $0x18] sm:$0xff] %vm192, %v187
    %197 = vrot.lane.b32.xlu0 %v69, 95
    %v198 = vpop.permute.xlu0 %197
    %199 = vrot.lane.b32.xlu0 %v70, 95
    %v200 = vpop.permute.xlu0 %199
    %201 = vrot.lane.b32.xlu0 %v71, 95
    %v202 = vpop.permute.xlu0 %201
    %203 = vrot.lane.b32.xlu0 %v72, 95
    %v204 = vpop.permute.xlu0 %203
    %vm209 = vcmask 1040128
    %210 = vst.msk [vmem:[%s157] sm:$0xff] %vm209, %v198
    %211 = vst.msk [vmem:[%s157 + $0x8] sm:$0xff] %vm209, %v200
    %212 = vst.msk [vmem:[%s157 + $0x10] sm:$0xff] %vm209, %v202
    %213 = vst.msk [vmem:[%s157 + $0x18] sm:$0xff] %vm209, %v204
    %214 = vrot.lane.b32.xlu0 %v57, 126
    %v215 = vpop.permute.xlu0 %214
    %216 = vrot.lane.b32.xlu0 %v58, 126
    %v217 = vpop.permute.xlu0 %216
    %218 = vrot.lane.b32.xlu0 %v59, 126
    %v219 = vpop.permute.xlu0 %218
    %220 = vrot.lane.b32.xlu0 %v60, 126
    %v221 = vpop.permute.xlu0 %220
    %s226 = scalar_lea.vmem [#allocation2], 64
    %vm227 = vcmask 244736
    %228 = vst.msk [vmem:[%s226] sm:$0xff] %vm227, %v215
    %229 = vst.msk [vmem:[%s226 + $0x8] sm:$0xff] %vm227, %v217
    %230 = vst.msk [vmem:[%s226 + $0x10] sm:$0xff] %vm227, %v219
    %231 = vst.msk [vmem:[%s226 + $0x18] sm:$0xff] %vm227, %v221
    %232 = vrot.lane.b32.xlu0 %v61, 30
    %v233 = vpop.permute.xlu0 %232
    %234 = vrot.lane.b32.xlu0 %v62, 30
    %v235 = vpop.permute.xlu0 %234
    %236 = vrot.lane.b32.xlu0 %v63, 30
    %v237 = vpop.permute.xlu0 %236
    %238 = vrot.lane.b32.xlu0 %v64, 30
    %v239 = vpop.permute.xlu0 %238
    %vm244 = vcmask 507136
    %245 = vst.msk [vmem:[%s226] sm:$0xff] %vm244, %v233
    %246 = vst.msk [vmem:[%s226 + $0x8] sm:$0xff] %vm244, %v235
    %247 = vst.msk [vmem:[%s226 + $0x10] sm:$0xff] %vm244, %v237
    %248 = vst.msk [vmem:[%s226 + $0x18] sm:$0xff] %vm244, %v239
    %249 = vrot.lane.b32.xlu0 %v65, 62
    %v250 = vpop.permute.xlu0 %249
    %251 = vrot.lane.b32.xlu0 %v66, 62
    %v252 = vpop.permute.xlu0 %251
    %253 = vrot.lane.b32.xlu0 %v67, 62
    %v254 = vpop.permute.xlu0 %253
    %255 = vrot.lane.b32.xlu0 %v68, 62
    %v256 = vpop.permute.xlu0 %255
    %vm261 = vcmask 769536
    %262 = vst.msk [vmem:[%s226] sm:$0xff] %vm261, %v250
    %263 = vst.msk [vmem:[%s226 + $0x8] sm:$0xff] %vm261, %v252
    %264 = vst.msk [vmem:[%s226 + $0x10] sm:$0xff] %vm261, %v254
    %265 = vst.msk [vmem:[%s226 + $0x18] sm:$0xff] %vm261, %v256
    %266 = vrot.lane.b32.xlu0 %v69, 94
    %v267 = vpop.permute.xlu0 %266
    %268 = vrot.lane.b32.xlu0 %v70, 94
    %v269 = vpop.permute.xlu0 %268
    %270 = vrot.lane.b32.xlu0 %v71, 94
    %v271 = vpop.permute.xlu0 %270
    %272 = vrot.lane.b32.xlu0 %v72, 94
    %v273 = vpop.permute.xlu0 %272
    %vm278 = vcmask 1031936
    %279 = vst.msk [vmem:[%s226] sm:$0xff] %vm278, %v267
    %280 = vst.msk [vmem:[%s226 + $0x8] sm:$0xff] %vm278, %v269
    %281 = vst.msk [vmem:[%s226 + $0x10] sm:$0xff] %vm278, %v271
    %282 = vst.msk [vmem:[%s226 + $0x18] sm:$0xff] %vm278, %v273
    %v283 = vld [vmem:[#allocation2] sm:$0xff]
    %v284 = vld [vmem:[#allocation2 + $0x8] sm:$0xff]
    %v285 = vld [vmem:[#allocation2 + $0x10] sm:$0xff]
    %v286 = vld [vmem:[#allocation2 + $0x18] sm:$0x3f]
    %v287 = vld [vmem:[%s157] sm:$0xff]
    %v288 = vld [vmem:[%s157 + $0x8] sm:$0xff]
    %v289 = vld [vmem:[%s157 + $0x10] sm:$0xff]
    %v290 = vld [vmem:[%s157 + $0x18] sm:$0x3f]
    %v291 = vld [vmem:[%s226] sm:$0xff]
    %v292 = vld [vmem:[%s226 + $0x8] sm:$0xff]
    %v293 = vld [vmem:[%s226 + $0x10] sm:$0xff]
    %v294 = vld [vmem:[%s226 + $0x18] sm:$0x3f]
    %v295 = vld [vmem:[#allocation2 + $0x1] sm:$0xff]
    %v296 = vld [vmem:[#allocation2 + $0x9] sm:$0xff]
    %v297 = vld [vmem:[#allocation2 + $0x11] sm:$0xff]
    %v298 = vld [vmem:[#allocation2 + $0x19] sm:$0x3f]
    %v299 = vld [vmem:[%s157 + $0x1] sm:$0xff]
    %v300 = vld [vmem:[%s157 + $0x9] sm:$0xff]
    %v301 = vld [vmem:[%s157 + $0x11] sm:$0xff]
    %v302 = vld [vmem:[%s157 + $0x19] sm:$0x3f]
    %v303 = vld [vmem:[%s226 + $0x1] sm:$0xff]
    %v304 = vld [vmem:[%s226 + $0x9] sm:$0xff]
    %v305 = vld [vmem:[%s226 + $0x11] sm:$0xff]
    %v306 = vld [vmem:[%s226 + $0x19] sm:$0x3f]
    %v307 = vld [vmem:[#allocation2 + $0x2] sm:$0xff]
    %v308 = vld [vmem:[#allocation2 + $0xa] sm:$0xff]
    %v309 = vld [vmem:[#allocation2 + $0x12] sm:$0xff]
    %v310 = vld [vmem:[#allocation2 + $0x1a] sm:$0x3f]
    %v311 = vld [vmem:[%s157 + $0x2] sm:$0xff]
    %v312 = vld [vmem:[%s157 + $0xa] sm:$0xff]
    %v313 = vld [vmem:[%s157 + $0x12] sm:$0xff]
    %v314 = vld [vmem:[%s157 + $0x1a] sm:$0x3f]
    %v315 = vld [vmem:[%s226 + $0x2] sm:$0xff]
    %v316 = vld [vmem:[%s226 + $0xa] sm:$0xff]
    %v317 = vld [vmem:[%s226 + $0x12] sm:$0xff]
    %v318 = vld [vmem:[%s226 + $0x1a] sm:$0x3f]
    %319 = vst [vmem:[#allocation3] sm:$0xff] 0.0
    %320 = vst [vmem:[#allocation3 + $0x8] sm:$0xff] 0.0
    %321 = vst [vmem:[#allocation3 + $0x10] sm:$0xff] 0.0
    %322 = vst [vmem:[#allocation3 + $0x18] sm:$0xff] 0.0
    %323 = vst [vmem:[#allocation3 + $0x20] sm:$0xff] 0.0
    %324 = vst [vmem:[#allocation3 + $0x28] sm:$0xff] 0.0
    %325 = vst [vmem:[#allocation3 + $0x30] sm:$0xff] 0.0
    %326 = vst [vmem:[#allocation3 + $0x38] sm:$0xff] 0.0
    %327 = vst [vmem:[#allocation3 + $0x40] sm:$0xff] 0.0
    %328 = vst [vmem:[#allocation3 + $0x48] sm:$0xff] 0.0
    %329 = vst [vmem:[#allocation3 + $0x50] sm:$0xff] 0.0
    %v330 = vlaneseq
    %vm331 = vcmp.ge.s32.totalorder %v330, 0
    %vm332 = vcmp.lt.s32.totalorder %v330, 256
    %vm333 = vmand %vm331, %vm332
    %334 = vst.msk [vmem:[#allocation3 + $0x58] sm:$0x3] %vm333, 0.0
    %s335 = sld [smem:[#allocation4]]
    %v336 = vstv %s335
    %v337 = vmul.f32 %v283, %v336
    %v338 = vmul.f32 %v284, %v336
    %v339 = vmul.f32 %v285, %v336
    %v340 = vmul.f32 %v286, %v336
    %s341 = sld [smem:[#allocation4 + $0x1]]
    %v342 = vstv %s341
    %v343 = vmul.f32 %v287, %v342
    %v344 = vmul.f32 %v288, %v342
    %v345 = vmul.f32 %v289, %v342
    %v346 = vmul.f32 %v290, %v342
    %v347 = vadd.f32 %v337, %v343
    %v348 = vadd.f32 %v338, %v344
    %v349 = vadd.f32 %v339, %v345
    %v350 = vadd.f32 %v340, %v346
    %s351 = sld [smem:[#allocation4 + $0x2]]
    %v352 = vstv %s351
    %v353 = vmul.f32 %v291, %v352
    %v354 = vmul.f32 %v292, %v352
    %v355 = vmul.f32 %v293, %v352
    %v356 = vmul.f32 %v294, %v352
    %v357 = vadd.f32 %v347, %v353
    %v358 = vadd.f32 %v348, %v354
    %v359 = vadd.f32 %v349, %v355
    %v360 = vadd.f32 %v350, %v356
    %s361 = sld [smem:[#allocation4 + $0x3]]
    %v362 = vstv %s361
    %v363 = vmul.f32 %v295, %v362
    %v364 = vmul.f32 %v296, %v362
    %v365 = vmul.f32 %v297, %v362
    %v366 = vmul.f32 %v298, %v362
    %v367 = vadd.f32 %v357, %v363
    %v368 = vadd.f32 %v358, %v364
    %v369 = vadd.f32 %v359, %v365
    %v370 = vadd.f32 %v360, %v366
    %s371 = sld [smem:[#allocation4 + $0x4]]
    %v372 = vstv %s371
    %v373 = vmul.f32 %v299, %v372
    %v374 = vmul.f32 %v300, %v372
    %v375 = vmul.f32 %v301, %v372
    %v376 = vmul.f32 %v302, %v372
    %v377 = vadd.f32 %v367, %v373
    %v378 = vadd.f32 %v368, %v374
    %v379 = vadd.f32 %v369, %v375
    %v380 = vadd.f32 %v370, %v376
    %s381 = sld [smem:[#allocation4 + $0x5]]
    %v382 = vstv %s381
    %v383 = vmul.f32 %v303, %v382
    %v384 = vmul.f32 %v304, %v382
    %v385 = vmul.f32 %v305, %v382
    %v386 = vmul.f32 %v306, %v382
    %v387 = vadd.f32 %v377, %v383
    %v388 = vadd.f32 %v378, %v384
    %v389 = vadd.f32 %v379, %v385
    %v390 = vadd.f32 %v380, %v386
    %s391 = sld [smem:[#allocation4 + $0x6]]
    %v392 = vstv %s391
    %v393 = vmul.f32 %v307, %v392
    %v394 = vmul.f32 %v308, %v392
    %v395 = vmul.f32 %v309, %v392
    %v396 = vmul.f32 %v310, %v392
    %v397 = vadd.f32 %v387, %v393
    %v398 = vadd.f32 %v388, %v394
    %v399 = vadd.f32 %v389, %v395
    %v400 = vadd.f32 %v390, %v396
    %s401 = sld [smem:[#allocation4 + $0x7]]
    %v402 = vstv %s401
    %v403 = vmul.f32 %v311, %v402
    %v404 = vmul.f32 %v312, %v402
    %v405 = vmul.f32 %v313, %v402
    %v406 = vmul.f32 %v314, %v402
    %v407 = vadd.f32 %v397, %v403
    %v408 = vadd.f32 %v398, %v404
    %v409 = vadd.f32 %v399, %v405
    %v410 = vadd.f32 %v400, %v406
    %s411 = sld [smem:[#allocation4 + $0x8]]
    %v412 = vstv %s411
    %v413 = vmul.f32 %v315, %v412
    %v414 = vmul.f32 %v316, %v412
    %v415 = vmul.f32 %v317, %v412
    %v416 = vmul.f32 %v318, %v412
    %v417 = vadd.f32 %v407, %v413
    %v418 = vadd.f32 %v408, %v414
    %v419 = vadd.f32 %v409, %v415
    %v420 = vadd.f32 %v410, %v416
    %s421 = sld [smem:[#allocation6]]
    %v422 = vstv %s421
    %v423 = vadd.f32 %v417, %v422
    %v424 = vadd.f32 %v418, %v422
    %v425 = vadd.f32 %v419, %v422
    %v426 = vadd.f32 %v420, %v422
    %v427 = vmax.f32 %v423, 0.0
    %v428 = vmax.f32 %v424, 0.0
    %v429 = vmax.f32 %v425, 0.0
    %v430 = vmax.f32 %v426, 0.0
    %vm435 = vcmask 1046528
    %v436 = vrot.slane %v427, 1
    %v437 = vrot.slane %v428, 1
    %v438 = vsel %vm435, %v436, %v437
    %v439 = vrot.slane %v429, 1
    %v440 = vsel %vm435, %v437, %v439
    %v441 = vrot.slane %v430, 1
    %v442 = vsel %vm435, %v439, %v441
    %v447 = vmax.f32 %v427, %v438
    %v448 = vmax.f32 %v428, %v440
    %v449 = vmax.f32 %v429, %v442
    %v450 = vmax.f32 %v430, %v441
    %455 = vrot.lane.b32.xlu0 %v447, 127
    %v456 = vpop.permute.xlu0 %455
    %457 = vrot.lane.b32.xlu0 %v448, 127
    %v458 = vpop.permute.xlu0 %457
    %459 = vrot.lane.b32.xlu0 %v449, 127
    %v460 = vpop.permute.xlu0 %459
    %461 = vrot.lane.b32.xlu0 %v450, 127
    %v462 = vpop.permute.xlu0 %461
    %v467 = vmax.f32 %v447, %v456
    %v468 = vmax.f32 %v448, %v458
    %v469 = vmax.f32 %v449, %v460
    %v470 = vmax.f32 %v450, %v462
    %vm471 = vcmp.lt.s32.totalorder %v330, 127
    %vm472 = vmand %vm331, %vm471
    %473 = vst.msk [vmem:[#allocation3] sm:$0x1] %vm472, %v467
    %475 = vst [vmem:[#allocation1] sm:$0xff] %v467
    %s476 = scalar_lea.vmem [#allocation1], 2
    %v477 = vld [vmem:[%s476] ss:$9 sm:$0xff]
    %479 = vst.msk [vmem:[#allocation3 + $0x1] sm:$0x1] %vm472, %v477
    %480 = vst [vmem:[#allocation1] sm:$0xff] %v467
    %s481 = scalar_lea.vmem [#allocation1], 4
    %v482 = vld [vmem:[%s481] ss:$9 sm:$0xff]
    %484 = vst.msk [vmem:[#allocation3 + $0x2] sm:$0x1] %vm472, %v482
    %485 = vst [vmem:[#allocation1] sm:$0xff] %v467
    %s486 = scalar_lea.vmem [#allocation1], 6
    %v487 = vld [vmem:[%s486] ss:$9 sm:$0xff]
    %489 = vst.msk [vmem:[#allocation3 + $0x3] sm:$0x1] %vm472, %v487
    %490 = vst.msk [vmem:[#allocation3 + $0x4] sm:$0x1] %vm472, %v468
    %492 = vst [vmem:[#allocation1] sm:$0xff] %v468
    %s493 = scalar_lea.vmem [#allocation1], 2
    %v494 = vld [vmem:[%s493] ss:$9 sm:$0xff]
    %496 = vst.msk [vmem:[#allocation3 + $0x5] sm:$0x1] %vm472, %v494
    %497 = vst [vmem:[#allocation1] sm:$0xff] %v468
    %s498 = scalar_lea.vmem [#allocation1], 4
    %v499 = vld [vmem:[%s498] ss:$9 sm:$0xff]
    %501 = vst.msk [vmem:[#allocation3 + $0x6] sm:$0x1] %vm472, %v499
    %502 = vst [vmem:[#allocation1] sm:$0xff] %v468
    %s503 = scalar_lea.vmem [#allocation1], 6
    %v504 = vld [vmem:[%s503] ss:$9 sm:$0xff]
    %506 = vst.msk [vmem:[#allocation3 + $0x7] sm:$0x1] %vm472, %v504
    %507 = vst.msk [vmem:[#allocation3 + $0x8] sm:$0x1] %vm472, %v469
    %509 = vst [vmem:[#allocation1] sm:$0xff] %v469
    %s510 = scalar_lea.vmem [#allocation1], 2
    %v511 = vld [vmem:[%s510] ss:$9 sm:$0xff]
    %513 = vst.msk [vmem:[#allocation3 + $0x9] sm:$0x1] %vm472, %v511
    %514 = vst [vmem:[#allocation1] sm:$0xff] %v469
    %s515 = scalar_lea.vmem [#allocation1], 4
    %v516 = vld [vmem:[%s515] ss:$9 sm:$0xff]
    %518 = vst.msk [vmem:[#allocation3 + $0xa] sm:$0x1] %vm472, %v516
    %519 = vst [vmem:[#allocation1] sm:$0xff] %v469
    %s520 = scalar_lea.vmem [#allocation1], 6
    %v521 = vld [vmem:[%s520] ss:$9 sm:$0xff]
    %523 = vst.msk [vmem:[#allocation3 + $0xb] sm:$0x1] %vm472, %v521
    %524 = vst.msk [vmem:[#allocation3 + $0xc] sm:$0x1] %vm472, %v470
    %526 = vst [vmem:[#allocation1] sm:$0xff] %v470
    %s527 = scalar_lea.vmem [#allocation1], 2
    %v528 = vld [vmem:[%s527] ss:$9 sm:$0xff]
    %530 = vst.msk [vmem:[#allocation3 + $0xd] sm:$0x1] %vm472, %v528
    %531 = vst [vmem:[#allocation1] sm:$0xff] %v470
    %s532 = scalar_lea.vmem [#allocation1], 4
    %v533 = vld [vmem:[%s532] ss:$9 sm:$0xff]
    %535 = vst.msk [vmem:[#allocation3 + $0xe] sm:$0x1] %vm472, %v533
    %s536 = sld [smem:[#allocation4 + $0x80]]
    %v537 = vstv %s536
    %v538 = vmul.f32 %v283, %v537
    %v539 = vmul.f32 %v284, %v537
    %v540 = vmul.f32 %v285, %v537
    %v541 = vmul.f32 %v286, %v537
    %s542 = sld [smem:[#allocation4 + $0x81]]
    %v543 = vstv %s542
    %v544 = vmul.f32 %v287, %v543
    %v545 = vmul.f32 %v288, %v543
    %v546 = vmul.f32 %v289, %v543
    %v547 = vmul.f32 %v290, %v543
    %v548 = vadd.f32 %v538, %v544
    %v549 = vadd.f32 %v539, %v545
    %v550 = vadd.f32 %v540, %v546
    %v551 = vadd.f32 %v541, %v547
    %s552 = sld [smem:[#allocation4 + $0x82]]
    %v553 = vstv %s552
    %v554 = vmul.f32 %v291, %v553
    %v555 = vmul.f32 %v292, %v553
    %v556 = vmul.f32 %v293, %v553
    %v557 = vmul.f32 %v294, %v553
    %v558 = vadd.f32 %v548, %v554
    %v559 = vadd.f32 %v549, %v555
    %v560 = vadd.f32 %v550, %v556
    %v561 = vadd.f32 %v551, %v557
    %s562 = sld [smem:[#allocation4 + $0x83]]
    %v563 = vstv %s562
    %v564 = vmul.f32 %v295, %v563
    %v565 = vmul.f32 %v296, %v563
    %v566 = vmul.f32 %v297, %v563
    %v567 = vmul.f32 %v298, %v563
    %v568 = vadd.f32 %v558, %v564
    %v569 = vadd.f32 %v559, %v565
    %v570 = vadd.f32 %v560, %v566
    %v571 = vadd.f32 %v561, %v567
    %s572 = sld [smem:[#allocation4 + $0x84]]
    %v573 = vstv %s572
    %v574 = vmul.f32 %v299, %v573
    %v575 = vmul.f32 %v300, %v573
    %v576 = vmul.f32 %v301, %v573
    %v577 = vmul.f32 %v302, %v573
    %v578 = vadd.f32 %v568, %v574
    %v579 = vadd.f32 %v569, %v575
    %v580 = vadd.f32 %v570, %v576
    %v581 = vadd.f32 %v571, %v577
    %s582 = sld [smem:[#allocation4 + $0x85]]
    %v583 = vstv %s582
    %v584 = vmul.f32 %v303, %v583
    %v585 = vmul.f32 %v304, %v583
    %v586 = vmul.f32 %v305, %v583
    %v587 = vmul.f32 %v306, %v583
    %v588 = vadd.f32 %v578, %v584
    %v589 = vadd.f32 %v579, %v585
    %v590 = vadd.f32 %v580, %v586
    %v591 = vadd.f32 %v581, %v587
    %s592 = sld [smem:[#allocation4 + $0x86]]
    %v593 = vstv %s592
    %v594 = vmul.f32 %v307, %v593
    %v595 = vmul.f32 %v308, %v593
    %v596 = vmul.f32 %v309, %v593
    %v597 = vmul.f32 %v310, %v593
    %v598 = vadd.f32 %v588, %v594
    %v599 = vadd.f32 %v589, %v595
    %v600 = vadd.f32 %v590, %v596
    %v601 = vadd.f32 %v591, %v597
    %s602 = sld [smem:[#allocation4 + $0x87]]
    %v603 = vstv %s602
    %v604 = vmul.f32 %v311, %v603
    %v605 = vmul.f32 %v312, %v603
    %v606 = vmul.f32 %v313, %v603
    %v607 = vmul.f32 %v314, %v603
    %v608 = vadd.f32 %v598, %v604
    %v609 = vadd.f32 %v599, %v605
    %v610 = vadd.f32 %v600, %v606
    %v611 = vadd.f32 %v601, %v607
    %s612 = sld [smem:[#allocation4 + $0x88]]
    %v613 = vstv %s612
    %v614 = vmul.f32 %v315, %v613
    %v615 = vmul.f32 %v316, %v613
    %v616 = vmul.f32 %v317, %v613
    %v617 = vmul.f32 %v318, %v613
    %v618 = vadd.f32 %v608, %v614
    %v619 = vadd.f32 %v609, %v615
    %v620 = vadd.f32 %v610, %v616
    %v621 = vadd.f32 %v611, %v617
    %s622 = sld [smem:[#allocation6 + $0x1]]
    %v623 = vstv %s622
    %v624 = vadd.f32 %v618, %v623
    %v625 = vadd.f32 %v619, %v623
    %v626 = vadd.f32 %v620, %v623
    %v627 = vadd.f32 %v621, %v623
    %v628 = vmax.f32 %v624, 0.0
    %v629 = vmax.f32 %v625, 0.0
    %v630 = vmax.f32 %v626, 0.0
    %v631 = vmax.f32 %v627, 0.0
    %v636 = vrot.slane %v628, 1
    %v637 = vrot.slane %v629, 1
    %v638 = vsel %vm435, %v636, %v637
    %v639 = vrot.slane %v630, 1
    %v640 = vsel %vm435, %v637, %v639
    %v641 = vrot.slane %v631, 1
    %v642 = vsel %vm435, %v639, %v641
    %v647 = vmax.f32 %v628, %v638
    %v648 = vmax.f32 %v629, %v640
    %v649 = vmax.f32 %v630, %v642
    %v650 = vmax.f32 %v631, %v641
    %655 = vrot.lane.b32.xlu0 %v647, 127
    %v656 = vpop.permute.xlu0 %655
    %657 = vrot.lane.b32.xlu0 %v648, 127
    %v658 = vpop.permute.xlu0 %657
    %659 = vrot.lane.b32.xlu0 %v649, 127
    %v660 = vpop.permute.xlu0 %659
    %661 = vrot.lane.b32.xlu0 %v650, 127
    %v662 = vpop.permute.xlu0 %661
    %v667 = vmax.f32 %v647, %v656
    %v668 = vmax.f32 %v648, %v658
    %v669 = vmax.f32 %v649, %v660
    %v670 = vmax.f32 %v650, %v662
    %671 = vst.msk [vmem:[#allocation3 + $0xf] sm:$0x1] %vm472, %v667
    %673 = vst [vmem:[#allocation1] sm:$0xff] %v667
    %s674 = scalar_lea.vmem [#allocation1], 2
    %v675 = vld [vmem:[%s674] ss:$9 sm:$0xff]
    %677 = vst.msk [vmem:[#allocation3 + $0x10] sm:$0x1] %vm472, %v675
    %678 = vst [vmem:[#allocation1] sm:$0xff] %v667
    %s679 = scalar_lea.vmem [#allocation1], 4
    %v680 = vld [vmem:[%s679] ss:$9 sm:$0xff]
    %682 = vst.msk [vmem:[#allocation3 + $0x11] sm:$0x1] %vm472, %v680
    %683 = vst [vmem:[#allocation1] sm:$0xff] %v667
    %s684 = scalar_lea.vmem [#allocation1], 6
    %v685 = vld [vmem:[%s684] ss:$9 sm:$0xff]
    %687 = vst.msk [vmem:[#allocation3 + $0x12] sm:$0x1] %vm472, %v685
    %688 = vst.msk [vmem:[#allocation3 + $0x13] sm:$0x1] %vm472, %v668
    %690 = vst [vmem:[#allocation1] sm:$0xff] %v668
    %s691 = scalar_lea.vmem [#allocation1], 2
    %v692 = vld [vmem:[%s691] ss:$9 sm:$0xff]
    %694 = vst.msk [vmem:[#allocation3 + $0x14] sm:$0x1] %vm472, %v692
    %695 = vst [vmem:[#allocation1] sm:$0xff] %v668
    %s696 = scalar_lea.vmem [#allocation1], 4
    %v697 = vld [vmem:[%s696] ss:$9 sm:$0xff]
    %699 = vst.msk [vmem:[#allocation3 + $0x15] sm:$0x1] %vm472, %v697
    %700 = vst [vmem:[#allocation1] sm:$0xff] %v668
    %s701 = scalar_lea.vmem [#allocation1], 6
    %v702 = vld [vmem:[%s701] ss:$9 sm:$0xff]
    %704 = vst.msk [vmem:[#allocation3 + $0x16] sm:$0x1] %vm472, %v702
    %705 = vst.msk [vmem:[#allocation3 + $0x17] sm:$0x1] %vm472, %v669
    %707 = vst [vmem:[#allocation1] sm:$0xff] %v669
    %s708 = scalar_lea.vmem [#allocation1], 2
    %v709 = vld [vmem:[%s708] ss:$9 sm:$0xff]
    %711 = vst.msk [vmem:[#allocation3 + $0x18] sm:$0x1] %vm472, %v709
    %712 = vst [vmem:[#allocation1] sm:$0xff] %v669
    %s713 = scalar_lea.vmem [#allocation1], 4
    %v714 = vld [vmem:[%s713] ss:$9 sm:$0xff]
    %716 = vst.msk [vmem:[#allocation3 + $0x19] sm:$0x1] %vm472, %v714
    %717 = vst [vmem:[#allocation1] sm:$0xff] %v669
    %s718 = scalar_lea.vmem [#allocation1], 6
    %v719 = vld [vmem:[%s718] ss:$9 sm:$0xff]
    %721 = vst.msk [vmem:[#allocation3 + $0x1a] sm:$0x1] %vm472, %v719
    %722 = vst.msk [vmem:[#allocation3 + $0x1b] sm:$0x1] %vm472, %v670
    %724 = vst [vmem:[#allocation1] sm:$0xff] %v670
    %s725 = scalar_lea.vmem [#allocation1], 2
    %v726 = vld [vmem:[%s725] ss:$9 sm:$0xff]
    %728 = vst.msk [vmem:[#allocation3 + $0x1c] sm:$0x1] %vm472, %v726
    %729 = vst [vmem:[#allocation1] sm:$0xff] %v670
    %s730 = scalar_lea.vmem [#allocation1], 4
    %v731 = vld [vmem:[%s730] ss:$9 sm:$0xff]
    %733 = vst.msk [vmem:[#allocation3 + $0x1d] sm:$0x1] %vm472, %v731
    %s734 = sld [smem:[#allocation4 + $0x100]]
    %v735 = vstv %s734
    %v736 = vmul.f32 %v283, %v735
    %v737 = vmul.f32 %v284, %v735
    %v738 = vmul.f32 %v285, %v735
    %v739 = vmul.f32 %v286, %v735
    %s740 = sld [smem:[#allocation4 + $0x101]]
    %v741 = vstv %s740
    %v742 = vmul.f32 %v287, %v741
    %v743 = vmul.f32 %v288, %v741
    %v744 = vmul.f32 %v289, %v741
    %v745 = vmul.f32 %v290, %v741
    %v746 = vadd.f32 %v736, %v742
    %v747 = vadd.f32 %v737, %v743
    %v748 = vadd.f32 %v738, %v744
    %v749 = vadd.f32 %v739, %v745
    %s750 = sld [smem:[#allocation4 + $0x102]]
    %v751 = vstv %s750
    %v752 = vmul.f32 %v291, %v751
    %v753 = vmul.f32 %v292, %v751
    %v754 = vmul.f32 %v293, %v751
    %v755 = vmul.f32 %v294, %v751
    %v756 = vadd.f32 %v746, %v752
    %v757 = vadd.f32 %v747, %v753
    %v758 = vadd.f32 %v748, %v754
    %v759 = vadd.f32 %v749, %v755
    %s760 = sld [smem:[#allocation4 + $0x103]]
    %v761 = vstv %s760
    %v762 = vmul.f32 %v295, %v761
    %v763 = vmul.f32 %v296, %v761
    %v764 = vmul.f32 %v297, %v761
    %v765 = vmul.f32 %v298, %v761
    %v766 = vadd.f32 %v756, %v762
    %v767 = vadd.f32 %v757, %v763
    %v768 = vadd.f32 %v758, %v764
    %v769 = vadd.f32 %v759, %v765
    %s770 = sld [smem:[#allocation4 + $0x104]]
    %v771 = vstv %s770
    %v772 = vmul.f32 %v299, %v771
    %v773 = vmul.f32 %v300, %v771
    %v774 = vmul.f32 %v301, %v771
    %v775 = vmul.f32 %v302, %v771
    %v776 = vadd.f32 %v766, %v772
    %v777 = vadd.f32 %v767, %v773
    %v778 = vadd.f32 %v768, %v774
    %v779 = vadd.f32 %v769, %v775
    %s780 = sld [smem:[#allocation4 + $0x105]]
    %v781 = vstv %s780
    %v782 = vmul.f32 %v303, %v781
    %v783 = vmul.f32 %v304, %v781
    %v784 = vmul.f32 %v305, %v781
    %v785 = vmul.f32 %v306, %v781
    %v786 = vadd.f32 %v776, %v782
    %v787 = vadd.f32 %v777, %v783
    %v788 = vadd.f32 %v778, %v784
    %v789 = vadd.f32 %v779, %v785
    %s790 = sld [smem:[#allocation4 + $0x106]]
    %v791 = vstv %s790
    %v792 = vmul.f32 %v307, %v791
    %v793 = vmul.f32 %v308, %v791
    %v794 = vmul.f32 %v309, %v791
    %v795 = vmul.f32 %v310, %v791
    %v796 = vadd.f32 %v786, %v792
    %v797 = vadd.f32 %v787, %v793
    %v798 = vadd.f32 %v788, %v794
    %v799 = vadd.f32 %v789, %v795
    %s800 = sld [smem:[#allocation4 + $0x107]]
    %v801 = vstv %s800
    %v802 = vmul.f32 %v311, %v801
    %v803 = vmul.f32 %v312, %v801
    %v804 = vmul.f32 %v313, %v801
    %v805 = vmul.f32 %v314, %v801
    %v806 = vadd.f32 %v796, %v802
    %v807 = vadd.f32 %v797, %v803
    %v808 = vadd.f32 %v798, %v804
    %v809 = vadd.f32 %v799, %v805
    %s810 = sld [smem:[#allocation4 + $0x108]]
    %v811 = vstv %s810
    %v812 = vmul.f32 %v315, %v811
    %v813 = vmul.f32 %v316, %v811
    %v814 = vmul.f32 %v317, %v811
    %v815 = vmul.f32 %v318, %v811
    %v816 = vadd.f32 %v806, %v812
    %v817 = vadd.f32 %v807, %v813
    %v818 = vadd.f32 %v808, %v814
    %v819 = vadd.f32 %v809, %v815
    %s820 = sld [smem:[#allocation6 + $0x2]]
    %v821 = vstv %s820
    %v822 = vadd.f32 %v816, %v821
    %v823 = vadd.f32 %v817, %v821
    %v824 = vadd.f32 %v818, %v821
    %v825 = vadd.f32 %v819, %v821
    %v826 = vmax.f32 %v822, 0.0
    %v827 = vmax.f32 %v823, 0.0
    %v828 = vmax.f32 %v824, 0.0
    %v829 = vmax.f32 %v825, 0.0
    %v834 = vrot.slane %v826, 1
    %v835 = vrot.slane %v827, 1
    %v836 = vsel %vm435, %v834, %v835
    %v837 = vrot.slane %v828, 1
    %v838 = vsel %vm435, %v835, %v837
    %v839 = vrot.slane %v829, 1
    %v840 = vsel %vm435, %v837, %v839
    %v845 = vmax.f32 %v826, %v836
    %v846 = vmax.f32 %v827, %v838
    %v847 = vmax.f32 %v828, %v840
    %v848 = vmax.f32 %v829, %v839
    %853 = vrot.lane.b32.xlu0 %v845, 127
    %v854 = vpop.permute.xlu0 %853
    %855 = vrot.lane.b32.xlu0 %v846, 127
    %v856 = vpop.permute.xlu0 %855
    %857 = vrot.lane.b32.xlu0 %v847, 127
    %v858 = vpop.permute.xlu0 %857
    %859 = vrot.lane.b32.xlu0 %v848, 127
    %v860 = vpop.permute.xlu0 %859
    %v865 = vmax.f32 %v845, %v854
    %v866 = vmax.f32 %v846, %v856
    %v867 = vmax.f32 %v847, %v858
    %v868 = vmax.f32 %v848, %v860
    %869 = vst.msk [vmem:[#allocation3 + $0x1e] sm:$0x1] %vm472, %v865
    %871 = vst [vmem:[#allocation1] sm:$0xff] %v865
    %s872 = scalar_lea.vmem [#allocation1], 2
    %v873 = vld [vmem:[%s872] ss:$9 sm:$0xff]
    %875 = vst.msk [vmem:[#allocation3 + $0x1f] sm:$0x1] %vm472, %v873
    %876 = vst [vmem:[#allocation1] sm:$0xff] %v865
    %s877 = scalar_lea.vmem [#allocation1], 4
    %v878 = vld [vmem:[%s877] ss:$9 sm:$0xff]
    %880 = vst.msk [vmem:[#allocation3 + $0x20] sm:$0x1] %vm472, %v878
    %881 = vst [vmem:[#allocation1] sm:$0xff] %v865
    %s882 = scalar_lea.vmem [#allocation1], 6
    %v883 = vld [vmem:[%s882] ss:$9 sm:$0xff]
    %885 = vst.msk [vmem:[#allocation3 + $0x21] sm:$0x1] %vm472, %v883
    %886 = vst.msk [vmem:[#allocation3 + $0x22] sm:$0x1] %vm472, %v866
    %888 = vst [vmem:[#allocation1] sm:$0xff] %v866
    %s889 = scalar_lea.vmem [#allocation1], 2
    %v890 = vld [vmem:[%s889] ss:$9 sm:$0xff]
    %892 = vst.msk [vmem:[#allocation3 + $0x23] sm:$0x1] %vm472, %v890
    %893 = vst [vmem:[#allocation1] sm:$0xff] %v866
    %s894 = scalar_lea.vmem [#allocation1], 4
    %v895 = vld [vmem:[%s894] ss:$9 sm:$0xff]
    %897 = vst.msk [vmem:[#allocation3 + $0x24] sm:$0x1] %vm472, %v895
    %898 = vst [vmem:[#allocation1] sm:$0xff] %v866
    %s899 = scalar_lea.vmem [#allocation1], 6
    %v900 = vld [vmem:[%s899] ss:$9 sm:$0xff]
    %902 = vst.msk [vmem:[#allocation3 + $0x25] sm:$0x1] %vm472, %v900
    %903 = vst.msk [vmem:[#allocation3 + $0x26] sm:$0x1] %vm472, %v867
    %905 = vst [vmem:[#allocation1] sm:$0xff] %v867
    %s906 = scalar_lea.vmem [#allocation1], 2
    %v907 = vld [vmem:[%s906] ss:$9 sm:$0xff]
    %909 = vst.msk [vmem:[#allocation3 + $0x27] sm:$0x1] %vm472, %v907
    %910 = vst [vmem:[#allocation1] sm:$0xff] %v867
    %s911 = scalar_lea.vmem [#allocation1], 4
    %v912 = vld [vmem:[%s911] ss:$9 sm:$0xff]
    %914 = vst.msk [vmem:[#allocation3 + $0x28] sm:$0x1] %vm472, %v912
    %915 = vst [vmem:[#allocation1] sm:$0xff] %v867
    %s916 = scalar_lea.vmem [#allocation1], 6
    %v917 = vld [vmem:[%s916] ss:$9 sm:$0xff]
    %919 = vst.msk [vmem:[#allocation3 + $0x29] sm:$0x1] %vm472, %v917
    %920 = vst.msk [vmem:[#allocation3 + $0x2a] sm:$0x1] %vm472, %v868
    %922 = vst [vmem:[#allocation1] sm:$0xff] %v868
    %s923 = scalar_lea.vmem [#allocation1], 2
    %v924 = vld [vmem:[%s923] ss:$9 sm:$0xff]
    %926 = vst.msk [vmem:[#allocation3 + $0x2b] sm:$0x1] %vm472, %v924
    %927 = vst [vmem:[#allocation1] sm:$0xff] %v868
    %s928 = scalar_lea.vmem [#allocation1], 4
    %v929 = vld [vmem:[%s928] ss:$9 sm:$0xff]
    %931 = vst.msk [vmem:[#allocation3 + $0x2c] sm:$0x1] %vm472, %v929
    %s932 = sld [smem:[#allocation4 + $0x180]]
    %v933 = vstv %s932
    %v934 = vmul.f32 %v283, %v933
    %v935 = vmul.f32 %v284, %v933
    %v936 = vmul.f32 %v285, %v933
    %v937 = vmul.f32 %v286, %v933
    %s938 = sld [smem:[#allocation4 + $0x181]]
    %v939 = vstv %s938
    %v940 = vmul.f32 %v287, %v939
    %v941 = vmul.f32 %v288, %v939
    %v942 = vmul.f32 %v289, %v939
    %v943 = vmul.f32 %v290, %v939
    %v944 = vadd.f32 %v934, %v940
    %v945 = vadd.f32 %v935, %v941
    %v946 = vadd.f32 %v936, %v942
    %v947 = vadd.f32 %v937, %v943
    %s948 = sld [smem:[#allocation4 + $0x182]]
    %v949 = vstv %s948
    %v950 = vmul.f32 %v291, %v949
    %v951 = vmul.f32 %v292, %v949
    %v952 = vmul.f32 %v293, %v949
    %v953 = vmul.f32 %v294, %v949
    %v954 = vadd.f32 %v944, %v950
    %v955 = vadd.f32 %v945, %v951
    %v956 = vadd.f32 %v946, %v952
    %v957 = vadd.f32 %v947, %v953
    %s958 = sld [smem:[#allocation4 + $0x183]]
    %v959 = vstv %s958
    %v960 = vmul.f32 %v295, %v959
    %v961 = vmul.f32 %v296, %v959
    %v962 = vmul.f32 %v297, %v959
    %v963 = vmul.f32 %v298, %v959
    %v964 = vadd.f32 %v954, %v960
    %v965 = vadd.f32 %v955, %v961
    %v966 = vadd.f32 %v956, %v962
    %v967 = vadd.f32 %v957, %v963
    %s968 = sld [smem:[#allocation4 + $0x184]]
    %v969 = vstv %s968
    %v970 = vmul.f32 %v299, %v969
    %v971 = vmul.f32 %v300, %v969
    %v972 = vmul.f32 %v301, %v969
    %v973 = vmul.f32 %v302, %v969
    %v974 = vadd.f32 %v964, %v970
    %v975 = vadd.f32 %v965, %v971
    %v976 = vadd.f32 %v966, %v972
    %v977 = vadd.f32 %v967, %v973
    %s978 = sld [smem:[#allocation4 + $0x185]]
    %v979 = vstv %s978
    %v980 = vmul.f32 %v303, %v979
    %v981 = vmul.f32 %v304, %v979
    %v982 = vmul.f32 %v305, %v979
    %v983 = vmul.f32 %v306, %v979
    %v984 = vadd.f32 %v974, %v980
    %v985 = vadd.f32 %v975, %v981
    %v986 = vadd.f32 %v976, %v982
    %v987 = vadd.f32 %v977, %v983
    %s988 = sld [smem:[#allocation4 + $0x186]]
    %v989 = vstv %s988
    %v990 = vmul.f32 %v307, %v989
    %v991 = vmul.f32 %v308, %v989
    %v992 = vmul.f32 %v309, %v989
    %v993 = vmul.f32 %v310, %v989
    %v994 = vadd.f32 %v984, %v990
    %v995 = vadd.f32 %v985, %v991
    %v996 = vadd.f32 %v986, %v992
    %v997 = vadd.f32 %v987, %v993
    %s998 = sld [smem:[#allocation4 + $0x187]]
    %v999 = vstv %s998
    %v1000 = vmul.f32 %v311, %v999
    %v1001 = vmul.f32 %v312, %v999
    %v1002 = vmul.f32 %v313, %v999
    %v1003 = vmul.f32 %v314, %v999
    %v1004 = vadd.f32 %v994, %v1000
    %v1005 = vadd.f32 %v995, %v1001
    %v1006 = vadd.f32 %v996, %v1002
    %v1007 = vadd.f32 %v997, %v1003
    %s1008 = sld [smem:[#allocation4 + $0x188]]
    %v1009 = vstv %s1008
    %v1010 = vmul.f32 %v315, %v1009
    %v1011 = vmul.f32 %v316, %v1009
    %v1012 = vmul.f32 %v317, %v1009
    %v1013 = vmul.f32 %v318, %v1009
    %v1014 = vadd.f32 %v1004, %v1010
    %v1015 = vadd.f32 %v1005, %v1011
    %v1016 = vadd.f32 %v1006, %v1012
    %v1017 = vadd.f32 %v1007, %v1013
    %s1018 = sld [smem:[#allocation6 + $0x3]]
    %v1019 = vstv %s1018
    %v1020 = vadd.f32 %v1014, %v1019
    %v1021 = vadd.f32 %v1015, %v1019
    %v1022 = vadd.f32 %v1016, %v1019
    %v1023 = vadd.f32 %v1017, %v1019
    %v1024 = vmax.f32 %v1020, 0.0
    %v1025 = vmax.f32 %v1021, 0.0
    %v1026 = vmax.f32 %v1022, 0.0
    %v1027 = vmax.f32 %v1023, 0.0
    %v1032 = vrot.slane %v1024, 1
    %v1033 = vrot.slane %v1025, 1
    %v1034 = vsel %vm435, %v1032, %v1033
    %v1035 = vrot.slane %v1026, 1
    %v1036 = vsel %vm435, %v1033, %v1035
    %v1037 = vrot.slane %v1027, 1
    %v1038 = vsel %vm435, %v1035, %v1037
    %v1043 = vmax.f32 %v1024, %v1034
    %v1044 = vmax.f32 %v1025, %v1036
    %v1045 = vmax.f32 %v1026, %v1038
    %v1046 = vmax.f32 %v1027, %v1037
    %1051 = vrot.lane.b32.xlu0 %v1043, 127
    %v1052 = vpop.permute.xlu0 %1051
    %1053 = vrot.lane.b32.xlu0 %v1044, 127
    %v1054 = vpop.permute.xlu0 %1053
    %1055 = vrot.lane.b32.xlu0 %v1045, 127
    %v1056 = vpop.permute.xlu0 %1055
    %1057 = vrot.lane.b32.xlu0 %v1046, 127
    %v1058 = vpop.permute.xlu0 %1057
    %v1063 = vmax.f32 %v1043, %v1052
    %v1064 = vmax.f32 %v1044, %v1054
    %v1065 = vmax.f32 %v1045, %v1056
    %v1066 = vmax.f32 %v1046, %v1058
    %1067 = vst.msk [vmem:[#allocation3 + $0x2d] sm:$0x1] %vm472, %v1063
    %1069 = vst [vmem:[#allocation1] sm:$0xff] %v1063
    %s1070 = scalar_lea.vmem [#allocation1], 2
    %v1071 = vld [vmem:[%s1070] ss:$9 sm:$0xff]
    %1073 = vst.msk [vmem:[#allocation3 + $0x2e] sm:$0x1] %vm472, %v1071
    %1074 = vst [vmem:[#allocation1] sm:$0xff] %v1063
    %s1075 = scalar_lea.vmem [#allocation1], 4
    %v1076 = vld [vmem:[%s1075] ss:$9 sm:$0xff]
    %1078 = vst.msk [vmem:[#allocation3 + $0x2f] sm:$0x1] %vm472, %v1076
    %1079 = vst [vmem:[#allocation1] sm:$0xff] %v1063
    %s1080 = scalar_lea.vmem [#allocation1], 6
    %v1081 = vld [vmem:[%s1080] ss:$9 sm:$0xff]
    %1083 = vst.msk [vmem:[#allocation3 + $0x30] sm:$0x1] %vm472, %v1081
    %1084 = vst.msk [vmem:[#allocation3 + $0x31] sm:$0x1] %vm472, %v1064
    %1086 = vst [vmem:[#allocation1] sm:$0xff] %v1064
    %s1087 = scalar_lea.vmem [#allocation1], 2
    %v1088 = vld [vmem:[%s1087] ss:$9 sm:$0xff]
    %1090 = vst.msk [vmem:[#allocation3 + $0x32] sm:$0x1] %vm472, %v1088
    %1091 = vst [vmem:[#allocation1] sm:$0xff] %v1064
    %s1092 = scalar_lea.vmem [#allocation1], 4
    %v1093 = vld [vmem:[%s1092] ss:$9 sm:$0xff]
    %1095 = vst.msk [vmem:[#allocation3 + $0x33] sm:$0x1] %vm472, %v1093
    %1096 = vst [vmem:[#allocation1] sm:$0xff] %v1064
    %s1097 = scalar_lea.vmem [#allocation1], 6
    %v1098 = vld [vmem:[%s1097] ss:$9 sm:$0xff]
    %1100 = vst.msk [vmem:[#allocation3 + $0x34] sm:$0x1] %vm472, %v1098
    %1101 = vst.msk [vmem:[#allocation3 + $0x35] sm:$0x1] %vm472, %v1065
    %1103 = vst [vmem:[#allocation1] sm:$0xff] %v1065
    %s1104 = scalar_lea.vmem [#allocation1], 2
    %v1105 = vld [vmem:[%s1104] ss:$9 sm:$0xff]
    %1107 = vst.msk [vmem:[#allocation3 + $0x36] sm:$0x1] %vm472, %v1105
    %1108 = vst [vmem:[#allocation1] sm:$0xff] %v1065
    %s1109 = scalar_lea.vmem [#allocation1], 4
    %v1110 = vld [vmem:[%s1109] ss:$9 sm:$0xff]
    %1112 = vst.msk [vmem:[#allocation3 + $0x37] sm:$0x1] %vm472, %v1110
    %1113 = vst [vmem:[#allocation1] sm:$0xff] %v1065
    %s1114 = scalar_lea.vmem [#allocation1], 6
    %v1115 = vld [vmem:[%s1114] ss:$9 sm:$0xff]
    %1117 = vst.msk [vmem:[#allocation3 + $0x38] sm:$0x1] %vm472, %v1115
    %1118 = vst.msk [vmem:[#allocation3 + $0x39] sm:$0x1] %vm472, %v1066
    %1120 = vst [vmem:[#allocation1] sm:$0xff] %v1066
    %s1121 = scalar_lea.vmem [#allocation1], 2
    %v1122 = vld [vmem:[%s1121] ss:$9 sm:$0xff]
    %1124 = vst.msk [vmem:[#allocation3 + $0x3a] sm:$0x1] %vm472, %v1122
    %1125 = vst [vmem:[#allocation1] sm:$0xff] %v1066
    %s1126 = scalar_lea.vmem [#allocation1], 4
    %v1127 = vld [vmem:[%s1126] ss:$9 sm:$0xff]
    %1129 = vst.msk [vmem:[#allocation3 + $0x3b] sm:$0x1] %vm472, %v1127
    %s1130 = sld [smem:[#allocation4 + $0x200]]
    %v1131 = vstv %s1130
    %v1132 = vmul.f32 %v283, %v1131
    %v1133 = vmul.f32 %v284, %v1131
    %v1134 = vmul.f32 %v285, %v1131
    %v1135 = vmul.f32 %v286, %v1131
    %s1136 = sld [smem:[#allocation4 + $0x201]]
    %v1137 = vstv %s1136
    %v1138 = vmul.f32 %v287, %v1137
    %v1139 = vmul.f32 %v288, %v1137
    %v1140 = vmul.f32 %v289, %v1137
    %v1141 = vmul.f32 %v290, %v1137
    %v1142 = vadd.f32 %v1132, %v1138
    %v1143 = vadd.f32 %v1133, %v1139
    %v1144 = vadd.f32 %v1134, %v1140
    %v1145 = vadd.f32 %v1135, %v1141
    %s1146 = sld [smem:[#allocation4 + $0x202]]
    %v1147 = vstv %s1146
    %v1148 = vmul.f32 %v291, %v1147
    %v1149 = vmul.f32 %v292, %v1147
    %v1150 = vmul.f32 %v293, %v1147
    %v1151 = vmul.f32 %v294, %v1147
    %v1152 = vadd.f32 %v1142, %v1148
    %v1153 = vadd.f32 %v1143, %v1149
    %v1154 = vadd.f32 %v1144, %v1150
    %v1155 = vadd.f32 %v1145, %v1151
    %s1156 = sld [smem:[#allocation4 + $0x203]]
    %v1157 = vstv %s1156
    %v1158 = vmul.f32 %v295, %v1157
    %v1159 = vmul.f32 %v296, %v1157
    %v1160 = vmul.f32 %v297, %v1157
    %v1161 = vmul.f32 %v298, %v1157
    %v1162 = vadd.f32 %v1152, %v1158
    %v1163 = vadd.f32 %v1153, %v1159
    %v1164 = vadd.f32 %v1154, %v1160
    %v1165 = vadd.f32 %v1155, %v1161
    %s1166 = sld [smem:[#allocation4 + $0x204]]
    %v1167 = vstv %s1166
    %v1168 = vmul.f32 %v299, %v1167
    %v1169 = vmul.f32 %v300, %v1167
    %v1170 = vmul.f32 %v301, %v1167
    %v1171 = vmul.f32 %v302, %v1167
    %v1172 = vadd.f32 %v1162, %v1168
    %v1173 = vadd.f32 %v1163, %v1169
    %v1174 = vadd.f32 %v1164, %v1170
    %v1175 = vadd.f32 %v1165, %v1171
    %s1176 = sld [smem:[#allocation4 + $0x205]]
    %v1177 = vstv %s1176
    %v1178 = vmul.f32 %v303, %v1177
    %v1179 = vmul.f32 %v304, %v1177
    %v1180 = vmul.f32 %v305, %v1177
    %v1181 = vmul.f32 %v306, %v1177
    %v1182 = vadd.f32 %v1172, %v1178
    %v1183 = vadd.f32 %v1173, %v1179
    %v1184 = vadd.f32 %v1174, %v1180
    %v1185 = vadd.f32 %v1175, %v1181
    %s1186 = sld [smem:[#allocation4 + $0x206]]
    %v1187 = vstv %s1186
    %v1188 = vmul.f32 %v307, %v1187
    %v1189 = vmul.f32 %v308, %v1187
    %v1190 = vmul.f32 %v309, %v1187
    %v1191 = vmul.f32 %v310, %v1187
    %v1192 = vadd.f32 %v1182, %v1188
    %v1193 = vadd.f32 %v1183, %v1189
    %v1194 = vadd.f32 %v1184, %v1190
    %v1195 = vadd.f32 %v1185, %v1191
    %s1196 = sld [smem:[#allocation4 + $0x207]]
    %v1197 = vstv %s1196
    %v1198 = vmul.f32 %v311, %v1197
    %v1199 = vmul.f32 %v312, %v1197
    %v1200 = vmul.f32 %v313, %v1197
    %v1201 = vmul.f32 %v314, %v1197
    %v1202 = vadd.f32 %v1192, %v1198
    %v1203 = vadd.f32 %v1193, %v1199
    %v1204 = vadd.f32 %v1194, %v1200
    %v1205 = vadd.f32 %v1195, %v1201
    %s1206 = sld [smem:[#allocation4 + $0x208]]
    %v1207 = vstv %s1206
    %v1208 = vmul.f32 %v315, %v1207
    %v1209 = vmul.f32 %v316, %v1207
    %v1210 = vmul.f32 %v317, %v1207
    %v1211 = vmul.f32 %v318, %v1207
    %v1212 = vadd.f32 %v1202, %v1208
    %v1213 = vadd.f32 %v1203, %v1209
    %v1214 = vadd.f32 %v1204, %v1210
    %v1215 = vadd.f32 %v1205, %v1211
    %s1216 = sld [smem:[#allocation6 + $0x4]]
    %v1217 = vstv %s1216
    %v1218 = vadd.f32 %v1212, %v1217
    %v1219 = vadd.f32 %v1213, %v1217
    %v1220 = vadd.f32 %v1214, %v1217
    %v1221 = vadd.f32 %v1215, %v1217
    %v1222 = vmax.f32 %v1218, 0.0
    %v1223 = vmax.f32 %v1219, 0.0
    %v1224 = vmax.f32 %v1220, 0.0
    %v1225 = vmax.f32 %v1221, 0.0
    %v1230 = vrot.slane %v1222, 1
    %v1231 = vrot.slane %v1223, 1
    %v1232 = vsel %vm435, %v1230, %v1231
    %v1233 = vrot.slane %v1224, 1
    %v1234 = vsel %vm435, %v1231, %v1233
    %v1235 = vrot.slane %v1225, 1
    %v1236 = vsel %vm435, %v1233, %v1235
    %v1241 = vmax.f32 %v1222, %v1232
    %v1242 = vmax.f32 %v1223, %v1234
    %v1243 = vmax.f32 %v1224, %v1236
    %v1244 = vmax.f32 %v1225, %v1235
    %1249 = vrot.lane.b32.xlu0 %v1241, 127
    %v1250 = vpop.permute.xlu0 %1249
    %1251 = vrot.lane.b32.xlu0 %v1242, 127
    %v1252 = vpop.permute.xlu0 %1251
    %1253 = vrot.lane.b32.xlu0 %v1243, 127
    %v1254 = vpop.permute.xlu0 %1253
    %1255 = vrot.lane.b32.xlu0 %v1244, 127
    %v1256 = vpop.permute.xlu0 %1255
    %v1261 = vmax.f32 %v1241, %v1250
    %v1262 = vmax.f32 %v1242, %v1252
    %v1263 = vmax.f32 %v1243, %v1254
    %v1264 = vmax.f32 %v1244, %v1256
    %1265 = vst.msk [vmem:[#allocation3 + $0x3c] sm:$0x1] %vm472, %v1261
    %1267 = vst [vmem:[#allocation1] sm:$0xff] %v1261
    %s1268 = scalar_lea.vmem [#allocation1], 2
    %v1269 = vld [vmem:[%s1268] ss:$9 sm:$0xff]
    %1271 = vst.msk [vmem:[#allocation3 + $0x3d] sm:$0x1] %vm472, %v1269
    %1272 = vst [vmem:[#allocation1] sm:$0xff] %v1261
    %s1273 = scalar_lea.vmem [#allocation1], 4
    %v1274 = vld [vmem:[%s1273] ss:$9 sm:$0xff]
    %1276 = vst.msk [vmem:[#allocation3 + $0x3e] sm:$0x1] %vm472, %v1274
    %1277 = vst [vmem:[#allocation1] sm:$0xff] %v1261
    %s1278 = scalar_lea.vmem [#allocation1], 6
    %v1279 = vld [vmem:[%s1278] ss:$9 sm:$0xff]
    %1281 = vst.msk [vmem:[#allocation3 + $0x3f] sm:$0x1] %vm472, %v1279
    %1282 = vst.msk [vmem:[#allocation3 + $0x40] sm:$0x1] %vm472, %v1262
    %1284 = vst [vmem:[#allocation1] sm:$0xff] %v1262
    %s1285 = scalar_lea.vmem [#allocation1], 2
    %v1286 = vld [vmem:[%s1285] ss:$9 sm:$0xff]
    %1288 = vst.msk [vmem:[#allocation3 + $0x41] sm:$0x1] %vm472, %v1286
    %1289 = vst [vmem:[#allocation1] sm:$0xff] %v1262
    %s1290 = scalar_lea.vmem [#allocation1], 4
    %v1291 = vld [vmem:[%s1290] ss:$9 sm:$0xff]
    %1293 = vst.msk [vmem:[#allocation3 + $0x42] sm:$0x1] %vm472, %v1291
    %1294 = vst [vmem:[#allocation1] sm:$0xff] %v1262
    %s1295 = scalar_lea.vmem [#allocation1], 6
    %v1296 = vld [vmem:[%s1295] ss:$9 sm:$0xff]
    %1298 = vst.msk [vmem:[#allocation3 + $0x43] sm:$0x1] %vm472, %v1296
    %1299 = vst.msk [vmem:[#allocation3 + $0x44] sm:$0x1] %vm472, %v1263
    %1301 = vst [vmem:[#allocation1] sm:$0xff] %v1263
    %s1302 = scalar_lea.vmem [#allocation1], 2
    %v1303 = vld [vmem:[%s1302] ss:$9 sm:$0xff]
    %1305 = vst.msk [vmem:[#allocation3 + $0x45] sm:$0x1] %vm472, %v1303
    %1306 = vst [vmem:[#allocation1] sm:$0xff] %v1263
    %s1307 = scalar_lea.vmem [#allocation1], 4
    %v1308 = vld [vmem:[%s1307] ss:$9 sm:$0xff]
    %1310 = vst.msk [vmem:[#allocation3 + $0x46] sm:$0x1] %vm472, %v1308
    %1311 = vst [vmem:[#allocation1] sm:$0xff] %v1263
    %s1312 = scalar_lea.vmem [#allocation1], 6
    %v1313 = vld [vmem:[%s1312] ss:$9 sm:$0xff]
    %1315 = vst.msk [vmem:[#allocation3 + $0x47] sm:$0x1] %vm472, %v1313
    %1316 = vst.msk [vmem:[#allocation3 + $0x48] sm:$0x1] %vm472, %v1264
    %1318 = vst [vmem:[#allocation1] sm:$0xff] %v1264
    %s1319 = scalar_lea.vmem [#allocation1], 2
    %v1320 = vld [vmem:[%s1319] ss:$9 sm:$0xff]
    %1322 = vst.msk [vmem:[#allocation3 + $0x49] sm:$0x1] %vm472, %v1320
    %1323 = vst [vmem:[#allocation1] sm:$0xff] %v1264
    %s1324 = scalar_lea.vmem [#allocation1], 4
    %v1325 = vld [vmem:[%s1324] ss:$9 sm:$0xff]
    %1327 = vst.msk [vmem:[#allocation3 + $0x4a] sm:$0x1] %vm472, %v1325
    %s1328 = sld [smem:[#allocation4 + $0x280]]
    %v1329 = vstv %s1328
    %v1330 = vmul.f32 %v283, %v1329
    %v1331 = vmul.f32 %v284, %v1329
    %v1332 = vmul.f32 %v285, %v1329
    %v1333 = vmul.f32 %v286, %v1329
    %s1334 = sld [smem:[#allocation4 + $0x281]]
    %v1335 = vstv %s1334
    %v1336 = vmul.f32 %v287, %v1335
    %v1337 = vmul.f32 %v288, %v1335
    %v1338 = vmul.f32 %v289, %v1335
    %v1339 = vmul.f32 %v290, %v1335
    %v1340 = vadd.f32 %v1330, %v1336
    %v1341 = vadd.f32 %v1331, %v1337
    %v1342 = vadd.f32 %v1332, %v1338
    %v1343 = vadd.f32 %v1333, %v1339
    %s1344 = sld [smem:[#allocation4 + $0x282]]
    %v1345 = vstv %s1344
    %v1346 = vmul.f32 %v291, %v1345
    %v1347 = vmul.f32 %v292, %v1345
    %v1348 = vmul.f32 %v293, %v1345
    %v1349 = vmul.f32 %v294, %v1345
    %v1350 = vadd.f32 %v1340, %v1346
    %v1351 = vadd.f32 %v1341, %v1347
    %v1352 = vadd.f32 %v1342, %v1348
    %v1353 = vadd.f32 %v1343, %v1349
    %s1354 = sld [smem:[#allocation4 + $0x283]]
    %v1355 = vstv %s1354
    %v1356 = vmul.f32 %v295, %v1355
    %v1357 = vmul.f32 %v296, %v1355
    %v1358 = vmul.f32 %v297, %v1355
    %v1359 = vmul.f32 %v298, %v1355
    %v1360 = vadd.f32 %v1350, %v1356
    %v1361 = vadd.f32 %v1351, %v1357
    %v1362 = vadd.f32 %v1352, %v1358
    %v1363 = vadd.f32 %v1353, %v1359
    %s1364 = sld [smem:[#allocation4 + $0x284]]
    %v1365 = vstv %s1364
    %v1366 = vmul.f32 %v299, %v1365
    %v1367 = vmul.f32 %v300, %v1365
    %v1368 = vmul.f32 %v301, %v1365
    %v1369 = vmul.f32 %v302, %v1365
    %v1370 = vadd.f32 %v1360, %v1366
    %v1371 = vadd.f32 %v1361, %v1367
    %v1372 = vadd.f32 %v1362, %v1368
    %v1373 = vadd.f32 %v1363, %v1369
    %s1374 = sld [smem:[#allocation4 + $0x285]]
    %v1375 = vstv %s1374
    %v1376 = vmul.f32 %v303, %v1375
    %v1377 = vmul.f32 %v304, %v1375
    %v1378 = vmul.f32 %v305, %v1375
    %v1379 = vmul.f32 %v306, %v1375
    %v1380 = vadd.f32 %v1370, %v1376
    %v1381 = vadd.f32 %v1371, %v1377
    %v1382 = vadd.f32 %v1372, %v1378
    %v1383 = vadd.f32 %v1373, %v1379
    %s1384 = sld [smem:[#allocation4 + $0x286]]
    %v1385 = vstv %s1384
    %v1386 = vmul.f32 %v307, %v1385
    %v1387 = vmul.f32 %v308, %v1385
    %v1388 = vmul.f32 %v309, %v1385
    %v1389 = vmul.f32 %v310, %v1385
    %v1390 = vadd.f32 %v1380, %v1386
    %v1391 = vadd.f32 %v1381, %v1387
    %v1392 = vadd.f32 %v1382, %v1388
    %v1393 = vadd.f32 %v1383, %v1389
    %s1394 = sld [smem:[#allocation4 + $0x287]]
    %v1395 = vstv %s1394
    %v1396 = vmul.f32 %v311, %v1395
    %v1397 = vmul.f32 %v312, %v1395
    %v1398 = vmul.f32 %v313, %v1395
    %v1399 = vmul.f32 %v314, %v1395
    %v1400 = vadd.f32 %v1390, %v1396
    %v1401 = vadd.f32 %v1391, %v1397
    %v1402 = vadd.f32 %v1392, %v1398
    %v1403 = vadd.f32 %v1393, %v1399
    %s1404 = sld [smem:[#allocation4 + $0x288]]
    %v1405 = vstv %s1404
    %v1406 = vmul.f32 %v315, %v1405
    %v1407 = vmul.f32 %v316, %v1405
    %v1408 = vmul.f32 %v317, %v1405
    %v1409 = vmul.f32 %v318, %v1405
    %v1410 = vadd.f32 %v1400, %v1406
    %v1411 = vadd.f32 %v1401, %v1407
    %v1412 = vadd.f32 %v1402, %v1408
    %v1413 = vadd.f32 %v1403, %v1409
    %s1414 = sld [smem:[#allocation6 + $0x5]]
    %v1415 = vstv %s1414
    %v1416 = vadd.f32 %v1410, %v1415
    %v1417 = vadd.f32 %v1411, %v1415
    %v1418 = vadd.f32 %v1412, %v1415
    %v1419 = vadd.f32 %v1413, %v1415
    %v1420 = vmax.f32 %v1416, 0.0
    %v1421 = vmax.f32 %v1417, 0.0
    %v1422 = vmax.f32 %v1418, 0.0
    %v1423 = vmax.f32 %v1419, 0.0
    %v1428 = vrot.slane %v1420, 1
    %v1429 = vrot.slane %v1421, 1
    %v1430 = vsel %vm435, %v1428, %v1429
    %v1431 = vrot.slane %v1422, 1
    %v1432 = vsel %vm435, %v1429, %v1431
    %v1433 = vrot.slane %v1423, 1
    %v1434 = vsel %vm435, %v1431, %v1433
    %v1439 = vmax.f32 %v1420, %v1430
    %v1440 = vmax.f32 %v1421, %v1432
    %v1441 = vmax.f32 %v1422, %v1434
    %v1442 = vmax.f32 %v1423, %v1433
    %1447 = vrot.lane.b32.xlu0 %v1439, 127
    %v1448 = vpop.permute.xlu0 %1447
    %1449 = vrot.lane.b32.xlu0 %v1440, 127
    %v1450 = vpop.permute.xlu0 %1449
    %1451 = vrot.lane.b32.xlu0 %v1441, 127
    %v1452 = vpop.permute.xlu0 %1451
    %1453 = vrot.lane.b32.xlu0 %v1442, 127
    %v1454 = vpop.permute.xlu0 %1453
    %v1459 = vmax.f32 %v1439, %v1448
    %v1460 = vmax.f32 %v1440, %v1450
    %v1461 = vmax.f32 %v1441, %v1452
    %v1462 = vmax.f32 %v1442, %v1454
    %1463 = vst.msk [vmem:[#allocation3 + $0x4b] sm:$0x1] %vm472, %v1459
    %1465 = vst [vmem:[#allocation1] sm:$0xff] %v1459
    %s1466 = scalar_lea.vmem [#allocation1], 2
    %v1467 = vld [vmem:[%s1466] ss:$9 sm:$0xff]
    %1469 = vst.msk [vmem:[#allocation3 + $0x4c] sm:$0x1] %vm472, %v1467
    %1470 = vst [vmem:[#allocation1] sm:$0xff] %v1459
    %s1471 = scalar_lea.vmem [#allocation1], 4
    %v1472 = vld [vmem:[%s1471] ss:$9 sm:$0xff]
    %1474 = vst.msk [vmem:[#allocation3 + $0x4d] sm:$0x1] %vm472, %v1472
    %1475 = vst [vmem:[#allocation1] sm:$0xff] %v1459
    %s1476 = scalar_lea.vmem [#allocation1], 6
    %v1477 = vld [vmem:[%s1476] ss:$9 sm:$0xff]
    %1479 = vst.msk [vmem:[#allocation3 + $0x4e] sm:$0x1] %vm472, %v1477
    %1480 = vst.msk [vmem:[#allocation3 + $0x4f] sm:$0x1] %vm472, %v1460
    %1482 = vst [vmem:[#allocation1] sm:$0xff] %v1460
    %s1483 = scalar_lea.vmem [#allocation1], 2
    %v1484 = vld [vmem:[%s1483] ss:$9 sm:$0xff]
    %1486 = vst.msk [vmem:[#allocation3 + $0x50] sm:$0x1] %vm472, %v1484
    %1487 = vst [vmem:[#allocation1] sm:$0xff] %v1460
    %s1488 = scalar_lea.vmem [#allocation1], 4
    %v1489 = vld [vmem:[%s1488] ss:$9 sm:$0xff]
    %1491 = vst.msk [vmem:[#allocation3 + $0x51] sm:$0x1] %vm472, %v1489
    %1492 = vst [vmem:[#allocation1] sm:$0xff] %v1460
    %s1493 = scalar_lea.vmem [#allocation1], 6
    %v1494 = vld [vmem:[%s1493] ss:$9 sm:$0xff]
    %1496 = vst.msk [vmem:[#allocation3 + $0x52] sm:$0x1] %vm472, %v1494
    %1497 = vst.msk [vmem:[#allocation3 + $0x53] sm:$0x1] %vm472, %v1461
    %1499 = vst [vmem:[#allocation1] sm:$0xff] %v1461
    %s1500 = scalar_lea.vmem [#allocation1], 2
    %v1501 = vld [vmem:[%s1500] ss:$9 sm:$0xff]
    %1503 = vst.msk [vmem:[#allocation3 + $0x54] sm:$0x1] %vm472, %v1501
    %1504 = vst [vmem:[#allocation1] sm:$0xff] %v1461
    %s1505 = scalar_lea.vmem [#allocation1], 4
    %v1506 = vld [vmem:[%s1505] ss:$9 sm:$0xff]
    %1508 = vst.msk [vmem:[#allocation3 + $0x55] sm:$0x1] %vm472, %v1506
    %1509 = vst [vmem:[#allocation1] sm:$0xff] %v1461
    %s1510 = scalar_lea.vmem [#allocation1], 6
    %v1511 = vld [vmem:[%s1510] ss:$9 sm:$0xff]
    %1513 = vst.msk [vmem:[#allocation3 + $0x56] sm:$0x1] %vm472, %v1511
    %1514 = vst.msk [vmem:[#allocation3 + $0x57] sm:$0x1] %vm472, %v1462
    %1516 = vst [vmem:[#allocation1] sm:$0xff] %v1462
    %s1517 = scalar_lea.vmem [#allocation1], 2
    %v1518 = vld [vmem:[%s1517] ss:$9 sm:$0xff]
    %1520 = vst.msk [vmem:[#allocation3 + $0x58] sm:$0x1] %vm472, %v1518
    %1521 = vst [vmem:[#allocation1] sm:$0xff] %v1462
    %s1522 = scalar_lea.vmem [#allocation1], 4
    %v1523 = vld [vmem:[%s1522] ss:$9 sm:$0xff]
    %1525 = vst.msk [vmem:[#allocation3 + $0x59] sm:$0x1] %vm472, %v1523
    %v1526 = vld [vmem:[#allocation3] sm:$0xff]
    %v1527 = vld [vmem:[#allocation3 + $0x8] sm:$0xff]
    %v1528 = vld [vmem:[#allocation3 + $0x10] sm:$0xff]
    %v1529 = vld [vmem:[#allocation3 + $0x18] sm:$0xff]
    %v1530 = vld [vmem:[#allocation3 + $0x20] sm:$0xff]
    %v1531 = vld [vmem:[#allocation3 + $0x28] sm:$0xff]
    %v1532 = vld [vmem:[#allocation3 + $0x30] sm:$0xff]
    %v1533 = vld [vmem:[#allocation3 + $0x38] sm:$0xff]
    %v1534 = vld [vmem:[#allocation3 + $0x40] sm:$0xff]
    %v1535 = vld [vmem:[#allocation3 + $0x48] sm:$0xff]
    %v1536 = vld [vmem:[#allocation3 + $0x50] sm:$0xff]
    %v1537 = vld [vmem:[#allocation3 + $0x58] sm:$0x3]
    %v1538 = vld [vmem:[%s3] sm:$0xff]
    %v1539 = vld [vmem:[%s3 + $0x8] sm:$0xff]
    %v1540 = vld [vmem:[%s3 + $0x10] sm:$0xff]
    %v1541 = vld [vmem:[%s3 + $0x18] sm:$0xff]
    %v1542 = vld [vmem:[%s3 + $0x20] sm:$0xff]
    %v1543 = vld [vmem:[%s3 + $0x28] sm:$0xff]
    %v1544 = vld [vmem:[%s3 + $0x30] sm:$0xff]
    %v1545 = vld [vmem:[%s3 + $0x38] sm:$0xff]
    %v1546 = vld [vmem:[%s3 + $0x40] sm:$0xff]
    %v1547 = vld [vmem:[%s3 + $0x48] sm:$0xff]
    %v1548 = vld [vmem:[%s3 + $0x50] sm:$0xff]
    %v1549 = vld [vmem:[%s3 + $0x58] sm:$0xff]
    %v1550 = vld [vmem:[%s3 + $0x60] sm:$0xff]
    %v1551 = vld [vmem:[%s3 + $0x68] sm:$0xff]
    %v1552 = vld [vmem:[%s3 + $0x70] sm:$0xff]
    %v1553 = vld [vmem:[%s3 + $0x78] sm:$0xff]
    %v1554 = vld [vmem:[%s3 + $0x80] sm:$0xff]
    %v1555 = vld [vmem:[%s3 + $0x88] sm:$0xff]
    %v1556 = vld [vmem:[%s3 + $0x90] sm:$0xff]
    %v1557 = vld [vmem:[%s3 + $0x98] sm:$0xff]
    %v1558 = vld [vmem:[%s3 + $0xa0] sm:$0xff]
    %v1559 = vld [vmem:[%s3 + $0xa8] sm:$0xff]
    %v1560 = vld [vmem:[%s3 + $0xb0] sm:$0xff]
    %v1561 = vld [vmem:[%s3 + $0xb8] sm:$0xff]
    %v1562 = vld [vmem:[%s3 + $0xc0] sm:$0xff]
    %v1563 = vld [vmem:[%s3 + $0xc8] sm:$0xff]
    %v1564 = vld [vmem:[%s3 + $0xd0] sm:$0xff]
    %v1565 = vld [vmem:[%s3 + $0xd8] sm:$0xff]
    %v1566 = vld [vmem:[%s3 + $0xe0] sm:$0xff]
    %v1567 = vld [vmem:[%s3 + $0xe8] sm:$0xff]
    %v1568 = vld [vmem:[%s3 + $0xf0] sm:$0xff]
    %v1569 = vld [vmem:[%s3 + $0xf8] sm:$0xff]
    %v1570 = vld [vmem:[%s3 + $0x100] sm:$0xff]
    %v1571 = vld [vmem:[%s3 + $0x108] sm:$0xff]
    %v1572 = vld [vmem:[%s3 + $0x110] sm:$0xff]
    %v1573 = vld [vmem:[%s3 + $0x118] sm:$0xff]
    %v1574 = vld [vmem:[%s3 + $0x120] sm:$0xff]
    %v1575 = vld [vmem:[%s3 + $0x128] sm:$0xff]
    %v1576 = vld [vmem:[%s3 + $0x130] sm:$0xff]
    %v1577 = vld [vmem:[%s3 + $0x138] sm:$0xff]
    %v1578 = vld [vmem:[%s3 + $0x140] sm:$0xff]
    %v1579 = vld [vmem:[%s3 + $0x148] sm:$0xff]
    %v1580 = vld [vmem:[%s3 + $0x150] sm:$0xff]
    %v1581 = vld [vmem:[%s3 + $0x158] sm:$0xff]
    %v1582 = vld [vmem:[%s3 + $0x160] sm:$0xff]
    %v1583 = vld [vmem:[%s3 + $0x168] sm:$0xff]
    %v1584 = vld [vmem:[%s3 + $0x170] sm:$0xff]
    %v1585 = vld [vmem:[%s3 + $0x178] sm:$0xff]
    %v1586 = vld [vmem:[%s3 + $0x180] sm:$0xff]
    %v1587 = vld [vmem:[%s3 + $0x188] sm:$0xff]
    %v1588 = vld [vmem:[%s3 + $0x190] sm:$0xff]
    %v1589 = vld [vmem:[%s3 + $0x198] sm:$0xff]
    %v1590 = vld [vmem:[%s3 + $0x1a0] sm:$0xff]
    %v1591 = vld [vmem:[%s3 + $0x1a8] sm:$0xff]
    %v1592 = vld [vmem:[%s3 + $0x1b0] sm:$0xff]
    %v1593 = vld [vmem:[%s3 + $0x1b8] sm:$0xff]
    %v1594 = vld [vmem:[%s3 + $0x1c0] sm:$0xff]
    %v1595 = vld [vmem:[%s3 + $0x1c8] sm:$0xff]
    %v1596 = vld [vmem:[%s3 + $0x1d0] sm:$0xff]
    %v1597 = vld [vmem:[%s3 + $0x1d8] sm:$0xff]
    %v1598 = vld [vmem:[%s3 + $0x1e0] sm:$0xff]
    %v1599 = vld [vmem:[%s3 + $0x1e8] sm:$0xff]
    %v1600 = vld [vmem:[%s3 + $0x1f0] sm:$0xff]
    %v1601 = vld [vmem:[%s3 + $0x1f8] sm:$0xff]
    %v1602 = vld [vmem:[%s3 + $0x200] sm:$0xff]
    %v1603 = vld [vmem:[%s3 + $0x208] sm:$0xff]
    %v1604 = vld [vmem:[%s3 + $0x210] sm:$0xff]
    %v1605 = vld [vmem:[%s3 + $0x218] sm:$0xff]
    %v1606 = vld [vmem:[%s3 + $0x220] sm:$0xff]
    %v1607 = vld [vmem:[%s3 + $0x228] sm:$0xff]
    %v1608 = vld [vmem:[%s3 + $0x230] sm:$0xff]
    %v1609 = vld [vmem:[%s3 + $0x238] sm:$0xff]
    %v1610 = vld [vmem:[%s3 + $0x240] sm:$0xff]
    %v1611 = vld [vmem:[%s3 + $0x248] sm:$0xff]
    %v1612 = vld [vmem:[%s3 + $0x250] sm:$0xff]
    %v1613 = vld [vmem:[%s3 + $0x258] sm:$0xff]
    %v1614 = vld [vmem:[%s3 + $0x260] sm:$0xff]
    %v1615 = vld [vmem:[%s3 + $0x268] sm:$0xff]
    %v1616 = vld [vmem:[%s3 + $0x270] sm:$0xff]
    %v1617 = vld [vmem:[%s3 + $0x278] sm:$0xff]
    %v1618 = vld [vmem:[%s3 + $0x280] sm:$0xff]
    %v1619 = vld [vmem:[%s3 + $0x288] sm:$0xff]
    %v1620 = vld [vmem:[%s3 + $0x290] sm:$0xff]
    %v1621 = vld [vmem:[%s3 + $0x298] sm:$0xff]
    %v1622 = vld [vmem:[%s3 + $0x2a0] sm:$0xff]
    %v1623 = vld [vmem:[%s3 + $0x2a8] sm:$0xff]
    %v1624 = vld [vmem:[%s3 + $0x2b0] sm:$0xff]
    %v1625 = vld [vmem:[%s3 + $0x2b8] sm:$0xff]
    %v1626 = vld [vmem:[%s3 + $0x2c0] sm:$0xff]
    %v1627 = vld [vmem:[%s3 + $0x2c8] sm:$0xff]
    %v1628 = vld [vmem:[%s3 + $0x2d0] sm:$0xff]
    %v1629 = vld [vmem:[%s3 + $0x2d8] sm:$0xff]
    %v1630 = vld [vmem:[%s3 + $0x2e0] sm:$0xff]
    %v1631 = vld [vmem:[%s3 + $0x2e8] sm:$0xff]
    %v1632 = vld [vmem:[%s3 + $0x2f0] sm:$0xff]
    %v1633 = vld [vmem:[%s3 + $0x2f8] sm:$0xff]
    %v1634 = vld [vmem:[%s3 + $0x300] sm:$0xff]
    %v1635 = vld [vmem:[%s3 + $0x308] sm:$0xff]
    %v1636 = vld [vmem:[%s3 + $0x310] sm:$0xff]
    %v1637 = vld [vmem:[%s3 + $0x318] sm:$0xff]
    %v1638 = vld [vmem:[%s3 + $0x320] sm:$0xff]
    %v1639 = vld [vmem:[%s3 + $0x328] sm:$0xff]
    %v1640 = vld [vmem:[%s3 + $0x330] sm:$0xff]
    %v1641 = vld [vmem:[%s3 + $0x338] sm:$0xff]
    %v1642 = vld [vmem:[%s3 + $0x340] sm:$0xff]
    %v1643 = vld [vmem:[%s3 + $0x348] sm:$0xff]
    %v1644 = vld [vmem:[%s3 + $0x350] sm:$0xff]
    %v1645 = vld [vmem:[%s3 + $0x358] sm:$0xff]
    %v1646 = vld [vmem:[%s3 + $0x360] sm:$0xff]
    %v1647 = vld [vmem:[%s3 + $0x368] sm:$0xff]
    %v1648 = vld [vmem:[%s3 + $0x370] sm:$0xff]
    %v1649 = vld [vmem:[%s3 + $0x378] sm:$0xff]
    %v1650 = vld [vmem:[%s3 + $0x380] sm:$0xff]
    %v1651 = vld [vmem:[%s3 + $0x388] sm:$0xff]
    %v1652 = vld [vmem:[%s3 + $0x390] sm:$0xff]
    %v1653 = vld [vmem:[%s3 + $0x398] sm:$0xff]
    %v1654 = vld [vmem:[%s3 + $0x3a0] sm:$0xff]
    %v1655 = vld [vmem:[%s3 + $0x3a8] sm:$0xff]
    %v1656 = vld [vmem:[%s3 + $0x3b0] sm:$0xff]
    %v1657 = vld [vmem:[%s3 + $0x3b8] sm:$0xff]
    %v1658 = vld [vmem:[%s3 + $0x3c0] sm:$0xff]
    %v1659 = vld [vmem:[%s3 + $0x3c8] sm:$0xff]
    %v1660 = vld [vmem:[%s3 + $0x3d0] sm:$0xff]
    %v1661 = vld [vmem:[%s3 + $0x3d8] sm:$0xff]
    %v1662 = vld [vmem:[%s3 + $0x3e0] sm:$0xff]
    %v1663 = vld [vmem:[%s3 + $0x3e8] sm:$0xff]
    %v1664 = vld [vmem:[%s3 + $0x3f0] sm:$0xff]
    %v1665 = vld [vmem:[%s3 + $0x3f8] sm:$0xff]
    %v1666 = vld [vmem:[%s3 + $0x400] sm:$0xff]
    %v1667 = vld [vmem:[%s3 + $0x408] sm:$0xff]
    %v1668 = vld [vmem:[%s3 + $0x410] sm:$0xff]
    %v1669 = vld [vmem:[%s3 + $0x418] sm:$0xff]
    %v1670 = vld [vmem:[%s3 + $0x420] sm:$0xff]
    %v1671 = vld [vmem:[%s3 + $0x428] sm:$0xff]
    %v1672 = vld [vmem:[%s3 + $0x430] sm:$0xff]
    %v1673 = vld [vmem:[%s3 + $0x438] sm:$0xff]
    %v1674 = vld [vmem:[%s3 + $0x440] sm:$0xff]
    %v1675 = vld [vmem:[%s3 + $0x448] sm:$0xff]
    %v1676 = vld [vmem:[%s3 + $0x450] sm:$0xff]
    %v1677 = vld [vmem:[%s3 + $0x458] sm:$0xff]
    %v1678 = vld [vmem:[%s3 + $0x460] sm:$0xff]
    %v1679 = vld [vmem:[%s3 + $0x468] sm:$0xff]
    %v1680 = vld [vmem:[%s3 + $0x470] sm:$0xff]
    %v1681 = vld [vmem:[%s3 + $0x478] sm:$0xff]
    %v1682 = vld [vmem:[%s3 + $0x480] sm:$0xff]
    %v1683 = vld [vmem:[%s3 + $0x488] sm:$0xff]
    %v1684 = vld [vmem:[%s3 + $0x490] sm:$0xff]
    %v1685 = vld [vmem:[%s3 + $0x498] sm:$0xff]
    %v1686 = vld [vmem:[%s3 + $0x4a0] sm:$0xff]
    %v1687 = vld [vmem:[%s3 + $0x4a8] sm:$0xff]
    %v1688 = vld [vmem:[%s3 + $0x4b0] sm:$0xff]
    %v1689 = vld [vmem:[%s3 + $0x4b8] sm:$0xff]
    %v1690 = vld [vmem:[%s3 + $0x4c0] sm:$0xff]
    %v1691 = vld [vmem:[%s3 + $0x4c8] sm:$0xff]
    %v1692 = vld [vmem:[%s3 + $0x4d0] sm:$0xff]
    %v1693 = vld [vmem:[%s3 + $0x4d8] sm:$0xff]
    %v1694 = vld [vmem:[%s3 + $0x4e0] sm:$0xff]
    %v1695 = vld [vmem:[%s3 + $0x4e8] sm:$0xff]
    %v1696 = vld [vmem:[%s3 + $0x4f0] sm:$0xff]
    %v1697 = vld [vmem:[%s3 + $0x4f8] sm:$0xff]
    %v1698 = vld [vmem:[%s3 + $0x500] sm:$0xff]
    %v1699 = vld [vmem:[%s3 + $0x508] sm:$0xff]
    %v1700 = vld [vmem:[%s3 + $0x510] sm:$0xff]
    %v1701 = vld [vmem:[%s3 + $0x518] sm:$0xff]
    %v1702 = vld [vmem:[%s3 + $0x520] sm:$0xff]
    %v1703 = vld [vmem:[%s3 + $0x528] sm:$0xff]
    %v1704 = vld [vmem:[%s3 + $0x530] sm:$0xff]
    %v1705 = vld [vmem:[%s3 + $0x538] sm:$0xff]
    %v1706 = vld [vmem:[%s3 + $0x540] sm:$0xff]
    %v1707 = vld [vmem:[%s3 + $0x548] sm:$0xff]
    %v1708 = vld [vmem:[%s3 + $0x550] sm:$0xff]
    %v1709 = vld [vmem:[%s3 + $0x558] sm:$0xff]
    %v1710 = vld [vmem:[%s3 + $0x560] sm:$0xff]
    %v1711 = vld [vmem:[%s3 + $0x568] sm:$0xff]
    %v1712 = vld [vmem:[%s3 + $0x570] sm:$0xff]
    %v1713 = vld [vmem:[%s3 + $0x578] sm:$0xff]
    %v1714 = vld [vmem:[%s3 + $0x580] sm:$0xff]
    %v1715 = vld [vmem:[%s3 + $0x588] sm:$0xff]
    %v1716 = vld [vmem:[%s3 + $0x590] sm:$0xff]
    %v1717 = vld [vmem:[%s3 + $0x598] sm:$0xff]
    %v1718 = vld [vmem:[%s3 + $0x5a0] sm:$0xff]
    %v1719 = vld [vmem:[%s3 + $0x5a8] sm:$0xff]
    %v1720 = vld [vmem:[%s3 + $0x5b0] sm:$0xff]
    %v1721 = vld [vmem:[%s3 + $0x5b8] sm:$0xff]
    %v1722 = vld [vmem:[%s3 + $0x5c0] sm:$0xff]
    %v1723 = vld [vmem:[%s3 + $0x5c8] sm:$0xff]
    %v1724 = vld [vmem:[%s3 + $0x5d0] sm:$0xff]
    %v1725 = vld [vmem:[%s3 + $0x5d8] sm:$0xff]
    %v1726 = vld [vmem:[%s3 + $0x5e0] sm:$0xff]
    %v1727 = vld [vmem:[%s3 + $0x5e8] sm:$0xff]
    %v1728 = vld [vmem:[%s3 + $0x5f0] sm:$0xff]
    %v1729 = vld [vmem:[%s3 + $0x5f8] sm:$0xff]
    %v1730 = vld [vmem:[%s3 + $0x600] sm:$0xff]
    %v1731 = vld [vmem:[%s3 + $0x608] sm:$0xff]
    %v1732 = vld [vmem:[%s3 + $0x610] sm:$0xff]
    %v1733 = vld [vmem:[%s3 + $0x618] sm:$0xff]
    %v1734 = vld [vmem:[%s3 + $0x620] sm:$0xff]
    %v1735 = vld [vmem:[%s3 + $0x628] sm:$0xff]
    %v1736 = vld [vmem:[%s3 + $0x630] sm:$0xff]
    %v1737 = vld [vmem:[%s3 + $0x638] sm:$0xff]
    %v1738 = vld [vmem:[%s3 + $0x640] sm:$0xff]
    %v1739 = vld [vmem:[%s3 + $0x648] sm:$0xff]
    %v1740 = vld [vmem:[%s3 + $0x650] sm:$0xff]
    %v1741 = vld [vmem:[%s3 + $0x658] sm:$0xff]
    %v1742 = vld [vmem:[%s3 + $0x660] sm:$0xff]
    %v1743 = vld [vmem:[%s3 + $0x668] sm:$0xff]
    %v1744 = vld [vmem:[%s3 + $0x670] sm:$0xff]
    %v1745 = vld [vmem:[%s3 + $0x678] sm:$0xff]
    %v1746 = vld [vmem:[%s3 + $0x680] sm:$0xff]
    %v1747 = vld [vmem:[%s3 + $0x688] sm:$0xff]
    %v1748 = vld [vmem:[%s3 + $0x690] sm:$0xff]
    %v1749 = vld [vmem:[%s3 + $0x698] sm:$0xff]
    %v1750 = vld [vmem:[%s3 + $0x6a0] sm:$0xff]
    %v1751 = vld [vmem:[%s3 + $0x6a8] sm:$0xff]
    %v1752 = vld [vmem:[%s3 + $0x6b0] sm:$0xff]
    %v1753 = vld [vmem:[%s3 + $0x6b8] sm:$0xff]
    %v1754 = vld [vmem:[%s3 + $0x6c0] sm:$0xff]
    %v1755 = vld [vmem:[%s3 + $0x6c8] sm:$0xff]
    %v1756 = vld [vmem:[%s3 + $0x6d0] sm:$0xff]
    %v1757 = vld [vmem:[%s3 + $0x6d8] sm:$0xff]
    %v1758 = vld [vmem:[%s3 + $0x6e0] sm:$0xff]
    %v1759 = vld [vmem:[%s3 + $0x6e8] sm:$0xff]
    %v1760 = vld [vmem:[%s3 + $0x6f0] sm:$0xff]
    %v1761 = vld [vmem:[%s3 + $0x6f8] sm:$0xff]
    %v1762 = vld [vmem:[%s3 + $0x700] sm:$0xff]
    %v1763 = vld [vmem:[%s3 + $0x708] sm:$0xff]
    %v1764 = vld [vmem:[%s3 + $0x710] sm:$0xff]
    %v1765 = vld [vmem:[%s3 + $0x718] sm:$0xff]
    %v1766 = vld [vmem:[%s3 + $0x720] sm:$0xff]
    %v1767 = vld [vmem:[%s3 + $0x728] sm:$0xff]
    %v1768 = vld [vmem:[%s3 + $0x730] sm:$0xff]
    %v1769 = vld [vmem:[%s3 + $0x738] sm:$0xff]
    %v1770 = vld [vmem:[%s3 + $0x740] sm:$0xff]
    %v1771 = vld [vmem:[%s3 + $0x748] sm:$0xff]
    %v1772 = vld [vmem:[%s3 + $0x750] sm:$0xff]
    %v1773 = vld [vmem:[%s3 + $0x758] sm:$0xff]
    %v1774 = vld [vmem:[%s3 + $0x760] sm:$0xff]
    %v1775 = vld [vmem:[%s3 + $0x768] sm:$0xff]
    %v1776 = vld [vmem:[%s3 + $0x770] sm:$0xff]
    %v1777 = vld [vmem:[%s3 + $0x778] sm:$0xff]
    %v1778 = vld [vmem:[%s3 + $0x780] sm:$0xff]
    %v1779 = vld [vmem:[%s3 + $0x788] sm:$0xff]
    %v1780 = vld [vmem:[%s3 + $0x790] sm:$0xff]
    %v1781 = vld [vmem:[%s3 + $0x798] sm:$0xff]
    %v1782 = vld [vmem:[%s3 + $0x7a0] sm:$0xff]
    %v1783 = vld [vmem:[%s3 + $0x7a8] sm:$0xff]
    %v1784 = vld [vmem:[%s3 + $0x7b0] sm:$0xff]
    %v1785 = vld [vmem:[%s3 + $0x7b8] sm:$0xff]
    %v1786 = vld [vmem:[%s3 + $0x7c0] sm:$0xff]
    %v1787 = vld [vmem:[%s3 + $0x7c8] sm:$0xff]
    %v1788 = vld [vmem:[%s3 + $0x7d0] sm:$0xff]
    %v1789 = vld [vmem:[%s3 + $0x7d8] sm:$0xff]
    %v1790 = vld [vmem:[%s3 + $0x7e0] sm:$0xff]
    %v1791 = vld [vmem:[%s3 + $0x7e8] sm:$0xff]
    %v1792 = vld [vmem:[%s3 + $0x7f0] sm:$0xff]
    %v1793 = vld [vmem:[%s3 + $0x7f8] sm:$0xff]
    %v1794 = vld [vmem:[%s3 + $0x800] sm:$0xff]
    %v1795 = vld [vmem:[%s3 + $0x808] sm:$0xff]
    %v1796 = vld [vmem:[%s3 + $0x810] sm:$0xff]
    %v1797 = vld [vmem:[%s3 + $0x818] sm:$0xff]
    %v1798 = vld [vmem:[%s3 + $0x820] sm:$0xff]
    %v1799 = vld [vmem:[%s3 + $0x828] sm:$0xff]
    %v1800 = vld [vmem:[%s3 + $0x830] sm:$0xff]
    %v1801 = vld [vmem:[%s3 + $0x838] sm:$0xff]
    %v1802 = vld [vmem:[%s3 + $0x840] sm:$0xff]
    %v1803 = vld [vmem:[%s3 + $0x848] sm:$0xff]
    %v1804 = vld [vmem:[%s3 + $0x850] sm:$0xff]
    %v1805 = vld [vmem:[%s3 + $0x858] sm:$0xff]
    %v1806 = vld [vmem:[%s3 + $0x860] sm:$0xff]
    %v1807 = vld [vmem:[%s3 + $0x868] sm:$0xff]
    %v1808 = vld [vmem:[%s3 + $0x870] sm:$0xff]
    %v1809 = vld [vmem:[%s3 + $0x878] sm:$0xff]
    %v1810 = vld [vmem:[%s3 + $0x880] sm:$0xff]
    %v1811 = vld [vmem:[%s3 + $0x888] sm:$0xff]
    %v1812 = vld [vmem:[%s3 + $0x890] sm:$0xff]
    %v1813 = vld [vmem:[%s3 + $0x898] sm:$0xff]
    %v1814 = vld [vmem:[%s3 + $0x8a0] sm:$0xff]
    %v1815 = vld [vmem:[%s3 + $0x8a8] sm:$0xff]
    %v1816 = vld [vmem:[%s3 + $0x8b0] sm:$0xff]
    %v1817 = vld [vmem:[%s3 + $0x8b8] sm:$0xff]
    %v1818 = vld [vmem:[%s3 + $0x8c0] sm:$0xff]
    %v1819 = vld [vmem:[%s3 + $0x8c8] sm:$0xff]
    %v1820 = vld [vmem:[%s3 + $0x8d0] sm:$0xff]
    %v1821 = vld [vmem:[%s3 + $0x8d8] sm:$0xff]
    %v1822 = vld [vmem:[%s3 + $0x8e0] sm:$0xff]
    %v1823 = vld [vmem:[%s3 + $0x8e8] sm:$0xff]
    %v1824 = vld [vmem:[%s3 + $0x8f0] sm:$0xff]
    %v1825 = vld [vmem:[%s3 + $0x8f8] sm:$0xff]
    %v1826 = vld [vmem:[%s3 + $0x900] sm:$0xff]
    %v1827 = vld [vmem:[%s3 + $0x908] sm:$0xff]
    %v1828 = vld [vmem:[%s3 + $0x910] sm:$0xff]
    %v1829 = vld [vmem:[%s3 + $0x918] sm:$0xff]
    %v1830 = vld [vmem:[%s3 + $0x920] sm:$0xff]
    %v1831 = vld [vmem:[%s3 + $0x928] sm:$0xff]
    %v1832 = vld [vmem:[%s3 + $0x930] sm:$0xff]
    %v1833 = vld [vmem:[%s3 + $0x938] sm:$0xff]
    %v1834 = vld [vmem:[%s3 + $0x940] sm:$0xff]
    %v1835 = vld [vmem:[%s3 + $0x948] sm:$0xff]
    %v1836 = vld [vmem:[%s3 + $0x950] sm:$0xff]
    %v1837 = vld [vmem:[%s3 + $0x958] sm:$0xff]
    %v1838 = vld [vmem:[%s3 + $0x960] sm:$0xff]
    %v1839 = vld [vmem:[%s3 + $0x968] sm:$0xff]
    %v1840 = vld [vmem:[%s3 + $0x970] sm:$0xff]
    %v1841 = vld [vmem:[%s3 + $0x978] sm:$0xff]
    %v1842 = vld [vmem:[%s3 + $0x980] sm:$0xff]
    %v1843 = vld [vmem:[%s3 + $0x988] sm:$0xff]
    %v1844 = vld [vmem:[%s3 + $0x990] sm:$0xff]
    %v1845 = vld [vmem:[%s3 + $0x998] sm:$0xff]
    %v1846 = vld [vmem:[%s3 + $0x9a0] sm:$0xff]
    %v1847 = vld [vmem:[%s3 + $0x9a8] sm:$0xff]
    %v1848 = vld [vmem:[%s3 + $0x9b0] sm:$0xff]
    %v1849 = vld [vmem:[%s3 + $0x9b8] sm:$0xff]
    %v1850 = vld [vmem:[%s3 + $0x9c0] sm:$0xff]
    %v1851 = vld [vmem:[%s3 + $0x9c8] sm:$0xff]
    %v1852 = vld [vmem:[%s3 + $0x9d0] sm:$0xff]
    %v1853 = vld [vmem:[%s3 + $0x9d8] sm:$0xff]
    %v1854 = vld [vmem:[%s3 + $0x9e0] sm:$0xff]
    %v1855 = vld [vmem:[%s3 + $0x9e8] sm:$0xff]
    %v1856 = vld [vmem:[%s3 + $0x9f0] sm:$0xff]
    %v1857 = vld [vmem:[%s3 + $0x9f8] sm:$0xff]
    %v1858 = vld [vmem:[%s3 + $0xa00] sm:$0xff]
    %v1859 = vld [vmem:[%s3 + $0xa08] sm:$0xff]
    %v1860 = vld [vmem:[%s3 + $0xa10] sm:$0xff]
    %v1861 = vld [vmem:[%s3 + $0xa18] sm:$0xff]
    %v1862 = vld [vmem:[%s3 + $0xa20] sm:$0xff]
    %v1863 = vld [vmem:[%s3 + $0xa28] sm:$0xff]
    %v1864 = vld [vmem:[%s3 + $0xa30] sm:$0xff]
    %v1865 = vld [vmem:[%s3 + $0xa38] sm:$0xff]
    %v1866 = vld [vmem:[%s3 + $0xa40] sm:$0xff]
    %v1867 = vld [vmem:[%s3 + $0xa48] sm:$0xff]
    %v1868 = vld [vmem:[%s3 + $0xa50] sm:$0xff]
    %v1869 = vld [vmem:[%s3 + $0xa58] sm:$0xff]
    %v1870 = vld [vmem:[%s3 + $0xa60] sm:$0xff]
    %v1871 = vld [vmem:[%s3 + $0xa68] sm:$0xff]
    %v1872 = vld [vmem:[%s3 + $0xa70] sm:$0xff]
    %v1873 = vld [vmem:[%s3 + $0xa78] sm:$0xff]
    %v1874 = vld [vmem:[%s3 + $0xa80] sm:$0xff]
    %v1875 = vld [vmem:[%s3 + $0xa88] sm:$0xff]
    %v1876 = vld [vmem:[%s3 + $0xa90] sm:$0xff]
    %v1877 = vld [vmem:[%s3 + $0xa98] sm:$0xff]
    %v1878 = vld [vmem:[%s3 + $0xaa0] sm:$0xff]
    %v1879 = vld [vmem:[%s3 + $0xaa8] sm:$0xff]
    %v1880 = vld [vmem:[%s3 + $0xab0] sm:$0xff]
    %v1881 = vld [vmem:[%s3 + $0xab8] sm:$0xff]
    %v1882 = vld [vmem:[%s3 + $0xac0] sm:$0xff]
    %v1883 = vld [vmem:[%s3 + $0xac8] sm:$0xff]
    %v1884 = vld [vmem:[%s3 + $0xad0] sm:$0xff]
    %v1885 = vld [vmem:[%s3 + $0xad8] sm:$0xff]
    %v1886 = vld [vmem:[%s3 + $0xae0] sm:$0xff]
    %v1887 = vld [vmem:[%s3 + $0xae8] sm:$0xff]
    %v1888 = vld [vmem:[%s3 + $0xaf0] sm:$0xff]
    %v1889 = vld [vmem:[%s3 + $0xaf8] sm:$0xff]
    %v1890 = vld [vmem:[%s3 + $0xb00] sm:$0xff]
    %v1891 = vld [vmem:[%s3 + $0xb08] sm:$0xff]
    %v1892 = vld [vmem:[%s3 + $0xb10] sm:$0xff]
    %v1893 = vld [vmem:[%s3 + $0xb18] sm:$0xff]
    %v1894 = vld [vmem:[%s3 + $0xb20] sm:$0xff]
    %v1895 = vld [vmem:[%s3 + $0xb28] sm:$0xff]
    %v1896 = vld [vmem:[%s3 + $0xb30] sm:$0xff]
    %v1897 = vld [vmem:[%s3 + $0xb38] sm:$0xff]
    %v1898 = vld [vmem:[%s3 + $0xb40] sm:$0xff]
    %v1899 = vld [vmem:[%s3 + $0xb48] sm:$0xff]
    %v1900 = vld [vmem:[%s3 + $0xb50] sm:$0xff]
    %v1901 = vld [vmem:[%s3 + $0xb58] sm:$0xff]
    %v1902 = vld [vmem:[%s3 + $0xb60] sm:$0xff]
    %v1903 = vld [vmem:[%s3 + $0xb68] sm:$0xff]
    %v1904 = vld [vmem:[%s3 + $0xb70] sm:$0xff]
    %v1905 = vld [vmem:[%s3 + $0xb78] sm:$0xff]
    %v1906 = vld [vmem:[%s3 + $0xb80] sm:$0xff]
    %v1907 = vld [vmem:[%s3 + $0xb88] sm:$0xff]
    %v1908 = vld [vmem:[%s3 + $0xb90] sm:$0xff]
    %v1909 = vld [vmem:[%s3 + $0xb98] sm:$0xff]
    %v1910 = vld [vmem:[%s3 + $0xba0] sm:$0xff]
    %v1911 = vld [vmem:[%s3 + $0xba8] sm:$0xff]
    %v1912 = vld [vmem:[%s3 + $0xbb0] sm:$0xff]
    %v1913 = vld [vmem:[%s3 + $0xbb8] sm:$0xff]
    %v1914 = vld [vmem:[%s3 + $0xbc0] sm:$0xff]
    %v1915 = vld [vmem:[%s3 + $0xbc8] sm:$0xff]
    %v1916 = vld [vmem:[%s3 + $0xbd0] sm:$0xff]
    %v1917 = vld [vmem:[%s3 + $0xbd8] sm:$0xff]
    %v1918 = vld [vmem:[%s3 + $0xbe0] sm:$0xff]
    %v1919 = vld [vmem:[%s3 + $0xbe8] sm:$0xff]
    %v1920 = vld [vmem:[%s3 + $0xbf0] sm:$0xff]
    %v1921 = vld [vmem:[%s3 + $0xbf8] sm:$0xff]
    %v1922 = vld [vmem:[%s3 + $0xc00] sm:$0xff]
    %v1923 = vld [vmem:[%s3 + $0xc08] sm:$0xff]
    %v1924 = vld [vmem:[%s3 + $0xc10] sm:$0xff]
    %v1925 = vld [vmem:[%s3 + $0xc18] sm:$0xff]
    %v1926 = vld [vmem:[%s3 + $0xc20] sm:$0xff]
    %v1927 = vld [vmem:[%s3 + $0xc28] sm:$0xff]
    %v1928 = vld [vmem:[%s3 + $0xc30] sm:$0xff]
    %v1929 = vld [vmem:[%s3 + $0xc38] sm:$0xff]
    %v1930 = vld [vmem:[%s3 + $0xc40] sm:$0xff]
    %v1931 = vld [vmem:[%s3 + $0xc48] sm:$0xff]
    %v1932 = vld [vmem:[%s3 + $0xc50] sm:$0xff]
    %v1933 = vld [vmem:[%s3 + $0xc58] sm:$0xff]
    %v1934 = vld [vmem:[%s3 + $0xc60] sm:$0xff]
    %v1935 = vld [vmem:[%s3 + $0xc68] sm:$0xff]
    %v1936 = vld [vmem:[%s3 + $0xc70] sm:$0xff]
    %v1937 = vld [vmem:[%s3 + $0xc78] sm:$0xff]
    %v1938 = vld [vmem:[%s3 + $0xc80] sm:$0xff]
    %v1939 = vld [vmem:[%s3 + $0xc88] sm:$0xff]
    %v1940 = vld [vmem:[%s3 + $0xc90] sm:$0xff]
    %v1941 = vld [vmem:[%s3 + $0xc98] sm:$0xff]
    %v1942 = vld [vmem:[%s3 + $0xca0] sm:$0xff]
    %v1943 = vld [vmem:[%s3 + $0xca8] sm:$0xff]
    %v1944 = vld [vmem:[%s3 + $0xcb0] sm:$0xff]
    %v1945 = vld [vmem:[%s3 + $0xcb8] sm:$0xff]
    %v1946 = vld [vmem:[%s3 + $0xcc0] sm:$0xff]
    %v1947 = vld [vmem:[%s3 + $0xcc8] sm:$0xff]
    %v1948 = vld [vmem:[%s3 + $0xcd0] sm:$0xff]
    %v1949 = vld [vmem:[%s3 + $0xcd8] sm:$0xff]
    %v1950 = vld [vmem:[%s3 + $0xce0] sm:$0xff]
    %v1951 = vld [vmem:[%s3 + $0xce8] sm:$0xff]
    %v1952 = vld [vmem:[%s3 + $0xcf0] sm:$0xff]
    %v1953 = vld [vmem:[%s3 + $0xcf8] sm:$0xff]
    %v1954 = vld [vmem:[%s3 + $0xd00] sm:$0xff]
    %v1955 = vld [vmem:[%s3 + $0xd08] sm:$0xff]
    %v1956 = vld [vmem:[%s3 + $0xd10] sm:$0xff]
    %v1957 = vld [vmem:[%s3 + $0xd18] sm:$0xff]
    %v1958 = vld [vmem:[%s3 + $0xd20] sm:$0xff]
    %v1959 = vld [vmem:[%s3 + $0xd28] sm:$0xff]
    %v1960 = vld [vmem:[%s3 + $0xd30] sm:$0xff]
    %v1961 = vld [vmem:[%s3 + $0xd38] sm:$0xff]
    %v1962 = vld [vmem:[%s3 + $0xd40] sm:$0xff]
    %v1963 = vld [vmem:[%s3 + $0xd48] sm:$0xff]
    %v1964 = vld [vmem:[%s3 + $0xd50] sm:$0xff]
    %v1965 = vld [vmem:[%s3 + $0xd58] sm:$0xff]
    %v1966 = vld [vmem:[%s3 + $0xd60] sm:$0xff]
    %v1967 = vld [vmem:[%s3 + $0xd68] sm:$0xff]
    %v1968 = vld [vmem:[%s3 + $0xd70] sm:$0xff]
    %v1969 = vld [vmem:[%s3 + $0xd78] sm:$0xff]
    %v1970 = vld [vmem:[%s3 + $0xd80] sm:$0xff]
    %v1971 = vld [vmem:[%s3 + $0xd88] sm:$0xff]
    %v1972 = vld [vmem:[%s3 + $0xd90] sm:$0xff]
    %v1973 = vld [vmem:[%s3 + $0xd98] sm:$0xff]
    %v1974 = vld [vmem:[%s3 + $0xda0] sm:$0xff]
    %v1975 = vld [vmem:[%s3 + $0xda8] sm:$0xff]
    %v1976 = vld [vmem:[%s3 + $0xdb0] sm:$0xff]
    %v1977 = vld [vmem:[%s3 + $0xdb8] sm:$0xff]
    %v1978 = vld [vmem:[%s3 + $0xdc0] sm:$0xff]
    %v1979 = vld [vmem:[%s3 + $0xdc8] sm:$0xff]
    %v1980 = vld [vmem:[%s3 + $0xdd0] sm:$0xff]
    %v1981 = vld [vmem:[%s3 + $0xdd8] sm:$0xff]
    %v1982 = vld [vmem:[%s3 + $0xde0] sm:$0xff]
    %v1983 = vld [vmem:[%s3 + $0xde8] sm:$0xff]
    %v1984 = vld [vmem:[%s3 + $0xdf0] sm:$0xff]
    %v1985 = vld [vmem:[%s3 + $0xdf8] sm:$0xff]
    %v1986 = vld [vmem:[%s3 + $0xe00] sm:$0xff]
    %v1987 = vld [vmem:[%s3 + $0xe08] sm:$0xff]
    %v1988 = vld [vmem:[%s3 + $0xe10] sm:$0xff]
    %v1989 = vld [vmem:[%s3 + $0xe18] sm:$0xff]
    %v1990 = vld [vmem:[%s3 + $0xe20] sm:$0xff]
    %v1991 = vld [vmem:[%s3 + $0xe28] sm:$0xff]
    %v1992 = vld [vmem:[%s3 + $0xe30] sm:$0xff]
    %v1993 = vld [vmem:[%s3 + $0xe38] sm:$0xff]
    %v1994 = vld [vmem:[%s3 + $0xe40] sm:$0xff]
    %v1995 = vld [vmem:[%s3 + $0xe48] sm:$0xff]
    %v1996 = vld [vmem:[%s3 + $0xe50] sm:$0xff]
    %v1997 = vld [vmem:[%s3 + $0xe58] sm:$0xff]
    %v1998 = vld [vmem:[%s3 + $0xe60] sm:$0xff]
    %v1999 = vld [vmem:[%s3 + $0xe68] sm:$0xff]
    %v2000 = vld [vmem:[%s3 + $0xe70] sm:$0xff]
    %v2001 = vld [vmem:[%s3 + $0xe78] sm:$0xff]
    %v2002 = vld [vmem:[%s3 + $0xe80] sm:$0xff]
    %v2003 = vld [vmem:[%s3 + $0xe88] sm:$0xff]
    %v2004 = vld [vmem:[%s3 + $0xe90] sm:$0xff]
    %v2005 = vld [vmem:[%s3 + $0xe98] sm:$0xff]
    %v2006 = vld [vmem:[%s3 + $0xea0] sm:$0xff]
    %v2007 = vld [vmem:[%s3 + $0xea8] sm:$0xff]
    %v2008 = vld [vmem:[%s3 + $0xeb0] sm:$0xff]
    %v2009 = vld [vmem:[%s3 + $0xeb8] sm:$0xff]
    %v2010 = vld [vmem:[%s3 + $0xec0] sm:$0xff]
    %v2011 = vld [vmem:[%s3 + $0xec8] sm:$0xff]
    %v2012 = vld [vmem:[%s3 + $0xed0] sm:$0xff]
    %v2013 = vld [vmem:[%s3 + $0xed8] sm:$0xff]
    %v2014 = vld [vmem:[%s3 + $0xee0] sm:$0xff]
    %v2015 = vld [vmem:[%s3 + $0xee8] sm:$0xff]
    %v2016 = vld [vmem:[%s3 + $0xef0] sm:$0xff]
    %v2017 = vld [vmem:[%s3 + $0xef8] sm:$0xff]
    %v2018 = vld [vmem:[%s3 + $0xf00] sm:$0xff]
    %v2019 = vld [vmem:[%s3 + $0xf08] sm:$0xff]
    %v2020 = vld [vmem:[%s3 + $0xf10] sm:$0xff]
    %v2021 = vld [vmem:[%s3 + $0xf18] sm:$0xff]
    %v2022 = vld [vmem:[%s3 + $0xf20] sm:$0xff]
    %v2023 = vld [vmem:[%s3 + $0xf28] sm:$0xff]
    %v2024 = vld [vmem:[%s3 + $0xf30] sm:$0xff]
    %v2025 = vld [vmem:[%s3 + $0xf38] sm:$0xff]
    %v2026 = vld [vmem:[%s3 + $0xf40] sm:$0xff]
    %v2027 = vld [vmem:[%s3 + $0xf48] sm:$0xff]
    %v2028 = vld [vmem:[%s3 + $0xf50] sm:$0xff]
    %v2029 = vld [vmem:[%s3 + $0xf58] sm:$0xff]
    %v2030 = vld [vmem:[%s3 + $0xf60] sm:$0xff]
    %v2031 = vld [vmem:[%s3 + $0xf68] sm:$0xff]
    %v2032 = vld [vmem:[%s3 + $0xf70] sm:$0xff]
    %v2033 = vld [vmem:[%s3 + $0xf78] sm:$0xff]
    %v2034 = vld [vmem:[%s3 + $0xf80] sm:$0xff]
    %v2035 = vld [vmem:[%s3 + $0xf88] sm:$0xff]
    %v2036 = vld [vmem:[%s3 + $0xf90] sm:$0xff]
    %v2037 = vld [vmem:[%s3 + $0xf98] sm:$0xff]
    %v2038 = vld [vmem:[%s3 + $0xfa0] sm:$0xff]
    %v2039 = vld [vmem:[%s3 + $0xfa8] sm:$0xff]
    %v2040 = vld [vmem:[%s3 + $0xfb0] sm:$0xff]
    %v2041 = vld [vmem:[%s3 + $0xfb8] sm:$0xff]
    %v2042 = vld [vmem:[%s3 + $0xfc0] sm:$0xff]
    %v2043 = vld [vmem:[%s3 + $0xfc8] sm:$0xff]
    %v2044 = vld [vmem:[%s3 + $0xfd0] sm:$0xff]
    %v2045 = vld [vmem:[%s3 + $0xfd8] sm:$0xff]
    %v2046 = vld [vmem:[%s3 + $0xfe0] sm:$0xff]
    %v2047 = vld [vmem:[%s3 + $0xfe8] sm:$0xff]
    %v2048 = vld [vmem:[%s3 + $0xff0] sm:$0xff]
    %v2049 = vld [vmem:[%s3 + $0xff8] sm:$0xff]
    %v2050 = vld [vmem:[%s3 + $0x1000] sm:$0xff]
    %v2051 = vld [vmem:[%s3 + $0x1008] sm:$0xff]
    %v2052 = vld [vmem:[%s3 + $0x1010] sm:$0xff]
    %v2053 = vld [vmem:[%s3 + $0x1018] sm:$0xff]
    %v2054 = vld [vmem:[%s3 + $0x1020] sm:$0xff]
    %v2055 = vld [vmem:[%s3 + $0x1028] sm:$0xff]
    %v2056 = vld [vmem:[%s3 + $0x1030] sm:$0xff]
    %v2057 = vld [vmem:[%s3 + $0x1038] sm:$0xff]
    %v2058 = vld [vmem:[%s3 + $0x1040] sm:$0xff]
    %v2059 = vld [vmem:[%s3 + $0x1048] sm:$0xff]
    %v2060 = vld [vmem:[%s3 + $0x1050] sm:$0xff]
    %v2061 = vld [vmem:[%s3 + $0x1058] sm:$0xff]
    %v2062 = vld [vmem:[%s3 + $0x1060] sm:$0xff]
    %v2063 = vld [vmem:[%s3 + $0x1068] sm:$0xff]
    %v2064 = vld [vmem:[%s3 + $0x1070] sm:$0xff]
    %v2065 = vld [vmem:[%s3 + $0x1078] sm:$0xff]
    %v2066 = vld [vmem:[%s3 + $0x1080] sm:$0xff]
    %v2067 = vld [vmem:[%s3 + $0x1088] sm:$0xff]
    %v2068 = vld [vmem:[%s3 + $0x1090] sm:$0xff]
    %v2069 = vld [vmem:[%s3 + $0x1098] sm:$0xff]
    %v2070 = vld [vmem:[%s3 + $0x10a0] sm:$0xff]
    %v2071 = vld [vmem:[%s3 + $0x10a8] sm:$0xff]
    %v2072 = vld [vmem:[%s3 + $0x10b0] sm:$0xff]
    %v2073 = vld [vmem:[%s3 + $0x10b8] sm:$0xff]
    %v2074 = vld [vmem:[%s3 + $0x10c0] sm:$0xff]
    %v2075 = vld [vmem:[%s3 + $0x10c8] sm:$0xff]
    %v2076 = vld [vmem:[%s3 + $0x10d0] sm:$0xff]
    %v2077 = vld [vmem:[%s3 + $0x10d8] sm:$0xff]
    %v2078 = vld [vmem:[%s3 + $0x10e0] sm:$0xff]
    %v2079 = vld [vmem:[%s3 + $0x10e8] sm:$0xff]
    %v2080 = vld [vmem:[%s3 + $0x10f0] sm:$0xff]
    %v2081 = vld [vmem:[%s3 + $0x10f8] sm:$0xff]
    %v2082 = vld [vmem:[%s3 + $0x1100] sm:$0xff]
    %v2083 = vld [vmem:[%s3 + $0x1108] sm:$0xff]
    %v2084 = vld [vmem:[%s3 + $0x1110] sm:$0xff]
    %v2085 = vld [vmem:[%s3 + $0x1118] sm:$0xff]
    %v2086 = vld [vmem:[%s3 + $0x1120] sm:$0xff]
    %v2087 = vld [vmem:[%s3 + $0x1128] sm:$0xff]
    %v2088 = vld [vmem:[%s3 + $0x1130] sm:$0xff]
    %v2089 = vld [vmem:[%s3 + $0x1138] sm:$0xff]
    %v2090 = vld [vmem:[%s3 + $0x1140] sm:$0xff]
    %v2091 = vld [vmem:[%s3 + $0x1148] sm:$0xff]
    %v2092 = vld [vmem:[%s3 + $0x1150] sm:$0xff]
    %v2093 = vld [vmem:[%s3 + $0x1158] sm:$0xff]
    %v2094 = vld [vmem:[%s3 + $0x1160] sm:$0xff]
    %v2095 = vld [vmem:[%s3 + $0x1168] sm:$0xff]
    %v2096 = vld [vmem:[%s3 + $0x1170] sm:$0xff]
    %v2097 = vld [vmem:[%s3 + $0x1178] sm:$0xff]
    %v2098 = vld [vmem:[%s3 + $0x1180] sm:$0xff]
    %v2099 = vld [vmem:[%s3 + $0x1188] sm:$0xff]
    %v2100 = vld [vmem:[%s3 + $0x1190] sm:$0xff]
    %v2101 = vld [vmem:[%s3 + $0x1198] sm:$0xff]
    %v2102 = vld [vmem:[%s3 + $0x11a0] sm:$0xff]
    %v2103 = vld [vmem:[%s3 + $0x11a8] sm:$0xff]
    %v2104 = vld [vmem:[%s3 + $0x11b0] sm:$0xff]
    %v2105 = vld [vmem:[%s3 + $0x11b8] sm:$0xff]
    %v2106 = vld [vmem:[%s3 + $0x11c0] sm:$0xff]
    %v2107 = vld [vmem:[%s3 + $0x11c8] sm:$0xff]
    %v2108 = vld [vmem:[%s3 + $0x11d0] sm:$0xff]
    %v2109 = vld [vmem:[%s3 + $0x11d8] sm:$0xff]
    %v2110 = vld [vmem:[%s3 + $0x11e0] sm:$0xff]
    %v2111 = vld [vmem:[%s3 + $0x11e8] sm:$0xff]
    %v2112 = vld [vmem:[%s3 + $0x11f0] sm:$0xff]
    %v2113 = vld [vmem:[%s3 + $0x11f8] sm:$0xff]
    %v2114 = vld [vmem:[%s3 + $0x1200] sm:$0xff]
    %v2115 = vld [vmem:[%s3 + $0x1208] sm:$0xff]
    %v2116 = vld [vmem:[%s3 + $0x1210] sm:$0xff]
    %v2117 = vld [vmem:[%s3 + $0x1218] sm:$0xff]
    %v2118 = vld [vmem:[%s3 + $0x1220] sm:$0xff]
    %v2119 = vld [vmem:[%s3 + $0x1228] sm:$0xff]
    %v2120 = vld [vmem:[%s3 + $0x1230] sm:$0xff]
    %v2121 = vld [vmem:[%s3 + $0x1238] sm:$0xff]
    %v2122 = vld [vmem:[%s3 + $0x1240] sm:$0xff]
    %v2123 = vld [vmem:[%s3 + $0x1248] sm:$0xff]
    %v2124 = vld [vmem:[%s3 + $0x1250] sm:$0xff]
    %v2125 = vld [vmem:[%s3 + $0x1258] sm:$0xff]
    %v2126 = vld [vmem:[%s3 + $0x1260] sm:$0xff]
    %v2127 = vld [vmem:[%s3 + $0x1268] sm:$0xff]
    %v2128 = vld [vmem:[%s3 + $0x1270] sm:$0xff]
    %v2129 = vld [vmem:[%s3 + $0x1278] sm:$0xff]
    %v2130 = vld [vmem:[%s3 + $0x1280] sm:$0xff]
    %v2131 = vld [vmem:[%s3 + $0x1288] sm:$0xff]
    %v2132 = vld [vmem:[%s3 + $0x1290] sm:$0xff]
    %v2133 = vld [vmem:[%s3 + $0x1298] sm:$0xff]
    %v2134 = vld [vmem:[%s3 + $0x12a0] sm:$0xff]
    %v2135 = vld [vmem:[%s3 + $0x12a8] sm:$0xff]
    %v2136 = vld [vmem:[%s3 + $0x12b0] sm:$0xff]
    %v2137 = vld [vmem:[%s3 + $0x12b8] sm:$0xff]
    %v2138 = vld [vmem:[%s3 + $0x12c0] sm:$0xff]
    %v2139 = vld [vmem:[%s3 + $0x12c8] sm:$0xff]
    %v2140 = vld [vmem:[%s3 + $0x12d0] sm:$0xff]
    %v2141 = vld [vmem:[%s3 + $0x12d8] sm:$0xff]
    %v2142 = vld [vmem:[%s3 + $0x12e0] sm:$0xff]
    %v2143 = vld [vmem:[%s3 + $0x12e8] sm:$0xff]
    %v2144 = vld [vmem:[%s3 + $0x12f0] sm:$0xff]
    %v2145 = vld [vmem:[%s3 + $0x12f8] sm:$0xff]
    %v2146 = vld [vmem:[%s3 + $0x1300] sm:$0xff]
    %v2147 = vld [vmem:[%s3 + $0x1308] sm:$0xff]
    %v2148 = vld [vmem:[%s3 + $0x1310] sm:$0xff]
    %v2149 = vld [vmem:[%s3 + $0x1318] sm:$0xff]
    %v2150 = vld [vmem:[%s3 + $0x1320] sm:$0xff]
    %v2151 = vld [vmem:[%s3 + $0x1328] sm:$0xff]
    %v2152 = vld [vmem:[%s3 + $0x1330] sm:$0xff]
    %v2153 = vld [vmem:[%s3 + $0x1338] sm:$0xff]
    %v2154 = vld [vmem:[%s3 + $0x1340] sm:$0xff]
    %v2155 = vld [vmem:[%s3 + $0x1348] sm:$0xff]
    %v2156 = vld [vmem:[%s3 + $0x1350] sm:$0xff]
    %v2157 = vld [vmem:[%s3 + $0x1358] sm:$0xff]
    %v2158 = vld [vmem:[%s3 + $0x1360] sm:$0xff]
    %v2159 = vld [vmem:[%s3 + $0x1368] sm:$0xff]
    %v2160 = vld [vmem:[%s3 + $0x1370] sm:$0xff]
    %v2161 = vld [vmem:[%s3 + $0x1378] sm:$0xff]
    %v2162 = vld [vmem:[%s3 + $0x1380] sm:$0xff]
    %v2163 = vld [vmem:[%s3 + $0x1388] sm:$0xff]
    %v2164 = vld [vmem:[%s3 + $0x1390] sm:$0xff]
    %v2165 = vld [vmem:[%s3 + $0x1398] sm:$0xff]
    %v2166 = vld [vmem:[%s3 + $0x13a0] sm:$0xff]
    %v2167 = vld [vmem:[%s3 + $0x13a8] sm:$0xff]
    %v2168 = vld [vmem:[%s3 + $0x13b0] sm:$0xff]
    %v2169 = vld [vmem:[%s3 + $0x13b8] sm:$0xff]
    %v2170 = vld [vmem:[%s3 + $0x13c0] sm:$0xff]
    %v2171 = vld [vmem:[%s3 + $0x13c8] sm:$0xff]
    %v2172 = vld [vmem:[%s3 + $0x13d0] sm:$0xff]
    %v2173 = vld [vmem:[%s3 + $0x13d8] sm:$0xff]
    %v2174 = vld [vmem:[%s3 + $0x13e0] sm:$0xff]
    %v2175 = vld [vmem:[%s3 + $0x13e8] sm:$0xff]
    %v2176 = vld [vmem:[%s3 + $0x13f0] sm:$0xff]
    %v2177 = vld [vmem:[%s3 + $0x13f8] sm:$0xff]
    %v2178 = vld [vmem:[%s3 + $0x1400] sm:$0xff]
    %v2179 = vld [vmem:[%s3 + $0x1408] sm:$0xff]
    %v2180 = vld [vmem:[%s3 + $0x1410] sm:$0xff]
    %v2181 = vld [vmem:[%s3 + $0x1418] sm:$0xff]
    %v2182 = vld [vmem:[%s3 + $0x1420] sm:$0xff]
    %v2183 = vld [vmem:[%s3 + $0x1428] sm:$0xff]
    %v2184 = vld [vmem:[%s3 + $0x1430] sm:$0xff]
    %v2185 = vld [vmem:[%s3 + $0x1438] sm:$0xff]
    %v2186 = vld [vmem:[%s3 + $0x1440] sm:$0xff]
    %v2187 = vld [vmem:[%s3 + $0x1448] sm:$0xff]
    %v2188 = vld [vmem:[%s3 + $0x1450] sm:$0xff]
    %v2189 = vld [vmem:[%s3 + $0x1458] sm:$0xff]
    %v2190 = vld [vmem:[%s3 + $0x1460] sm:$0xff]
    %v2191 = vld [vmem:[%s3 + $0x1468] sm:$0xff]
    %v2192 = vld [vmem:[%s3 + $0x1470] sm:$0xff]
    %v2193 = vld [vmem:[%s3 + $0x1478] sm:$0xff]
    %v2194 = vld [vmem:[%s3 + $0x1480] sm:$0xff]
    %v2195 = vld [vmem:[%s3 + $0x1488] sm:$0xff]
    %v2196 = vld [vmem:[%s3 + $0x1490] sm:$0xff]
    %v2197 = vld [vmem:[%s3 + $0x1498] sm:$0xff]
    %v2198 = vld [vmem:[%s3 + $0x14a0] sm:$0xff]
    %v2199 = vld [vmem:[%s3 + $0x14a8] sm:$0xff]
    %v2200 = vld [vmem:[%s3 + $0x14b0] sm:$0xff]
    %v2201 = vld [vmem:[%s3 + $0x14b8] sm:$0xff]
    %v2202 = vld [vmem:[%s3 + $0x14c0] sm:$0xff]
    %v2203 = vld [vmem:[%s3 + $0x14c8] sm:$0xff]
    %v2204 = vld [vmem:[%s3 + $0x14d0] sm:$0xff]
    %v2205 = vld [vmem:[%s3 + $0x14d8] sm:$0xff]
    %v2206 = vld [vmem:[%s3 + $0x14e0] sm:$0xff]
    %v2207 = vld [vmem:[%s3 + $0x14e8] sm:$0xff]
    %v2208 = vld [vmem:[%s3 + $0x14f0] sm:$0xff]
    %v2209 = vld [vmem:[%s3 + $0x14f8] sm:$0xff]
    %v2210 = vld [vmem:[%s3 + $0x1500] sm:$0xff]
    %v2211 = vld [vmem:[%s3 + $0x1508] sm:$0xff]
    %v2212 = vld [vmem:[%s3 + $0x1510] sm:$0xff]
    %v2213 = vld [vmem:[%s3 + $0x1518] sm:$0xff]
    %v2214 = vld [vmem:[%s3 + $0x1520] sm:$0xff]
    %v2215 = vld [vmem:[%s3 + $0x1528] sm:$0xff]
    %v2216 = vld [vmem:[%s3 + $0x1530] sm:$0xff]
    %v2217 = vld [vmem:[%s3 + $0x1538] sm:$0xff]
    %v2218 = vld [vmem:[%s3 + $0x1540] sm:$0xff]
    %v2219 = vld [vmem:[%s3 + $0x1548] sm:$0xff]
    %v2220 = vld [vmem:[%s3 + $0x1550] sm:$0xff]
    %v2221 = vld [vmem:[%s3 + $0x1558] sm:$0xff]
    %v2222 = vld [vmem:[%s3 + $0x1560] sm:$0xff]
    %v2223 = vld [vmem:[%s3 + $0x1568] sm:$0xff]
    %v2224 = vld [vmem:[%s3 + $0x1570] sm:$0xff]
    %v2225 = vld [vmem:[%s3 + $0x1578] sm:$0xff]
    %v2226 = vld [vmem:[%s3 + $0x1580] sm:$0xff]
    %v2227 = vld [vmem:[%s3 + $0x1588] sm:$0xff]
    %v2228 = vld [vmem:[%s3 + $0x1590] sm:$0xff]
    %v2229 = vld [vmem:[%s3 + $0x1598] sm:$0xff]
    %v2230 = vld [vmem:[%s3 + $0x15a0] sm:$0xff]
    %v2231 = vld [vmem:[%s3 + $0x15a8] sm:$0xff]
    %v2232 = vld [vmem:[%s3 + $0x15b0] sm:$0xff]
    %v2233 = vld [vmem:[%s3 + $0x15b8] sm:$0xff]
    %v2234 = vld [vmem:[%s3 + $0x15c0] sm:$0xff]
    %v2235 = vld [vmem:[%s3 + $0x15c8] sm:$0xff]
    %v2236 = vld [vmem:[%s3 + $0x15d0] sm:$0xff]
    %v2237 = vld [vmem:[%s3 + $0x15d8] sm:$0xff]
    %v2238 = vld [vmem:[%s3 + $0x15e0] sm:$0xff]
    %v2239 = vld [vmem:[%s3 + $0x15e8] sm:$0xff]
    %v2240 = vld [vmem:[%s3 + $0x15f0] sm:$0xff]
    %v2241 = vld [vmem:[%s3 + $0x15f8] sm:$0xff]
    %v2242 = vld [vmem:[%s3 + $0x1600] sm:$0xff]
    %v2243 = vld [vmem:[%s3 + $0x1608] sm:$0xff]
    %v2244 = vld [vmem:[%s3 + $0x1610] sm:$0xff]
    %v2245 = vld [vmem:[%s3 + $0x1618] sm:$0xff]
    %v2246 = vld [vmem:[%s3 + $0x1620] sm:$0xff]
    %v2247 = vld [vmem:[%s3 + $0x1628] sm:$0xff]
    %v2248 = vld [vmem:[%s3 + $0x1630] sm:$0xff]
    %v2249 = vld [vmem:[%s3 + $0x1638] sm:$0xff]
    %v2250 = vld [vmem:[%s3 + $0x1640] sm:$0xff]
    %v2251 = vld [vmem:[%s3 + $0x1648] sm:$0xff]
    %v2252 = vld [vmem:[%s3 + $0x1650] sm:$0xff]
    %v2253 = vld [vmem:[%s3 + $0x1658] sm:$0xff]
    %v2254 = vld [vmem:[%s3 + $0x1660] sm:$0xff]
    %v2255 = vld [vmem:[%s3 + $0x1668] sm:$0xff]
    %v2256 = vld [vmem:[%s3 + $0x1670] sm:$0xff]
    %v2257 = vld [vmem:[%s3 + $0x1678] sm:$0xff]
    %v2258 = vld [vmem:[%s3 + $0x1680] sm:$0xff]
    %v2259 = vld [vmem:[%s3 + $0x1688] sm:$0xff]
    %v2260 = vld [vmem:[%s3 + $0x1690] sm:$0xff]
    %v2261 = vld [vmem:[%s3 + $0x1698] sm:$0xff]
    %v2262 = vld [vmem:[%s3 + $0x16a0] sm:$0xff]
    %v2263 = vld [vmem:[%s3 + $0x16a8] sm:$0xff]
    %v2264 = vld [vmem:[%s3 + $0x16b0] sm:$0xff]
    %v2265 = vld [vmem:[%s3 + $0x16b8] sm:$0xff]
    %v2266 = vld [vmem:[%s3 + $0x16c0] sm:$0xff]
    %v2267 = vld [vmem:[%s3 + $0x16c8] sm:$0xff]
    %v2268 = vld [vmem:[%s3 + $0x16d0] sm:$0xff]
    %v2269 = vld [vmem:[%s3 + $0x16d8] sm:$0xff]
    %v2270 = vld [vmem:[%s3 + $0x16e0] sm:$0xff]
    %v2271 = vld [vmem:[%s3 + $0x16e8] sm:$0xff]
    %v2272 = vld [vmem:[%s3 + $0x16f0] sm:$0xff]
    %v2273 = vld [vmem:[%s3 + $0x16f8] sm:$0xff]
    %v2274 = vld [vmem:[%s3 + $0x1700] sm:$0xff]
    %v2275 = vld [vmem:[%s3 + $0x1708] sm:$0xff]
    %v2276 = vld [vmem:[%s3 + $0x1710] sm:$0xff]
    %v2277 = vld [vmem:[%s3 + $0x1718] sm:$0xff]
    %v2278 = vld [vmem:[%s3 + $0x1720] sm:$0xff]
    %v2279 = vld [vmem:[%s3 + $0x1728] sm:$0xff]
    %v2280 = vld [vmem:[%s3 + $0x1730] sm:$0xff]
    %v2281 = vld [vmem:[%s3 + $0x1738] sm:$0xff]
    %v2282 = vld [vmem:[%s3 + $0x1740] sm:$0xff]
    %v2283 = vld [vmem:[%s3 + $0x1748] sm:$0xff]
    %v2284 = vld [vmem:[%s3 + $0x1750] sm:$0xff]
    %v2285 = vld [vmem:[%s3 + $0x1758] sm:$0xff]
    %v2286 = vld [vmem:[%s3 + $0x1760] sm:$0xff]
    %v2287 = vld [vmem:[%s3 + $0x1768] sm:$0xff]
    %v2288 = vld [vmem:[%s3 + $0x1770] sm:$0xff]
    %v2289 = vld [vmem:[%s3 + $0x1778] sm:$0xff]
    %v2290 = vld [vmem:[%s3 + $0x1780] sm:$0xff]
    %v2291 = vld [vmem:[%s3 + $0x1788] sm:$0xff]
    %v2292 = vld [vmem:[%s3 + $0x1790] sm:$0xff]
    %v2293 = vld [vmem:[%s3 + $0x1798] sm:$0xff]
    %v2294 = vld [vmem:[%s3 + $0x17a0] sm:$0xff]
    %v2295 = vld [vmem:[%s3 + $0x17a8] sm:$0xff]
    %v2296 = vld [vmem:[%s3 + $0x17b0] sm:$0xff]
    %v2297 = vld [vmem:[%s3 + $0x17b8] sm:$0xff]
    %v2298 = vld [vmem:[%s3 + $0x17c0] sm:$0xff]
    %v2299 = vld [vmem:[%s3 + $0x17c8] sm:$0xff]
    %v2300 = vld [vmem:[%s3 + $0x17d0] sm:$0xff]
    %v2301 = vld [vmem:[%s3 + $0x17d8] sm:$0xff]
    %v2302 = vld [vmem:[%s3 + $0x17e0] sm:$0xff]
    %v2303 = vld [vmem:[%s3 + $0x17e8] sm:$0xff]
    %v2304 = vld [vmem:[%s3 + $0x17f0] sm:$0xff]
    %v2305 = vld [vmem:[%s3 + $0x17f8] sm:$0xff]
    %v2306 = vld [vmem:[%s3 + $0x1800] sm:$0xff]
    %v2307 = vld [vmem:[%s3 + $0x1808] sm:$0xff]
    %v2308 = vld [vmem:[%s3 + $0x1810] sm:$0xff]
    %v2309 = vld [vmem:[%s3 + $0x1818] sm:$0xff]
    %v2310 = vld [vmem:[%s3 + $0x1820] sm:$0xff]
    %v2311 = vld [vmem:[%s3 + $0x1828] sm:$0xff]
    %v2312 = vld [vmem:[%s3 + $0x1830] sm:$0xff]
    %v2313 = vld [vmem:[%s3 + $0x1838] sm:$0xff]
    %v2314 = vld [vmem:[%s3 + $0x1840] sm:$0xff]
    %v2315 = vld [vmem:[%s3 + $0x1848] sm:$0xff]
    %v2316 = vld [vmem:[%s3 + $0x1850] sm:$0xff]
    %v2317 = vld [vmem:[%s3 + $0x1858] sm:$0xff]
    %v2318 = vld [vmem:[%s3 + $0x1860] sm:$0xff]
    %v2319 = vld [vmem:[%s3 + $0x1868] sm:$0xff]
    %v2320 = vld [vmem:[%s3 + $0x1870] sm:$0xff]
    %v2321 = vld [vmem:[%s3 + $0x1878] sm:$0xff]
    %v2322 = vld [vmem:[%s3 + $0x1880] sm:$0xff]
    %v2323 = vld [vmem:[%s3 + $0x1888] sm:$0xff]
    %v2324 = vld [vmem:[%s3 + $0x1890] sm:$0xff]
    %v2325 = vld [vmem:[%s3 + $0x1898] sm:$0xff]
    %v2326 = vld [vmem:[%s3 + $0x18a0] sm:$0xff]
    %v2327 = vld [vmem:[%s3 + $0x18a8] sm:$0xff]
    %v2328 = vld [vmem:[%s3 + $0x18b0] sm:$0xff]
    %v2329 = vld [vmem:[%s3 + $0x18b8] sm:$0xff]
    %v2330 = vld [vmem:[%s3 + $0x18c0] sm:$0xff]
    %v2331 = vld [vmem:[%s3 + $0x18c8] sm:$0xff]
    %v2332 = vld [vmem:[%s3 + $0x18d0] sm:$0xff]
    %v2333 = vld [vmem:[%s3 + $0x18d8] sm:$0xff]
    %v2334 = vld [vmem:[%s3 + $0x18e0] sm:$0xff]
    %v2335 = vld [vmem:[%s3 + $0x18e8] sm:$0xff]
    %v2336 = vld [vmem:[%s3 + $0x18f0] sm:$0xff]
    %v2337 = vld [vmem:[%s3 + $0x18f8] sm:$0xff]
    %v2338 = vld [vmem:[%s3 + $0x1900] sm:$0xff]
    %v2339 = vld [vmem:[%s3 + $0x1908] sm:$0xff]
    %v2340 = vld [vmem:[%s3 + $0x1910] sm:$0xff]
    %v2341 = vld [vmem:[%s3 + $0x1918] sm:$0xff]
    %v2342 = vld [vmem:[%s3 + $0x1920] sm:$0xff]
    %v2343 = vld [vmem:[%s3 + $0x1928] sm:$0xff]
    %v2344 = vld [vmem:[%s3 + $0x1930] sm:$0xff]
    %v2345 = vld [vmem:[%s3 + $0x1938] sm:$0xff]
    %v2346 = vld [vmem:[%s3 + $0x1940] sm:$0xff]
    %v2347 = vld [vmem:[%s3 + $0x1948] sm:$0xff]
    %v2348 = vld [vmem:[%s3 + $0x1950] sm:$0xff]
    %v2349 = vld [vmem:[%s3 + $0x1958] sm:$0xff]
    %v2350 = vld [vmem:[%s3 + $0x1960] sm:$0xff]
    %v2351 = vld [vmem:[%s3 + $0x1968] sm:$0xff]
    %v2352 = vld [vmem:[%s3 + $0x1970] sm:$0xff]
    %v2353 = vld [vmem:[%s3 + $0x1978] sm:$0xff]
    %v2354 = vld [vmem:[%s3 + $0x1980] sm:$0xff]
    %v2355 = vld [vmem:[%s3 + $0x1988] sm:$0xff]
    %v2356 = vld [vmem:[%s3 + $0x1990] sm:$0xff]
    %v2357 = vld [vmem:[%s3 + $0x1998] sm:$0xff]
    %v2358 = vld [vmem:[%s3 + $0x19a0] sm:$0xff]
    %v2359 = vld [vmem:[%s3 + $0x19a8] sm:$0xff]
    %v2360 = vld [vmem:[%s3 + $0x19b0] sm:$0xff]
    %v2361 = vld [vmem:[%s3 + $0x19b8] sm:$0xff]
    %v2362 = vld [vmem:[%s3 + $0x19c0] sm:$0xff]
    %v2363 = vld [vmem:[%s3 + $0x19c8] sm:$0xff]
    %v2364 = vld [vmem:[%s3 + $0x19d0] sm:$0xff]
    %v2365 = vld [vmem:[%s3 + $0x19d8] sm:$0xff]
    %v2366 = vld [vmem:[%s3 + $0x19e0] sm:$0xff]
    %v2367 = vld [vmem:[%s3 + $0x19e8] sm:$0xff]
    %v2368 = vld [vmem:[%s3 + $0x19f0] sm:$0xff]
    %v2369 = vld [vmem:[%s3 + $0x19f8] sm:$0xff]
    %v2370 = vld [vmem:[%s3 + $0x1a00] sm:$0xff]
    %v2371 = vld [vmem:[%s3 + $0x1a08] sm:$0xff]
    %v2372 = vld [vmem:[%s3 + $0x1a10] sm:$0xff]
    %v2373 = vld [vmem:[%s3 + $0x1a18] sm:$0xff]
    %v2374 = vld [vmem:[%s3 + $0x1a20] sm:$0xff]
    %v2375 = vld [vmem:[%s3 + $0x1a28] sm:$0xff]
    %v2376 = vld [vmem:[%s3 + $0x1a30] sm:$0xff]
    %v2377 = vld [vmem:[%s3 + $0x1a38] sm:$0xff]
    %v2378 = vld [vmem:[%s3 + $0x1a40] sm:$0xff]
    %v2379 = vld [vmem:[%s3 + $0x1a48] sm:$0xff]
    %v2380 = vld [vmem:[%s3 + $0x1a50] sm:$0xff]
    %v2381 = vld [vmem:[%s3 + $0x1a58] sm:$0xff]
    %v2382 = vld [vmem:[%s3 + $0x1a60] sm:$0xff]
    %v2383 = vld [vmem:[%s3 + $0x1a68] sm:$0xff]
    %v2384 = vld [vmem:[%s3 + $0x1a70] sm:$0xff]
    %v2385 = vld [vmem:[%s3 + $0x1a78] sm:$0xff]
    %v2386 = vld [vmem:[%s3 + $0x1a80] sm:$0xff]
    %v2387 = vld [vmem:[%s3 + $0x1a88] sm:$0xff]
    %v2388 = vld [vmem:[%s3 + $0x1a90] sm:$0xff]
    %v2389 = vld [vmem:[%s3 + $0x1a98] sm:$0xff]
    %v2390 = vld [vmem:[%s3 + $0x1aa0] sm:$0xff]
    %v2391 = vld [vmem:[%s3 + $0x1aa8] sm:$0xff]
    %v2392 = vld [vmem:[%s3 + $0x1ab0] sm:$0xff]
    %v2393 = vld [vmem:[%s3 + $0x1ab8] sm:$0xff]
    %v2394 = vld [vmem:[%s3 + $0x1ac0] sm:$0xff]
    %v2395 = vld [vmem:[%s3 + $0x1ac8] sm:$0xff]
    %v2396 = vld [vmem:[%s3 + $0x1ad0] sm:$0xff]
    %v2397 = vld [vmem:[%s3 + $0x1ad8] sm:$0xff]
    %v2398 = vld [vmem:[%s3 + $0x1ae0] sm:$0xff]
    %v2399 = vld [vmem:[%s3 + $0x1ae8] sm:$0xff]
    %v2400 = vld [vmem:[%s3 + $0x1af0] sm:$0xff]
    %v2401 = vld [vmem:[%s3 + $0x1af8] sm:$0xff]
    %v2402 = vld [vmem:[%s3 + $0x1b00] sm:$0xff]
    %v2403 = vld [vmem:[%s3 + $0x1b08] sm:$0xff]
    %v2404 = vld [vmem:[%s3 + $0x1b10] sm:$0xff]
    %v2405 = vld [vmem:[%s3 + $0x1b18] sm:$0xff]
    %v2406 = vld [vmem:[%s3 + $0x1b20] sm:$0xff]
    %v2407 = vld [vmem:[%s3 + $0x1b28] sm:$0xff]
    %v2408 = vld [vmem:[%s3 + $0x1b30] sm:$0xff]
    %v2409 = vld [vmem:[%s3 + $0x1b38] sm:$0xff]
    %v2410 = vld [vmem:[%s3 + $0x1b40] sm:$0xff]
    %v2411 = vld [vmem:[%s3 + $0x1b48] sm:$0xff]
    %v2412 = vld [vmem:[%s3 + $0x1b50] sm:$0xff]
    %v2413 = vld [vmem:[%s3 + $0x1b58] sm:$0xff]
    %v2414 = vld [vmem:[%s3 + $0x1b60] sm:$0xff]
    %v2415 = vld [vmem:[%s3 + $0x1b68] sm:$0xff]
    %v2416 = vld [vmem:[%s3 + $0x1b70] sm:$0xff]
    %v2417 = vld [vmem:[%s3 + $0x1b78] sm:$0xff]
    %v2418 = vld [vmem:[%s3 + $0x1b80] sm:$0xff]
    %v2419 = vld [vmem:[%s3 + $0x1b88] sm:$0xff]
    %v2420 = vld [vmem:[%s3 + $0x1b90] sm:$0xff]
    %v2421 = vld [vmem:[%s3 + $0x1b98] sm:$0xff]
    %v2422 = vld [vmem:[%s3 + $0x1ba0] sm:$0xff]
    %v2423 = vld [vmem:[%s3 + $0x1ba8] sm:$0xff]
    %v2424 = vld [vmem:[%s3 + $0x1bb0] sm:$0xff]
    %v2425 = vld [vmem:[%s3 + $0x1bb8] sm:$0xff]
    %v2426 = vld [vmem:[%s3 + $0x1bc0] sm:$0xff]
    %v2427 = vld [vmem:[%s3 + $0x1bc8] sm:$0xff]
    %v2428 = vld [vmem:[%s3 + $0x1bd0] sm:$0xff]
    %v2429 = vld [vmem:[%s3 + $0x1bd8] sm:$0xff]
    %v2430 = vld [vmem:[%s3 + $0x1be0] sm:$0xff]
    %v2431 = vld [vmem:[%s3 + $0x1be8] sm:$0xff]
    %v2432 = vld [vmem:[%s3 + $0x1bf0] sm:$0xff]
    %v2433 = vld [vmem:[%s3 + $0x1bf8] sm:$0xff]
    %v2434 = vld [vmem:[%s3 + $0x1c00] sm:$0xff]
    %v2435 = vld [vmem:[%s3 + $0x1c08] sm:$0xff]
    %v2436 = vld [vmem:[%s3 + $0x1c10] sm:$0xff]
    %v2437 = vld [vmem:[%s3 + $0x1c18] sm:$0xff]
    %v2438 = vld [vmem:[%s3 + $0x1c20] sm:$0xff]
    %v2439 = vld [vmem:[%s3 + $0x1c28] sm:$0xff]
    %v2440 = vld [vmem:[%s3 + $0x1c30] sm:$0xff]
    %v2441 = vld [vmem:[%s3 + $0x1c38] sm:$0xff]
    %v2442 = vld [vmem:[%s3 + $0x1c40] sm:$0xff]
    %v2443 = vld [vmem:[%s3 + $0x1c48] sm:$0xff]
    %v2444 = vld [vmem:[%s3 + $0x1c50] sm:$0xff]
    %v2445 = vld [vmem:[%s3 + $0x1c58] sm:$0xff]
    %v2446 = vld [vmem:[%s3 + $0x1c60] sm:$0xff]
    %v2447 = vld [vmem:[%s3 + $0x1c68] sm:$0xff]
    %v2448 = vld [vmem:[%s3 + $0x1c70] sm:$0xff]
    %v2449 = vld [vmem:[%s3 + $0x1c78] sm:$0xff]
    %v2450 = vld [vmem:[%s3 + $0x1c80] sm:$0xff]
    %v2451 = vld [vmem:[%s3 + $0x1c88] sm:$0xff]
    %v2452 = vld [vmem:[%s3 + $0x1c90] sm:$0xff]
    %v2453 = vld [vmem:[%s3 + $0x1c98] sm:$0xff]
    %v2454 = vld [vmem:[%s3 + $0x1ca0] sm:$0xff]
    %v2455 = vld [vmem:[%s3 + $0x1ca8] sm:$0xff]
    %v2456 = vld [vmem:[%s3 + $0x1cb0] sm:$0xff]
    %v2457 = vld [vmem:[%s3 + $0x1cb8] sm:$0xff]
    %v2458 = vld [vmem:[%s3 + $0x1cc0] sm:$0xff]
    %v2459 = vld [vmem:[%s3 + $0x1cc8] sm:$0xff]
    %v2460 = vld [vmem:[%s3 + $0x1cd0] sm:$0xff]
    %v2461 = vld [vmem:[%s3 + $0x1cd8] sm:$0xff]
    %v2462 = vld [vmem:[%s3 + $0x1ce0] sm:$0xff]
    %v2463 = vld [vmem:[%s3 + $0x1ce8] sm:$0xff]
    %v2464 = vld [vmem:[%s3 + $0x1cf0] sm:$0xff]
    %v2465 = vld [vmem:[%s3 + $0x1cf8] sm:$0xff]
    %v2466 = vld [vmem:[%s3 + $0x1d00] sm:$0xff]
    %v2467 = vld [vmem:[%s3 + $0x1d08] sm:$0xff]
    %v2468 = vld [vmem:[%s3 + $0x1d10] sm:$0xff]
    %v2469 = vld [vmem:[%s3 + $0x1d18] sm:$0xff]
    %v2470 = vld [vmem:[%s3 + $0x1d20] sm:$0xff]
    %v2471 = vld [vmem:[%s3 + $0x1d28] sm:$0xff]
    %v2472 = vld [vmem:[%s3 + $0x1d30] sm:$0xff]
    %v2473 = vld [vmem:[%s3 + $0x1d38] sm:$0xff]
    %v2474 = vld [vmem:[%s3 + $0x1d40] sm:$0xff]
    %v2475 = vld [vmem:[%s3 + $0x1d48] sm:$0xff]
    %v2476 = vld [vmem:[%s3 + $0x1d50] sm:$0xff]
    %v2477 = vld [vmem:[%s3 + $0x1d58] sm:$0xff]
    %v2478 = vld [vmem:[%s3 + $0x1d60] sm:$0xff]
    %v2479 = vld [vmem:[%s3 + $0x1d68] sm:$0xff]
    %v2480 = vld [vmem:[%s3 + $0x1d70] sm:$0xff]
    %v2481 = vld [vmem:[%s3 + $0x1d78] sm:$0xff]
    %v2482 = vld [vmem:[%s3 + $0x1d80] sm:$0xff]
    %v2483 = vld [vmem:[%s3 + $0x1d88] sm:$0xff]
    %v2484 = vld [vmem:[%s3 + $0x1d90] sm:$0xff]
    %v2485 = vld [vmem:[%s3 + $0x1d98] sm:$0xff]
    %v2486 = vld [vmem:[%s3 + $0x1da0] sm:$0xff]
    %v2487 = vld [vmem:[%s3 + $0x1da8] sm:$0xff]
    %v2488 = vld [vmem:[%s3 + $0x1db0] sm:$0xff]
    %v2489 = vld [vmem:[%s3 + $0x1db8] sm:$0xff]
    %v2490 = vld [vmem:[%s3 + $0x1dc0] sm:$0xff]
    %v2491 = vld [vmem:[%s3 + $0x1dc8] sm:$0xff]
    %v2492 = vld [vmem:[%s3 + $0x1dd0] sm:$0xff]
    %v2493 = vld [vmem:[%s3 + $0x1dd8] sm:$0xff]
    %v2494 = vld [vmem:[%s3 + $0x1de0] sm:$0xff]
    %v2495 = vld [vmem:[%s3 + $0x1de8] sm:$0xff]
    %v2496 = vld [vmem:[%s3 + $0x1df0] sm:$0xff]
    %v2497 = vld [vmem:[%s3 + $0x1df8] sm:$0xff]
    %v2498 = vld [vmem:[%s3 + $0x1e00] sm:$0xff]
    %v2499 = vld [vmem:[%s3 + $0x1e08] sm:$0xff]
    %v2500 = vld [vmem:[%s3 + $0x1e10] sm:$0xff]
    %v2501 = vld [vmem:[%s3 + $0x1e18] sm:$0xff]
    %v2502 = vld [vmem:[%s3 + $0x1e20] sm:$0xff]
    %v2503 = vld [vmem:[%s3 + $0x1e28] sm:$0xff]
    %v2504 = vld [vmem:[%s3 + $0x1e30] sm:$0xff]
    %v2505 = vld [vmem:[%s3 + $0x1e38] sm:$0xff]
    %v2506 = vld [vmem:[%s3 + $0x1e40] sm:$0xff]
    %v2507 = vld [vmem:[%s3 + $0x1e48] sm:$0xff]
    %v2508 = vld [vmem:[%s3 + $0x1e50] sm:$0xff]
    %v2509 = vld [vmem:[%s3 + $0x1e58] sm:$0xff]
    %v2510 = vld [vmem:[%s3 + $0x1e60] sm:$0xff]
    %v2511 = vld [vmem:[%s3 + $0x1e68] sm:$0xff]
    %v2512 = vld [vmem:[%s3 + $0x1e70] sm:$0xff]
    %v2513 = vld [vmem:[%s3 + $0x1e78] sm:$0xff]
    %v2514 = vld [vmem:[%s3 + $0x1e80] sm:$0xff]
    %v2515 = vld [vmem:[%s3 + $0x1e88] sm:$0xff]
    %v2516 = vld [vmem:[%s3 + $0x1e90] sm:$0xff]
    %v2517 = vld [vmem:[%s3 + $0x1e98] sm:$0xff]
    %v2518 = vld [vmem:[%s3 + $0x1ea0] sm:$0xff]
    %v2519 = vld [vmem:[%s3 + $0x1ea8] sm:$0xff]
    %v2520 = vld [vmem:[%s3 + $0x1eb0] sm:$0xff]
    %v2521 = vld [vmem:[%s3 + $0x1eb8] sm:$0xff]
    %v2522 = vld [vmem:[%s3 + $0x1ec0] sm:$0xff]
    %v2523 = vld [vmem:[%s3 + $0x1ec8] sm:$0xff]
    %v2524 = vld [vmem:[%s3 + $0x1ed0] sm:$0xff]
    %v2525 = vld [vmem:[%s3 + $0x1ed8] sm:$0xff]
    %v2526 = vld [vmem:[%s3 + $0x1ee0] sm:$0xff]
    %v2527 = vld [vmem:[%s3 + $0x1ee8] sm:$0xff]
    %v2528 = vld [vmem:[%s3 + $0x1ef0] sm:$0xff]
    %v2529 = vld [vmem:[%s3 + $0x1ef8] sm:$0xff]
    %v2530 = vld [vmem:[%s3 + $0x1f00] sm:$0xff]
    %v2531 = vld [vmem:[%s3 + $0x1f08] sm:$0xff]
    %v2532 = vld [vmem:[%s3 + $0x1f10] sm:$0xff]
    %v2533 = vld [vmem:[%s3 + $0x1f18] sm:$0xff]
    %v2534 = vld [vmem:[%s3 + $0x1f20] sm:$0xff]
    %v2535 = vld [vmem:[%s3 + $0x1f28] sm:$0xff]
    %v2536 = vld [vmem:[%s3 + $0x1f30] sm:$0xff]
    %v2537 = vld [vmem:[%s3 + $0x1f38] sm:$0xff]
    %v2538 = vld [vmem:[%s3 + $0x1f40] sm:$0xff]
    %v2539 = vld [vmem:[%s3 + $0x1f48] sm:$0xff]
    %v2540 = vld [vmem:[%s3 + $0x1f50] sm:$0xff]
    %v2541 = vld [vmem:[%s3 + $0x1f58] sm:$0xff]
    %v2542 = vld [vmem:[%s3 + $0x1f60] sm:$0xff]
    %v2543 = vld [vmem:[%s3 + $0x1f68] sm:$0xff]
    %v2544 = vld [vmem:[%s3 + $0x1f70] sm:$0xff]
    %v2545 = vld [vmem:[%s3 + $0x1f78] sm:$0xff]
    %v2546 = vld [vmem:[%s3 + $0x1f80] sm:$0xff]
    %v2547 = vld [vmem:[%s3 + $0x1f88] sm:$0xff]
    %v2548 = vld [vmem:[%s3 + $0x1f90] sm:$0xff]
    %v2549 = vld [vmem:[%s3 + $0x1f98] sm:$0xff]
    %v2550 = vld [vmem:[%s3 + $0x1fa0] sm:$0xff]
    %v2551 = vld [vmem:[%s3 + $0x1fa8] sm:$0xff]
    %v2552 = vld [vmem:[%s3 + $0x1fb0] sm:$0xff]
    %v2553 = vld [vmem:[%s3 + $0x1fb8] sm:$0xff]
    %v2554 = vld [vmem:[%s3 + $0x1fc0] sm:$0xff]
    %v2555 = vld [vmem:[%s3 + $0x1fc8] sm:$0xff]
    %v2556 = vld [vmem:[%s3 + $0x1fd0] sm:$0xff]
    %v2557 = vld [vmem:[%s3 + $0x1fd8] sm:$0xff]
    %v2558 = vld [vmem:[%s3 + $0x1fe0] sm:$0xff]
    %v2559 = vld [vmem:[%s3 + $0x1fe8] sm:$0xff]
    %v2560 = vld [vmem:[%s3 + $0x1ff0] sm:$0xff]
    %v2561 = vld [vmem:[%s3 + $0x1ff8] sm:$0xff]
    %v2562 = vld [vmem:[%s3 + $0x2000] sm:$0xff]
    %v2563 = vld [vmem:[%s3 + $0x2008] sm:$0xff]
    %v2564 = vld [vmem:[%s3 + $0x2010] sm:$0xff]
    %v2565 = vld [vmem:[%s3 + $0x2018] sm:$0xff]
    %v2566 = vld [vmem:[%s3 + $0x2020] sm:$0xff]
    %v2567 = vld [vmem:[%s3 + $0x2028] sm:$0xff]
    %v2568 = vld [vmem:[%s3 + $0x2030] sm:$0xff]
    %v2569 = vld [vmem:[%s3 + $0x2038] sm:$0xff]
    %v2570 = vld [vmem:[%s3 + $0x2040] sm:$0xff]
    %v2571 = vld [vmem:[%s3 + $0x2048] sm:$0xff]
    %v2572 = vld [vmem:[%s3 + $0x2050] sm:$0xff]
    %v2573 = vld [vmem:[%s3 + $0x2058] sm:$0xff]
    %v2574 = vld [vmem:[%s3 + $0x2060] sm:$0xff]
    %v2575 = vld [vmem:[%s3 + $0x2068] sm:$0xff]
    %v2576 = vld [vmem:[%s3 + $0x2070] sm:$0xff]
    %v2577 = vld [vmem:[%s3 + $0x2078] sm:$0xff]
    %v2578 = vld [vmem:[%s3 + $0x2080] sm:$0xff]
    %v2579 = vld [vmem:[%s3 + $0x2088] sm:$0xff]
    %v2580 = vld [vmem:[%s3 + $0x2090] sm:$0xff]
    %v2581 = vld [vmem:[%s3 + $0x2098] sm:$0xff]
    %v2582 = vld [vmem:[%s3 + $0x20a0] sm:$0xff]
    %v2583 = vld [vmem:[%s3 + $0x20a8] sm:$0xff]
    %v2584 = vld [vmem:[%s3 + $0x20b0] sm:$0xff]
    %v2585 = vld [vmem:[%s3 + $0x20b8] sm:$0xff]
    %v2586 = vld [vmem:[%s3 + $0x20c0] sm:$0xff]
    %v2587 = vld [vmem:[%s3 + $0x20c8] sm:$0xff]
    %v2588 = vld [vmem:[%s3 + $0x20d0] sm:$0xff]
    %v2589 = vld [vmem:[%s3 + $0x20d8] sm:$0xff]
    %v2590 = vld [vmem:[%s3 + $0x20e0] sm:$0xff]
    %v2591 = vld [vmem:[%s3 + $0x20e8] sm:$0xff]
    %v2592 = vld [vmem:[%s3 + $0x20f0] sm:$0xff]
    %v2593 = vld [vmem:[%s3 + $0x20f8] sm:$0xff]
    %v2594 = vld [vmem:[%s3 + $0x2100] sm:$0xff]
    %v2595 = vld [vmem:[%s3 + $0x2108] sm:$0xff]
    %v2596 = vld [vmem:[%s3 + $0x2110] sm:$0xff]
    %v2597 = vld [vmem:[%s3 + $0x2118] sm:$0xff]
    %v2598 = vld [vmem:[%s3 + $0x2120] sm:$0xff]
    %v2599 = vld [vmem:[%s3 + $0x2128] sm:$0xff]
    %v2600 = vld [vmem:[%s3 + $0x2130] sm:$0xff]
    %v2601 = vld [vmem:[%s3 + $0x2138] sm:$0xff]
    %v2602 = vld [vmem:[%s3 + $0x2140] sm:$0xff]
    %v2603 = vld [vmem:[%s3 + $0x2148] sm:$0xff]
    %v2604 = vld [vmem:[%s3 + $0x2150] sm:$0xff]
    %v2605 = vld [vmem:[%s3 + $0x2158] sm:$0xff]
    %v2606 = vld [vmem:[%s3 + $0x2160] sm:$0xff]
    %v2607 = vld [vmem:[%s3 + $0x2168] sm:$0xff]
    %v2608 = vld [vmem:[%s3 + $0x2170] sm:$0xff]
    %v2609 = vld [vmem:[%s3 + $0x2178] sm:$0xff]
    %v2610 = vld [vmem:[%s3 + $0x2180] sm:$0xff]
    %v2611 = vld [vmem:[%s3 + $0x2188] sm:$0xff]
    %v2612 = vld [vmem:[%s3 + $0x2190] sm:$0xff]
    %v2613 = vld [vmem:[%s3 + $0x2198] sm:$0xff]
    %v2614 = vld [vmem:[%s3 + $0x21a0] sm:$0xff]
    %v2615 = vld [vmem:[%s3 + $0x21a8] sm:$0xff]
    %v2616 = vld [vmem:[%s3 + $0x21b0] sm:$0xff]
    %v2617 = vld [vmem:[%s3 + $0x21b8] sm:$0xff]
    %v2618 = vld [vmem:[%s3 + $0x21c0] sm:$0xff]
    %v2619 = vld [vmem:[%s3 + $0x21c8] sm:$0xff]
    %v2620 = vld [vmem:[%s3 + $0x21d0] sm:$0xff]
    %v2621 = vld [vmem:[%s3 + $0x21d8] sm:$0xff]
    %v2622 = vld [vmem:[%s3 + $0x21e0] sm:$0xff]
    %v2623 = vld [vmem:[%s3 + $0x21e8] sm:$0xff]
    %v2624 = vld [vmem:[%s3 + $0x21f0] sm:$0xff]
    %v2625 = vld [vmem:[%s3 + $0x21f8] sm:$0xff]
    %v2626 = vld [vmem:[%s3 + $0x2200] sm:$0xff]
    %v2627 = vld [vmem:[%s3 + $0x2208] sm:$0xff]
    %v2628 = vld [vmem:[%s3 + $0x2210] sm:$0xff]
    %v2629 = vld [vmem:[%s3 + $0x2218] sm:$0xff]
    %v2630 = vld [vmem:[%s3 + $0x2220] sm:$0xff]
    %v2631 = vld [vmem:[%s3 + $0x2228] sm:$0xff]
    %v2632 = vld [vmem:[%s3 + $0x2230] sm:$0xff]
    %v2633 = vld [vmem:[%s3 + $0x2238] sm:$0xff]
    %v2634 = vld [vmem:[%s3 + $0x2240] sm:$0xff]
    %v2635 = vld [vmem:[%s3 + $0x2248] sm:$0xff]
    %v2636 = vld [vmem:[%s3 + $0x2250] sm:$0xff]
    %v2637 = vld [vmem:[%s3 + $0x2258] sm:$0xff]
    %v2638 = vld [vmem:[%s3 + $0x2260] sm:$0xff]
    %v2639 = vld [vmem:[%s3 + $0x2268] sm:$0xff]
    %v2640 = vld [vmem:[%s3 + $0x2270] sm:$0xff]
    %v2641 = vld [vmem:[%s3 + $0x2278] sm:$0xff]
    %v2642 = vld [vmem:[%s3 + $0x2280] sm:$0xff]
    %v2643 = vld [vmem:[%s3 + $0x2288] sm:$0xff]
    %v2644 = vld [vmem:[%s3 + $0x2290] sm:$0xff]
    %v2645 = vld [vmem:[%s3 + $0x2298] sm:$0xff]
    %v2646 = vld [vmem:[%s3 + $0x22a0] sm:$0xff]
    %v2647 = vld [vmem:[%s3 + $0x22a8] sm:$0xff]
    %v2648 = vld [vmem:[%s3 + $0x22b0] sm:$0xff]
    %v2649 = vld [vmem:[%s3 + $0x22b8] sm:$0xff]
    %v2650 = vld [vmem:[%s3 + $0x22c0] sm:$0xff]
    %v2651 = vld [vmem:[%s3 + $0x22c8] sm:$0xff]
    %v2652 = vld [vmem:[%s3 + $0x22d0] sm:$0xff]
    %v2653 = vld [vmem:[%s3 + $0x22d8] sm:$0xff]
    %v2654 = vld [vmem:[%s3 + $0x22e0] sm:$0xff]
    %v2655 = vld [vmem:[%s3 + $0x22e8] sm:$0xff]
    %v2656 = vld [vmem:[%s3 + $0x22f0] sm:$0xff]
    %v2657 = vld [vmem:[%s3 + $0x22f8] sm:$0xff]
    %v2658 = vld [vmem:[%s3 + $0x2300] sm:$0xff]
    %v2659 = vld [vmem:[%s3 + $0x2308] sm:$0xff]
    %v2660 = vld [vmem:[%s3 + $0x2310] sm:$0xff]
    %v2661 = vld [vmem:[%s3 + $0x2318] sm:$0xff]
    %v2662 = vld [vmem:[%s3 + $0x2320] sm:$0xff]
    %v2663 = vld [vmem:[%s3 + $0x2328] sm:$0xff]
    %v2664 = vld [vmem:[%s3 + $0x2330] sm:$0xff]
    %v2665 = vld [vmem:[%s3 + $0x2338] sm:$0xff]
    %v2666 = vld [vmem:[%s3 + $0x2340] sm:$0xff]
    %v2667 = vld [vmem:[%s3 + $0x2348] sm:$0xff]
    %v2668 = vld [vmem:[%s3 + $0x2350] sm:$0xff]
    %v2669 = vld [vmem:[%s3 + $0x2358] sm:$0xff]
    %v2670 = vld [vmem:[%s3 + $0x2360] sm:$0xff]
    %v2671 = vld [vmem:[%s3 + $0x2368] sm:$0xff]
    %v2672 = vld [vmem:[%s3 + $0x2370] sm:$0xff]
    %v2673 = vld [vmem:[%s3 + $0x2378] sm:$0xff]
    %v2674 = vld [vmem:[%s3 + $0x2380] sm:$0xff]
    %v2675 = vld [vmem:[%s3 + $0x2388] sm:$0xff]
    %v2676 = vld [vmem:[%s3 + $0x2390] sm:$0xff]
    %v2677 = vld [vmem:[%s3 + $0x2398] sm:$0xff]
    %v2678 = vld [vmem:[%s3 + $0x23a0] sm:$0xff]
    %v2679 = vld [vmem:[%s3 + $0x23a8] sm:$0xff]
    %v2680 = vld [vmem:[%s3 + $0x23b0] sm:$0xff]
    %v2681 = vld [vmem:[%s3 + $0x23b8] sm:$0xff]
    %v2682 = vld [vmem:[%s3 + $0x23c0] sm:$0xff]
    %v2683 = vld [vmem:[%s3 + $0x23c8] sm:$0xff]
    %v2684 = vld [vmem:[%s3 + $0x23d0] sm:$0xff]
    %v2685 = vld [vmem:[%s3 + $0x23d8] sm:$0xff]
    %v2686 = vld [vmem:[%s3 + $0x23e0] sm:$0xff]
    %v2687 = vld [vmem:[%s3 + $0x23e8] sm:$0xff]
    %v2688 = vld [vmem:[%s3 + $0x23f0] sm:$0xff]
    %v2689 = vld [vmem:[%s3 + $0x23f8] sm:$0xff]
    %v2690 = vld [vmem:[%s3 + $0x2400] sm:$0xff]
    %v2691 = vld [vmem:[%s3 + $0x2408] sm:$0xff]
    %v2692 = vld [vmem:[%s3 + $0x2410] sm:$0xff]
    %v2693 = vld [vmem:[%s3 + $0x2418] sm:$0xff]
    %v2694 = vld [vmem:[%s3 + $0x2420] sm:$0xff]
    %v2695 = vld [vmem:[%s3 + $0x2428] sm:$0xff]
    %v2696 = vld [vmem:[%s3 + $0x2430] sm:$0xff]
    %v2697 = vld [vmem:[%s3 + $0x2438] sm:$0xff]
    %v2698 = vld [vmem:[%s3 + $0x2440] sm:$0xff]
    %v2699 = vld [vmem:[%s3 + $0x2448] sm:$0xff]
    %v2700 = vld [vmem:[%s3 + $0x2450] sm:$0xff]
    %v2701 = vld [vmem:[%s3 + $0x2458] sm:$0xff]
    %v2702 = vld [vmem:[%s3 + $0x2460] sm:$0xff]
    %v2703 = vld [vmem:[%s3 + $0x2468] sm:$0xff]
    %v2704 = vld [vmem:[%s3 + $0x2470] sm:$0xff]
    %v2705 = vld [vmem:[%s3 + $0x2478] sm:$0xff]
    %v2706 = vld [vmem:[%s3 + $0x2480] sm:$0xff]
    %v2707 = vld [vmem:[%s3 + $0x2488] sm:$0xff]
    %v2708 = vld [vmem:[%s3 + $0x2490] sm:$0xff]
    %v2709 = vld [vmem:[%s3 + $0x2498] sm:$0xff]
    %v2710 = vld [vmem:[%s3 + $0x24a0] sm:$0xff]
    %v2711 = vld [vmem:[%s3 + $0x24a8] sm:$0xff]
    %v2712 = vld [vmem:[%s3 + $0x24b0] sm:$0xff]
    %v2713 = vld [vmem:[%s3 + $0x24b8] sm:$0xff]
    %v2714 = vld [vmem:[%s3 + $0x24c0] sm:$0xff]
    %v2715 = vld [vmem:[%s3 + $0x24c8] sm:$0xff]
    %v2716 = vld [vmem:[%s3 + $0x24d0] sm:$0xff]
    %v2717 = vld [vmem:[%s3 + $0x24d8] sm:$0xff]
    %v2718 = vld [vmem:[%s3 + $0x24e0] sm:$0xff]
    %v2719 = vld [vmem:[%s3 + $0x24e8] sm:$0xff]
    %v2720 = vld [vmem:[%s3 + $0x24f0] sm:$0xff]
    %v2721 = vld [vmem:[%s3 + $0x24f8] sm:$0xff]
    %v2722 = vld [vmem:[%s3 + $0x2500] sm:$0xff]
    %v2723 = vld [vmem:[%s3 + $0x2508] sm:$0xff]
    %v2724 = vld [vmem:[%s3 + $0x2510] sm:$0xff]
    %v2725 = vld [vmem:[%s3 + $0x2518] sm:$0xff]
    %v2726 = vld [vmem:[%s3 + $0x2520] sm:$0xff]
    %v2727 = vld [vmem:[%s3 + $0x2528] sm:$0xff]
    %v2728 = vld [vmem:[%s3 + $0x2530] sm:$0xff]
    %v2729 = vld [vmem:[%s3 + $0x2538] sm:$0xff]
    %v2730 = vld [vmem:[%s3 + $0x2540] sm:$0xff]
    %v2731 = vld [vmem:[%s3 + $0x2548] sm:$0xff]
    %v2732 = vld [vmem:[%s3 + $0x2550] sm:$0xff]
    %v2733 = vld [vmem:[%s3 + $0x2558] sm:$0xff]
    %v2734 = vld [vmem:[%s3 + $0x2560] sm:$0xff]
    %v2735 = vld [vmem:[%s3 + $0x2568] sm:$0xff]
    %v2736 = vld [vmem:[%s3 + $0x2570] sm:$0xff]
    %v2737 = vld [vmem:[%s3 + $0x2578] sm:$0xff]
    %v2738 = vld [vmem:[%s3 + $0x2580] sm:$0xff]
    %v2739 = vld [vmem:[%s3 + $0x2588] sm:$0xff]
    %v2740 = vld [vmem:[%s3 + $0x2590] sm:$0xff]
    %v2741 = vld [vmem:[%s3 + $0x2598] sm:$0xff]
    %v2742 = vld [vmem:[%s3 + $0x25a0] sm:$0xff]
    %v2743 = vld [vmem:[%s3 + $0x25a8] sm:$0xff]
    %v2744 = vld [vmem:[%s3 + $0x25b0] sm:$0xff]
    %v2745 = vld [vmem:[%s3 + $0x25b8] sm:$0xff]
    %v2746 = vld [vmem:[%s3 + $0x25c0] sm:$0xff]
    %v2747 = vld [vmem:[%s3 + $0x25c8] sm:$0xff]
    %v2748 = vld [vmem:[%s3 + $0x25d0] sm:$0xff]
    %v2749 = vld [vmem:[%s3 + $0x25d8] sm:$0xff]
    %v2750 = vld [vmem:[%s3 + $0x25e0] sm:$0xff]
    %v2751 = vld [vmem:[%s3 + $0x25e8] sm:$0xff]
    %v2752 = vld [vmem:[%s3 + $0x25f0] sm:$0xff]
    %v2753 = vld [vmem:[%s3 + $0x25f8] sm:$0xff]
    %v2754 = vld [vmem:[%s3 + $0x2600] sm:$0xff]
    %v2755 = vld [vmem:[%s3 + $0x2608] sm:$0xff]
    %v2756 = vld [vmem:[%s3 + $0x2610] sm:$0xff]
    %v2757 = vld [vmem:[%s3 + $0x2618] sm:$0xff]
    %v2758 = vld [vmem:[%s3 + $0x2620] sm:$0xff]
    %v2759 = vld [vmem:[%s3 + $0x2628] sm:$0xff]
    %v2760 = vld [vmem:[%s3 + $0x2630] sm:$0xff]
    %v2761 = vld [vmem:[%s3 + $0x2638] sm:$0xff]
    %v2762 = vld [vmem:[%s3 + $0x2640] sm:$0xff]
    %v2763 = vld [vmem:[%s3 + $0x2648] sm:$0xff]
    %v2764 = vld [vmem:[%s3 + $0x2650] sm:$0xff]
    %v2765 = vld [vmem:[%s3 + $0x2658] sm:$0xff]
    %v2766 = vld [vmem:[%s3 + $0x2660] sm:$0xff]
    %v2767 = vld [vmem:[%s3 + $0x2668] sm:$0xff]
    %v2768 = vld [vmem:[%s3 + $0x2670] sm:$0xff]
    %v2769 = vld [vmem:[%s3 + $0x2678] sm:$0xff]
    %v2770 = vld [vmem:[%s3 + $0x2680] sm:$0xff]
    %v2771 = vld [vmem:[%s3 + $0x2688] sm:$0xff]
    %v2772 = vld [vmem:[%s3 + $0x2690] sm:$0xff]
    %v2773 = vld [vmem:[%s3 + $0x2698] sm:$0xff]
    %v2774 = vld [vmem:[%s3 + $0x26a0] sm:$0xff]
    %v2775 = vld [vmem:[%s3 + $0x26a8] sm:$0xff]
    %v2776 = vld [vmem:[%s3 + $0x26b0] sm:$0xff]
    %v2777 = vld [vmem:[%s3 + $0x26b8] sm:$0xff]
    %v2778 = vld [vmem:[%s3 + $0x26c0] sm:$0xff]
    %v2779 = vld [vmem:[%s3 + $0x26c8] sm:$0xff]
    %v2780 = vld [vmem:[%s3 + $0x26d0] sm:$0xff]
    %v2781 = vld [vmem:[%s3 + $0x26d8] sm:$0xff]
    %v2782 = vld [vmem:[%s3 + $0x26e0] sm:$0xff]
    %v2783 = vld [vmem:[%s3 + $0x26e8] sm:$0xff]
    %v2784 = vld [vmem:[%s3 + $0x26f0] sm:$0xff]
    %v2785 = vld [vmem:[%s3 + $0x26f8] sm:$0xff]
    %v2786 = vld [vmem:[%s3 + $0x2700] sm:$0xff]
    %v2787 = vld [vmem:[%s3 + $0x2708] sm:$0xff]
    %v2788 = vld [vmem:[%s3 + $0x2710] sm:$0xff]
    %v2789 = vld [vmem:[%s3 + $0x2718] sm:$0xff]
    %v2790 = vld [vmem:[%s3 + $0x2720] sm:$0xff]
    %v2791 = vld [vmem:[%s3 + $0x2728] sm:$0xff]
    %v2792 = vld [vmem:[%s3 + $0x2730] sm:$0xff]
    %v2793 = vld [vmem:[%s3 + $0x2738] sm:$0xff]
    %v2794 = vld [vmem:[%s3 + $0x2740] sm:$0xff]
    %v2795 = vld [vmem:[%s3 + $0x2748] sm:$0xff]
    %v2796 = vld [vmem:[%s3 + $0x2750] sm:$0xff]
    %v2797 = vld [vmem:[%s3 + $0x2758] sm:$0xff]
    %v2798 = vld [vmem:[%s3 + $0x2760] sm:$0xff]
    %v2799 = vld [vmem:[%s3 + $0x2768] sm:$0xff]
    %v2800 = vld [vmem:[%s3 + $0x2770] sm:$0xff]
    %v2801 = vld [vmem:[%s3 + $0x2778] sm:$0xff]
    %v2802 = vld [vmem:[%s3 + $0x2780] sm:$0xff]
    %v2803 = vld [vmem:[%s3 + $0x2788] sm:$0xff]
    %v2804 = vld [vmem:[%s3 + $0x2790] sm:$0xff]
    %v2805 = vld [vmem:[%s3 + $0x2798] sm:$0xff]
    %v2806 = vld [vmem:[%s3 + $0x27a0] sm:$0xff]
    %v2807 = vld [vmem:[%s3 + $0x27a8] sm:$0xff]
    %v2808 = vld [vmem:[%s3 + $0x27b0] sm:$0xff]
    %v2809 = vld [vmem:[%s3 + $0x27b8] sm:$0xff]
    %v2810 = vld [vmem:[%s3 + $0x27c0] sm:$0xff]
    %v2811 = vld [vmem:[%s3 + $0x27c8] sm:$0xff]
    %v2812 = vld [vmem:[%s3 + $0x27d0] sm:$0xff]
    %v2813 = vld [vmem:[%s3 + $0x27d8] sm:$0xff]
    %v2814 = vld [vmem:[%s3 + $0x27e0] sm:$0xff]
    %v2815 = vld [vmem:[%s3 + $0x27e8] sm:$0xff]
    %v2816 = vld [vmem:[%s3 + $0x27f0] sm:$0xff]
    %v2817 = vld [vmem:[%s3 + $0x27f8] sm:$0xff]
    %v2818 = vld [vmem:[%s3 + $0x2800] sm:$0xff]
    %v2819 = vld [vmem:[%s3 + $0x2808] sm:$0xff]
    %v2820 = vld [vmem:[%s3 + $0x2810] sm:$0xff]
    %v2821 = vld [vmem:[%s3 + $0x2818] sm:$0xff]
    %v2822 = vld [vmem:[%s3 + $0x2820] sm:$0xff]
    %v2823 = vld [vmem:[%s3 + $0x2828] sm:$0xff]
    %v2824 = vld [vmem:[%s3 + $0x2830] sm:$0xff]
    %v2825 = vld [vmem:[%s3 + $0x2838] sm:$0xff]
    %v2826 = vld [vmem:[%s3 + $0x2840] sm:$0xff]
    %v2827 = vld [vmem:[%s3 + $0x2848] sm:$0xff]
    %v2828 = vld [vmem:[%s3 + $0x2850] sm:$0xff]
    %v2829 = vld [vmem:[%s3 + $0x2858] sm:$0xff]
    %v2830 = vld [vmem:[%s3 + $0x2860] sm:$0xff]
    %v2831 = vld [vmem:[%s3 + $0x2868] sm:$0xff]
    %v2832 = vld [vmem:[%s3 + $0x2870] sm:$0xff]
    %v2833 = vld [vmem:[%s3 + $0x2878] sm:$0xff]
    %v2834 = vld [vmem:[%s3 + $0x2880] sm:$0xff]
    %v2835 = vld [vmem:[%s3 + $0x2888] sm:$0xff]
    %v2836 = vld [vmem:[%s3 + $0x2890] sm:$0xff]
    %v2837 = vld [vmem:[%s3 + $0x2898] sm:$0xff]
    %v2838 = vld [vmem:[%s3 + $0x28a0] sm:$0xff]
    %v2839 = vld [vmem:[%s3 + $0x28a8] sm:$0xff]
    %v2840 = vld [vmem:[%s3 + $0x28b0] sm:$0xff]
    %v2841 = vld [vmem:[%s3 + $0x28b8] sm:$0xff]
    %v2842 = vld [vmem:[%s3 + $0x28c0] sm:$0xff]
    %v2843 = vld [vmem:[%s3 + $0x28c8] sm:$0xff]
    %v2844 = vld [vmem:[%s3 + $0x28d0] sm:$0xff]
    %v2845 = vld [vmem:[%s3 + $0x28d8] sm:$0xff]
    %v2846 = vld [vmem:[%s3 + $0x28e0] sm:$0xff]
    %v2847 = vld [vmem:[%s3 + $0x28e8] sm:$0xff]
    %v2848 = vld [vmem:[%s3 + $0x28f0] sm:$0xff]
    %v2849 = vld [vmem:[%s3 + $0x28f8] sm:$0xff]
    %v2850 = vld [vmem:[%s3 + $0x2900] sm:$0xff]
    %v2851 = vld [vmem:[%s3 + $0x2908] sm:$0xff]
    %v2852 = vld [vmem:[%s3 + $0x2910] sm:$0xff]
    %v2853 = vld [vmem:[%s3 + $0x2918] sm:$0xff]
    %v2854 = vld [vmem:[%s3 + $0x2920] sm:$0xff]
    %v2855 = vld [vmem:[%s3 + $0x2928] sm:$0xff]
    %v2856 = vld [vmem:[%s3 + $0x2930] sm:$0xff]
    %v2857 = vld [vmem:[%s3 + $0x2938] sm:$0xff]
    %v2858 = vld [vmem:[%s3 + $0x2940] sm:$0xff]
    %v2859 = vld [vmem:[%s3 + $0x2948] sm:$0xff]
    %v2860 = vld [vmem:[%s3 + $0x2950] sm:$0xff]
    %v2861 = vld [vmem:[%s3 + $0x2958] sm:$0xff]
    %v2862 = vld [vmem:[%s3 + $0x2960] sm:$0xff]
    %v2863 = vld [vmem:[%s3 + $0x2968] sm:$0xff]
    %v2864 = vld [vmem:[%s3 + $0x2970] sm:$0xff]
    %v2865 = vld [vmem:[%s3 + $0x2978] sm:$0xff]
    %v2866 = vld [vmem:[%s3 + $0x2980] sm:$0xff]
    %v2867 = vld [vmem:[%s3 + $0x2988] sm:$0xff]
    %v2868 = vld [vmem:[%s3 + $0x2990] sm:$0xff]
    %v2869 = vld [vmem:[%s3 + $0x2998] sm:$0xff]
    %v2870 = vld [vmem:[%s3 + $0x29a0] sm:$0xff]
    %v2871 = vld [vmem:[%s3 + $0x29a8] sm:$0xff]
    %v2872 = vld [vmem:[%s3 + $0x29b0] sm:$0xff]
    %v2873 = vld [vmem:[%s3 + $0x29b8] sm:$0xff]
    %v2874 = vld [vmem:[%s3 + $0x29c0] sm:$0xff]
    %v2875 = vld [vmem:[%s3 + $0x29c8] sm:$0xff]
    %v2876 = vld [vmem:[%s3 + $0x29d0] sm:$0xff]
    %v2877 = vld [vmem:[%s3 + $0x29d8] sm:$0xff]
    %v2878 = vld [vmem:[%s3 + $0x29e0] sm:$0xff]
    %v2879 = vld [vmem:[%s3 + $0x29e8] sm:$0xff]
    %v2880 = vld [vmem:[%s3 + $0x29f0] sm:$0xff]
    %v2881 = vld [vmem:[%s3 + $0x29f8] sm:$0xff]
    %v2882 = vld [vmem:[%s3 + $0x2a00] sm:$0xff]
    %v2883 = vld [vmem:[%s3 + $0x2a08] sm:$0xff]
    %v2884 = vld [vmem:[%s3 + $0x2a10] sm:$0xff]
    %v2885 = vld [vmem:[%s3 + $0x2a18] sm:$0xff]
    %v2886 = vld [vmem:[%s3 + $0x2a20] sm:$0xff]
    %v2887 = vld [vmem:[%s3 + $0x2a28] sm:$0xff]
    %v2888 = vld [vmem:[%s3 + $0x2a30] sm:$0xff]
    %v2889 = vld [vmem:[%s3 + $0x2a38] sm:$0xff]
    %v2890 = vld [vmem:[%s3 + $0x2a40] sm:$0xff]
    %v2891 = vld [vmem:[%s3 + $0x2a48] sm:$0xff]
    %v2892 = vld [vmem:[%s3 + $0x2a50] sm:$0xff]
    %v2893 = vld [vmem:[%s3 + $0x2a58] sm:$0xff]
    %v2894 = vld [vmem:[%s3 + $0x2a60] sm:$0xff]
    %v2895 = vld [vmem:[%s3 + $0x2a68] sm:$0xff]
    %v2896 = vld [vmem:[%s3 + $0x2a70] sm:$0xff]
    %v2897 = vld [vmem:[%s3 + $0x2a78] sm:$0xff]
    %v2898 = vld [vmem:[%s3 + $0x2a80] sm:$0xff]
    %v2899 = vld [vmem:[%s3 + $0x2a88] sm:$0xff]
    %v2900 = vld [vmem:[%s3 + $0x2a90] sm:$0xff]
    %v2901 = vld [vmem:[%s3 + $0x2a98] sm:$0xff]
    %v2902 = vld [vmem:[%s3 + $0x2aa0] sm:$0xff]
    %v2903 = vld [vmem:[%s3 + $0x2aa8] sm:$0xff]
    %v2904 = vld [vmem:[%s3 + $0x2ab0] sm:$0xff]
    %v2905 = vld [vmem:[%s3 + $0x2ab8] sm:$0xff]
    %v2906 = vld [vmem:[%s3 + $0x2ac0] sm:$0xff]
    %v2907 = vld [vmem:[%s3 + $0x2ac8] sm:$0xff]
    %v2908 = vld [vmem:[%s3 + $0x2ad0] sm:$0xff]
    %v2909 = vld [vmem:[%s3 + $0x2ad8] sm:$0xff]
    %v2910 = vld [vmem:[%s3 + $0x2ae0] sm:$0xff]
    %v2911 = vld [vmem:[%s3 + $0x2ae8] sm:$0xff]
    %v2912 = vld [vmem:[%s3 + $0x2af0] sm:$0xff]
    %v2913 = vld [vmem:[%s3 + $0x2af8] sm:$0xff]
    %v2914 = vld [vmem:[%s3 + $0x2b00] sm:$0xff]
    %v2915 = vld [vmem:[%s3 + $0x2b08] sm:$0xff]
    %v2916 = vld [vmem:[%s3 + $0x2b10] sm:$0xff]
    %v2917 = vld [vmem:[%s3 + $0x2b18] sm:$0xff]
    %v2918 = vld [vmem:[%s3 + $0x2b20] sm:$0xff]
    %v2919 = vld [vmem:[%s3 + $0x2b28] sm:$0xff]
    %v2920 = vld [vmem:[%s3 + $0x2b30] sm:$0xff]
    %v2921 = vld [vmem:[%s3 + $0x2b38] sm:$0xff]
    %v2922 = vld [vmem:[%s3 + $0x2b40] sm:$0xff]
    %v2923 = vld [vmem:[%s3 + $0x2b48] sm:$0xff]
    %v2924 = vld [vmem:[%s3 + $0x2b50] sm:$0xff]
    %v2925 = vld [vmem:[%s3 + $0x2b58] sm:$0xff]
    %v2926 = vld [vmem:[%s3 + $0x2b60] sm:$0xff]
    %v2927 = vld [vmem:[%s3 + $0x2b68] sm:$0xff]
    %v2928 = vld [vmem:[%s3 + $0x2b70] sm:$0xff]
    %v2929 = vld [vmem:[%s3 + $0x2b78] sm:$0xff]
    %v2930 = vld [vmem:[%s3 + $0x2b80] sm:$0xff]
    %v2931 = vld [vmem:[%s3 + $0x2b88] sm:$0xff]
    %v2932 = vld [vmem:[%s3 + $0x2b90] sm:$0xff]
    %v2933 = vld [vmem:[%s3 + $0x2b98] sm:$0xff]
    %v2934 = vld [vmem:[%s3 + $0x2ba0] sm:$0xff]
    %v2935 = vld [vmem:[%s3 + $0x2ba8] sm:$0xff]
    %v2936 = vld [vmem:[%s3 + $0x2bb0] sm:$0xff]
    %v2937 = vld [vmem:[%s3 + $0x2bb8] sm:$0xff]
    %v2938 = vld [vmem:[%s3 + $0x2bc0] sm:$0xff]
    %v2939 = vld [vmem:[%s3 + $0x2bc8] sm:$0xff]
    %v2940 = vld [vmem:[%s3 + $0x2bd0] sm:$0xff]
    %v2941 = vld [vmem:[%s3 + $0x2bd8] sm:$0xff]
    %v2942 = vld [vmem:[%s3 + $0x2be0] sm:$0xff]
    %v2943 = vld [vmem:[%s3 + $0x2be8] sm:$0xff]
    %v2944 = vld [vmem:[%s3 + $0x2bf0] sm:$0xff]
    %v2945 = vld [vmem:[%s3 + $0x2bf8] sm:$0xff]
    %v2946 = vld [vmem:[%s3 + $0x2c00] sm:$0xff]
    %v2947 = vld [vmem:[%s3 + $0x2c08] sm:$0xff]
    %v2948 = vld [vmem:[%s3 + $0x2c10] sm:$0xff]
    %v2949 = vld [vmem:[%s3 + $0x2c18] sm:$0xff]
    %v2950 = vld [vmem:[%s3 + $0x2c20] sm:$0xff]
    %v2951 = vld [vmem:[%s3 + $0x2c28] sm:$0xff]
    %v2952 = vld [vmem:[%s3 + $0x2c30] sm:$0xff]
    %v2953 = vld [vmem:[%s3 + $0x2c38] sm:$0xff]
    %v2954 = vld [vmem:[%s3 + $0x2c40] sm:$0xff]
    %v2955 = vld [vmem:[%s3 + $0x2c48] sm:$0xff]
    %v2956 = vld [vmem:[%s3 + $0x2c50] sm:$0xff]
    %v2957 = vld [vmem:[%s3 + $0x2c58] sm:$0xff]
    %v2958 = vld [vmem:[%s3 + $0x2c60] sm:$0xff]
    %v2959 = vld [vmem:[%s3 + $0x2c68] sm:$0xff]
    %v2960 = vld [vmem:[%s3 + $0x2c70] sm:$0xff]
    %v2961 = vld [vmem:[%s3 + $0x2c78] sm:$0xff]
    %v2962 = vld [vmem:[%s3 + $0x2c80] sm:$0xff]
    %v2963 = vld [vmem:[%s3 + $0x2c88] sm:$0xff]
    %v2964 = vld [vmem:[%s3 + $0x2c90] sm:$0xff]
    %v2965 = vld [vmem:[%s3 + $0x2c98] sm:$0xff]
    %v2966 = vld [vmem:[%s3 + $0x2ca0] sm:$0xff]
    %v2967 = vld [vmem:[%s3 + $0x2ca8] sm:$0xff]
    %v2968 = vld [vmem:[%s3 + $0x2cb0] sm:$0xff]
    %v2969 = vld [vmem:[%s3 + $0x2cb8] sm:$0xff]
    %v2970 = vld [vmem:[%s3 + $0x2cc0] sm:$0xff]
    %v2971 = vld [vmem:[%s3 + $0x2cc8] sm:$0xff]
    %v2972 = vld [vmem:[%s3 + $0x2cd0] sm:$0xff]
    %v2973 = vld [vmem:[%s3 + $0x2cd8] sm:$0xff]
    %v2974 = vld [vmem:[%s3 + $0x2ce0] sm:$0xff]
    %v2975 = vld [vmem:[%s3 + $0x2ce8] sm:$0xff]
    %v2976 = vld [vmem:[%s3 + $0x2cf0] sm:$0xff]
    %v2977 = vld [vmem:[%s3 + $0x2cf8] sm:$0xff]
    %v2978 = vld [vmem:[%s4] sm:$0x1]
    %v2991 = vperm.slane %v1526, 0
    %v2992 = vperm.slane %v1526, 1
    %v2993 = vperm.slane %v1526, 2
    %v2994 = vperm.slane %v1526, 3
    %v2995 = vperm.slane %v1526, 4
    %v2996 = vperm.slane %v1526, 5
    %v2997 = vperm.slane %v1526, 6
    %v2998 = vperm.slane %v1526, 7
    %v2999 = vperm.slane %v1527, 0
    %v3000 = vperm.slane %v1527, 1
    %v3001 = vperm.slane %v1527, 2
    %v3002 = vperm.slane %v1527, 3
    %v3003 = vperm.slane %v1527, 4
    %v3004 = vperm.slane %v1527, 5
    %v3005 = vperm.slane %v1527, 6
    %v3006 = vperm.slane %v1527, 7
    %v3007 = vperm.slane %v1528, 0
    %v3008 = vperm.slane %v1528, 1
    %v3009 = vperm.slane %v1528, 2
    %v3010 = vperm.slane %v1528, 3
    %v3011 = vperm.slane %v1528, 4
    %v3012 = vperm.slane %v1528, 5
    %v3013 = vperm.slane %v1528, 6
    %v3014 = vperm.slane %v1528, 7
    %v3015 = vperm.slane %v1529, 0
    %v3016 = vperm.slane %v1529, 1
    %v3017 = vperm.slane %v1529, 2
    %v3018 = vperm.slane %v1529, 3
    %v3019 = vperm.slane %v1529, 4
    %v3020 = vperm.slane %v1529, 5
    %v3021 = vperm.slane %v1529, 6
    %v3022 = vperm.slane %v1529, 7
    %v3023 = vperm.slane %v1530, 0
    %v3024 = vperm.slane %v1530, 1
    %v3025 = vperm.slane %v1530, 2
    %v3026 = vperm.slane %v1530, 3
    %v3027 = vperm.slane %v1530, 4
    %v3028 = vperm.slane %v1530, 5
    %v3029 = vperm.slane %v1530, 6
    %v3030 = vperm.slane %v1530, 7
    %v3031 = vperm.slane %v1531, 0
    %v3032 = vperm.slane %v1531, 1
    %v3033 = vperm.slane %v1531, 2
    %v3034 = vperm.slane %v1531, 3
    %v3035 = vperm.slane %v1531, 4
    %v3036 = vperm.slane %v1531, 5
    %v3037 = vperm.slane %v1531, 6
    %v3038 = vperm.slane %v1531, 7
    %v3039 = vperm.slane %v1532, 0
    %v3040 = vperm.slane %v1532, 1
    %v3041 = vperm.slane %v1532, 2
    %v3042 = vperm.slane %v1532, 3
    %v3043 = vperm.slane %v1532, 4
    %v3044 = vperm.slane %v1532, 5
    %v3045 = vperm.slane %v1532, 6
    %v3046 = vperm.slane %v1532, 7
    %v3047 = vperm.slane %v1533, 0
    %v3048 = vperm.slane %v1533, 1
    %v3049 = vperm.slane %v1533, 2
    %v3050 = vperm.slane %v1533, 3
    %v3051 = vperm.slane %v1533, 4
    %v3052 = vperm.slane %v1533, 5
    %v3053 = vperm.slane %v1533, 6
    %v3054 = vperm.slane %v1533, 7
    %v3055 = vperm.slane %v1534, 0
    %v3056 = vperm.slane %v1534, 1
    %v3057 = vperm.slane %v1534, 2
    %v3058 = vperm.slane %v1534, 3
    %v3059 = vperm.slane %v1534, 4
    %v3060 = vperm.slane %v1534, 5
    %v3061 = vperm.slane %v1534, 6
    %v3062 = vperm.slane %v1534, 7
    %v3063 = vperm.slane %v1535, 0
    %v3064 = vperm.slane %v1535, 1
    %v3065 = vperm.slane %v1535, 2
    %v3066 = vperm.slane %v1535, 3
    %v3067 = vperm.slane %v1535, 4
    %v3068 = vperm.slane %v1535, 5
    %v3069 = vperm.slane %v1535, 6
    %v3070 = vperm.slane %v1535, 7
    %v3071 = vperm.slane %v1536, 0
    %v3072 = vperm.slane %v1536, 1
    %v3073 = vperm.slane %v1536, 2
    %v3074 = vperm.slane %v1536, 3
    %v3075 = vperm.slane %v1536, 4
    %v3076 = vperm.slane %v1536, 5
    %v3077 = vperm.slane %v1536, 6
    %v3078 = vperm.slane %v1536, 7
    %v3079 = vperm.slane %v1537, 0
    %v3080 = vperm.slane %v1537, 1
    %3171 = vmatpush.msra.mxu0 %v1553
    %3172 = vmatpush.msra.mxu0 %v1552
    %3173 = vmatpush.msra.mxu0 %v1551
    %3174 = vmatpush.msra.mxu0 %v1550
    %3175 = vmatpush.msra.mxu0 %v1549
    %3176 = vmatpush.msra.mxu0 %v1548
    %3177 = vmatpush.msra.mxu0 %v1547
    %3178 = vmatpush.msra.mxu0 %v1546
    %3179 = vmatpush.msra.mxu0 %v1545
    %3180 = vmatpush.msra.mxu0 %v1544
    %3181 = vmatpush.msra.mxu0 %v1543
    %3182 = vmatpush.msra.mxu0 %v1542
    %3183 = vmatpush.msra.mxu0 %v1541
    %3184 = vmatpush.msra.mxu0 %v1540
    %3185 = vmatpush.msra.mxu0 %v1539
    %3186 = vmatpush.msra.mxu0 %v1538
    %3187 = vmatmul.f32.gmra.mxu0 %v2991
    %v3188 = vpop.f32.mrf.mxu0
    %v3189 = vadd.f32 %v2978, %v3188
    %3190 = vdwg.mxu0
    %3191 = vmatpush.msra.mxu0 %v1569
    %3192 = vmatpush.msra.mxu0 %v1568
    %3193 = vmatpush.msra.mxu0 %v1567
    %3194 = vmatpush.msra.mxu0 %v1566
    %3195 = vmatpush.msra.mxu0 %v1565
    %3196 = vmatpush.msra.mxu0 %v1564
    %3197 = vmatpush.msra.mxu0 %v1563
    %3198 = vmatpush.msra.mxu0 %v1562
    %3199 = vmatpush.msra.mxu0 %v1561
    %3200 = vmatpush.msra.mxu0 %v1560
    %3201 = vmatpush.msra.mxu0 %v1559
    %3202 = vmatpush.msra.mxu0 %v1558
    %3203 = vmatpush.msra.mxu0 %v1557
    %3204 = vmatpush.msra.mxu0 %v1556
    %3205 = vmatpush.msra.mxu0 %v1555
    %3206 = vmatpush.msra.mxu0 %v1554
    %3207 = vmatmul.f32.gmra.mxu0 %v2992
    %v3208 = vpop.f32.mrf.mxu0
    %v3209 = vadd.f32 %v3189, %v3208
    %3210 = vdwg.mxu0
    %3211 = vmatpush.msra.mxu0 %v1585
    %3212 = vmatpush.msra.mxu0 %v1584
    %3213 = vmatpush.msra.mxu0 %v1583
    %3214 = vmatpush.msra.mxu0 %v1582
    %3215 = vmatpush.msra.mxu0 %v1581
    %3216 = vmatpush.msra.mxu0 %v1580
    %3217 = vmatpush.msra.mxu0 %v1579
    %3218 = vmatpush.msra.mxu0 %v1578
    %3219 = vmatpush.msra.mxu0 %v1577
    %3220 = vmatpush.msra.mxu0 %v1576
    %3221 = vmatpush.msra.mxu0 %v1575
    %3222 = vmatpush.msra.mxu0 %v1574
    %3223 = vmatpush.msra.mxu0 %v1573
    %3224 = vmatpush.msra.mxu0 %v1572
    %3225 = vmatpush.msra.mxu0 %v1571
    %3226 = vmatpush.msra.mxu0 %v1570
    %3227 = vmatmul.f32.gmra.mxu0 %v2993
    %v3228 = vpop.f32.mrf.mxu0
    %v3229 = vadd.f32 %v3209, %v3228
    %3230 = vdwg.mxu0
    %3231 = vmatpush.msra.mxu0 %v1601
    %3232 = vmatpush.msra.mxu0 %v1600
    %3233 = vmatpush.msra.mxu0 %v1599
    %3234 = vmatpush.msra.mxu0 %v1598
    %3235 = vmatpush.msra.mxu0 %v1597
    %3236 = vmatpush.msra.mxu0 %v1596
    %3237 = vmatpush.msra.mxu0 %v1595
    %3238 = vmatpush.msra.mxu0 %v1594
    %3239 = vmatpush.msra.mxu0 %v1593
    %3240 = vmatpush.msra.mxu0 %v1592
    %3241 = vmatpush.msra.mxu0 %v1591
    %3242 = vmatpush.msra.mxu0 %v1590
    %3243 = vmatpush.msra.mxu0 %v1589
    %3244 = vmatpush.msra.mxu0 %v1588
    %3245 = vmatpush.msra.mxu0 %v1587
    %3246 = vmatpush.msra.mxu0 %v1586
    %3247 = vmatmul.f32.gmra.mxu0 %v2994
    %v3248 = vpop.f32.mrf.mxu0
    %v3249 = vadd.f32 %v3229, %v3248
    %3250 = vdwg.mxu0
    %3251 = vmatpush.msra.mxu0 %v1617
    %3252 = vmatpush.msra.mxu0 %v1616
    %3253 = vmatpush.msra.mxu0 %v1615
    %3254 = vmatpush.msra.mxu0 %v1614
    %3255 = vmatpush.msra.mxu0 %v1613
    %3256 = vmatpush.msra.mxu0 %v1612
    %3257 = vmatpush.msra.mxu0 %v1611
    %3258 = vmatpush.msra.mxu0 %v1610
    %3259 = vmatpush.msra.mxu0 %v1609
    %3260 = vmatpush.msra.mxu0 %v1608
    %3261 = vmatpush.msra.mxu0 %v1607
    %3262 = vmatpush.msra.mxu0 %v1606
    %3263 = vmatpush.msra.mxu0 %v1605
    %3264 = vmatpush.msra.mxu0 %v1604
    %3265 = vmatpush.msra.mxu0 %v1603
    %3266 = vmatpush.msra.mxu0 %v1602
    %3267 = vmatmul.f32.gmra.mxu0 %v2995
    %v3268 = vpop.f32.mrf.mxu0
    %v3269 = vadd.f32 %v3249, %v3268
    %3270 = vdwg.mxu0
    %3271 = vmatpush.msra.mxu0 %v1633
    %3272 = vmatpush.msra.mxu0 %v1632
    %3273 = vmatpush.msra.mxu0 %v1631
    %3274 = vmatpush.msra.mxu0 %v1630
    %3275 = vmatpush.msra.mxu0 %v1629
    %3276 = vmatpush.msra.mxu0 %v1628
    %3277 = vmatpush.msra.mxu0 %v1627
    %3278 = vmatpush.msra.mxu0 %v1626
    %3279 = vmatpush.msra.mxu0 %v1625
    %3280 = vmatpush.msra.mxu0 %v1624
    %3281 = vmatpush.msra.mxu0 %v1623
    %3282 = vmatpush.msra.mxu0 %v1622
    %3283 = vmatpush.msra.mxu0 %v1621
    %3284 = vmatpush.msra.mxu0 %v1620
    %3285 = vmatpush.msra.mxu0 %v1619
    %3286 = vmatpush.msra.mxu0 %v1618
    %3287 = vmatmul.f32.gmra.mxu0 %v2996
    %v3288 = vpop.f32.mrf.mxu0
    %v3289 = vadd.f32 %v3269, %v3288
    %3290 = vdwg.mxu0
    %3291 = vmatpush.msra.mxu0 %v1649
    %3292 = vmatpush.msra.mxu0 %v1648
    %3293 = vmatpush.msra.mxu0 %v1647
    %3294 = vmatpush.msra.mxu0 %v1646
    %3295 = vmatpush.msra.mxu0 %v1645
    %3296 = vmatpush.msra.mxu0 %v1644
    %3297 = vmatpush.msra.mxu0 %v1643
    %3298 = vmatpush.msra.mxu0 %v1642
    %3299 = vmatpush.msra.mxu0 %v1641
    %3300 = vmatpush.msra.mxu0 %v1640
    %3301 = vmatpush.msra.mxu0 %v1639
    %3302 = vmatpush.msra.mxu0 %v1638
    %3303 = vmatpush.msra.mxu0 %v1637
    %3304 = vmatpush.msra.mxu0 %v1636
    %3305 = vmatpush.msra.mxu0 %v1635
    %3306 = vmatpush.msra.mxu0 %v1634
    %3307 = vmatmul.f32.gmra.mxu0 %v2997
    %v3308 = vpop.f32.mrf.mxu0
    %v3309 = vadd.f32 %v3289, %v3308
    %3310 = vdwg.mxu0
    %3311 = vmatpush.msra.mxu0 %v1665
    %3312 = vmatpush.msra.mxu0 %v1664
    %3313 = vmatpush.msra.mxu0 %v1663
    %3314 = vmatpush.msra.mxu0 %v1662
    %3315 = vmatpush.msra.mxu0 %v1661
    %3316 = vmatpush.msra.mxu0 %v1660
    %3317 = vmatpush.msra.mxu0 %v1659
    %3318 = vmatpush.msra.mxu0 %v1658
    %3319 = vmatpush.msra.mxu0 %v1657
    %3320 = vmatpush.msra.mxu0 %v1656
    %3321 = vmatpush.msra.mxu0 %v1655
    %3322 = vmatpush.msra.mxu0 %v1654
    %3323 = vmatpush.msra.mxu0 %v1653
    %3324 = vmatpush.msra.mxu0 %v1652
    %3325 = vmatpush.msra.mxu0 %v1651
    %3326 = vmatpush.msra.mxu0 %v1650
    %3327 = vmatmul.f32.gmra.mxu0 %v2998
    %v3328 = vpop.f32.mrf.mxu0
    %v3329 = vadd.f32 %v3309, %v3328
    %3330 = vdwg.mxu0
    %3331 = vmatpush.msra.mxu0 %v1681
    %3332 = vmatpush.msra.mxu0 %v1680
    %3333 = vmatpush.msra.mxu0 %v1679
    %3334 = vmatpush.msra.mxu0 %v1678
    %3335 = vmatpush.msra.mxu0 %v1677
    %3336 = vmatpush.msra.mxu0 %v1676
    %3337 = vmatpush.msra.mxu0 %v1675
    %3338 = vmatpush.msra.mxu0 %v1674
    %3339 = vmatpush.msra.mxu0 %v1673
    %3340 = vmatpush.msra.mxu0 %v1672
    %3341 = vmatpush.msra.mxu0 %v1671
    %3342 = vmatpush.msra.mxu0 %v1670
    %3343 = vmatpush.msra.mxu0 %v1669
    %3344 = vmatpush.msra.mxu0 %v1668
    %3345 = vmatpush.msra.mxu0 %v1667
    %3346 = vmatpush.msra.mxu0 %v1666
    %3347 = vmatmul.f32.gmra.mxu0 %v2999
    %v3348 = vpop.f32.mrf.mxu0
    %v3349 = vadd.f32 %v3329, %v3348
    %3350 = vdwg.mxu0
    %3351 = vmatpush.msra.mxu0 %v1697
    %3352 = vmatpush.msra.mxu0 %v1696
    %3353 = vmatpush.msra.mxu0 %v1695
    %3354 = vmatpush.msra.mxu0 %v1694
    %3355 = vmatpush.msra.mxu0 %v1693
    %3356 = vmatpush.msra.mxu0 %v1692
    %3357 = vmatpush.msra.mxu0 %v1691
    %3358 = vmatpush.msra.mxu0 %v1690
    %3359 = vmatpush.msra.mxu0 %v1689
    %3360 = vmatpush.msra.mxu0 %v1688
    %3361 = vmatpush.msra.mxu0 %v1687
    %3362 = vmatpush.msra.mxu0 %v1686
    %3363 = vmatpush.msra.mxu0 %v1685
    %3364 = vmatpush.msra.mxu0 %v1684
    %3365 = vmatpush.msra.mxu0 %v1683
    %3366 = vmatpush.msra.mxu0 %v1682
    %3367 = vmatmul.f32.gmra.mxu0 %v3000
    %v3368 = vpop.f32.mrf.mxu0
    %v3369 = vadd.f32 %v3349, %v3368
    %3370 = vdwg.mxu0
    %3371 = vmatpush.msra.mxu0 %v1713
    %3372 = vmatpush.msra.mxu0 %v1712
    %3373 = vmatpush.msra.mxu0 %v1711
    %3374 = vmatpush.msra.mxu0 %v1710
    %3375 = vmatpush.msra.mxu0 %v1709
    %3376 = vmatpush.msra.mxu0 %v1708
    %3377 = vmatpush.msra.mxu0 %v1707
    %3378 = vmatpush.msra.mxu0 %v1706
    %3379 = vmatpush.msra.mxu0 %v1705
    %3380 = vmatpush.msra.mxu0 %v1704
    %3381 = vmatpush.msra.mxu0 %v1703
    %3382 = vmatpush.msra.mxu0 %v1702
    %3383 = vmatpush.msra.mxu0 %v1701
    %3384 = vmatpush.msra.mxu0 %v1700
    %3385 = vmatpush.msra.mxu0 %v1699
    %3386 = vmatpush.msra.mxu0 %v1698
    %3387 = vmatmul.f32.gmra.mxu0 %v3001
    %v3388 = vpop.f32.mrf.mxu0
    %v3389 = vadd.f32 %v3369, %v3388
    %3390 = vdwg.mxu0
    %3391 = vmatpush.msra.mxu0 %v1729
    %3392 = vmatpush.msra.mxu0 %v1728
    %3393 = vmatpush.msra.mxu0 %v1727
    %3394 = vmatpush.msra.mxu0 %v1726
    %3395 = vmatpush.msra.mxu0 %v1725
    %3396 = vmatpush.msra.mxu0 %v1724
    %3397 = vmatpush.msra.mxu0 %v1723
    %3398 = vmatpush.msra.mxu0 %v1722
    %3399 = vmatpush.msra.mxu0 %v1721
    %3400 = vmatpush.msra.mxu0 %v1720
    %3401 = vmatpush.msra.mxu0 %v1719
    %3402 = vmatpush.msra.mxu0 %v1718
    %3403 = vmatpush.msra.mxu0 %v1717
    %3404 = vmatpush.msra.mxu0 %v1716
    %3405 = vmatpush.msra.mxu0 %v1715
    %3406 = vmatpush.msra.mxu0 %v1714
    %3407 = vmatmul.f32.gmra.mxu0 %v3002
    %v3408 = vpop.f32.mrf.mxu0
    %v3409 = vadd.f32 %v3389, %v3408
    %3410 = vdwg.mxu0
    %3411 = vmatpush.msra.mxu0 %v1745
    %3412 = vmatpush.msra.mxu0 %v1744
    %3413 = vmatpush.msra.mxu0 %v1743
    %3414 = vmatpush.msra.mxu0 %v1742
    %3415 = vmatpush.msra.mxu0 %v1741
    %3416 = vmatpush.msra.mxu0 %v1740
    %3417 = vmatpush.msra.mxu0 %v1739
    %3418 = vmatpush.msra.mxu0 %v1738
    %3419 = vmatpush.msra.mxu0 %v1737
    %3420 = vmatpush.msra.mxu0 %v1736
    %3421 = vmatpush.msra.mxu0 %v1735
    %3422 = vmatpush.msra.mxu0 %v1734
    %3423 = vmatpush.msra.mxu0 %v1733
    %3424 = vmatpush.msra.mxu0 %v1732
    %3425 = vmatpush.msra.mxu0 %v1731
    %3426 = vmatpush.msra.mxu0 %v1730
    %3427 = vmatmul.f32.gmra.mxu0 %v3003
    %v3428 = vpop.f32.mrf.mxu0
    %v3429 = vadd.f32 %v3409, %v3428
    %3430 = vdwg.mxu0
    %3431 = vmatpush.msra.mxu0 %v1761
    %3432 = vmatpush.msra.mxu0 %v1760
    %3433 = vmatpush.msra.mxu0 %v1759
    %3434 = vmatpush.msra.mxu0 %v1758
    %3435 = vmatpush.msra.mxu0 %v1757
    %3436 = vmatpush.msra.mxu0 %v1756
    %3437 = vmatpush.msra.mxu0 %v1755
    %3438 = vmatpush.msra.mxu0 %v1754
    %3439 = vmatpush.msra.mxu0 %v1753
    %3440 = vmatpush.msra.mxu0 %v1752
    %3441 = vmatpush.msra.mxu0 %v1751
    %3442 = vmatpush.msra.mxu0 %v1750
    %3443 = vmatpush.msra.mxu0 %v1749
    %3444 = vmatpush.msra.mxu0 %v1748
    %3445 = vmatpush.msra.mxu0 %v1747
    %3446 = vmatpush.msra.mxu0 %v1746
    %3447 = vmatmul.f32.gmra.mxu0 %v3004
    %v3448 = vpop.f32.mrf.mxu0
    %v3449 = vadd.f32 %v3429, %v3448
    %3450 = vdwg.mxu0
    %3451 = vmatpush.msra.mxu0 %v1777
    %3452 = vmatpush.msra.mxu0 %v1776
    %3453 = vmatpush.msra.mxu0 %v1775
    %3454 = vmatpush.msra.mxu0 %v1774
    %3455 = vmatpush.msra.mxu0 %v1773
    %3456 = vmatpush.msra.mxu0 %v1772
    %3457 = vmatpush.msra.mxu0 %v1771
    %3458 = vmatpush.msra.mxu0 %v1770
    %3459 = vmatpush.msra.mxu0 %v1769
    %3460 = vmatpush.msra.mxu0 %v1768
    %3461 = vmatpush.msra.mxu0 %v1767
    %3462 = vmatpush.msra.mxu0 %v1766
    %3463 = vmatpush.msra.mxu0 %v1765
    %3464 = vmatpush.msra.mxu0 %v1764
    %3465 = vmatpush.msra.mxu0 %v1763
    %3466 = vmatpush.msra.mxu0 %v1762
    %3467 = vmatmul.f32.gmra.mxu0 %v3005
    %v3468 = vpop.f32.mrf.mxu0
    %v3469 = vadd.f32 %v3449, %v3468
    %3470 = vdwg.mxu0
    %3471 = vmatpush.msra.mxu0 %v1793
    %3472 = vmatpush.msra.mxu0 %v1792
    %3473 = vmatpush.msra.mxu0 %v1791
    %3474 = vmatpush.msra.mxu0 %v1790
    %3475 = vmatpush.msra.mxu0 %v1789
    %3476 = vmatpush.msra.mxu0 %v1788
    %3477 = vmatpush.msra.mxu0 %v1787
    %3478 = vmatpush.msra.mxu0 %v1786
    %3479 = vmatpush.msra.mxu0 %v1785
    %3480 = vmatpush.msra.mxu0 %v1784
    %3481 = vmatpush.msra.mxu0 %v1783
    %3482 = vmatpush.msra.mxu0 %v1782
    %3483 = vmatpush.msra.mxu0 %v1781
    %3484 = vmatpush.msra.mxu0 %v1780
    %3485 = vmatpush.msra.mxu0 %v1779
    %3486 = vmatpush.msra.mxu0 %v1778
    %3487 = vmatmul.f32.gmra.mxu0 %v3006
    %v3488 = vpop.f32.mrf.mxu0
    %v3489 = vadd.f32 %v3469, %v3488
    %3490 = vdwg.mxu0
    %3491 = vmatpush.msra.mxu0 %v1809
    %3492 = vmatpush.msra.mxu0 %v1808
    %3493 = vmatpush.msra.mxu0 %v1807
    %3494 = vmatpush.msra.mxu0 %v1806
    %3495 = vmatpush.msra.mxu0 %v1805
    %3496 = vmatpush.msra.mxu0 %v1804
    %3497 = vmatpush.msra.mxu0 %v1803
    %3498 = vmatpush.msra.mxu0 %v1802
    %3499 = vmatpush.msra.mxu0 %v1801
    %3500 = vmatpush.msra.mxu0 %v1800
    %3501 = vmatpush.msra.mxu0 %v1799
    %3502 = vmatpush.msra.mxu0 %v1798
    %3503 = vmatpush.msra.mxu0 %v1797
    %3504 = vmatpush.msra.mxu0 %v1796
    %3505 = vmatpush.msra.mxu0 %v1795
    %3506 = vmatpush.msra.mxu0 %v1794
    %3507 = vmatmul.f32.gmra.mxu0 %v3007
    %v3508 = vpop.f32.mrf.mxu0
    %v3509 = vadd.f32 %v3489, %v3508
    %3510 = vdwg.mxu0
    %3511 = vmatpush.msra.mxu0 %v1825
    %3512 = vmatpush.msra.mxu0 %v1824
    %3513 = vmatpush.msra.mxu0 %v1823
    %3514 = vmatpush.msra.mxu0 %v1822
    %3515 = vmatpush.msra.mxu0 %v1821
    %3516 = vmatpush.msra.mxu0 %v1820
    %3517 = vmatpush.msra.mxu0 %v1819
    %3518 = vmatpush.msra.mxu0 %v1818
    %3519 = vmatpush.msra.mxu0 %v1817
    %3520 = vmatpush.msra.mxu0 %v1816
    %3521 = vmatpush.msra.mxu0 %v1815
    %3522 = vmatpush.msra.mxu0 %v1814
    %3523 = vmatpush.msra.mxu0 %v1813
    %3524 = vmatpush.msra.mxu0 %v1812
    %3525 = vmatpush.msra.mxu0 %v1811
    %3526 = vmatpush.msra.mxu0 %v1810
    %3527 = vmatmul.f32.gmra.mxu0 %v3008
    %v3528 = vpop.f32.mrf.mxu0
    %v3529 = vadd.f32 %v3509, %v3528
    %3530 = vdwg.mxu0
    %3531 = vmatpush.msra.mxu0 %v1841
    %3532 = vmatpush.msra.mxu0 %v1840
    %3533 = vmatpush.msra.mxu0 %v1839
    %3534 = vmatpush.msra.mxu0 %v1838
    %3535 = vmatpush.msra.mxu0 %v1837
    %3536 = vmatpush.msra.mxu0 %v1836
    %3537 = vmatpush.msra.mxu0 %v1835
    %3538 = vmatpush.msra.mxu0 %v1834
    %3539 = vmatpush.msra.mxu0 %v1833
    %3540 = vmatpush.msra.mxu0 %v1832
    %3541 = vmatpush.msra.mxu0 %v1831
    %3542 = vmatpush.msra.mxu0 %v1830
    %3543 = vmatpush.msra.mxu0 %v1829
    %3544 = vmatpush.msra.mxu0 %v1828
    %3545 = vmatpush.msra.mxu0 %v1827
    %3546 = vmatpush.msra.mxu0 %v1826
    %3547 = vmatmul.f32.gmra.mxu0 %v3009
    %v3548 = vpop.f32.mrf.mxu0
    %v3549 = vadd.f32 %v3529, %v3548
    %3550 = vdwg.mxu0
    %3551 = vmatpush.msra.mxu0 %v1857
    %3552 = vmatpush.msra.mxu0 %v1856
    %3553 = vmatpush.msra.mxu0 %v1855
    %3554 = vmatpush.msra.mxu0 %v1854
    %3555 = vmatpush.msra.mxu0 %v1853
    %3556 = vmatpush.msra.mxu0 %v1852
    %3557 = vmatpush.msra.mxu0 %v1851
    %3558 = vmatpush.msra.mxu0 %v1850
    %3559 = vmatpush.msra.mxu0 %v1849
    %3560 = vmatpush.msra.mxu0 %v1848
    %3561 = vmatpush.msra.mxu0 %v1847
    %3562 = vmatpush.msra.mxu0 %v1846
    %3563 = vmatpush.msra.mxu0 %v1845
    %3564 = vmatpush.msra.mxu0 %v1844
    %3565 = vmatpush.msra.mxu0 %v1843
    %3566 = vmatpush.msra.mxu0 %v1842
    %3567 = vmatmul.f32.gmra.mxu0 %v3010
    %v3568 = vpop.f32.mrf.mxu0
    %v3569 = vadd.f32 %v3549, %v3568
    %3570 = vdwg.mxu0
    %3571 = vmatpush.msra.mxu0 %v1873
    %3572 = vmatpush.msra.mxu0 %v1872
    %3573 = vmatpush.msra.mxu0 %v1871
    %3574 = vmatpush.msra.mxu0 %v1870
    %3575 = vmatpush.msra.mxu0 %v1869
    %3576 = vmatpush.msra.mxu0 %v1868
    %3577 = vmatpush.msra.mxu0 %v1867
    %3578 = vmatpush.msra.mxu0 %v1866
    %3579 = vmatpush.msra.mxu0 %v1865
    %3580 = vmatpush.msra.mxu0 %v1864
    %3581 = vmatpush.msra.mxu0 %v1863
    %3582 = vmatpush.msra.mxu0 %v1862
    %3583 = vmatpush.msra.mxu0 %v1861
    %3584 = vmatpush.msra.mxu0 %v1860
    %3585 = vmatpush.msra.mxu0 %v1859
    %3586 = vmatpush.msra.mxu0 %v1858
    %3587 = vmatmul.f32.gmra.mxu0 %v3011
    %v3588 = vpop.f32.mrf.mxu0
    %v3589 = vadd.f32 %v3569, %v3588
    %3590 = vdwg.mxu0
    %3591 = vmatpush.msra.mxu0 %v1889
    %3592 = vmatpush.msra.mxu0 %v1888
    %3593 = vmatpush.msra.mxu0 %v1887
    %3594 = vmatpush.msra.mxu0 %v1886
    %3595 = vmatpush.msra.mxu0 %v1885
    %3596 = vmatpush.msra.mxu0 %v1884
    %3597 = vmatpush.msra.mxu0 %v1883
    %3598 = vmatpush.msra.mxu0 %v1882
    %3599 = vmatpush.msra.mxu0 %v1881
    %3600 = vmatpush.msra.mxu0 %v1880
    %3601 = vmatpush.msra.mxu0 %v1879
    %3602 = vmatpush.msra.mxu0 %v1878
    %3603 = vmatpush.msra.mxu0 %v1877
    %3604 = vmatpush.msra.mxu0 %v1876
    %3605 = vmatpush.msra.mxu0 %v1875
    %3606 = vmatpush.msra.mxu0 %v1874
    %3607 = vmatmul.f32.gmra.mxu0 %v3012
    %v3608 = vpop.f32.mrf.mxu0
    %v3609 = vadd.f32 %v3589, %v3608
    %3610 = vdwg.mxu0
    %3611 = vmatpush.msra.mxu0 %v1905
    %3612 = vmatpush.msra.mxu0 %v1904
    %3613 = vmatpush.msra.mxu0 %v1903
    %3614 = vmatpush.msra.mxu0 %v1902
    %3615 = vmatpush.msra.mxu0 %v1901
    %3616 = vmatpush.msra.mxu0 %v1900
    %3617 = vmatpush.msra.mxu0 %v1899
    %3618 = vmatpush.msra.mxu0 %v1898
    %3619 = vmatpush.msra.mxu0 %v1897
    %3620 = vmatpush.msra.mxu0 %v1896
    %3621 = vmatpush.msra.mxu0 %v1895
    %3622 = vmatpush.msra.mxu0 %v1894
    %3623 = vmatpush.msra.mxu0 %v1893
    %3624 = vmatpush.msra.mxu0 %v1892
    %3625 = vmatpush.msra.mxu0 %v1891
    %3626 = vmatpush.msra.mxu0 %v1890
    %3627 = vmatmul.f32.gmra.mxu0 %v3013
    %v3628 = vpop.f32.mrf.mxu0
    %v3629 = vadd.f32 %v3609, %v3628
    %3630 = vdwg.mxu0
    %3631 = vmatpush.msra.mxu0 %v1921
    %3632 = vmatpush.msra.mxu0 %v1920
    %3633 = vmatpush.msra.mxu0 %v1919
    %3634 = vmatpush.msra.mxu0 %v1918
    %3635 = vmatpush.msra.mxu0 %v1917
    %3636 = vmatpush.msra.mxu0 %v1916
    %3637 = vmatpush.msra.mxu0 %v1915
    %3638 = vmatpush.msra.mxu0 %v1914
    %3639 = vmatpush.msra.mxu0 %v1913
    %3640 = vmatpush.msra.mxu0 %v1912
    %3641 = vmatpush.msra.mxu0 %v1911
    %3642 = vmatpush.msra.mxu0 %v1910
    %3643 = vmatpush.msra.mxu0 %v1909
    %3644 = vmatpush.msra.mxu0 %v1908
    %3645 = vmatpush.msra.mxu0 %v1907
    %3646 = vmatpush.msra.mxu0 %v1906
    %3647 = vmatmul.f32.gmra.mxu0 %v3014
    %v3648 = vpop.f32.mrf.mxu0
    %v3649 = vadd.f32 %v3629, %v3648
    %3650 = vdwg.mxu0
    %3651 = vmatpush.msra.mxu0 %v1937
    %3652 = vmatpush.msra.mxu0 %v1936
    %3653 = vmatpush.msra.mxu0 %v1935
    %3654 = vmatpush.msra.mxu0 %v1934
    %3655 = vmatpush.msra.mxu0 %v1933
    %3656 = vmatpush.msra.mxu0 %v1932
    %3657 = vmatpush.msra.mxu0 %v1931
    %3658 = vmatpush.msra.mxu0 %v1930
    %3659 = vmatpush.msra.mxu0 %v1929
    %3660 = vmatpush.msra.mxu0 %v1928
    %3661 = vmatpush.msra.mxu0 %v1927
    %3662 = vmatpush.msra.mxu0 %v1926
    %3663 = vmatpush.msra.mxu0 %v1925
    %3664 = vmatpush.msra.mxu0 %v1924
    %3665 = vmatpush.msra.mxu0 %v1923
    %3666 = vmatpush.msra.mxu0 %v1922
    %3667 = vmatmul.f32.gmra.mxu0 %v3015
    %v3668 = vpop.f32.mrf.mxu0
    %v3669 = vadd.f32 %v3649, %v3668
    %3670 = vdwg.mxu0
    %3671 = vmatpush.msra.mxu0 %v1953
    %3672 = vmatpush.msra.mxu0 %v1952
    %3673 = vmatpush.msra.mxu0 %v1951
    %3674 = vmatpush.msra.mxu0 %v1950
    %3675 = vmatpush.msra.mxu0 %v1949
    %3676 = vmatpush.msra.mxu0 %v1948
    %3677 = vmatpush.msra.mxu0 %v1947
    %3678 = vmatpush.msra.mxu0 %v1946
    %3679 = vmatpush.msra.mxu0 %v1945
    %3680 = vmatpush.msra.mxu0 %v1944
    %3681 = vmatpush.msra.mxu0 %v1943
    %3682 = vmatpush.msra.mxu0 %v1942
    %3683 = vmatpush.msra.mxu0 %v1941
    %3684 = vmatpush.msra.mxu0 %v1940
    %3685 = vmatpush.msra.mxu0 %v1939
    %3686 = vmatpush.msra.mxu0 %v1938
    %3687 = vmatmul.f32.gmra.mxu0 %v3016
    %v3688 = vpop.f32.mrf.mxu0
    %v3689 = vadd.f32 %v3669, %v3688
    %3690 = vdwg.mxu0
    %3691 = vmatpush.msra.mxu0 %v1969
    %3692 = vmatpush.msra.mxu0 %v1968
    %3693 = vmatpush.msra.mxu0 %v1967
    %3694 = vmatpush.msra.mxu0 %v1966
    %3695 = vmatpush.msra.mxu0 %v1965
    %3696 = vmatpush.msra.mxu0 %v1964
    %3697 = vmatpush.msra.mxu0 %v1963
    %3698 = vmatpush.msra.mxu0 %v1962
    %3699 = vmatpush.msra.mxu0 %v1961
    %3700 = vmatpush.msra.mxu0 %v1960
    %3701 = vmatpush.msra.mxu0 %v1959
    %3702 = vmatpush.msra.mxu0 %v1958
    %3703 = vmatpush.msra.mxu0 %v1957
    %3704 = vmatpush.msra.mxu0 %v1956
    %3705 = vmatpush.msra.mxu0 %v1955
    %3706 = vmatpush.msra.mxu0 %v1954
    %3707 = vmatmul.f32.gmra.mxu0 %v3017
    %v3708 = vpop.f32.mrf.mxu0
    %v3709 = vadd.f32 %v3689, %v3708
    %3710 = vdwg.mxu0
    %3711 = vmatpush.msra.mxu0 %v1985
    %3712 = vmatpush.msra.mxu0 %v1984
    %3713 = vmatpush.msra.mxu0 %v1983
    %3714 = vmatpush.msra.mxu0 %v1982
    %3715 = vmatpush.msra.mxu0 %v1981
    %3716 = vmatpush.msra.mxu0 %v1980
    %3717 = vmatpush.msra.mxu0 %v1979
    %3718 = vmatpush.msra.mxu0 %v1978
    %3719 = vmatpush.msra.mxu0 %v1977
    %3720 = vmatpush.msra.mxu0 %v1976
    %3721 = vmatpush.msra.mxu0 %v1975
    %3722 = vmatpush.msra.mxu0 %v1974
    %3723 = vmatpush.msra.mxu0 %v1973
    %3724 = vmatpush.msra.mxu0 %v1972
    %3725 = vmatpush.msra.mxu0 %v1971
    %3726 = vmatpush.msra.mxu0 %v1970
    %3727 = vmatmul.f32.gmra.mxu0 %v3018
    %v3728 = vpop.f32.mrf.mxu0
    %v3729 = vadd.f32 %v3709, %v3728
    %3730 = vdwg.mxu0
    %3731 = vmatpush.msra.mxu0 %v2001
    %3732 = vmatpush.msra.mxu0 %v2000
    %3733 = vmatpush.msra.mxu0 %v1999
    %3734 = vmatpush.msra.mxu0 %v1998
    %3735 = vmatpush.msra.mxu0 %v1997
    %3736 = vmatpush.msra.mxu0 %v1996
    %3737 = vmatpush.msra.mxu0 %v1995
    %3738 = vmatpush.msra.mxu0 %v1994
    %3739 = vmatpush.msra.mxu0 %v1993
    %3740 = vmatpush.msra.mxu0 %v1992
    %3741 = vmatpush.msra.mxu0 %v1991
    %3742 = vmatpush.msra.mxu0 %v1990
    %3743 = vmatpush.msra.mxu0 %v1989
    %3744 = vmatpush.msra.mxu0 %v1988
    %3745 = vmatpush.msra.mxu0 %v1987
    %3746 = vmatpush.msra.mxu0 %v1986
    %3747 = vmatmul.f32.gmra.mxu0 %v3019
    %v3748 = vpop.f32.mrf.mxu0
    %v3749 = vadd.f32 %v3729, %v3748
    %3750 = vdwg.mxu0
    %3751 = vmatpush.msra.mxu0 %v2017
    %3752 = vmatpush.msra.mxu0 %v2016
    %3753 = vmatpush.msra.mxu0 %v2015
    %3754 = vmatpush.msra.mxu0 %v2014
    %3755 = vmatpush.msra.mxu0 %v2013
    %3756 = vmatpush.msra.mxu0 %v2012
    %3757 = vmatpush.msra.mxu0 %v2011
    %3758 = vmatpush.msra.mxu0 %v2010
    %3759 = vmatpush.msra.mxu0 %v2009
    %3760 = vmatpush.msra.mxu0 %v2008
    %3761 = vmatpush.msra.mxu0 %v2007
    %3762 = vmatpush.msra.mxu0 %v2006
    %3763 = vmatpush.msra.mxu0 %v2005
    %3764 = vmatpush.msra.mxu0 %v2004
    %3765 = vmatpush.msra.mxu0 %v2003
    %3766 = vmatpush.msra.mxu0 %v2002
    %3767 = vmatmul.f32.gmra.mxu0 %v3020
    %v3768 = vpop.f32.mrf.mxu0
    %v3769 = vadd.f32 %v3749, %v3768
    %3770 = vdwg.mxu0
    %3771 = vmatpush.msra.mxu0 %v2033
    %3772 = vmatpush.msra.mxu0 %v2032
    %3773 = vmatpush.msra.mxu0 %v2031
    %3774 = vmatpush.msra.mxu0 %v2030
    %3775 = vmatpush.msra.mxu0 %v2029
    %3776 = vmatpush.msra.mxu0 %v2028
    %3777 = vmatpush.msra.mxu0 %v2027
    %3778 = vmatpush.msra.mxu0 %v2026
    %3779 = vmatpush.msra.mxu0 %v2025
    %3780 = vmatpush.msra.mxu0 %v2024
    %3781 = vmatpush.msra.mxu0 %v2023
    %3782 = vmatpush.msra.mxu0 %v2022
    %3783 = vmatpush.msra.mxu0 %v2021
    %3784 = vmatpush.msra.mxu0 %v2020
    %3785 = vmatpush.msra.mxu0 %v2019
    %3786 = vmatpush.msra.mxu0 %v2018
    %3787 = vmatmul.f32.gmra.mxu0 %v3021
    %v3788 = vpop.f32.mrf.mxu0
    %v3789 = vadd.f32 %v3769, %v3788
    %3790 = vdwg.mxu0
    %3791 = vmatpush.msra.mxu0 %v2049
    %3792 = vmatpush.msra.mxu0 %v2048
    %3793 = vmatpush.msra.mxu0 %v2047
    %3794 = vmatpush.msra.mxu0 %v2046
    %3795 = vmatpush.msra.mxu0 %v2045
    %3796 = vmatpush.msra.mxu0 %v2044
    %3797 = vmatpush.msra.mxu0 %v2043
    %3798 = vmatpush.msra.mxu0 %v2042
    %3799 = vmatpush.msra.mxu0 %v2041
    %3800 = vmatpush.msra.mxu0 %v2040
    %3801 = vmatpush.msra.mxu0 %v2039
    %3802 = vmatpush.msra.mxu0 %v2038
    %3803 = vmatpush.msra.mxu0 %v2037
    %3804 = vmatpush.msra.mxu0 %v2036
    %3805 = vmatpush.msra.mxu0 %v2035
    %3806 = vmatpush.msra.mxu0 %v2034
    %3807 = vmatmul.f32.gmra.mxu0 %v3022
    %v3808 = vpop.f32.mrf.mxu0
    %v3809 = vadd.f32 %v3789, %v3808
    %3810 = vdwg.mxu0
    %3811 = vmatpush.msra.mxu0 %v2065
    %3812 = vmatpush.msra.mxu0 %v2064
    %3813 = vmatpush.msra.mxu0 %v2063
    %3814 = vmatpush.msra.mxu0 %v2062
    %3815 = vmatpush.msra.mxu0 %v2061
    %3816 = vmatpush.msra.mxu0 %v2060
    %3817 = vmatpush.msra.mxu0 %v2059
    %3818 = vmatpush.msra.mxu0 %v2058
    %3819 = vmatpush.msra.mxu0 %v2057
    %3820 = vmatpush.msra.mxu0 %v2056
    %3821 = vmatpush.msra.mxu0 %v2055
    %3822 = vmatpush.msra.mxu0 %v2054
    %3823 = vmatpush.msra.mxu0 %v2053
    %3824 = vmatpush.msra.mxu0 %v2052
    %3825 = vmatpush.msra.mxu0 %v2051
    %3826 = vmatpush.msra.mxu0 %v2050
    %3827 = vmatmul.f32.gmra.mxu0 %v3023
    %v3828 = vpop.f32.mrf.mxu0
    %v3829 = vadd.f32 %v3809, %v3828
    %3830 = vdwg.mxu0
    %3831 = vmatpush.msra.mxu0 %v2081
    %3832 = vmatpush.msra.mxu0 %v2080
    %3833 = vmatpush.msra.mxu0 %v2079
    %3834 = vmatpush.msra.mxu0 %v2078
    %3835 = vmatpush.msra.mxu0 %v2077
    %3836 = vmatpush.msra.mxu0 %v2076
    %3837 = vmatpush.msra.mxu0 %v2075
    %3838 = vmatpush.msra.mxu0 %v2074
    %3839 = vmatpush.msra.mxu0 %v2073
    %3840 = vmatpush.msra.mxu0 %v2072
    %3841 = vmatpush.msra.mxu0 %v2071
    %3842 = vmatpush.msra.mxu0 %v2070
    %3843 = vmatpush.msra.mxu0 %v2069
    %3844 = vmatpush.msra.mxu0 %v2068
    %3845 = vmatpush.msra.mxu0 %v2067
    %3846 = vmatpush.msra.mxu0 %v2066
    %3847 = vmatmul.f32.gmra.mxu0 %v3024
    %v3848 = vpop.f32.mrf.mxu0
    %v3849 = vadd.f32 %v3829, %v3848
    %3850 = vdwg.mxu0
    %3851 = vmatpush.msra.mxu0 %v2097
    %3852 = vmatpush.msra.mxu0 %v2096
    %3853 = vmatpush.msra.mxu0 %v2095
    %3854 = vmatpush.msra.mxu0 %v2094
    %3855 = vmatpush.msra.mxu0 %v2093
    %3856 = vmatpush.msra.mxu0 %v2092
    %3857 = vmatpush.msra.mxu0 %v2091
    %3858 = vmatpush.msra.mxu0 %v2090
    %3859 = vmatpush.msra.mxu0 %v2089
    %3860 = vmatpush.msra.mxu0 %v2088
    %3861 = vmatpush.msra.mxu0 %v2087
    %3862 = vmatpush.msra.mxu0 %v2086
    %3863 = vmatpush.msra.mxu0 %v2085
    %3864 = vmatpush.msra.mxu0 %v2084
    %3865 = vmatpush.msra.mxu0 %v2083
    %3866 = vmatpush.msra.mxu0 %v2082
    %3867 = vmatmul.f32.gmra.mxu0 %v3025
    %v3868 = vpop.f32.mrf.mxu0
    %v3869 = vadd.f32 %v3849, %v3868
    %3870 = vdwg.mxu0
    %3871 = vmatpush.msra.mxu0 %v2113
    %3872 = vmatpush.msra.mxu0 %v2112
    %3873 = vmatpush.msra.mxu0 %v2111
    %3874 = vmatpush.msra.mxu0 %v2110
    %3875 = vmatpush.msra.mxu0 %v2109
    %3876 = vmatpush.msra.mxu0 %v2108
    %3877 = vmatpush.msra.mxu0 %v2107
    %3878 = vmatpush.msra.mxu0 %v2106
    %3879 = vmatpush.msra.mxu0 %v2105
    %3880 = vmatpush.msra.mxu0 %v2104
    %3881 = vmatpush.msra.mxu0 %v2103
    %3882 = vmatpush.msra.mxu0 %v2102
    %3883 = vmatpush.msra.mxu0 %v2101
    %3884 = vmatpush.msra.mxu0 %v2100
    %3885 = vmatpush.msra.mxu0 %v2099
    %3886 = vmatpush.msra.mxu0 %v2098
    %3887 = vmatmul.f32.gmra.mxu0 %v3026
    %v3888 = vpop.f32.mrf.mxu0
    %v3889 = vadd.f32 %v3869, %v3888
    %3890 = vdwg.mxu0
    %3891 = vmatpush.msra.mxu0 %v2129
    %3892 = vmatpush.msra.mxu0 %v2128
    %3893 = vmatpush.msra.mxu0 %v2127
    %3894 = vmatpush.msra.mxu0 %v2126
    %3895 = vmatpush.msra.mxu0 %v2125
    %3896 = vmatpush.msra.mxu0 %v2124
    %3897 = vmatpush.msra.mxu0 %v2123
    %3898 = vmatpush.msra.mxu0 %v2122
    %3899 = vmatpush.msra.mxu0 %v2121
    %3900 = vmatpush.msra.mxu0 %v2120
    %3901 = vmatpush.msra.mxu0 %v2119
    %3902 = vmatpush.msra.mxu0 %v2118
    %3903 = vmatpush.msra.mxu0 %v2117
    %3904 = vmatpush.msra.mxu0 %v2116
    %3905 = vmatpush.msra.mxu0 %v2115
    %3906 = vmatpush.msra.mxu0 %v2114
    %3907 = vmatmul.f32.gmra.mxu0 %v3027
    %v3908 = vpop.f32.mrf.mxu0
    %v3909 = vadd.f32 %v3889, %v3908
    %3910 = vdwg.mxu0
    %3911 = vmatpush.msra.mxu0 %v2145
    %3912 = vmatpush.msra.mxu0 %v2144
    %3913 = vmatpush.msra.mxu0 %v2143
    %3914 = vmatpush.msra.mxu0 %v2142
    %3915 = vmatpush.msra.mxu0 %v2141
    %3916 = vmatpush.msra.mxu0 %v2140
    %3917 = vmatpush.msra.mxu0 %v2139
    %3918 = vmatpush.msra.mxu0 %v2138
    %3919 = vmatpush.msra.mxu0 %v2137
    %3920 = vmatpush.msra.mxu0 %v2136
    %3921 = vmatpush.msra.mxu0 %v2135
    %3922 = vmatpush.msra.mxu0 %v2134
    %3923 = vmatpush.msra.mxu0 %v2133
    %3924 = vmatpush.msra.mxu0 %v2132
    %3925 = vmatpush.msra.mxu0 %v2131
    %3926 = vmatpush.msra.mxu0 %v2130
    %3927 = vmatmul.f32.gmra.mxu0 %v3028
    %v3928 = vpop.f32.mrf.mxu0
    %v3929 = vadd.f32 %v3909, %v3928
    %3930 = vdwg.mxu0
    %3931 = vmatpush.msra.mxu0 %v2161
    %3932 = vmatpush.msra.mxu0 %v2160
    %3933 = vmatpush.msra.mxu0 %v2159
    %3934 = vmatpush.msra.mxu0 %v2158
    %3935 = vmatpush.msra.mxu0 %v2157
    %3936 = vmatpush.msra.mxu0 %v2156
    %3937 = vmatpush.msra.mxu0 %v2155
    %3938 = vmatpush.msra.mxu0 %v2154
    %3939 = vmatpush.msra.mxu0 %v2153
    %3940 = vmatpush.msra.mxu0 %v2152
    %3941 = vmatpush.msra.mxu0 %v2151
    %3942 = vmatpush.msra.mxu0 %v2150
    %3943 = vmatpush.msra.mxu0 %v2149
    %3944 = vmatpush.msra.mxu0 %v2148
    %3945 = vmatpush.msra.mxu0 %v2147
    %3946 = vmatpush.msra.mxu0 %v2146
    %3947 = vmatmul.f32.gmra.mxu0 %v3029
    %v3948 = vpop.f32.mrf.mxu0
    %v3949 = vadd.f32 %v3929, %v3948
    %3950 = vdwg.mxu0
    %3951 = vmatpush.msra.mxu0 %v2177
    %3952 = vmatpush.msra.mxu0 %v2176
    %3953 = vmatpush.msra.mxu0 %v2175
    %3954 = vmatpush.msra.mxu0 %v2174
    %3955 = vmatpush.msra.mxu0 %v2173
    %3956 = vmatpush.msra.mxu0 %v2172
    %3957 = vmatpush.msra.mxu0 %v2171
    %3958 = vmatpush.msra.mxu0 %v2170
    %3959 = vmatpush.msra.mxu0 %v2169
    %3960 = vmatpush.msra.mxu0 %v2168
    %3961 = vmatpush.msra.mxu0 %v2167
    %3962 = vmatpush.msra.mxu0 %v2166
    %3963 = vmatpush.msra.mxu0 %v2165
    %3964 = vmatpush.msra.mxu0 %v2164
    %3965 = vmatpush.msra.mxu0 %v2163
    %3966 = vmatpush.msra.mxu0 %v2162
    %3967 = vmatmul.f32.gmra.mxu0 %v3030
    %v3968 = vpop.f32.mrf.mxu0
    %v3969 = vadd.f32 %v3949, %v3968
    %3970 = vdwg.mxu0
    %3971 = vmatpush.msra.mxu0 %v2193
    %3972 = vmatpush.msra.mxu0 %v2192
    %3973 = vmatpush.msra.mxu0 %v2191
    %3974 = vmatpush.msra.mxu0 %v2190
    %3975 = vmatpush.msra.mxu0 %v2189
    %3976 = vmatpush.msra.mxu0 %v2188
    %3977 = vmatpush.msra.mxu0 %v2187
    %3978 = vmatpush.msra.mxu0 %v2186
    %3979 = vmatpush.msra.mxu0 %v2185
    %3980 = vmatpush.msra.mxu0 %v2184
    %3981 = vmatpush.msra.mxu0 %v2183
    %3982 = vmatpush.msra.mxu0 %v2182
    %3983 = vmatpush.msra.mxu0 %v2181
    %3984 = vmatpush.msra.mxu0 %v2180
    %3985 = vmatpush.msra.mxu0 %v2179
    %3986 = vmatpush.msra.mxu0 %v2178
    %3987 = vmatmul.f32.gmra.mxu0 %v3031
    %v3988 = vpop.f32.mrf.mxu0
    %v3989 = vadd.f32 %v3969, %v3988
    %3990 = vdwg.mxu0
    %3991 = vmatpush.msra.mxu0 %v2209
    %3992 = vmatpush.msra.mxu0 %v2208
    %3993 = vmatpush.msra.mxu0 %v2207
    %3994 = vmatpush.msra.mxu0 %v2206
    %3995 = vmatpush.msra.mxu0 %v2205
    %3996 = vmatpush.msra.mxu0 %v2204
    %3997 = vmatpush.msra.mxu0 %v2203
    %3998 = vmatpush.msra.mxu0 %v2202
    %3999 = vmatpush.msra.mxu0 %v2201
    %4000 = vmatpush.msra.mxu0 %v2200
    %4001 = vmatpush.msra.mxu0 %v2199
    %4002 = vmatpush.msra.mxu0 %v2198
    %4003 = vmatpush.msra.mxu0 %v2197
    %4004 = vmatpush.msra.mxu0 %v2196
    %4005 = vmatpush.msra.mxu0 %v2195
    %4006 = vmatpush.msra.mxu0 %v2194
    %4007 = vmatmul.f32.gmra.mxu0 %v3032
    %v4008 = vpop.f32.mrf.mxu0
    %v4009 = vadd.f32 %v3989, %v4008
    %4010 = vdwg.mxu0
    %4011 = vmatpush.msra.mxu0 %v2225
    %4012 = vmatpush.msra.mxu0 %v2224
    %4013 = vmatpush.msra.mxu0 %v2223
    %4014 = vmatpush.msra.mxu0 %v2222
    %4015 = vmatpush.msra.mxu0 %v2221
    %4016 = vmatpush.msra.mxu0 %v2220
    %4017 = vmatpush.msra.mxu0 %v2219
    %4018 = vmatpush.msra.mxu0 %v2218
    %4019 = vmatpush.msra.mxu0 %v2217
    %4020 = vmatpush.msra.mxu0 %v2216
    %4021 = vmatpush.msra.mxu0 %v2215
    %4022 = vmatpush.msra.mxu0 %v2214
    %4023 = vmatpush.msra.mxu0 %v2213
    %4024 = vmatpush.msra.mxu0 %v2212
    %4025 = vmatpush.msra.mxu0 %v2211
    %4026 = vmatpush.msra.mxu0 %v2210
    %4027 = vmatmul.f32.gmra.mxu0 %v3033
    %v4028 = vpop.f32.mrf.mxu0
    %v4029 = vadd.f32 %v4009, %v4028
    %4030 = vdwg.mxu0
    %4031 = vmatpush.msra.mxu0 %v2241
    %4032 = vmatpush.msra.mxu0 %v2240
    %4033 = vmatpush.msra.mxu0 %v2239
    %4034 = vmatpush.msra.mxu0 %v2238
    %4035 = vmatpush.msra.mxu0 %v2237
    %4036 = vmatpush.msra.mxu0 %v2236
    %4037 = vmatpush.msra.mxu0 %v2235
    %4038 = vmatpush.msra.mxu0 %v2234
    %4039 = vmatpush.msra.mxu0 %v2233
    %4040 = vmatpush.msra.mxu0 %v2232
    %4041 = vmatpush.msra.mxu0 %v2231
    %4042 = vmatpush.msra.mxu0 %v2230
    %4043 = vmatpush.msra.mxu0 %v2229
    %4044 = vmatpush.msra.mxu0 %v2228
    %4045 = vmatpush.msra.mxu0 %v2227
    %4046 = vmatpush.msra.mxu0 %v2226
    %4047 = vmatmul.f32.gmra.mxu0 %v3034
    %v4048 = vpop.f32.mrf.mxu0
    %v4049 = vadd.f32 %v4029, %v4048
    %4050 = vdwg.mxu0
    %4051 = vmatpush.msra.mxu0 %v2257
    %4052 = vmatpush.msra.mxu0 %v2256
    %4053 = vmatpush.msra.mxu0 %v2255
    %4054 = vmatpush.msra.mxu0 %v2254
    %4055 = vmatpush.msra.mxu0 %v2253
    %4056 = vmatpush.msra.mxu0 %v2252
    %4057 = vmatpush.msra.mxu0 %v2251
    %4058 = vmatpush.msra.mxu0 %v2250
    %4059 = vmatpush.msra.mxu0 %v2249
    %4060 = vmatpush.msra.mxu0 %v2248
    %4061 = vmatpush.msra.mxu0 %v2247
    %4062 = vmatpush.msra.mxu0 %v2246
    %4063 = vmatpush.msra.mxu0 %v2245
    %4064 = vmatpush.msra.mxu0 %v2244
    %4065 = vmatpush.msra.mxu0 %v2243
    %4066 = vmatpush.msra.mxu0 %v2242
    %4067 = vmatmul.f32.gmra.mxu0 %v3035
    %v4068 = vpop.f32.mrf.mxu0
    %v4069 = vadd.f32 %v4049, %v4068
    %4070 = vdwg.mxu0
    %4071 = vmatpush.msra.mxu0 %v2273
    %4072 = vmatpush.msra.mxu0 %v2272
    %4073 = vmatpush.msra.mxu0 %v2271
    %4074 = vmatpush.msra.mxu0 %v2270
    %4075 = vmatpush.msra.mxu0 %v2269
    %4076 = vmatpush.msra.mxu0 %v2268
    %4077 = vmatpush.msra.mxu0 %v2267
    %4078 = vmatpush.msra.mxu0 %v2266
    %4079 = vmatpush.msra.mxu0 %v2265
    %4080 = vmatpush.msra.mxu0 %v2264
    %4081 = vmatpush.msra.mxu0 %v2263
    %4082 = vmatpush.msra.mxu0 %v2262
    %4083 = vmatpush.msra.mxu0 %v2261
    %4084 = vmatpush.msra.mxu0 %v2260
    %4085 = vmatpush.msra.mxu0 %v2259
    %4086 = vmatpush.msra.mxu0 %v2258
    %4087 = vmatmul.f32.gmra.mxu0 %v3036
    %v4088 = vpop.f32.mrf.mxu0
    %v4089 = vadd.f32 %v4069, %v4088
    %4090 = vdwg.mxu0
    %4091 = vmatpush.msra.mxu0 %v2289
    %4092 = vmatpush.msra.mxu0 %v2288
    %4093 = vmatpush.msra.mxu0 %v2287
    %4094 = vmatpush.msra.mxu0 %v2286
    %4095 = vmatpush.msra.mxu0 %v2285
    %4096 = vmatpush.msra.mxu0 %v2284
    %4097 = vmatpush.msra.mxu0 %v2283
    %4098 = vmatpush.msra.mxu0 %v2282
    %4099 = vmatpush.msra.mxu0 %v2281
    %4100 = vmatpush.msra.mxu0 %v2280
    %4101 = vmatpush.msra.mxu0 %v2279
    %4102 = vmatpush.msra.mxu0 %v2278
    %4103 = vmatpush.msra.mxu0 %v2277
    %4104 = vmatpush.msra.mxu0 %v2276
    %4105 = vmatpush.msra.mxu0 %v2275
    %4106 = vmatpush.msra.mxu0 %v2274
    %4107 = vmatmul.f32.gmra.mxu0 %v3037
    %v4108 = vpop.f32.mrf.mxu0
    %v4109 = vadd.f32 %v4089, %v4108
    %4110 = vdwg.mxu0
    %4111 = vmatpush.msra.mxu0 %v2305
    %4112 = vmatpush.msra.mxu0 %v2304
    %4113 = vmatpush.msra.mxu0 %v2303
    %4114 = vmatpush.msra.mxu0 %v2302
    %4115 = vmatpush.msra.mxu0 %v2301
    %4116 = vmatpush.msra.mxu0 %v2300
    %4117 = vmatpush.msra.mxu0 %v2299
    %4118 = vmatpush.msra.mxu0 %v2298
    %4119 = vmatpush.msra.mxu0 %v2297
    %4120 = vmatpush.msra.mxu0 %v2296
    %4121 = vmatpush.msra.mxu0 %v2295
    %4122 = vmatpush.msra.mxu0 %v2294
    %4123 = vmatpush.msra.mxu0 %v2293
    %4124 = vmatpush.msra.mxu0 %v2292
    %4125 = vmatpush.msra.mxu0 %v2291
    %4126 = vmatpush.msra.mxu0 %v2290
    %4127 = vmatmul.f32.gmra.mxu0 %v3038
    %v4128 = vpop.f32.mrf.mxu0
    %v4129 = vadd.f32 %v4109, %v4128
    %4130 = vdwg.mxu0
    %4131 = vmatpush.msra.mxu0 %v2321
    %4132 = vmatpush.msra.mxu0 %v2320
    %4133 = vmatpush.msra.mxu0 %v2319
    %4134 = vmatpush.msra.mxu0 %v2318
    %4135 = vmatpush.msra.mxu0 %v2317
    %4136 = vmatpush.msra.mxu0 %v2316
    %4137 = vmatpush.msra.mxu0 %v2315
    %4138 = vmatpush.msra.mxu0 %v2314
    %4139 = vmatpush.msra.mxu0 %v2313
    %4140 = vmatpush.msra.mxu0 %v2312
    %4141 = vmatpush.msra.mxu0 %v2311
    %4142 = vmatpush.msra.mxu0 %v2310
    %4143 = vmatpush.msra.mxu0 %v2309
    %4144 = vmatpush.msra.mxu0 %v2308
    %4145 = vmatpush.msra.mxu0 %v2307
    %4146 = vmatpush.msra.mxu0 %v2306
    %4147 = vmatmul.f32.gmra.mxu0 %v3039
    %v4148 = vpop.f32.mrf.mxu0
    %v4149 = vadd.f32 %v4129, %v4148
    %4150 = vdwg.mxu0
    %4151 = vmatpush.msra.mxu0 %v2337
    %4152 = vmatpush.msra.mxu0 %v2336
    %4153 = vmatpush.msra.mxu0 %v2335
    %4154 = vmatpush.msra.mxu0 %v2334
    %4155 = vmatpush.msra.mxu0 %v2333
    %4156 = vmatpush.msra.mxu0 %v2332
    %4157 = vmatpush.msra.mxu0 %v2331
    %4158 = vmatpush.msra.mxu0 %v2330
    %4159 = vmatpush.msra.mxu0 %v2329
    %4160 = vmatpush.msra.mxu0 %v2328
    %4161 = vmatpush.msra.mxu0 %v2327
    %4162 = vmatpush.msra.mxu0 %v2326
    %4163 = vmatpush.msra.mxu0 %v2325
    %4164 = vmatpush.msra.mxu0 %v2324
    %4165 = vmatpush.msra.mxu0 %v2323
    %4166 = vmatpush.msra.mxu0 %v2322
    %4167 = vmatmul.f32.gmra.mxu0 %v3040
    %v4168 = vpop.f32.mrf.mxu0
    %v4169 = vadd.f32 %v4149, %v4168
    %4170 = vdwg.mxu0
    %4171 = vmatpush.msra.mxu0 %v2353
    %4172 = vmatpush.msra.mxu0 %v2352
    %4173 = vmatpush.msra.mxu0 %v2351
    %4174 = vmatpush.msra.mxu0 %v2350
    %4175 = vmatpush.msra.mxu0 %v2349
    %4176 = vmatpush.msra.mxu0 %v2348
    %4177 = vmatpush.msra.mxu0 %v2347
    %4178 = vmatpush.msra.mxu0 %v2346
    %4179 = vmatpush.msra.mxu0 %v2345
    %4180 = vmatpush.msra.mxu0 %v2344
    %4181 = vmatpush.msra.mxu0 %v2343
    %4182 = vmatpush.msra.mxu0 %v2342
    %4183 = vmatpush.msra.mxu0 %v2341
    %4184 = vmatpush.msra.mxu0 %v2340
    %4185 = vmatpush.msra.mxu0 %v2339
    %4186 = vmatpush.msra.mxu0 %v2338
    %4187 = vmatmul.f32.gmra.mxu0 %v3041
    %v4188 = vpop.f32.mrf.mxu0
    %v4189 = vadd.f32 %v4169, %v4188
    %4190 = vdwg.mxu0
    %4191 = vmatpush.msra.mxu0 %v2369
    %4192 = vmatpush.msra.mxu0 %v2368
    %4193 = vmatpush.msra.mxu0 %v2367
    %4194 = vmatpush.msra.mxu0 %v2366
    %4195 = vmatpush.msra.mxu0 %v2365
    %4196 = vmatpush.msra.mxu0 %v2364
    %4197 = vmatpush.msra.mxu0 %v2363
    %4198 = vmatpush.msra.mxu0 %v2362
    %4199 = vmatpush.msra.mxu0 %v2361
    %4200 = vmatpush.msra.mxu0 %v2360
    %4201 = vmatpush.msra.mxu0 %v2359
    %4202 = vmatpush.msra.mxu0 %v2358
    %4203 = vmatpush.msra.mxu0 %v2357
    %4204 = vmatpush.msra.mxu0 %v2356
    %4205 = vmatpush.msra.mxu0 %v2355
    %4206 = vmatpush.msra.mxu0 %v2354
    %4207 = vmatmul.f32.gmra.mxu0 %v3042
    %v4208 = vpop.f32.mrf.mxu0
    %v4209 = vadd.f32 %v4189, %v4208
    %4210 = vdwg.mxu0
    %4211 = vmatpush.msra.mxu0 %v2385
    %4212 = vmatpush.msra.mxu0 %v2384
    %4213 = vmatpush.msra.mxu0 %v2383
    %4214 = vmatpush.msra.mxu0 %v2382
    %4215 = vmatpush.msra.mxu0 %v2381
    %4216 = vmatpush.msra.mxu0 %v2380
    %4217 = vmatpush.msra.mxu0 %v2379
    %4218 = vmatpush.msra.mxu0 %v2378
    %4219 = vmatpush.msra.mxu0 %v2377
    %4220 = vmatpush.msra.mxu0 %v2376
    %4221 = vmatpush.msra.mxu0 %v2375
    %4222 = vmatpush.msra.mxu0 %v2374
    %4223 = vmatpush.msra.mxu0 %v2373
    %4224 = vmatpush.msra.mxu0 %v2372
    %4225 = vmatpush.msra.mxu0 %v2371
    %4226 = vmatpush.msra.mxu0 %v2370
    %4227 = vmatmul.f32.gmra.mxu0 %v3043
    %v4228 = vpop.f32.mrf.mxu0
    %v4229 = vadd.f32 %v4209, %v4228
    %4230 = vdwg.mxu0
    %4231 = vmatpush.msra.mxu0 %v2401
    %4232 = vmatpush.msra.mxu0 %v2400
    %4233 = vmatpush.msra.mxu0 %v2399
    %4234 = vmatpush.msra.mxu0 %v2398
    %4235 = vmatpush.msra.mxu0 %v2397
    %4236 = vmatpush.msra.mxu0 %v2396
    %4237 = vmatpush.msra.mxu0 %v2395
    %4238 = vmatpush.msra.mxu0 %v2394
    %4239 = vmatpush.msra.mxu0 %v2393
    %4240 = vmatpush.msra.mxu0 %v2392
    %4241 = vmatpush.msra.mxu0 %v2391
    %4242 = vmatpush.msra.mxu0 %v2390
    %4243 = vmatpush.msra.mxu0 %v2389
    %4244 = vmatpush.msra.mxu0 %v2388
    %4245 = vmatpush.msra.mxu0 %v2387
    %4246 = vmatpush.msra.mxu0 %v2386
    %4247 = vmatmul.f32.gmra.mxu0 %v3044
    %v4248 = vpop.f32.mrf.mxu0
    %v4249 = vadd.f32 %v4229, %v4248
    %4250 = vdwg.mxu0
    %4251 = vmatpush.msra.mxu0 %v2417
    %4252 = vmatpush.msra.mxu0 %v2416
    %4253 = vmatpush.msra.mxu0 %v2415
    %4254 = vmatpush.msra.mxu0 %v2414
    %4255 = vmatpush.msra.mxu0 %v2413
    %4256 = vmatpush.msra.mxu0 %v2412
    %4257 = vmatpush.msra.mxu0 %v2411
    %4258 = vmatpush.msra.mxu0 %v2410
    %4259 = vmatpush.msra.mxu0 %v2409
    %4260 = vmatpush.msra.mxu0 %v2408
    %4261 = vmatpush.msra.mxu0 %v2407
    %4262 = vmatpush.msra.mxu0 %v2406
    %4263 = vmatpush.msra.mxu0 %v2405
    %4264 = vmatpush.msra.mxu0 %v2404
    %4265 = vmatpush.msra.mxu0 %v2403
    %4266 = vmatpush.msra.mxu0 %v2402
    %4267 = vmatmul.f32.gmra.mxu0 %v3045
    %v4268 = vpop.f32.mrf.mxu0
    %v4269 = vadd.f32 %v4249, %v4268
    %4270 = vdwg.mxu0
    %4271 = vmatpush.msra.mxu0 %v2433
    %4272 = vmatpush.msra.mxu0 %v2432
    %4273 = vmatpush.msra.mxu0 %v2431
    %4274 = vmatpush.msra.mxu0 %v2430
    %4275 = vmatpush.msra.mxu0 %v2429
    %4276 = vmatpush.msra.mxu0 %v2428
    %4277 = vmatpush.msra.mxu0 %v2427
    %4278 = vmatpush.msra.mxu0 %v2426
    %4279 = vmatpush.msra.mxu0 %v2425
    %4280 = vmatpush.msra.mxu0 %v2424
    %4281 = vmatpush.msra.mxu0 %v2423
    %4282 = vmatpush.msra.mxu0 %v2422
    %4283 = vmatpush.msra.mxu0 %v2421
    %4284 = vmatpush.msra.mxu0 %v2420
    %4285 = vmatpush.msra.mxu0 %v2419
    %4286 = vmatpush.msra.mxu0 %v2418
    %4287 = vmatmul.f32.gmra.mxu0 %v3046
    %v4288 = vpop.f32.mrf.mxu0
    %v4289 = vadd.f32 %v4269, %v4288
    %4290 = vdwg.mxu0
    %4291 = vmatpush.msra.mxu0 %v2449
    %4292 = vmatpush.msra.mxu0 %v2448
    %4293 = vmatpush.msra.mxu0 %v2447
    %4294 = vmatpush.msra.mxu0 %v2446
    %4295 = vmatpush.msra.mxu0 %v2445
    %4296 = vmatpush.msra.mxu0 %v2444
    %4297 = vmatpush.msra.mxu0 %v2443
    %4298 = vmatpush.msra.mxu0 %v2442
    %4299 = vmatpush.msra.mxu0 %v2441
    %4300 = vmatpush.msra.mxu0 %v2440
    %4301 = vmatpush.msra.mxu0 %v2439
    %4302 = vmatpush.msra.mxu0 %v2438
    %4303 = vmatpush.msra.mxu0 %v2437
    %4304 = vmatpush.msra.mxu0 %v2436
    %4305 = vmatpush.msra.mxu0 %v2435
    %4306 = vmatpush.msra.mxu0 %v2434
    %4307 = vmatmul.f32.gmra.mxu0 %v3047
    %v4308 = vpop.f32.mrf.mxu0
    %v4309 = vadd.f32 %v4289, %v4308
    %4310 = vdwg.mxu0
    %4311 = vmatpush.msra.mxu0 %v2465
    %4312 = vmatpush.msra.mxu0 %v2464
    %4313 = vmatpush.msra.mxu0 %v2463
    %4314 = vmatpush.msra.mxu0 %v2462
    %4315 = vmatpush.msra.mxu0 %v2461
    %4316 = vmatpush.msra.mxu0 %v2460
    %4317 = vmatpush.msra.mxu0 %v2459
    %4318 = vmatpush.msra.mxu0 %v2458
    %4319 = vmatpush.msra.mxu0 %v2457
    %4320 = vmatpush.msra.mxu0 %v2456
    %4321 = vmatpush.msra.mxu0 %v2455
    %4322 = vmatpush.msra.mxu0 %v2454
    %4323 = vmatpush.msra.mxu0 %v2453
    %4324 = vmatpush.msra.mxu0 %v2452
    %4325 = vmatpush.msra.mxu0 %v2451
    %4326 = vmatpush.msra.mxu0 %v2450
    %4327 = vmatmul.f32.gmra.mxu0 %v3048
    %v4328 = vpop.f32.mrf.mxu0
    %v4329 = vadd.f32 %v4309, %v4328
    %4330 = vdwg.mxu0
    %4331 = vmatpush.msra.mxu0 %v2481
    %4332 = vmatpush.msra.mxu0 %v2480
    %4333 = vmatpush.msra.mxu0 %v2479
    %4334 = vmatpush.msra.mxu0 %v2478
    %4335 = vmatpush.msra.mxu0 %v2477
    %4336 = vmatpush.msra.mxu0 %v2476
    %4337 = vmatpush.msra.mxu0 %v2475
    %4338 = vmatpush.msra.mxu0 %v2474
    %4339 = vmatpush.msra.mxu0 %v2473
    %4340 = vmatpush.msra.mxu0 %v2472
    %4341 = vmatpush.msra.mxu0 %v2471
    %4342 = vmatpush.msra.mxu0 %v2470
    %4343 = vmatpush.msra.mxu0 %v2469
    %4344 = vmatpush.msra.mxu0 %v2468
    %4345 = vmatpush.msra.mxu0 %v2467
    %4346 = vmatpush.msra.mxu0 %v2466
    %4347 = vmatmul.f32.gmra.mxu0 %v3049
    %v4348 = vpop.f32.mrf.mxu0
    %v4349 = vadd.f32 %v4329, %v4348
    %4350 = vdwg.mxu0
    %4351 = vmatpush.msra.mxu0 %v2497
    %4352 = vmatpush.msra.mxu0 %v2496
    %4353 = vmatpush.msra.mxu0 %v2495
    %4354 = vmatpush.msra.mxu0 %v2494
    %4355 = vmatpush.msra.mxu0 %v2493
    %4356 = vmatpush.msra.mxu0 %v2492
    %4357 = vmatpush.msra.mxu0 %v2491
    %4358 = vmatpush.msra.mxu0 %v2490
    %4359 = vmatpush.msra.mxu0 %v2489
    %4360 = vmatpush.msra.mxu0 %v2488
    %4361 = vmatpush.msra.mxu0 %v2487
    %4362 = vmatpush.msra.mxu0 %v2486
    %4363 = vmatpush.msra.mxu0 %v2485
    %4364 = vmatpush.msra.mxu0 %v2484
    %4365 = vmatpush.msra.mxu0 %v2483
    %4366 = vmatpush.msra.mxu0 %v2482
    %4367 = vmatmul.f32.gmra.mxu0 %v3050
    %v4368 = vpop.f32.mrf.mxu0
    %v4369 = vadd.f32 %v4349, %v4368
    %4370 = vdwg.mxu0
    %4371 = vmatpush.msra.mxu0 %v2513
    %4372 = vmatpush.msra.mxu0 %v2512
    %4373 = vmatpush.msra.mxu0 %v2511
    %4374 = vmatpush.msra.mxu0 %v2510
    %4375 = vmatpush.msra.mxu0 %v2509
    %4376 = vmatpush.msra.mxu0 %v2508
    %4377 = vmatpush.msra.mxu0 %v2507
    %4378 = vmatpush.msra.mxu0 %v2506
    %4379 = vmatpush.msra.mxu0 %v2505
    %4380 = vmatpush.msra.mxu0 %v2504
    %4381 = vmatpush.msra.mxu0 %v2503
    %4382 = vmatpush.msra.mxu0 %v2502
    %4383 = vmatpush.msra.mxu0 %v2501
    %4384 = vmatpush.msra.mxu0 %v2500
    %4385 = vmatpush.msra.mxu0 %v2499
    %4386 = vmatpush.msra.mxu0 %v2498
    %4387 = vmatmul.f32.gmra.mxu0 %v3051
    %v4388 = vpop.f32.mrf.mxu0
    %v4389 = vadd.f32 %v4369, %v4388
    %4390 = vdwg.mxu0
    %4391 = vmatpush.msra.mxu0 %v2529
    %4392 = vmatpush.msra.mxu0 %v2528
    %4393 = vmatpush.msra.mxu0 %v2527
    %4394 = vmatpush.msra.mxu0 %v2526
    %4395 = vmatpush.msra.mxu0 %v2525
    %4396 = vmatpush.msra.mxu0 %v2524
    %4397 = vmatpush.msra.mxu0 %v2523
    %4398 = vmatpush.msra.mxu0 %v2522
    %4399 = vmatpush.msra.mxu0 %v2521
    %4400 = vmatpush.msra.mxu0 %v2520
    %4401 = vmatpush.msra.mxu0 %v2519
    %4402 = vmatpush.msra.mxu0 %v2518
    %4403 = vmatpush.msra.mxu0 %v2517
    %4404 = vmatpush.msra.mxu0 %v2516
    %4405 = vmatpush.msra.mxu0 %v2515
    %4406 = vmatpush.msra.mxu0 %v2514
    %4407 = vmatmul.f32.gmra.mxu0 %v3052
    %v4408 = vpop.f32.mrf.mxu0
    %v4409 = vadd.f32 %v4389, %v4408
    %4410 = vdwg.mxu0
    %4411 = vmatpush.msra.mxu0 %v2545
    %4412 = vmatpush.msra.mxu0 %v2544
    %4413 = vmatpush.msra.mxu0 %v2543
    %4414 = vmatpush.msra.mxu0 %v2542
    %4415 = vmatpush.msra.mxu0 %v2541
    %4416 = vmatpush.msra.mxu0 %v2540
    %4417 = vmatpush.msra.mxu0 %v2539
    %4418 = vmatpush.msra.mxu0 %v2538
    %4419 = vmatpush.msra.mxu0 %v2537
    %4420 = vmatpush.msra.mxu0 %v2536
    %4421 = vmatpush.msra.mxu0 %v2535
    %4422 = vmatpush.msra.mxu0 %v2534
    %4423 = vmatpush.msra.mxu0 %v2533
    %4424 = vmatpush.msra.mxu0 %v2532
    %4425 = vmatpush.msra.mxu0 %v2531
    %4426 = vmatpush.msra.mxu0 %v2530
    %4427 = vmatmul.f32.gmra.mxu0 %v3053
    %v4428 = vpop.f32.mrf.mxu0
    %v4429 = vadd.f32 %v4409, %v4428
    %4430 = vdwg.mxu0
    %4431 = vmatpush.msra.mxu0 %v2561
    %4432 = vmatpush.msra.mxu0 %v2560
    %4433 = vmatpush.msra.mxu0 %v2559
    %4434 = vmatpush.msra.mxu0 %v2558
    %4435 = vmatpush.msra.mxu0 %v2557
    %4436 = vmatpush.msra.mxu0 %v2556
    %4437 = vmatpush.msra.mxu0 %v2555
    %4438 = vmatpush.msra.mxu0 %v2554
    %4439 = vmatpush.msra.mxu0 %v2553
    %4440 = vmatpush.msra.mxu0 %v2552
    %4441 = vmatpush.msra.mxu0 %v2551
    %4442 = vmatpush.msra.mxu0 %v2550
    %4443 = vmatpush.msra.mxu0 %v2549
    %4444 = vmatpush.msra.mxu0 %v2548
    %4445 = vmatpush.msra.mxu0 %v2547
    %4446 = vmatpush.msra.mxu0 %v2546
    %4447 = vmatmul.f32.gmra.mxu0 %v3054
    %v4448 = vpop.f32.mrf.mxu0
    %v4449 = vadd.f32 %v4429, %v4448
    %4450 = vdwg.mxu0
    %4451 = vmatpush.msra.mxu0 %v2577
    %4452 = vmatpush.msra.mxu0 %v2576
    %4453 = vmatpush.msra.mxu0 %v2575
    %4454 = vmatpush.msra.mxu0 %v2574
    %4455 = vmatpush.msra.mxu0 %v2573
    %4456 = vmatpush.msra.mxu0 %v2572
    %4457 = vmatpush.msra.mxu0 %v2571
    %4458 = vmatpush.msra.mxu0 %v2570
    %4459 = vmatpush.msra.mxu0 %v2569
    %4460 = vmatpush.msra.mxu0 %v2568
    %4461 = vmatpush.msra.mxu0 %v2567
    %4462 = vmatpush.msra.mxu0 %v2566
    %4463 = vmatpush.msra.mxu0 %v2565
    %4464 = vmatpush.msra.mxu0 %v2564
    %4465 = vmatpush.msra.mxu0 %v2563
    %4466 = vmatpush.msra.mxu0 %v2562
    %4467 = vmatmul.f32.gmra.mxu0 %v3055
    %v4468 = vpop.f32.mrf.mxu0
    %v4469 = vadd.f32 %v4449, %v4468
    %4470 = vdwg.mxu0
    %4471 = vmatpush.msra.mxu0 %v2593
    %4472 = vmatpush.msra.mxu0 %v2592
    %4473 = vmatpush.msra.mxu0 %v2591
    %4474 = vmatpush.msra.mxu0 %v2590
    %4475 = vmatpush.msra.mxu0 %v2589
    %4476 = vmatpush.msra.mxu0 %v2588
    %4477 = vmatpush.msra.mxu0 %v2587
    %4478 = vmatpush.msra.mxu0 %v2586
    %4479 = vmatpush.msra.mxu0 %v2585
    %4480 = vmatpush.msra.mxu0 %v2584
    %4481 = vmatpush.msra.mxu0 %v2583
    %4482 = vmatpush.msra.mxu0 %v2582
    %4483 = vmatpush.msra.mxu0 %v2581
    %4484 = vmatpush.msra.mxu0 %v2580
    %4485 = vmatpush.msra.mxu0 %v2579
    %4486 = vmatpush.msra.mxu0 %v2578
    %4487 = vmatmul.f32.gmra.mxu0 %v3056
    %v4488 = vpop.f32.mrf.mxu0
    %v4489 = vadd.f32 %v4469, %v4488
    %4490 = vdwg.mxu0
    %4491 = vmatpush.msra.mxu0 %v2609
    %4492 = vmatpush.msra.mxu0 %v2608
    %4493 = vmatpush.msra.mxu0 %v2607
    %4494 = vmatpush.msra.mxu0 %v2606
    %4495 = vmatpush.msra.mxu0 %v2605
    %4496 = vmatpush.msra.mxu0 %v2604
    %4497 = vmatpush.msra.mxu0 %v2603
    %4498 = vmatpush.msra.mxu0 %v2602
    %4499 = vmatpush.msra.mxu0 %v2601
    %4500 = vmatpush.msra.mxu0 %v2600
    %4501 = vmatpush.msra.mxu0 %v2599
    %4502 = vmatpush.msra.mxu0 %v2598
    %4503 = vmatpush.msra.mxu0 %v2597
    %4504 = vmatpush.msra.mxu0 %v2596
    %4505 = vmatpush.msra.mxu0 %v2595
    %4506 = vmatpush.msra.mxu0 %v2594
    %4507 = vmatmul.f32.gmra.mxu0 %v3057
    %v4508 = vpop.f32.mrf.mxu0
    %v4509 = vadd.f32 %v4489, %v4508
    %4510 = vdwg.mxu0
    %4511 = vmatpush.msra.mxu0 %v2625
    %4512 = vmatpush.msra.mxu0 %v2624
    %4513 = vmatpush.msra.mxu0 %v2623
    %4514 = vmatpush.msra.mxu0 %v2622
    %4515 = vmatpush.msra.mxu0 %v2621
    %4516 = vmatpush.msra.mxu0 %v2620
    %4517 = vmatpush.msra.mxu0 %v2619
    %4518 = vmatpush.msra.mxu0 %v2618
    %4519 = vmatpush.msra.mxu0 %v2617
    %4520 = vmatpush.msra.mxu0 %v2616
    %4521 = vmatpush.msra.mxu0 %v2615
    %4522 = vmatpush.msra.mxu0 %v2614
    %4523 = vmatpush.msra.mxu0 %v2613
    %4524 = vmatpush.msra.mxu0 %v2612
    %4525 = vmatpush.msra.mxu0 %v2611
    %4526 = vmatpush.msra.mxu0 %v2610
    %4527 = vmatmul.f32.gmra.mxu0 %v3058
    %v4528 = vpop.f32.mrf.mxu0
    %v4529 = vadd.f32 %v4509, %v4528
    %4530 = vdwg.mxu0
    %4531 = vmatpush.msra.mxu0 %v2641
    %4532 = vmatpush.msra.mxu0 %v2640
    %4533 = vmatpush.msra.mxu0 %v2639
    %4534 = vmatpush.msra.mxu0 %v2638
    %4535 = vmatpush.msra.mxu0 %v2637
    %4536 = vmatpush.msra.mxu0 %v2636
    %4537 = vmatpush.msra.mxu0 %v2635
    %4538 = vmatpush.msra.mxu0 %v2634
    %4539 = vmatpush.msra.mxu0 %v2633
    %4540 = vmatpush.msra.mxu0 %v2632
    %4541 = vmatpush.msra.mxu0 %v2631
    %4542 = vmatpush.msra.mxu0 %v2630
    %4543 = vmatpush.msra.mxu0 %v2629
    %4544 = vmatpush.msra.mxu0 %v2628
    %4545 = vmatpush.msra.mxu0 %v2627
    %4546 = vmatpush.msra.mxu0 %v2626
    %4547 = vmatmul.f32.gmra.mxu0 %v3059
    %v4548 = vpop.f32.mrf.mxu0
    %v4549 = vadd.f32 %v4529, %v4548
    %4550 = vdwg.mxu0
    %4551 = vmatpush.msra.mxu0 %v2657
    %4552 = vmatpush.msra.mxu0 %v2656
    %4553 = vmatpush.msra.mxu0 %v2655
    %4554 = vmatpush.msra.mxu0 %v2654
    %4555 = vmatpush.msra.mxu0 %v2653
    %4556 = vmatpush.msra.mxu0 %v2652
    %4557 = vmatpush.msra.mxu0 %v2651
    %4558 = vmatpush.msra.mxu0 %v2650
    %4559 = vmatpush.msra.mxu0 %v2649
    %4560 = vmatpush.msra.mxu0 %v2648
    %4561 = vmatpush.msra.mxu0 %v2647
    %4562 = vmatpush.msra.mxu0 %v2646
    %4563 = vmatpush.msra.mxu0 %v2645
    %4564 = vmatpush.msra.mxu0 %v2644
    %4565 = vmatpush.msra.mxu0 %v2643
    %4566 = vmatpush.msra.mxu0 %v2642
    %4567 = vmatmul.f32.gmra.mxu0 %v3060
    %v4568 = vpop.f32.mrf.mxu0
    %v4569 = vadd.f32 %v4549, %v4568
    %4570 = vdwg.mxu0
    %4571 = vmatpush.msra.mxu0 %v2673
    %4572 = vmatpush.msra.mxu0 %v2672
    %4573 = vmatpush.msra.mxu0 %v2671
    %4574 = vmatpush.msra.mxu0 %v2670
    %4575 = vmatpush.msra.mxu0 %v2669
    %4576 = vmatpush.msra.mxu0 %v2668
    %4577 = vmatpush.msra.mxu0 %v2667
    %4578 = vmatpush.msra.mxu0 %v2666
    %4579 = vmatpush.msra.mxu0 %v2665
    %4580 = vmatpush.msra.mxu0 %v2664
    %4581 = vmatpush.msra.mxu0 %v2663
    %4582 = vmatpush.msra.mxu0 %v2662
    %4583 = vmatpush.msra.mxu0 %v2661
    %4584 = vmatpush.msra.mxu0 %v2660
    %4585 = vmatpush.msra.mxu0 %v2659
    %4586 = vmatpush.msra.mxu0 %v2658
    %4587 = vmatmul.f32.gmra.mxu0 %v3061
    %v4588 = vpop.f32.mrf.mxu0
    %v4589 = vadd.f32 %v4569, %v4588
    %4590 = vdwg.mxu0
    %4591 = vmatpush.msra.mxu0 %v2689
    %4592 = vmatpush.msra.mxu0 %v2688
    %4593 = vmatpush.msra.mxu0 %v2687
    %4594 = vmatpush.msra.mxu0 %v2686
    %4595 = vmatpush.msra.mxu0 %v2685
    %4596 = vmatpush.msra.mxu0 %v2684
    %4597 = vmatpush.msra.mxu0 %v2683
    %4598 = vmatpush.msra.mxu0 %v2682
    %4599 = vmatpush.msra.mxu0 %v2681
    %4600 = vmatpush.msra.mxu0 %v2680
    %4601 = vmatpush.msra.mxu0 %v2679
    %4602 = vmatpush.msra.mxu0 %v2678
    %4603 = vmatpush.msra.mxu0 %v2677
    %4604 = vmatpush.msra.mxu0 %v2676
    %4605 = vmatpush.msra.mxu0 %v2675
    %4606 = vmatpush.msra.mxu0 %v2674
    %4607 = vmatmul.f32.gmra.mxu0 %v3062
    %v4608 = vpop.f32.mrf.mxu0
    %v4609 = vadd.f32 %v4589, %v4608
    %4610 = vdwg.mxu0
    %4611 = vmatpush.msra.mxu0 %v2705
    %4612 = vmatpush.msra.mxu0 %v2704
    %4613 = vmatpush.msra.mxu0 %v2703
    %4614 = vmatpush.msra.mxu0 %v2702
    %4615 = vmatpush.msra.mxu0 %v2701
    %4616 = vmatpush.msra.mxu0 %v2700
    %4617 = vmatpush.msra.mxu0 %v2699
    %4618 = vmatpush.msra.mxu0 %v2698
    %4619 = vmatpush.msra.mxu0 %v2697
    %4620 = vmatpush.msra.mxu0 %v2696
    %4621 = vmatpush.msra.mxu0 %v2695
    %4622 = vmatpush.msra.mxu0 %v2694
    %4623 = vmatpush.msra.mxu0 %v2693
    %4624 = vmatpush.msra.mxu0 %v2692
    %4625 = vmatpush.msra.mxu0 %v2691
    %4626 = vmatpush.msra.mxu0 %v2690
    %4627 = vmatmul.f32.gmra.mxu0 %v3063
    %v4628 = vpop.f32.mrf.mxu0
    %v4629 = vadd.f32 %v4609, %v4628
    %4630 = vdwg.mxu0
    %4631 = vmatpush.msra.mxu0 %v2721
    %4632 = vmatpush.msra.mxu0 %v2720
    %4633 = vmatpush.msra.mxu0 %v2719
    %4634 = vmatpush.msra.mxu0 %v2718
    %4635 = vmatpush.msra.mxu0 %v2717
    %4636 = vmatpush.msra.mxu0 %v2716
    %4637 = vmatpush.msra.mxu0 %v2715
    %4638 = vmatpush.msra.mxu0 %v2714
    %4639 = vmatpush.msra.mxu0 %v2713
    %4640 = vmatpush.msra.mxu0 %v2712
    %4641 = vmatpush.msra.mxu0 %v2711
    %4642 = vmatpush.msra.mxu0 %v2710
    %4643 = vmatpush.msra.mxu0 %v2709
    %4644 = vmatpush.msra.mxu0 %v2708
    %4645 = vmatpush.msra.mxu0 %v2707
    %4646 = vmatpush.msra.mxu0 %v2706
    %4647 = vmatmul.f32.gmra.mxu0 %v3064
    %v4648 = vpop.f32.mrf.mxu0
    %v4649 = vadd.f32 %v4629, %v4648
    %4650 = vdwg.mxu0
    %4651 = vmatpush.msra.mxu0 %v2737
    %4652 = vmatpush.msra.mxu0 %v2736
    %4653 = vmatpush.msra.mxu0 %v2735
    %4654 = vmatpush.msra.mxu0 %v2734
    %4655 = vmatpush.msra.mxu0 %v2733
    %4656 = vmatpush.msra.mxu0 %v2732
    %4657 = vmatpush.msra.mxu0 %v2731
    %4658 = vmatpush.msra.mxu0 %v2730
    %4659 = vmatpush.msra.mxu0 %v2729
    %4660 = vmatpush.msra.mxu0 %v2728
    %4661 = vmatpush.msra.mxu0 %v2727
    %4662 = vmatpush.msra.mxu0 %v2726
    %4663 = vmatpush.msra.mxu0 %v2725
    %4664 = vmatpush.msra.mxu0 %v2724
    %4665 = vmatpush.msra.mxu0 %v2723
    %4666 = vmatpush.msra.mxu0 %v2722
    %4667 = vmatmul.f32.gmra.mxu0 %v3065
    %v4668 = vpop.f32.mrf.mxu0
    %v4669 = vadd.f32 %v4649, %v4668
    %4670 = vdwg.mxu0
    %4671 = vmatpush.msra.mxu0 %v2753
    %4672 = vmatpush.msra.mxu0 %v2752
    %4673 = vmatpush.msra.mxu0 %v2751
    %4674 = vmatpush.msra.mxu0 %v2750
    %4675 = vmatpush.msra.mxu0 %v2749
    %4676 = vmatpush.msra.mxu0 %v2748
    %4677 = vmatpush.msra.mxu0 %v2747
    %4678 = vmatpush.msra.mxu0 %v2746
    %4679 = vmatpush.msra.mxu0 %v2745
    %4680 = vmatpush.msra.mxu0 %v2744
    %4681 = vmatpush.msra.mxu0 %v2743
    %4682 = vmatpush.msra.mxu0 %v2742
    %4683 = vmatpush.msra.mxu0 %v2741
    %4684 = vmatpush.msra.mxu0 %v2740
    %4685 = vmatpush.msra.mxu0 %v2739
    %4686 = vmatpush.msra.mxu0 %v2738
    %4687 = vmatmul.f32.gmra.mxu0 %v3066
    %v4688 = vpop.f32.mrf.mxu0
    %v4689 = vadd.f32 %v4669, %v4688
    %4690 = vdwg.mxu0
    %4691 = vmatpush.msra.mxu0 %v2769
    %4692 = vmatpush.msra.mxu0 %v2768
    %4693 = vmatpush.msra.mxu0 %v2767
    %4694 = vmatpush.msra.mxu0 %v2766
    %4695 = vmatpush.msra.mxu0 %v2765
    %4696 = vmatpush.msra.mxu0 %v2764
    %4697 = vmatpush.msra.mxu0 %v2763
    %4698 = vmatpush.msra.mxu0 %v2762
    %4699 = vmatpush.msra.mxu0 %v2761
    %4700 = vmatpush.msra.mxu0 %v2760
    %4701 = vmatpush.msra.mxu0 %v2759
    %4702 = vmatpush.msra.mxu0 %v2758
    %4703 = vmatpush.msra.mxu0 %v2757
    %4704 = vmatpush.msra.mxu0 %v2756
    %4705 = vmatpush.msra.mxu0 %v2755
    %4706 = vmatpush.msra.mxu0 %v2754
    %4707 = vmatmul.f32.gmra.mxu0 %v3067
    %v4708 = vpop.f32.mrf.mxu0
    %v4709 = vadd.f32 %v4689, %v4708
    %4710 = vdwg.mxu0
    %4711 = vmatpush.msra.mxu0 %v2785
    %4712 = vmatpush.msra.mxu0 %v2784
    %4713 = vmatpush.msra.mxu0 %v2783
    %4714 = vmatpush.msra.mxu0 %v2782
    %4715 = vmatpush.msra.mxu0 %v2781
    %4716 = vmatpush.msra.mxu0 %v2780
    %4717 = vmatpush.msra.mxu0 %v2779
    %4718 = vmatpush.msra.mxu0 %v2778
    %4719 = vmatpush.msra.mxu0 %v2777
    %4720 = vmatpush.msra.mxu0 %v2776
    %4721 = vmatpush.msra.mxu0 %v2775
    %4722 = vmatpush.msra.mxu0 %v2774
    %4723 = vmatpush.msra.mxu0 %v2773
    %4724 = vmatpush.msra.mxu0 %v2772
    %4725 = vmatpush.msra.mxu0 %v2771
    %4726 = vmatpush.msra.mxu0 %v2770
    %4727 = vmatmul.f32.gmra.mxu0 %v3068
    %v4728 = vpop.f32.mrf.mxu0
    %v4729 = vadd.f32 %v4709, %v4728
    %4730 = vdwg.mxu0
    %4731 = vmatpush.msra.mxu0 %v2801
    %4732 = vmatpush.msra.mxu0 %v2800
    %4733 = vmatpush.msra.mxu0 %v2799
    %4734 = vmatpush.msra.mxu0 %v2798
    %4735 = vmatpush.msra.mxu0 %v2797
    %4736 = vmatpush.msra.mxu0 %v2796
    %4737 = vmatpush.msra.mxu0 %v2795
    %4738 = vmatpush.msra.mxu0 %v2794
    %4739 = vmatpush.msra.mxu0 %v2793
    %4740 = vmatpush.msra.mxu0 %v2792
    %4741 = vmatpush.msra.mxu0 %v2791
    %4742 = vmatpush.msra.mxu0 %v2790
    %4743 = vmatpush.msra.mxu0 %v2789
    %4744 = vmatpush.msra.mxu0 %v2788
    %4745 = vmatpush.msra.mxu0 %v2787
    %4746 = vmatpush.msra.mxu0 %v2786
    %4747 = vmatmul.f32.gmra.mxu0 %v3069
    %v4748 = vpop.f32.mrf.mxu0
    %v4749 = vadd.f32 %v4729, %v4748
    %4750 = vdwg.mxu0
    %4751 = vmatpush.msra.mxu0 %v2817
    %4752 = vmatpush.msra.mxu0 %v2816
    %4753 = vmatpush.msra.mxu0 %v2815
    %4754 = vmatpush.msra.mxu0 %v2814
    %4755 = vmatpush.msra.mxu0 %v2813
    %4756 = vmatpush.msra.mxu0 %v2812
    %4757 = vmatpush.msra.mxu0 %v2811
    %4758 = vmatpush.msra.mxu0 %v2810
    %4759 = vmatpush.msra.mxu0 %v2809
    %4760 = vmatpush.msra.mxu0 %v2808
    %4761 = vmatpush.msra.mxu0 %v2807
    %4762 = vmatpush.msra.mxu0 %v2806
    %4763 = vmatpush.msra.mxu0 %v2805
    %4764 = vmatpush.msra.mxu0 %v2804
    %4765 = vmatpush.msra.mxu0 %v2803
    %4766 = vmatpush.msra.mxu0 %v2802
    %4767 = vmatmul.f32.gmra.mxu0 %v3070
    %v4768 = vpop.f32.mrf.mxu0
    %v4769 = vadd.f32 %v4749, %v4768
    %4770 = vdwg.mxu0
    %4771 = vmatpush.msra.mxu0 %v2833
    %4772 = vmatpush.msra.mxu0 %v2832
    %4773 = vmatpush.msra.mxu0 %v2831
    %4774 = vmatpush.msra.mxu0 %v2830
    %4775 = vmatpush.msra.mxu0 %v2829
    %4776 = vmatpush.msra.mxu0 %v2828
    %4777 = vmatpush.msra.mxu0 %v2827
    %4778 = vmatpush.msra.mxu0 %v2826
    %4779 = vmatpush.msra.mxu0 %v2825
    %4780 = vmatpush.msra.mxu0 %v2824
    %4781 = vmatpush.msra.mxu0 %v2823
    %4782 = vmatpush.msra.mxu0 %v2822
    %4783 = vmatpush.msra.mxu0 %v2821
    %4784 = vmatpush.msra.mxu0 %v2820
    %4785 = vmatpush.msra.mxu0 %v2819
    %4786 = vmatpush.msra.mxu0 %v2818
    %4787 = vmatmul.f32.gmra.mxu0 %v3071
    %v4788 = vpop.f32.mrf.mxu0
    %v4789 = vadd.f32 %v4769, %v4788
    %4790 = vdwg.mxu0
    %4791 = vmatpush.msra.mxu0 %v2849
    %4792 = vmatpush.msra.mxu0 %v2848
    %4793 = vmatpush.msra.mxu0 %v2847
    %4794 = vmatpush.msra.mxu0 %v2846
    %4795 = vmatpush.msra.mxu0 %v2845
    %4796 = vmatpush.msra.mxu0 %v2844
    %4797 = vmatpush.msra.mxu0 %v2843
    %4798 = vmatpush.msra.mxu0 %v2842
    %4799 = vmatpush.msra.mxu0 %v2841
    %4800 = vmatpush.msra.mxu0 %v2840
    %4801 = vmatpush.msra.mxu0 %v2839
    %4802 = vmatpush.msra.mxu0 %v2838
    %4803 = vmatpush.msra.mxu0 %v2837
    %4804 = vmatpush.msra.mxu0 %v2836
    %4805 = vmatpush.msra.mxu0 %v2835
    %4806 = vmatpush.msra.mxu0 %v2834
    %4807 = vmatmul.f32.gmra.mxu0 %v3072
    %v4808 = vpop.f32.mrf.mxu0
    %v4809 = vadd.f32 %v4789, %v4808
    %4810 = vdwg.mxu0
    %4811 = vmatpush.msra.mxu0 %v2865
    %4812 = vmatpush.msra.mxu0 %v2864
    %4813 = vmatpush.msra.mxu0 %v2863
    %4814 = vmatpush.msra.mxu0 %v2862
    %4815 = vmatpush.msra.mxu0 %v2861
    %4816 = vmatpush.msra.mxu0 %v2860
    %4817 = vmatpush.msra.mxu0 %v2859
    %4818 = vmatpush.msra.mxu0 %v2858
    %4819 = vmatpush.msra.mxu0 %v2857
    %4820 = vmatpush.msra.mxu0 %v2856
    %4821 = vmatpush.msra.mxu0 %v2855
    %4822 = vmatpush.msra.mxu0 %v2854
    %4823 = vmatpush.msra.mxu0 %v2853
    %4824 = vmatpush.msra.mxu0 %v2852
    %4825 = vmatpush.msra.mxu0 %v2851
    %4826 = vmatpush.msra.mxu0 %v2850
    %4827 = vmatmul.f32.gmra.mxu0 %v3073
    %v4828 = vpop.f32.mrf.mxu0
    %v4829 = vadd.f32 %v4809, %v4828
    %4830 = vdwg.mxu0
    %4831 = vmatpush.msra.mxu0 %v2881
    %4832 = vmatpush.msra.mxu0 %v2880
    %4833 = vmatpush.msra.mxu0 %v2879
    %4834 = vmatpush.msra.mxu0 %v2878
    %4835 = vmatpush.msra.mxu0 %v2877
    %4836 = vmatpush.msra.mxu0 %v2876
    %4837 = vmatpush.msra.mxu0 %v2875
    %4838 = vmatpush.msra.mxu0 %v2874
    %4839 = vmatpush.msra.mxu0 %v2873
    %4840 = vmatpush.msra.mxu0 %v2872
    %4841 = vmatpush.msra.mxu0 %v2871
    %4842 = vmatpush.msra.mxu0 %v2870
    %4843 = vmatpush.msra.mxu0 %v2869
    %4844 = vmatpush.msra.mxu0 %v2868
    %4845 = vmatpush.msra.mxu0 %v2867
    %4846 = vmatpush.msra.mxu0 %v2866
    %4847 = vmatmul.f32.gmra.mxu0 %v3074
    %v4848 = vpop.f32.mrf.mxu0
    %v4849 = vadd.f32 %v4829, %v4848
    %4850 = vdwg.mxu0
    %4851 = vmatpush.msra.mxu0 %v2897
    %4852 = vmatpush.msra.mxu0 %v2896
    %4853 = vmatpush.msra.mxu0 %v2895
    %4854 = vmatpush.msra.mxu0 %v2894
    %4855 = vmatpush.msra.mxu0 %v2893
    %4856 = vmatpush.msra.mxu0 %v2892
    %4857 = vmatpush.msra.mxu0 %v2891
    %4858 = vmatpush.msra.mxu0 %v2890
    %4859 = vmatpush.msra.mxu0 %v2889
    %4860 = vmatpush.msra.mxu0 %v2888
    %4861 = vmatpush.msra.mxu0 %v2887
    %4862 = vmatpush.msra.mxu0 %v2886
    %4863 = vmatpush.msra.mxu0 %v2885
    %4864 = vmatpush.msra.mxu0 %v2884
    %4865 = vmatpush.msra.mxu0 %v2883
    %4866 = vmatpush.msra.mxu0 %v2882
    %4867 = vmatmul.f32.gmra.mxu0 %v3075
    %v4868 = vpop.f32.mrf.mxu0
    %v4869 = vadd.f32 %v4849, %v4868
    %4870 = vdwg.mxu0
    %4871 = vmatpush.msra.mxu0 %v2913
    %4872 = vmatpush.msra.mxu0 %v2912
    %4873 = vmatpush.msra.mxu0 %v2911
    %4874 = vmatpush.msra.mxu0 %v2910
    %4875 = vmatpush.msra.mxu0 %v2909
    %4876 = vmatpush.msra.mxu0 %v2908
    %4877 = vmatpush.msra.mxu0 %v2907
    %4878 = vmatpush.msra.mxu0 %v2906
    %4879 = vmatpush.msra.mxu0 %v2905
    %4880 = vmatpush.msra.mxu0 %v2904
    %4881 = vmatpush.msra.mxu0 %v2903
    %4882 = vmatpush.msra.mxu0 %v2902
    %4883 = vmatpush.msra.mxu0 %v2901
    %4884 = vmatpush.msra.mxu0 %v2900
    %4885 = vmatpush.msra.mxu0 %v2899
    %4886 = vmatpush.msra.mxu0 %v2898
    %4887 = vmatmul.f32.gmra.mxu0 %v3076
    %v4888 = vpop.f32.mrf.mxu0
    %v4889 = vadd.f32 %v4869, %v4888
    %4890 = vdwg.mxu0
    %4891 = vmatpush.msra.mxu0 %v2929
    %4892 = vmatpush.msra.mxu0 %v2928
    %4893 = vmatpush.msra.mxu0 %v2927
    %4894 = vmatpush.msra.mxu0 %v2926
    %4895 = vmatpush.msra.mxu0 %v2925
    %4896 = vmatpush.msra.mxu0 %v2924
    %4897 = vmatpush.msra.mxu0 %v2923
    %4898 = vmatpush.msra.mxu0 %v2922
    %4899 = vmatpush.msra.mxu0 %v2921
    %4900 = vmatpush.msra.mxu0 %v2920
    %4901 = vmatpush.msra.mxu0 %v2919
    %4902 = vmatpush.msra.mxu0 %v2918
    %4903 = vmatpush.msra.mxu0 %v2917
    %4904 = vmatpush.msra.mxu0 %v2916
    %4905 = vmatpush.msra.mxu0 %v2915
    %4906 = vmatpush.msra.mxu0 %v2914
    %4907 = vmatmul.f32.gmra.mxu0 %v3077
    %v4908 = vpop.f32.mrf.mxu0
    %v4909 = vadd.f32 %v4889, %v4908
    %4910 = vdwg.mxu0
    %4911 = vmatpush.msra.mxu0 %v2945
    %4912 = vmatpush.msra.mxu0 %v2944
    %4913 = vmatpush.msra.mxu0 %v2943
    %4914 = vmatpush.msra.mxu0 %v2942
    %4915 = vmatpush.msra.mxu0 %v2941
    %4916 = vmatpush.msra.mxu0 %v2940
    %4917 = vmatpush.msra.mxu0 %v2939
    %4918 = vmatpush.msra.mxu0 %v2938
    %4919 = vmatpush.msra.mxu0 %v2937
    %4920 = vmatpush.msra.mxu0 %v2936
    %4921 = vmatpush.msra.mxu0 %v2935
    %4922 = vmatpush.msra.mxu0 %v2934
    %4923 = vmatpush.msra.mxu0 %v2933
    %4924 = vmatpush.msra.mxu0 %v2932
    %4925 = vmatpush.msra.mxu0 %v2931
    %4926 = vmatpush.msra.mxu0 %v2930
    %4927 = vmatmul.f32.gmra.mxu0 %v3078
    %v4928 = vpop.f32.mrf.mxu0
    %v4929 = vadd.f32 %v4909, %v4928
    %4930 = vdwg.mxu0
    %4931 = vmatpush.msra.mxu0 %v2961
    %4932 = vmatpush.msra.mxu0 %v2960
    %4933 = vmatpush.msra.mxu0 %v2959
    %4934 = vmatpush.msra.mxu0 %v2958
    %4935 = vmatpush.msra.mxu0 %v2957
    %4936 = vmatpush.msra.mxu0 %v2956
    %4937 = vmatpush.msra.mxu0 %v2955
    %4938 = vmatpush.msra.mxu0 %v2954
    %4939 = vmatpush.msra.mxu0 %v2953
    %4940 = vmatpush.msra.mxu0 %v2952
    %4941 = vmatpush.msra.mxu0 %v2951
    %4942 = vmatpush.msra.mxu0 %v2950
    %4943 = vmatpush.msra.mxu0 %v2949
    %4944 = vmatpush.msra.mxu0 %v2948
    %4945 = vmatpush.msra.mxu0 %v2947
    %4946 = vmatpush.msra.mxu0 %v2946
    %4947 = vmatmul.f32.gmra.mxu0 %v3079
    %v4948 = vpop.f32.mrf.mxu0
    %v4949 = vadd.f32 %v4929, %v4948
    %4950 = vdwg.mxu0
    %4951 = vmatpush.msra.mxu0 %v2977
    %4952 = vmatpush.msra.mxu0 %v2976
    %4953 = vmatpush.msra.mxu0 %v2975
    %4954 = vmatpush.msra.mxu0 %v2974
    %4955 = vmatpush.msra.mxu0 %v2973
    %4956 = vmatpush.msra.mxu0 %v2972
    %4957 = vmatpush.msra.mxu0 %v2971
    %4958 = vmatpush.msra.mxu0 %v2970
    %4959 = vmatpush.msra.mxu0 %v2969
    %4960 = vmatpush.msra.mxu0 %v2968
    %4961 = vmatpush.msra.mxu0 %v2967
    %4962 = vmatpush.msra.mxu0 %v2966
    %4963 = vmatpush.msra.mxu0 %v2965
    %4964 = vmatpush.msra.mxu0 %v2964
    %4965 = vmatpush.msra.mxu0 %v2963
    %4966 = vmatpush.msra.mxu0 %v2962
    %4967 = vmatmul.f32.gmra.mxu0 %v3080
    %v4968 = vpop.f32.mrf.mxu0
    %v4969 = vadd.f32 %v4949, %v4968
    %4970 = vdwg.mxu0
    %vm4971 = vcmask 73728
    %4972 = vst.msk [vmem:[%s5] sm:$0x1] %vm4971, %v4969
    %4974 = vrot.lane.b32.xlu0 %v4969, 118
    %v4975 = vpop.permute.xlu0 %4974
    %4977 = vst.msk [vmem:[%s5 + $0x1] sm:$0x1] %vm4971, %v4975
    %4978 = vrot.lane.b32.xlu0 %v4969, 108
    %v4979 = vpop.permute.xlu0 %4978
    %4981 = vst.msk [vmem:[%s5 + $0x2] sm:$0x1] %vm4971, %v4979
    %4982 = vrot.lane.b32.xlu0 %v4969, 98
    %v4983 = vpop.permute.xlu0 %4982
    %4985 = vst.msk [vmem:[%s5 + $0x3] sm:$0x1] %vm4971, %v4983
    // Predicated region
    $region30: #{net_forward.1} parent=1 // pred_check
      _
    $region31: #{net_forward.1} parent=1 // pred_check_branch
      %4987 = sbr.rel (0) target = $region33
    $region32: #{net_forward.1} parent=1 // pred_region
      _
    $region33: #{net_forward.1} parent=1 // pred_fallthru
      _
    // Predicated region
    $region34: #{net_forward.1} parent=1 // pred_check
      _
    $region35: #{net_forward.1} parent=1 // pred_check_branch
      %4989 = sbr.rel (0) target = $region37
    $region36: #{net_forward.1} parent=1 // pred_region
      _
    $region37: #{net_forward.1} parent=1 // pred_fallthru
      _
    %4990 = vsyncpa [#allocation5], 1
    %4991 = vsyncpa [#allocation7], 1

</llo_original>
